<compile_context>
chip_gen: v6e
topology: v6e:2x2x1
jax: 0.10.0
libtpu: 0.0.40
codegen_flags: <defaults>
</compile_context>

<pallas_src>
import functools

import jax
import jax.numpy as jnp
from jax import lax
from jax.experimental import pallas as pl
from jax.experimental.pallas import tpu as pltpu

EXPANSION = 4
BN_EPS = 1e-5


# ----------------------------------------------------------------------------
# Generation-aware tiling helpers
# ----------------------------------------------------------------------------
def _vmem_limit_bytes():
    """~3/4 of VMEM capacity: 96 MiB on v5e/v6e (128 MiB), 48 MiB on v7x
    (64 MiB).  Falls back to the v7x-safe 48 MiB if the query fails."""
    cap = 64 * 1024 * 1024
    try:
        cap = int(pltpu.get_tpu_info().vmem_capacity_bytes)
    except Exception:
        pass
    return min((cap * 3) // 4, 100 * 1024 * 1024)


def _pick_row_tile(Ho, Hq, Wq, Wo, cin, planes, cout, stride, budget_bytes):
    """Largest divisor of Ho whose per-grid-step VMEM footprint fits budget."""
    s = stride
    khalo = 2 // s
    # th-independent residents: input block + weight blocks (x2 bytes bf16,
    # x2 for the pipeline's default double buffering).
    # TODO(synk): single-buffer the constant-index weight blocks with
    # pipeline_mode=pl.Buffered(1) once validated on all generations.
    fixed = 2 * 2 * (s * s * Hq * Wq * cin)
    fixed += 2 * 2 * (cin * planes + 9 * planes * planes + planes * cout
                      + cin * cout)

    def per_step(th):
        b = fixed
        b += 2 * 2 * th * Wo * cout                       # bf16 out block (dbl buf)
        b += 2 * s * s * (th + khalo) * Wq * planes       # y1 phase planes (bf16)
        b += 4 * th * Wo * planes                         # conv2 f32 accumulator
        b += 2 * 4 * th * Wo * cout                       # conv3/shortcut f32 temps
        b += 4 * (th + khalo) * Wq * max(cin, planes)     # slack for relayouts
        return b

    for th in sorted((d for d in range(1, Ho + 1) if Ho % d == 0), reverse=True):
        if per_step(th) <= budget_bytes:
            return th
    return 1


# ----------------------------------------------------------------------------
# Fused Bottleneck kernel
# ----------------------------------------------------------------------------
def _bottleneck_kernel(x_ref, w1_ref, s1_ref, b1_ref, w2_ref, s2_ref, b2_ref,
                       w3_ref, s3_ref, b3_ref, *rest,
                       stride, th, H, W, has_proj):
    """
    x_ref : (s*s, Hq, Wq, Cin) bf16 -- phase-decomposed zero-padded image,
            resident in VMEM across the row-tile grid axis.
            x_ref[py*s+px, i, j, :] == x_padded[s*i+py, s*j+px, :]
    o_ref : (1, th, Wo, cout) bf16 -- final Bottleneck output row tile.
    """
    if has_proj:
        wsc_ref, ssc_ref, bsc_ref, o_ref = rest
    else:
        (o_ref,) = rest

    s = stride
    Wq = x_ref.shape[2]
    cin = x_ref.shape[3]
    planes = w1_ref.shape[1]
    cout = w3_ref.shape[1]
    Wo = W // s
    khalo = 2 // s                       # extra halo rows per phase plane
    rows = th + khalo                    # conv1 rows needed for this tile
    r0 = pl.program_id(1) * th           # first phase-plane row of this tile

    s1 = s1_ref[...]
    b1 = b1_ref[...]

    # --- conv1 (1x1) + BN1 + ReLU on the rows this tile needs ---------------
    # conv1 on the zero pad ring is relu(b1) != 0, so zero it with tiny
    # (rows,1,1)/(1,Wq,1) masks folded into one broadcast multiply.
    y1 = []
    for py in range(s):
        prow = s * (lax.broadcasted_iota(jnp.int32, (rows, 1, 1), 0) + r0) + py
        rmask = ((prow >= 1) & (prow <= H)).astype(jnp.float32)      # (rows,1,1)
        row_ph = []
        for px in range(s):
            pcol = s * lax.broadcasted_iota(jnp.int32, (1, Wq, 1), 1) + px
            cmask = ((pcol >= 1) & (pcol <= W)).astype(jnp.float32)  # (1,Wq,1)
            mask = rmask * cmask                                     # (rows,Wq,1)
            xw = x_ref[py * s + px, pl.ds(r0, rows), :, :]           # (rows,Wq,cin)
            t = jnp.dot(xw.reshape(rows * Wq, cin), w1_ref[...],
                        preferred_element_type=jnp.float32)
            t = jnp.maximum(t * s1 + b1, 0.0).reshape(rows, Wq, planes)
            row_ph.append((t * mask).astype(jnp.bfloat16))
        y1.append(row_ph)

    # --- conv2 (3x3, stride) + BN2 + ReLU ------------------------------------
    # Phase decomposition makes every strided tap a unit-stride static slice.
    # TODO(synk): fold the three dx taps into one K=3*planes matmul per dy
    # (deeper MXU K on v6e/v7x, fewer MRF pops / VALU accumulate passes).
    acc = jnp.zeros((th * Wo, planes), jnp.float32)
    for dy in range(3):
        py, qy = dy % s, dy // s
        for dx in range(3):
            px, qx = dx % s, dx // s
            patch = y1[py][px][qy:qy + th, qx:qx + Wo, :]
            acc = acc + jnp.dot(patch.reshape(th * Wo, planes), w2_ref[dy, dx],
                                preferred_element_type=jnp.float32)
    y2 = jnp.maximum(acc * s2_ref[...] + b2_ref[...], 0.0).astype(jnp.bfloat16)

    # --- conv3 (1x1) + BN3 + shortcut + residual add + ReLU (fused) ---------
    out = jnp.dot(y2, w3_ref[...], preferred_element_type=jnp.float32)
    out = out * s3_ref[...] + b3_ref[...]

    # Shortcut operand straight from the resident input block (no extra HBM
    # pass):  stride=1 -> unpadded window of x;  stride=2 -> phase (1,1),
    # i.e. x[s*i, s*j], exactly the strided 1x1 shortcut input.
    if s == 1:
        xs = x_ref[0, pl.ds(r0 + 1, th), pl.ds(1, W), :]
    else:
        xs = x_ref[1 * s + 1, pl.ds(r0, th), pl.ds(0, Wo), :]
    xs = xs.reshape(th * Wo, cin)

    if has_proj:
        sc = jnp.dot(xs, wsc_ref[...], preferred_element_type=jnp.float32)
        out = out + sc * ssc_ref[...] + bsc_ref[...]
    else:
        # TODO(synk): identity shortcut adds the bf16-cast activation (lossier
        # than the f32 PyTorch reference; fine at inference tolerances).
        out = out + xs.astype(jnp.float32)

    out = jnp.maximum(out, 0.0)
    o_ref[0] = out.reshape(th, Wo, cout).astype(o_ref.dtype)


# ----------------------------------------------------------------------------
# Bottleneck forward
# ----------------------------------------------------------------------------
def _fold_bn(gamma, beta, mean, var, eps=BN_EPS):
    scale = gamma / jnp.sqrt(var + eps)
    bias = beta - mean * scale
    return scale[None, :], bias[None, :]


def bottleneck_forward(x_nchw, p, stride):
    N, cin, H, W = x_nchw.shape
    planes = p["w1"].shape[0]
    cout = EXPANSION * planes
    s = stride
    assert H % s == 0 and W % s == 0, "spatial dims must be divisible by stride"
    Ho, Wo = H // s, W // s
    Hq, Wq = (H + 2) // s, (W + 2) // s
    has_proj = (s != 1) or (cin != cout)

    # NCHW -> NHWC + f32 -> bf16 + zero-pad(1): one fused XLA pass over x.
    # TODO(synk): when blocks are stacked, keep activations NHWC/bf16 end to
    # end so this boundary pass disappears entirely.
    x = jnp.transpose(x_nchw, (0, 2, 3, 1)).astype(jnp.bfloat16)
    xp = jnp.pad(x, ((0, 0), (1, 1), (1, 1), (0, 0)))
    if s == 1:
        xph = xp                                            # (N, Hq, Wq, cin)
    else:
        # phase-decompose: strided 3x3 taps & the strided shortcut become
        # unit-stride slices in-kernel.
        xph = xp.reshape(N, Hq, s, Wq, s, cin).transpose(0, 2, 4, 1, 3, 5)
        xph = xph.reshape(N * s * s, Hq, Wq, cin)

    s1, b1 = _fold_bn(p["bn1_g"], p["bn1_b"], p["bn1_m"], p["bn1_v"])
    s2, b2 = _fold_bn(p["bn2_g"], p["bn2_b"], p["bn2_m"], p["bn2_v"])
    s3, b3 = _fold_bn(p["bn3_g"], p["bn3_b"], p["bn3_m"], p["bn3_v"])

    w1 = p["w1"][:, :, 0, 0].T.astype(jnp.bfloat16)                  # (cin, planes)
    w2 = jnp.transpose(p["w2"], (2, 3, 1, 0)).astype(jnp.bfloat16)   # HWIO
    w3 = p["w3"][:, :, 0, 0].T.astype(jnp.bfloat16)                  # (planes, cout)

    vmem_limit = _vmem_limit_bytes()
    th = _pick_row_tile(Ho, Hq, Wq, Wo, cin, planes, cout, s, vmem_limit // 2)

    args = [xph, w1, s1, b1, w2, s2, b2, w3, s3, b3]
    in_specs = [
        pl.BlockSpec((s * s, Hq, Wq, cin), lambda n, r: (n, 0, 0, 0)),
        pl.BlockSpec((cin, planes), lambda n, r: (0, 0)),
        pl.BlockSpec((1, planes), lambda n, r: (0, 0)),
        pl.BlockSpec((1, planes), lambda n, r: (0, 0)),
        pl.BlockSpec((3, 3, planes, planes), lambda n, r: (0, 0, 0, 0)),
        pl.BlockSpec((1, planes), lambda n, r: (0, 0)),
        pl.BlockSpec((1, planes), lambda n, r: (0, 0)),
        pl.BlockSpec((planes, cout), lambda n, r: (0, 0)),
        pl.BlockSpec((1, cout), lambda n, r: (0, 0)),
        pl.BlockSpec((1, cout), lambda n, r: (0, 0)),
    ]
    if has_proj:
        ssc, bsc = _fold_bn(p["bnsc_g"], p["bnsc_b"], p["bnsc_m"], p["bnsc_v"])
        wsc = p["wsc"][:, :, 0, 0].T.astype(jnp.bfloat16)            # (cin, cout)
        args += [wsc, ssc, bsc]
        in_specs += [
            pl.BlockSpec((cin, cout), lambda n, r: (0, 0)),
            pl.BlockSpec((1, cout), lambda n, r: (0, 0)),
            pl.BlockSpec((1, cout), lambda n, r: (0, 0)),
        ]

    kern = functools.partial(_bottleneck_kernel, stride=s, th=th, H=H, W=W,
                             has_proj=has_proj)
    y = pl.pallas_call(
        kern,
        out_shape=jax.ShapeDtypeStruct((N, Ho, Wo, cout), jnp.bfloat16),
        grid=(N, Ho // th),
        in_specs=in_specs,
        out_specs=pl.BlockSpec((1, th, Wo, cout), lambda n, r: (n, r, 0, 0)),
        compiler_params=pltpu.CompilerParams(
            dimension_semantics=("parallel", "parallel"),
            vmem_limit_bytes=vmem_limit),
    )(*args)

    # back to NCHW in the caller's dtype (cast fuses with the transpose)
    return jnp.transpose(y, (0, 3, 1, 2)).astype(x_nchw.dtype)


# ----------------------------------------------------------------------------
# Pure-JAX reference (f32) and deterministic init
# ----------------------------------------------------------------------------
def reference_forward(x, p, stride):
    def conv(x, w, s, pad):
        return lax.conv_general_dilated(
            x, w, (s, s), [(pad, pad), (pad, pad)],
            dimension_numbers=("NCHW", "OIHW", "NCHW"))

    def bn(x, g, b, m, v):
        sc = g / jnp.sqrt(v + BN_EPS)
        return x * sc[None, :, None, None] + (b - m * sc)[None, :, None, None]

    out = jax.nn.relu(bn(conv(x, p["w1"], 1, 0),
                         p["bn1_g"], p["bn1_b"], p["bn1_m"], p["bn1_v"]))
    out = jax.nn.relu(bn(conv(out, p["w2"], stride, 1),
                         p["bn2_g"], p["bn2_b"], p["bn2_m"], p["bn2_v"]))
    out = bn(conv(out, p["w3"], 1, 0),
             p["bn3_g"], p["bn3_b"], p["bn3_m"], p["bn3_v"])
    if "wsc" in p:
        sc = bn(conv(x, p["wsc"], stride, 0),
                p["bnsc_g"], p["bnsc_b"], p["bnsc_m"], p["bnsc_v"])
    else:
        sc = x
    return jax.nn.relu(out + sc)


def init_params(key, in_planes, planes, stride):
    out_planes = EXPANSION * planes
    keys = jax.random.split(key, 16)

    def bn_params(k, c):
        k1, k2, k3, k4 = jax.random.split(k, 4)
        return (1.0 + 0.1 * jax.random.normal(k1, (c,), jnp.float32),
                0.1 * jax.random.normal(k2, (c,), jnp.float32),
                0.05 * jax.random.normal(k3, (c,), jnp.float32),
                jax.random.uniform(k4, (c,), jnp.float32, 0.5, 1.5))

    p = {}
    p["w1"] = 0.1 * jax.random.normal(keys[0], (planes, in_planes, 1, 1), jnp.float32)
    p["bn1_g"], p["bn1_b"], p["bn1_m"], p["bn1_v"] = bn_params(keys[1], planes)
    p["w2"] = 0.1 * jax.random.normal(keys[2], (planes, planes, 3, 3), jnp.float32)
    p["bn2_g"], p["bn2_b"], p["bn2_m"], p["bn2_v"] = bn_params(keys[3], planes)
    p["w3"] = 0.1 * jax.random.normal(keys[4], (out_planes, planes, 1, 1), jnp.float32)
    p["bn3_g"], p["bn3_b"], p["bn3_m"], p["bn3_v"] = bn_params(keys[5], out_planes)
    if stride != 1 or in_planes != out_planes:
        p["wsc"] = 0.1 * jax.random.normal(keys[6], (out_planes, in_planes, 1, 1),
                                           jnp.float32)
        p["bnsc_g"], p["bnsc_b"], p["bnsc_m"], p["bnsc_v"] = bn_params(keys[7], out_planes)
    return p


if __name__ == "__main__":
    key = jax.random.PRNGKey(0)
    kx, kp1, kp2, kp3 = jax.random.split(key, 4)

    fwd = jax.jit(bottleneck_forward, static_argnums=2)

    N, in_planes, H, W = 2, 4, 16, 16
    planes = 4
    x = jax.random.normal(kx, (N, in_planes, H, W), jnp.float32)

    # Case 1: stride=1, projection shortcut (in_planes != 4*planes)
    p1 = init_params(kp1, in_planes, planes, stride=1)
    out1 = jax.block_until_ready(fwd(x, p1, 1))
    ref1 = reference_forward(x, p1, 1)
    assert out1.shape == (N, EXPANSION * planes, H, W)
    assert jnp.allclose(out1, ref1, rtol=5e-2, atol=5e-2)   # bf16 MXU tolerance

    # Case 2: stride=2, strided projection shortcut
    p2 = init_params(kp2, in_planes, planes, stride=2)
    out2 = jax.block_until_ready(fwd(x, p2, 2))
    ref2 = reference_forward(x, p2, 2)
    assert out2.shape == (N, EXPANSION * planes, H // 2, W // 2)
    assert jnp.allclose(out2, ref2, rtol=5e-2, atol=5e-2)

    # Case 3: stride=1, identity shortcut (in_planes == 4*planes)
    x3 = jax.random.normal(kx, (N, EXPANSION * planes, H, W), jnp.float32)
    p3 = init_params(kp3, EXPANSION * planes, planes, stride=1)
    out3 = jax.block_until_ready(fwd(x3, p3, 1))
    ref3 = reference_forward(x3, p3, 1)
    assert out3.shape == (N, EXPANSION * planes, H, W)
    assert jnp.allclose(out3, ref3, rtol=5e-2, atol=5e-2)

    print("KERNEL_OK")
</pallas_src>

<mosaic_0001>
module attributes {stable_mosaic.version = 11 : i64} {
  func.func @_bottleneck_kernel(%arg0: i32, %arg1: i32, %arg2: memref<1x18x18x4xbf16, #tpu.memory_space<vmem>>, %arg3: memref<4x4xbf16, #tpu.memory_space<vmem>>, %arg4: memref<1x4xf32, #tpu.memory_space<vmem>>, %arg5: memref<1x4xf32, #tpu.memory_space<vmem>>, %arg6: memref<3x3x4x4xbf16, #tpu.memory_space<vmem>>, %arg7: memref<1x4xf32, #tpu.memory_space<vmem>>, %arg8: memref<1x4xf32, #tpu.memory_space<vmem>>, %arg9: memref<4x16xbf16, #tpu.memory_space<vmem>>, %arg10: memref<1x16xf32, #tpu.memory_space<vmem>>, %arg11: memref<1x16xf32, #tpu.memory_space<vmem>>, %arg12: memref<4x16xbf16, #tpu.memory_space<vmem>>, %arg13: memref<1x16xf32, #tpu.memory_space<vmem>>, %arg14: memref<1x16xf32, #tpu.memory_space<vmem>>, %arg15: memref<1x16x16x16xbf16, #tpu.memory_space<vmem>>) attributes {dimension_semantics = [#tpu.dimension_semantics<parallel>, #tpu.dimension_semantics<parallel>], iteration_bounds = array<i64: 2, 1>, scalar_prefetch = 0 : i64, scratch_operands = 0 : i64, tpu.core_type = #tpu.core_type<tc>, window_params = [{transform_indices = @transform_0, window_bounds = array<i64: 1, 18, 18, 4>}, {pipeline_mode = #tpu.pipeline_mode<synchronous>, transform_indices = @transform_1, window_bounds = array<i64: 4, 4>}, {pipeline_mode = #tpu.pipeline_mode<synchronous>, transform_indices = @transform_2, window_bounds = array<i64: 1, 4>}, {pipeline_mode = #tpu.pipeline_mode<synchronous>, transform_indices = @transform_3, window_bounds = array<i64: 1, 4>}, {pipeline_mode = #tpu.pipeline_mode<synchronous>, transform_indices = @transform_4, window_bounds = array<i64: 3, 3, 4, 4>}, {pipeline_mode = #tpu.pipeline_mode<synchronous>, transform_indices = @transform_5, window_bounds = array<i64: 1, 4>}, {pipeline_mode = #tpu.pipeline_mode<synchronous>, transform_indices = @transform_6, window_bounds = array<i64: 1, 4>}, {pipeline_mode = #tpu.pipeline_mode<synchronous>, transform_indices = @transform_7, window_bounds = array<i64: 4, 16>}, {pipeline_mode = #tpu.pipeline_mode<synchronous>, transform_indices = @transform_8, window_bounds = array<i64: 1, 16>}, {pipeline_mode = #tpu.pipeline_mode<synchronous>, transform_indices = @transform_9, window_bounds = array<i64: 1, 16>}, {pipeline_mode = #tpu.pipeline_mode<synchronous>, transform_indices = @transform_10, window_bounds = array<i64: 4, 16>}, {pipeline_mode = #tpu.pipeline_mode<synchronous>, transform_indices = @transform_11, window_bounds = array<i64: 1, 16>}, {pipeline_mode = #tpu.pipeline_mode<synchronous>, transform_indices = @transform_12, window_bounds = array<i64: 1, 16>}, {transform_indices = @transform_13, window_bounds = array<i64: 1, 16, 16, 16>}]} {
    %c16_i32 = arith.constant 16 : i32
    %0 = arith.muli %arg1, %c16_i32 : i32
    %c0 = arith.constant 0 : index
    %c0_0 = arith.constant 0 : index
    %1 = vector.load %arg4[%c0, %c0_0] : memref<1x4xf32, #tpu.memory_space<vmem>>, vector<1x4xf32>
    %c0_1 = arith.constant 0 : index
    %c0_2 = arith.constant 0 : index
    %2 = vector.load %arg5[%c0_1, %c0_2] : memref<1x4xf32, #tpu.memory_space<vmem>>, vector<1x4xf32>
    %3 = tpu.iota {dimensions = array<i32: 0>} : vector<18x1x1xi32>
    %4 = vector.broadcast %0 : i32 to vector<18x1x1xi32>
    %5 = arith.addi %3, %4 : vector<18x1x1xi32>
    %c1_i32 = arith.constant 1 : i32
    %6 = vector.broadcast %c1_i32 : i32 to vector<18x1x1xi32>
    %7 = arith.muli %6, %5 : vector<18x1x1xi32>
    %c0_i32 = arith.constant 0 : i32
    %8 = vector.broadcast %c0_i32 : i32 to vector<18x1x1xi32>
    %9 = arith.addi %7, %8 : vector<18x1x1xi32>
    %c1_i32_3 = arith.constant 1 : i32
    %10 = vector.broadcast %c1_i32_3 : i32 to vector<18x1x1xi32>
    %11 = arith.cmpi sge, %9, %10 : vector<18x1x1xi32>
    %c16_i32_4 = arith.constant 16 : i32
    %12 = vector.broadcast %c16_i32_4 : i32 to vector<18x1x1xi32>
    %13 = arith.cmpi sle, %9, %12 : vector<18x1x1xi32>
    %14 = arith.andi %11, %13 : vector<18x1x1xi1>
    %15 = arith.extui %14 : vector<18x1x1xi1> to vector<18x1x1xi32>
    %16 = arith.sitofp %15 : vector<18x1x1xi32> to vector<18x1x1xf32>
    %17 = tpu.iota {dimensions = array<i32: 1>} : vector<1x18x1xi32>
    %c1_i32_5 = arith.constant 1 : i32
    %18 = vector.broadcast %c1_i32_5 : i32 to vector<1x18x1xi32>
    %19 = arith.muli %18, %17 : vector<1x18x1xi32>
    %c0_i32_6 = arith.constant 0 : i32
    %20 = vector.broadcast %c0_i32_6 : i32 to vector<1x18x1xi32>
    %21 = arith.addi %19, %20 : vector<1x18x1xi32>
    %c1_i32_7 = arith.constant 1 : i32
    %22 = vector.broadcast %c1_i32_7 : i32 to vector<1x18x1xi32>
    %23 = arith.cmpi sge, %21, %22 : vector<1x18x1xi32>
    %c16_i32_8 = arith.constant 16 : i32
    %24 = vector.broadcast %c16_i32_8 : i32 to vector<1x18x1xi32>
    %25 = arith.cmpi sle, %21, %24 : vector<1x18x1xi32>
    %26 = arith.andi %23, %25 : vector<1x18x1xi1>
    %27 = arith.extui %26 : vector<1x18x1xi1> to vector<1x18x1xi32>
    %28 = arith.sitofp %27 : vector<1x18x1xi32> to vector<1x18x1xf32>
    %29 = vector.broadcast %16 : vector<18x1x1xf32> to vector<18x18x1xf32>
    %30 = vector.broadcast %28 : vector<1x18x1xf32> to vector<18x18x1xf32>
    %31 = arith.mulf %29, %30 : vector<18x18x1xf32>
    %c0_9 = arith.constant 0 : index
    %32 = arith.index_cast %0 : i32 to index
    %c0_10 = arith.constant 0 : index
    %c0_11 = arith.constant 0 : index
    %33 = vector.load %arg2[%c0_9, %32, %c0_10, %c0_11] : memref<1x18x18x4xbf16, #tpu.memory_space<vmem>>, vector<1x18x18x4xbf16>
    %34 = vector.shape_cast %33 : vector<1x18x18x4xbf16> to vector<18x18x4xbf16>
    %35 = vector.shape_cast %34 : vector<18x18x4xbf16> to vector<324x4xbf16>
    %c0_12 = arith.constant 0 : index
    %c0_13 = arith.constant 0 : index
    %36 = vector.load %arg3[%c0_12, %c0_13] : memref<4x4xbf16, #tpu.memory_space<vmem>>, vector<4x4xbf16>
    %cst = arith.constant dense<0.000000e+00> : vector<324x4xf32>
    %37 = tpu.matmul %35, %36, %cst {dimension_numbers = #tpu.dot_dimension_numbers<[1], [0], [0], [1], [0, 0, 1, 1], [], []>} : vector<324x4xbf16>, vector<4x4xbf16>, vector<324x4xf32> -> vector<324x4xf32>
    %38 = vector.broadcast %1 : vector<1x4xf32> to vector<324x4xf32>
    %39 = arith.mulf %37, %38 : vector<324x4xf32>
    %40 = vector.broadcast %2 : vector<1x4xf32> to vector<324x4xf32>
    %41 = arith.addf %39, %40 : vector<324x4xf32>
    %cst_14 = arith.constant 0.000000e+00 : f32
    %42 = vector.broadcast %cst_14 : f32 to vector<324x4xf32>
    %43 = arith.maximumf %41, %42 : vector<324x4xf32>
    %44 = vector.shape_cast %43 : vector<324x4xf32> to vector<18x18x4xf32>
    %45 = vector.broadcast %31 : vector<18x18x1xf32> to vector<18x18x4xf32>
    %46 = arith.mulf %44, %45 : vector<18x18x4xf32>
    %47 = arith.truncf %46 : vector<18x18x4xf32> to vector<18x18x4xbf16>
    %cst_15 = arith.constant 0.000000e+00 : f32
    %48 = vector.broadcast %cst_15 : f32 to vector<256x4xf32>
    %49 = vector.extract_strided_slice %47 {offsets = [0, 0, 0], sizes = [16, 16, 4], strides = [1, 1, 1]} : vector<18x18x4xbf16> to vector<16x16x4xbf16>
    %50 = vector.shape_cast %49 : vector<16x16x4xbf16> to vector<256x4xbf16>
    %c0_16 = arith.constant 0 : index
    %c0_17 = arith.constant 0 : index
    %c0_18 = arith.constant 0 : index
    %c0_19 = arith.constant 0 : index
    %51 = vector.load %arg6[%c0_16, %c0_17, %c0_18, %c0_19] : memref<3x3x4x4xbf16, #tpu.memory_space<vmem>>, vector<1x1x4x4xbf16>
    %52 = vector.shape_cast %51 : vector<1x1x4x4xbf16> to vector<4x4xbf16>
    %cst_20 = arith.constant dense<0.000000e+00> : vector<256x4xf32>
    %53 = tpu.matmul %50, %52, %cst_20 {dimension_numbers = #tpu.dot_dimension_numbers<[1], [0], [0], [1], [0, 0, 1, 1], [], []>} : vector<256x4xbf16>, vector<4x4xbf16>, vector<256x4xf32> -> vector<256x4xf32>
    %54 = arith.addf %48, %53 : vector<256x4xf32>
    %55 = vector.extract_strided_slice %47 {offsets = [0, 1, 0], sizes = [16, 16, 4], strides = [1, 1, 1]} : vector<18x18x4xbf16> to vector<16x16x4xbf16>
    %56 = vector.shape_cast %55 : vector<16x16x4xbf16> to vector<256x4xbf16>
    %c0_21 = arith.constant 0 : index
    %c1 = arith.constant 1 : index
    %c0_22 = arith.constant 0 : index
    %c0_23 = arith.constant 0 : index
    %57 = vector.load %arg6[%c0_21, %c1, %c0_22, %c0_23] : memref<3x3x4x4xbf16, #tpu.memory_space<vmem>>, vector<1x1x4x4xbf16>
    %58 = vector.shape_cast %57 : vector<1x1x4x4xbf16> to vector<4x4xbf16>
    %cst_24 = arith.constant dense<0.000000e+00> : vector<256x4xf32>
    %59 = tpu.matmul %56, %58, %cst_24 {dimension_numbers = #tpu.dot_dimension_numbers<[1], [0], [0], [1], [0, 0, 1, 1], [], []>} : vector<256x4xbf16>, vector<4x4xbf16>, vector<256x4xf32> -> vector<256x4xf32>
    %60 = arith.addf %54, %59 : vector<256x4xf32>
    %61 = vector.extract_strided_slice %47 {offsets = [0, 2, 0], sizes = [16, 16, 4], strides = [1, 1, 1]} : vector<18x18x4xbf16> to vector<16x16x4xbf16>
    %62 = vector.shape_cast %61 : vector<16x16x4xbf16> to vector<256x4xbf16>
    %c0_25 = arith.constant 0 : index
    %c2 = arith.constant 2 : index
    %c0_26 = arith.constant 0 : index
    %c0_27 = arith.constant 0 : index
    %63 = vector.load %arg6[%c0_25, %c2, %c0_26, %c0_27] : memref<3x3x4x4xbf16, #tpu.memory_space<vmem>>, vector<1x1x4x4xbf16>
    %64 = vector.shape_cast %63 : vector<1x1x4x4xbf16> to vector<4x4xbf16>
    %cst_28 = arith.constant dense<0.000000e+00> : vector<256x4xf32>
    %65 = tpu.matmul %62, %64, %cst_28 {dimension_numbers = #tpu.dot_dimension_numbers<[1], [0], [0], [1], [0, 0, 1, 1], [], []>} : vector<256x4xbf16>, vector<4x4xbf16>, vector<256x4xf32> -> vector<256x4xf32>
    %66 = arith.addf %60, %65 : vector<256x4xf32>
    %67 = vector.extract_strided_slice %47 {offsets = [1, 0, 0], sizes = [16, 16, 4], strides = [1, 1, 1]} : vector<18x18x4xbf16> to vector<16x16x4xbf16>
    %68 = vector.shape_cast %67 : vector<16x16x4xbf16> to vector<256x4xbf16>
    %c1_29 = arith.constant 1 : index
    %c0_30 = arith.constant 0 : index
    %c0_31 = arith.constant 0 : index
    %c0_32 = arith.constant 0 : index
    %69 = vector.load %arg6[%c1_29, %c0_30, %c0_31, %c0_32] : memref<3x3x4x4xbf16, #tpu.memory_space<vmem>>, vector<1x1x4x4xbf16>
    %70 = vector.shape_cast %69 : vector<1x1x4x4xbf16> to vector<4x4xbf16>
    %cst_33 = arith.constant dense<0.000000e+00> : vector<256x4xf32>
    %71 = tpu.matmul %68, %70, %cst_33 {dimension_numbers = #tpu.dot_dimension_numbers<[1], [0], [0], [1], [0, 0, 1, 1], [], []>} : vector<256x4xbf16>, vector<4x4xbf16>, vector<256x4xf32> -> vector<256x4xf32>
    %72 = arith.addf %66, %71 : vector<256x4xf32>
    %73 = vector.extract_strided_slice %47 {offsets = [1, 1, 0], sizes = [16, 16, 4], strides = [1, 1, 1]} : vector<18x18x4xbf16> to vector<16x16x4xbf16>
    %74 = vector.shape_cast %73 : vector<16x16x4xbf16> to vector<256x4xbf16>
    %c1_34 = arith.constant 1 : index
    %c1_35 = arith.constant 1 : index
    %c0_36 = arith.constant 0 : index
    %c0_37 = arith.constant 0 : index
    %75 = vector.load %arg6[%c1_34, %c1_35, %c0_36, %c0_37] : memref<3x3x4x4xbf16, #tpu.memory_space<vmem>>, vector<1x1x4x4xbf16>
    %76 = vector.shape_cast %75 : vector<1x1x4x4xbf16> to vector<4x4xbf16>
    %cst_38 = arith.constant dense<0.000000e+00> : vector<256x4xf32>
    %77 = tpu.matmul %74, %76, %cst_38 {dimension_numbers = #tpu.dot_dimension_numbers<[1], [0], [0], [1], [0, 0, 1, 1], [], []>} : vector<256x4xbf16>, vector<4x4xbf16>, vector<256x4xf32> -> vector<256x4xf32>
    %78 = arith.addf %72, %77 : vector<256x4xf32>
    %79 = vector.extract_strided_slice %47 {offsets = [1, 2, 0], sizes = [16, 16, 4], strides = [1, 1, 1]} : vector<18x18x4xbf16> to vector<16x16x4xbf16>
    %80 = vector.shape_cast %79 : vector<16x16x4xbf16> to vector<256x4xbf16>
    %c1_39 = arith.constant 1 : index
    %c2_40 = arith.constant 2 : index
    %c0_41 = arith.constant 0 : index
    %c0_42 = arith.constant 0 : index
    %81 = vector.load %arg6[%c1_39, %c2_40, %c0_41, %c0_42] : memref<3x3x4x4xbf16, #tpu.memory_space<vmem>>, vector<1x1x4x4xbf16>
    %82 = vector.shape_cast %81 : vector<1x1x4x4xbf16> to vector<4x4xbf16>
    %cst_43 = arith.constant dense<0.000000e+00> : vector<256x4xf32>
    %83 = tpu.matmul %80, %82, %cst_43 {dimension_numbers = #tpu.dot_dimension_numbers<[1], [0], [0], [1], [0, 0, 1, 1], [], []>} : vector<256x4xbf16>, vector<4x4xbf16>, vector<256x4xf32> -> vector<256x4xf32>
    %84 = arith.addf %78, %83 : vector<256x4xf32>
    %85 = vector.extract_strided_slice %47 {offsets = [2, 0, 0], sizes = [16, 16, 4], strides = [1, 1, 1]} : vector<18x18x4xbf16> to vector<16x16x4xbf16>
    %86 = vector.shape_cast %85 : vector<16x16x4xbf16> to vector<256x4xbf16>
    %c2_44 = arith.constant 2 : index
    %c0_45 = arith.constant 0 : index
    %c0_46 = arith.constant 0 : index
    %c0_47 = arith.constant 0 : index
    %87 = vector.load %arg6[%c2_44, %c0_45, %c0_46, %c0_47] : memref<3x3x4x4xbf16, #tpu.memory_space<vmem>>, vector<1x1x4x4xbf16>
    %88 = vector.shape_cast %87 : vector<1x1x4x4xbf16> to vector<4x4xbf16>
    %cst_48 = arith.constant dense<0.000000e+00> : vector<256x4xf32>
    %89 = tpu.matmul %86, %88, %cst_48 {dimension_numbers = #tpu.dot_dimension_numbers<[1], [0], [0], [1], [0, 0, 1, 1], [], []>} : vector<256x4xbf16>, vector<4x4xbf16>, vector<256x4xf32> -> vector<256x4xf32>
    %90 = arith.addf %84, %89 : vector<256x4xf32>
    %91 = vector.extract_strided_slice %47 {offsets = [2, 1, 0], sizes = [16, 16, 4], strides = [1, 1, 1]} : vector<18x18x4xbf16> to vector<16x16x4xbf16>
    %92 = vector.shape_cast %91 : vector<16x16x4xbf16> to vector<256x4xbf16>
    %c2_49 = arith.constant 2 : index
    %c1_50 = arith.constant 1 : index
    %c0_51 = arith.constant 0 : index
    %c0_52 = arith.constant 0 : index
    %93 = vector.load %arg6[%c2_49, %c1_50, %c0_51, %c0_52] : memref<3x3x4x4xbf16, #tpu.memory_space<vmem>>, vector<1x1x4x4xbf16>
    %94 = vector.shape_cast %93 : vector<1x1x4x4xbf16> to vector<4x4xbf16>
    %cst_53 = arith.constant dense<0.000000e+00> : vector<256x4xf32>
    %95 = tpu.matmul %92, %94, %cst_53 {dimension_numbers = #tpu.dot_dimension_numbers<[1], [0], [0], [1], [0, 0, 1, 1], [], []>} : vector<256x4xbf16>, vector<4x4xbf16>, vector<256x4xf32> -> vector<256x4xf32>
    %96 = arith.addf %90, %95 : vector<256x4xf32>
    %97 = vector.extract_strided_slice %47 {offsets = [2, 2, 0], sizes = [16, 16, 4], strides = [1, 1, 1]} : vector<18x18x4xbf16> to vector<16x16x4xbf16>
    %98 = vector.shape_cast %97 : vector<16x16x4xbf16> to vector<256x4xbf16>
    %c2_54 = arith.constant 2 : index
    %c2_55 = arith.constant 2 : index
    %c0_56 = arith.constant 0 : index
    %c0_57 = arith.constant 0 : index
    %99 = vector.load %arg6[%c2_54, %c2_55, %c0_56, %c0_57] : memref<3x3x4x4xbf16, #tpu.memory_space<vmem>>, vector<1x1x4x4xbf16>
    %100 = vector.shape_cast %99 : vector<1x1x4x4xbf16> to vector<4x4xbf16>
    %cst_58 = arith.constant dense<0.000000e+00> : vector<256x4xf32>
    %101 = tpu.matmul %98, %100, %cst_58 {dimension_numbers = #tpu.dot_dimension_numbers<[1], [0], [0], [1], [0, 0, 1, 1], [], []>} : vector<256x4xbf16>, vector<4x4xbf16>, vector<256x4xf32> -> vector<256x4xf32>
    %102 = arith.addf %96, %101 : vector<256x4xf32>
    %c0_59 = arith.constant 0 : index
    %c0_60 = arith.constant 0 : index
    %103 = vector.load %arg7[%c0_59, %c0_60] : memref<1x4xf32, #tpu.memory_space<vmem>>, vector<1x4xf32>
    %104 = vector.broadcast %103 : vector<1x4xf32> to vector<256x4xf32>
    %105 = arith.mulf %102, %104 : vector<256x4xf32>
    %c0_61 = arith.constant 0 : index
    %c0_62 = arith.constant 0 : index
    %106 = vector.load %arg8[%c0_61, %c0_62] : memref<1x4xf32, #tpu.memory_space<vmem>>, vector<1x4xf32>
    %107 = vector.broadcast %106 : vector<1x4xf32> to vector<256x4xf32>
    %108 = arith.addf %105, %107 : vector<256x4xf32>
    %cst_63 = arith.constant 0.000000e+00 : f32
    %109 = vector.broadcast %cst_63 : f32 to vector<256x4xf32>
    %110 = arith.maximumf %108, %109 : vector<256x4xf32>
    %111 = arith.truncf %110 : vector<256x4xf32> to vector<256x4xbf16>
    %c0_64 = arith.constant 0 : index
    %c0_65 = arith.constant 0 : index
    %112 = vector.load %arg9[%c0_64, %c0_65] : memref<4x16xbf16, #tpu.memory_space<vmem>>, vector<4x16xbf16>
    %cst_66 = arith.constant dense<0.000000e+00> : vector<256x16xf32>
    %113 = tpu.matmul %111, %112, %cst_66 {dimension_numbers = #tpu.dot_dimension_numbers<[1], [0], [0], [1], [0, 0, 1, 1], [], []>} : vector<256x4xbf16>, vector<4x16xbf16>, vector<256x16xf32> -> vector<256x16xf32>
    %c0_67 = arith.constant 0 : index
    %c0_68 = arith.constant 0 : index
    %114 = vector.load %arg10[%c0_67, %c0_68] : memref<1x16xf32, #tpu.memory_space<vmem>>, vector<1x16xf32>
    %115 = vector.broadcast %114 : vector<1x16xf32> to vector<256x16xf32>
    %116 = arith.mulf %113, %115 : vector<256x16xf32>
    %c0_69 = arith.constant 0 : index
    %c0_70 = arith.constant 0 : index
    %117 = vector.load %arg11[%c0_69, %c0_70] : memref<1x16xf32, #tpu.memory_space<vmem>>, vector<1x16xf32>
    %118 = vector.broadcast %117 : vector<1x16xf32> to vector<256x16xf32>
    %119 = arith.addf %116, %118 : vector<256x16xf32>
    %c1_i32_71 = arith.constant 1 : i32
    %120 = arith.addi %0, %c1_i32_71 : i32
    %c0_72 = arith.constant 0 : index
    %121 = arith.index_cast %120 : i32 to index
    %c1_73 = arith.constant 1 : index
    %c0_74 = arith.constant 0 : index
    %122 = vector.load %arg2[%c0_72, %121, %c1_73, %c0_74] : memref<1x18x18x4xbf16, #tpu.memory_space<vmem>>, vector<1x16x16x4xbf16>
    %123 = vector.shape_cast %122 : vector<1x16x16x4xbf16> to vector<16x16x4xbf16>
    %124 = vector.shape_cast %123 : vector<16x16x4xbf16> to vector<256x4xbf16>
    %c0_75 = arith.constant 0 : index
    %c0_76 = arith.constant 0 : index
    %125 = vector.load %arg12[%c0_75, %c0_76] : memref<4x16xbf16, #tpu.memory_space<vmem>>, vector<4x16xbf16>
    %cst_77 = arith.constant dense<0.000000e+00> : vector<256x16xf32>
    %126 = tpu.matmul %124, %125, %cst_77 {dimension_numbers = #tpu.dot_dimension_numbers<[1], [0], [0], [1], [0, 0, 1, 1], [], []>} : vector<256x4xbf16>, vector<4x16xbf16>, vector<256x16xf32> -> vector<256x16xf32>
    %c0_78 = arith.constant 0 : index
    %c0_79 = arith.constant 0 : index
    %127 = vector.load %arg13[%c0_78, %c0_79] : memref<1x16xf32, #tpu.memory_space<vmem>>, vector<1x16xf32>
    %128 = vector.broadcast %127 : vector<1x16xf32> to vector<256x16xf32>
    %129 = arith.mulf %126, %128 : vector<256x16xf32>
    %130 = arith.addf %119, %129 : vector<256x16xf32>
    %c0_80 = arith.constant 0 : index
    %c0_81 = arith.constant 0 : index
    %131 = vector.load %arg14[%c0_80, %c0_81] : memref<1x16xf32, #tpu.memory_space<vmem>>, vector<1x16xf32>
    %132 = vector.broadcast %131 : vector<1x16xf32> to vector<256x16xf32>
    %133 = arith.addf %130, %132 : vector<256x16xf32>
    %cst_82 = arith.constant 0.000000e+00 : f32
    %134 = vector.broadcast %cst_82 : f32 to vector<256x16xf32>
    %135 = arith.maximumf %133, %134 : vector<256x16xf32>
    %136 = vector.shape_cast %135 : vector<256x16xf32> to vector<16x16x16xf32>
    %137 = arith.truncf %136 : vector<16x16x16xf32> to vector<16x16x16xbf16>
    %c0_83 = arith.constant 0 : index
    %c0_84 = arith.constant 0 : index
    %c0_85 = arith.constant 0 : index
    %c0_86 = arith.constant 0 : index
    %138 = vector.load %arg15[%c0_83, %c0_84, %c0_85, %c0_86] : memref<1x16x16x16xbf16, #tpu.memory_space<vmem>>, vector<1x16x16x16xbf16>
    %139 = vector.shape_cast %138 : vector<1x16x16x16xbf16> to vector<16x16x16xbf16>
    %140 = vector.shape_cast %137 : vector<16x16x16xbf16> to vector<1x16x16x16xbf16>
    tpu.vector_store %arg15[%c0_83, %c0_84, %c0_85, %c0_86], %140 {strides = array<i32>} : memref<1x16x16x16xbf16, #tpu.memory_space<vmem>>, vector<1x16x16x16xbf16>,
    return
  }
  func.func @transform_0(%arg0: i32, %arg1: i32) -> (i32, i32, i32, i32) {
    %c0_i32 = arith.constant 0 : i32
    %c0_i32_0 = arith.constant 0 : i32
    %c0_i32_1 = arith.constant 0 : i32
    %c0_i32_2 = arith.constant 0 : i32
    return %arg0, %c0_i32, %c0_i32_0, %c0_i32_1 : i32, i32, i32, i32
  }
  func.func @transform_1(%arg0: i32, %arg1: i32) -> (i32, i32) {
    %c0_i32 = arith.constant 0 : i32
    %c0_i32_0 = arith.constant 0 : i32
    %c0_i32_1 = arith.constant 0 : i32
    return %c0_i32, %c0_i32_0 : i32, i32
  }
  func.func @transform_2(%arg0: i32, %arg1: i32) -> (i32, i32) {
    %c0_i32 = arith.constant 0 : i32
    %c0_i32_0 = arith.constant 0 : i32
    %c0_i32_1 = arith.constant 0 : i32
    return %c0_i32, %c0_i32_0 : i32, i32
  }
  func.func @transform_3(%arg0: i32, %arg1: i32) -> (i32, i32) {
    %c0_i32 = arith.constant 0 : i32
    %c0_i32_0 = arith.constant 0 : i32
    %c0_i32_1 = arith.constant 0 : i32
    return %c0_i32, %c0_i32_0 : i32, i32
  }
  func.func @transform_4(%arg0: i32, %arg1: i32) -> (i32, i32, i32, i32) {
    %c0_i32 = arith.constant 0 : i32
    %c0_i32_0 = arith.constant 0 : i32
    %c0_i32_1 = arith.constant 0 : i32
    %c0_i32_2 = arith.constant 0 : i32
    %c0_i32_3 = arith.constant 0 : i32
    return %c0_i32, %c0_i32_0, %c0_i32_1, %c0_i32_2 : i32, i32, i32, i32
  }
  func.func @transform_5(%arg0: i32, %arg1: i32) -> (i32, i32) {
    %c0_i32 = arith.constant 0 : i32
    %c0_i32_0 = arith.constant 0 : i32
    %c0_i32_1 = arith.constant 0 : i32
    return %c0_i32, %c0_i32_0 : i32, i32
  }
  func.func @transform_6(%arg0: i32, %arg1: i32) -> (i32, i32) {
    %c0_i32 = arith.constant 0 : i32
    %c0_i32_0 = arith.constant 0 : i32
    %c0_i32_1 = arith.constant 0 : i32
    return %c0_i32, %c0_i32_0 : i32, i32
  }
  func.func @transform_7(%arg0: i32, %arg1: i32) -> (i32, i32) {
    %c0_i32 = arith.constant 0 : i32
    %c0_i32_0 = arith.constant 0 : i32
    %c0_i32_1 = arith.constant 0 : i32
    return %c0_i32, %c0_i32_0 : i32, i32
  }
  func.func @transform_8(%arg0: i32, %arg1: i32) -> (i32, i32) {
    %c0_i32 = arith.constant 0 : i32
    %c0_i32_0 = arith.constant 0 : i32
    %c0_i32_1 = arith.constant 0 : i32
    return %c0_i32, %c0_i32_0 : i32, i32
  }
  func.func @transform_9(%arg0: i32, %arg1: i32) -> (i32, i32) {
    %c0_i32 = arith.constant 0 : i32
    %c0_i32_0 = arith.constant 0 : i32
    %c0_i32_1 = arith.constant 0 : i32
    return %c0_i32, %c0_i32_0 : i32, i32
  }
  func.func @transform_10(%arg0: i32, %arg1: i32) -> (i32, i32) {
    %c0_i32 = arith.constant 0 : i32
    %c0_i32_0 = arith.constant 0 : i32
    %c0_i32_1 = arith.constant 0 : i32
    return %c0_i32, %c0_i32_0 : i32, i32
  }
  func.func @transform_11(%arg0: i32, %arg1: i32) -> (i32, i32) {
    %c0_i32 = arith.constant 0 : i32
    %c0_i32_0 = arith.constant 0 : i32
    %c0_i32_1 = arith.constant 0 : i32
    return %c0_i32, %c0_i32_0 : i32, i32
  }
  func.func @transform_12(%arg0: i32, %arg1: i32) -> (i32, i32) {
    %c0_i32 = arith.constant 0 : i32
    %c0_i32_0 = arith.constant 0 : i32
    %c0_i32_1 = arith.constant 0 : i32
    return %c0_i32, %c0_i32_0 : i32, i32
  }
  func.func @transform_13(%arg0: i32, %arg1: i32) -> (i32, i32, i32, i32) {
    %c0_i32 = arith.constant 0 : i32
    %c0_i32_0 = arith.constant 0 : i32
    %c0_i32_1 = arith.constant 0 : i32
    return %arg0, %arg1, %c0_i32, %c0_i32_0 : i32, i32, i32, i32
  }
}

</mosaic_0001>

<llo_original>
// kernel: bottleneck_forward.1
$region0: #{bottleneck_forward.1}
  #allocation0 [shape = 'u32[]', space=smem, size = 0x4, offset = 0x4, fixed_abs, tag = 'smem constant byte address 0x4 - core index']
  #allocation1 [shape = 'u32[144,128]{1,0:T(1,128)}', space=vmem, size = 0x12000, scoped, tag = 'internal scratch']
  %s0 = inlined_call_operand.vmem [shape: bf16[2,18,18,4], index: 0, kind: input, shape index: {}]
  %s1 = inlined_call_operand.vmem [shape: bf16[4,4], index: 1, kind: input, shape index: {}]
  %s2 = inlined_call_operand.vmem [shape: f32[1,4], index: 2, kind: input, shape index: {}]
  %s3 = inlined_call_operand.vmem [shape: f32[1,4], index: 3, kind: input, shape index: {}]
  %s4 = inlined_call_operand.vmem [shape: bf16[3,3,4,4], index: 4, kind: input, shape index: {}]
  %s5 = inlined_call_operand.vmem [shape: f32[1,4], index: 5, kind: input, shape index: {}]
  %s6 = inlined_call_operand.vmem [shape: f32[1,4], index: 6, kind: input, shape index: {}]
  %s7 = inlined_call_operand.vmem [shape: bf16[4,16], index: 7, kind: input, shape index: {}]
  %s8 = inlined_call_operand.vmem [shape: f32[1,16], index: 8, kind: input, shape index: {}]
  %s9 = inlined_call_operand.vmem [shape: f32[1,16], index: 9, kind: input, shape index: {}]
  %s10 = inlined_call_operand.vmem [shape: bf16[4,16], index: 10, kind: input, shape index: {}]
  %s11 = inlined_call_operand.vmem [shape: f32[1,16], index: 11, kind: input, shape index: {}]
  %s12 = inlined_call_operand.vmem [shape: f32[1,16], index: 12, kind: input, shape index: {}]
  %s13 = inlined_call_operand.vmem [shape: bf16[2,16,16,16], index: 13, kind: output, shape index: {}]
  %s14 = sld [smem:[#allocation0]]
  $region85: #{bottleneck_forward.1} parent=0
    _
  %s16 = ssub.s32 1, %s14
  %s17 = scalar_select 0, %s16, %s14
  loop: start=0, step=1, limit=4
  $region2: #{bottleneck_forward.1} parent=0 // loop_pre_header
    _
  $region3: #{bottleneck_forward.1} parent=0 // loop_header
    %s19 = sphi 0, %s23
    %p20 = scmp.ge.s32.totalorder %s19, 4
    %s26 = sphi 0, %s38
    %s27 = sphi 0, %s34
    %s28 = sphi 0, %s26
    %s29 = sphi 0, %s27
    %s30 = sphi 0, %s28
    %s31 = sphi 0, %s29
    %s41 = sphi 0, %s43
    %s44 = sphi 0, %s41
    %s45 = sphi 0, %s44
    %s61 = sphi 0, %s45
    %s65 = sphi 0, %s65
    %s67 = sphi 0, %s65
    %s68 = sphi 0, %s67
    %s82 = sphi 0, %s68
    %s86 = sphi 0, %s86
    %s88 = sphi 0, %s86
    %s89 = sphi 0, %s88
    %s103 = sphi 0, %s89
    %s107 = sphi 0, %s107
    %s109 = sphi 0, %s107
    %s110 = sphi 0, %s109
    %s124 = sphi 0, %s110
    %s128 = sphi 0, %s128
    %s130 = sphi 0, %s128
    %s131 = sphi 0, %s130
    %s145 = sphi 0, %s131
    %s149 = sphi 0, %s149
    %s151 = sphi 0, %s149
    %s152 = sphi 0, %s151
    %s166 = sphi 0, %s152
    %s170 = sphi 0, %s170
    %s172 = sphi 0, %s170
    %s173 = sphi 0, %s172
    %s187 = sphi 0, %s173
    %s191 = sphi 0, %s191
    %s193 = sphi 0, %s191
    %s194 = sphi 0, %s193
    %s208 = sphi 0, %s194
    %s212 = sphi 0, %s212
    %s214 = sphi 0, %s212
    %s215 = sphi 0, %s214
    %s229 = sphi 0, %s215
    %s233 = sphi 0, %s233
    %s235 = sphi 0, %s233
    %s236 = sphi 0, %s235
    %s250 = sphi 0, %s236
    %s254 = sphi 0, %s254
    %s256 = sphi 0, %s254
    %s257 = sphi 0, %s256
    %s271 = sphi 0, %s257
    %s275 = sphi 0, %s275
    %s277 = sphi 0, %s275
    %s278 = sphi 0, %s277
    %s292 = sphi 0, %s278
    %s296 = sphi 0, %s296
    %s298 = sphi 0, %s296
    %s299 = sphi 0, %s298
    %s313 = sphi 0, %s299
    %s321 = sphi 0, %s323
    %s324 = sphi 0, %s321
    %s325 = sphi 0, %s324
    %s341 = sphi 0, %s325
  $region4: #{bottleneck_forward.1} parent=0 // loop_header_branch
    %22 = sbr.rel (%p20) target = $region8
  $region5: #{bottleneck_forward.1} parent=0 // loop_body
    %s24 = ssub.s32 %s19, 1
    %s25 = ssub.s32 %s19, 2
    %s32 = sadd.s32 1, %s27
    %p33 = scmp.ge.s32.totalorder %s32, 1
    %s34 = scalar_select %p33, 0, %s32
    %s35 = sadd.s32 1, %s26
    %s36 = scalar_select %p33, %s35, %s26
    %p37 = scmp.ge.s32.totalorder %s36, 2
    %s38 = scalar_select %p37, 0, %s36
    %s39 = ssub.s32 %s26, %s38
    %p40 = scmp.eq.s32.totalorder %s39, 0
    %s42 = sadd.s32 %s41, 1
    %s43 = scalar_select %p40, %s41, %s42
    %p46 = pneg %p40
    %p47 = scmp.eq.s32.totalorder %s19, 1
    %p48 = por %p46, %p47
    %p49 = scmp.ne.s32.totalorder %s41, %s44
    %p50 = scmp.eq.s32.totalorder %s19, 0
    %p51 = por %p49, %p50
    %p52 = scmp.ne.s32.totalorder %s41, %s44
    %p53 = scmp.eq.s32.totalorder %s24, 1
    %p54 = por %p52, %p53
    %p55 = scmp.ne.s32.totalorder %s44, %s45
    %p56 = scmp.eq.s32.totalorder %s24, 0
    %p57 = por %p55, %p56
    %p58 = scmp.ne.s32.totalorder %s44, %s45
    %p59 = scmp.eq.s32.totalorder %s25, 1
    %p60 = por %p58, %p59
    %p62 = scmp.ne.s32.totalorder %s45, %s61
    %p63 = scmp.eq.s32.totalorder %s25, 0
    %p64 = por %p62, %p63
    %s66 = sadd.s32 %s65, 1
    %p69 = scmp.eq.s32.totalorder %s19, 1
    %p70 = scmp.ne.s32.totalorder %s65, %s67
    %p71 = scmp.eq.s32.totalorder %s19, 0
    %p72 = por %p70, %p71
    %p73 = scmp.ne.s32.totalorder %s65, %s67
    %p74 = scmp.eq.s32.totalorder %s24, 1
    %p75 = por %p73, %p74
    %p76 = scmp.ne.s32.totalorder %s67, %s68
    %p77 = scmp.eq.s32.totalorder %s24, 0
    %p78 = por %p76, %p77
    %p79 = scmp.ne.s32.totalorder %s67, %s68
    %p80 = scmp.eq.s32.totalorder %s25, 1
    %p81 = por %p79, %p80
    %p83 = scmp.ne.s32.totalorder %s68, %s82
    %p84 = scmp.eq.s32.totalorder %s25, 0
    %p85 = por %p83, %p84
    %s87 = sadd.s32 %s86, 1
    %p90 = scmp.eq.s32.totalorder %s19, 1
    %p91 = scmp.ne.s32.totalorder %s86, %s88
    %p92 = scmp.eq.s32.totalorder %s19, 0
    %p93 = por %p91, %p92
    %p94 = scmp.ne.s32.totalorder %s86, %s88
    %p95 = scmp.eq.s32.totalorder %s24, 1
    %p96 = por %p94, %p95
    %p97 = scmp.ne.s32.totalorder %s88, %s89
    %p98 = scmp.eq.s32.totalorder %s24, 0
    %p99 = por %p97, %p98
    %p100 = scmp.ne.s32.totalorder %s88, %s89
    %p101 = scmp.eq.s32.totalorder %s25, 1
    %p102 = por %p100, %p101
    %p104 = scmp.ne.s32.totalorder %s89, %s103
    %p105 = scmp.eq.s32.totalorder %s25, 0
    %p106 = por %p104, %p105
    %s108 = sadd.s32 %s107, 1
    %p111 = scmp.eq.s32.totalorder %s19, 1
    %p112 = scmp.ne.s32.totalorder %s107, %s109
    %p113 = scmp.eq.s32.totalorder %s19, 0
    %p114 = por %p112, %p113
    %p115 = scmp.ne.s32.totalorder %s107, %s109
    %p116 = scmp.eq.s32.totalorder %s24, 1
    %p117 = por %p115, %p116
    %p118 = scmp.ne.s32.totalorder %s109, %s110
    %p119 = scmp.eq.s32.totalorder %s24, 0
    %p120 = por %p118, %p119
    %p121 = scmp.ne.s32.totalorder %s109, %s110
    %p122 = scmp.eq.s32.totalorder %s25, 1
    %p123 = por %p121, %p122
    %p125 = scmp.ne.s32.totalorder %s110, %s124
    %p126 = scmp.eq.s32.totalorder %s25, 0
    %p127 = por %p125, %p126
    %s129 = sadd.s32 %s128, 1
    %p132 = scmp.eq.s32.totalorder %s19, 1
    %p133 = scmp.ne.s32.totalorder %s128, %s130
    %p134 = scmp.eq.s32.totalorder %s19, 0
    %p135 = por %p133, %p134
    %p136 = scmp.ne.s32.totalorder %s128, %s130
    %p137 = scmp.eq.s32.totalorder %s24, 1
    %p138 = por %p136, %p137
    %p139 = scmp.ne.s32.totalorder %s130, %s131
    %p140 = scmp.eq.s32.totalorder %s24, 0
    %p141 = por %p139, %p140
    %p142 = scmp.ne.s32.totalorder %s130, %s131
    %p143 = scmp.eq.s32.totalorder %s25, 1
    %p144 = por %p142, %p143
    %p146 = scmp.ne.s32.totalorder %s131, %s145
    %p147 = scmp.eq.s32.totalorder %s25, 0
    %p148 = por %p146, %p147
    %s150 = sadd.s32 %s149, 1
    %p153 = scmp.eq.s32.totalorder %s19, 1
    %p154 = scmp.ne.s32.totalorder %s149, %s151
    %p155 = scmp.eq.s32.totalorder %s19, 0
    %p156 = por %p154, %p155
    %p157 = scmp.ne.s32.totalorder %s149, %s151
    %p158 = scmp.eq.s32.totalorder %s24, 1
    %p159 = por %p157, %p158
    %p160 = scmp.ne.s32.totalorder %s151, %s152
    %p161 = scmp.eq.s32.totalorder %s24, 0
    %p162 = por %p160, %p161
    %p163 = scmp.ne.s32.totalorder %s151, %s152
    %p164 = scmp.eq.s32.totalorder %s25, 1
    %p165 = por %p163, %p164
    %p167 = scmp.ne.s32.totalorder %s152, %s166
    %p168 = scmp.eq.s32.totalorder %s25, 0
    %p169 = por %p167, %p168
    %s171 = sadd.s32 %s170, 1
    %p174 = scmp.eq.s32.totalorder %s19, 1
    %p175 = scmp.ne.s32.totalorder %s170, %s172
    %p176 = scmp.eq.s32.totalorder %s19, 0
    %p177 = por %p175, %p176
    %p178 = scmp.ne.s32.totalorder %s170, %s172
    %p179 = scmp.eq.s32.totalorder %s24, 1
    %p180 = por %p178, %p179
    %p181 = scmp.ne.s32.totalorder %s172, %s173
    %p182 = scmp.eq.s32.totalorder %s24, 0
    %p183 = por %p181, %p182
    %p184 = scmp.ne.s32.totalorder %s172, %s173
    %p185 = scmp.eq.s32.totalorder %s25, 1
    %p186 = por %p184, %p185
    %p188 = scmp.ne.s32.totalorder %s173, %s187
    %p189 = scmp.eq.s32.totalorder %s25, 0
    %p190 = por %p188, %p189
    %s192 = sadd.s32 %s191, 1
    %p195 = scmp.eq.s32.totalorder %s19, 1
    %p196 = scmp.ne.s32.totalorder %s191, %s193
    %p197 = scmp.eq.s32.totalorder %s19, 0
    %p198 = por %p196, %p197
    %p199 = scmp.ne.s32.totalorder %s191, %s193
    %p200 = scmp.eq.s32.totalorder %s24, 1
    %p201 = por %p199, %p200
    %p202 = scmp.ne.s32.totalorder %s193, %s194
    %p203 = scmp.eq.s32.totalorder %s24, 0
    %p204 = por %p202, %p203
    %p205 = scmp.ne.s32.totalorder %s193, %s194
    %p206 = scmp.eq.s32.totalorder %s25, 1
    %p207 = por %p205, %p206
    %p209 = scmp.ne.s32.totalorder %s194, %s208
    %p210 = scmp.eq.s32.totalorder %s25, 0
    %p211 = por %p209, %p210
    %s213 = sadd.s32 %s212, 1
    %p216 = scmp.eq.s32.totalorder %s19, 1
    %p217 = scmp.ne.s32.totalorder %s212, %s214
    %p218 = scmp.eq.s32.totalorder %s19, 0
    %p219 = por %p217, %p218
    %p220 = scmp.ne.s32.totalorder %s212, %s214
    %p221 = scmp.eq.s32.totalorder %s24, 1
    %p222 = por %p220, %p221
    %p223 = scmp.ne.s32.totalorder %s214, %s215
    %p224 = scmp.eq.s32.totalorder %s24, 0
    %p225 = por %p223, %p224
    %p226 = scmp.ne.s32.totalorder %s214, %s215
    %p227 = scmp.eq.s32.totalorder %s25, 1
    %p228 = por %p226, %p227
    %p230 = scmp.ne.s32.totalorder %s215, %s229
    %p231 = scmp.eq.s32.totalorder %s25, 0
    %p232 = por %p230, %p231
    %s234 = sadd.s32 %s233, 1
    %p237 = scmp.eq.s32.totalorder %s19, 1
    %p238 = scmp.ne.s32.totalorder %s233, %s235
    %p239 = scmp.eq.s32.totalorder %s19, 0
    %p240 = por %p238, %p239
    %p241 = scmp.ne.s32.totalorder %s233, %s235
    %p242 = scmp.eq.s32.totalorder %s24, 1
    %p243 = por %p241, %p242
    %p244 = scmp.ne.s32.totalorder %s235, %s236
    %p245 = scmp.eq.s32.totalorder %s24, 0
    %p246 = por %p244, %p245
    %p247 = scmp.ne.s32.totalorder %s235, %s236
    %p248 = scmp.eq.s32.totalorder %s25, 1
    %p249 = por %p247, %p248
    %p251 = scmp.ne.s32.totalorder %s236, %s250
    %p252 = scmp.eq.s32.totalorder %s25, 0
    %p253 = por %p251, %p252
    %s255 = sadd.s32 %s254, 1
    %p258 = scmp.eq.s32.totalorder %s19, 1
    %p259 = scmp.ne.s32.totalorder %s254, %s256
    %p260 = scmp.eq.s32.totalorder %s19, 0
    %p261 = por %p259, %p260
    %p262 = scmp.ne.s32.totalorder %s254, %s256
    %p263 = scmp.eq.s32.totalorder %s24, 1
    %p264 = por %p262, %p263
    %p265 = scmp.ne.s32.totalorder %s256, %s257
    %p266 = scmp.eq.s32.totalorder %s24, 0
    %p267 = por %p265, %p266
    %p268 = scmp.ne.s32.totalorder %s256, %s257
    %p269 = scmp.eq.s32.totalorder %s25, 1
    %p270 = por %p268, %p269
    %p272 = scmp.ne.s32.totalorder %s257, %s271
    %p273 = scmp.eq.s32.totalorder %s25, 0
    %p274 = por %p272, %p273
    %s276 = sadd.s32 %s275, 1
    %p279 = scmp.eq.s32.totalorder %s19, 1
    %p280 = scmp.ne.s32.totalorder %s275, %s277
    %p281 = scmp.eq.s32.totalorder %s19, 0
    %p282 = por %p280, %p281
    %p283 = scmp.ne.s32.totalorder %s275, %s277
    %p284 = scmp.eq.s32.totalorder %s24, 1
    %p285 = por %p283, %p284
    %p286 = scmp.ne.s32.totalorder %s277, %s278
    %p287 = scmp.eq.s32.totalorder %s24, 0
    %p288 = por %p286, %p287
    %p289 = scmp.ne.s32.totalorder %s277, %s278
    %p290 = scmp.eq.s32.totalorder %s25, 1
    %p291 = por %p289, %p290
    %p293 = scmp.ne.s32.totalorder %s278, %s292
    %p294 = scmp.eq.s32.totalorder %s25, 0
    %p295 = por %p293, %p294
    %s297 = sadd.s32 %s296, 1
    %p300 = scmp.eq.s32.totalorder %s19, 1
    %p301 = scmp.ne.s32.totalorder %s296, %s298
    %p302 = scmp.eq.s32.totalorder %s19, 0
    %p303 = por %p301, %p302
    %p304 = scmp.ne.s32.totalorder %s296, %s298
    %p305 = scmp.eq.s32.totalorder %s24, 1
    %p306 = por %p304, %p305
    %p307 = scmp.ne.s32.totalorder %s298, %s299
    %p308 = scmp.eq.s32.totalorder %s24, 0
    %p309 = por %p307, %p308
    %p310 = scmp.ne.s32.totalorder %s298, %s299
    %p311 = scmp.eq.s32.totalorder %s25, 1
    %p312 = por %p310, %p311
    %p314 = scmp.ne.s32.totalorder %s299, %s313
    %p315 = scmp.eq.s32.totalorder %s25, 0
    %p316 = por %p314, %p315
    %s317 = ssub.s32 %s26, %s38
    %s318 = ssub.s32 %s27, %s34
    %s319 = sor.u32 %s317, %s318
    %p320 = scmp.eq.s32.totalorder %s319, 0
    %s322 = sadd.s32 %s321, 1
    %s323 = scalar_select %p320, %s321, %s322
    %p326 = pneg %p320
    %p327 = scmp.eq.s32.totalorder %s19, 1
    %p328 = por %p326, %p327
    %p329 = scmp.ne.s32.totalorder %s321, %s324
    %p330 = scmp.eq.s32.totalorder %s19, 0
    %p331 = por %p329, %p330
    %p332 = scmp.ne.s32.totalorder %s321, %s324
    %p333 = scmp.eq.s32.totalorder %s24, 1
    %p334 = por %p332, %p333
    %p335 = scmp.ne.s32.totalorder %s324, %s325
    %p336 = scmp.eq.s32.totalorder %s24, 0
    %p337 = por %p335, %p336
    %p338 = scmp.ne.s32.totalorder %s324, %s325
    %p339 = scmp.eq.s32.totalorder %s25, 1
    %p340 = por %p338, %p339
    %p342 = scmp.ne.s32.totalorder %s325, %s341
    %p343 = scmp.eq.s32.totalorder %s25, 0
    %p344 = por %p342, %p343
    %p345 = scmp.le.s32.totalorder 1, %s19
    %p346 = scmp.lt.s32.totalorder %s19, 3
    %p347 = pnand %p345, %p346
    %p348 = pneg %p347
    // Predicated region
    $region9: #{bottleneck_forward.1} parent=5 // pred_check
      _
    $region10: #{bottleneck_forward.1} parent=5 // pred_check_branch
      %350 = sbr.rel (%p347) target = $region12
    $region11: #{bottleneck_forward.1} parent=5 // pred_region
      %s351 = ssub.s32 %s19, 1
      // Predicated region
      $region13: #{bottleneck_forward.1} parent=11 // pred_check
        %p352 = pneg %p78
      $region14: #{bottleneck_forward.1} parent=11 // pred_check_branch
        %354 = sbr.rel (%p352) target = $region16
      $region15: #{bottleneck_forward.1} parent=11 // pred_region
        _
      $region16: #{bottleneck_forward.1} parent=11 // pred_fallthru
        _
      // Predicated region
      $region17: #{bottleneck_forward.1} parent=11 // pred_check
        %p355 = pneg %p99
      $region18: #{bottleneck_forward.1} parent=11 // pred_check_branch
        %357 = sbr.rel (%p355) target = $region20
      $region19: #{bottleneck_forward.1} parent=11 // pred_region
        _
      $region20: #{bottleneck_forward.1} parent=11 // pred_fallthru
        _
      // Predicated region
      $region21: #{bottleneck_forward.1} parent=11 // pred_check
        %p358 = pneg %p120
      $region22: #{bottleneck_forward.1} parent=11 // pred_check_branch
        %360 = sbr.rel (%p358) target = $region24
      $region23: #{bottleneck_forward.1} parent=11 // pred_region
        _
      $region24: #{bottleneck_forward.1} parent=11 // pred_fallthru
        _
      // Predicated region
      $region25: #{bottleneck_forward.1} parent=11 // pred_check
        %p361 = pneg %p141
      $region26: #{bottleneck_forward.1} parent=11 // pred_check_branch
        %363 = sbr.rel (%p361) target = $region28
      $region27: #{bottleneck_forward.1} parent=11 // pred_region
        _
      $region28: #{bottleneck_forward.1} parent=11 // pred_fallthru
        _
      // Predicated region
      $region29: #{bottleneck_forward.1} parent=11 // pred_check
        %p364 = pneg %p162
      $region30: #{bottleneck_forward.1} parent=11 // pred_check_branch
        %366 = sbr.rel (%p364) target = $region32
      $region31: #{bottleneck_forward.1} parent=11 // pred_region
        _
      $region32: #{bottleneck_forward.1} parent=11 // pred_fallthru
        _
      // Predicated region
      $region33: #{bottleneck_forward.1} parent=11 // pred_check
        %p367 = pneg %p183
      $region34: #{bottleneck_forward.1} parent=11 // pred_check_branch
        %369 = sbr.rel (%p367) target = $region36
      $region35: #{bottleneck_forward.1} parent=11 // pred_region
        _
      $region36: #{bottleneck_forward.1} parent=11 // pred_fallthru
        _
      // Predicated region
      $region37: #{bottleneck_forward.1} parent=11 // pred_check
        %p370 = pneg %p204
      $region38: #{bottleneck_forward.1} parent=11 // pred_check_branch
        %372 = sbr.rel (%p370) target = $region40
      $region39: #{bottleneck_forward.1} parent=11 // pred_region
        _
      $region40: #{bottleneck_forward.1} parent=11 // pred_fallthru
        _
      // Predicated region
      $region41: #{bottleneck_forward.1} parent=11 // pred_check
        %p373 = pneg %p225
      $region42: #{bottleneck_forward.1} parent=11 // pred_check_branch
        %375 = sbr.rel (%p373) target = $region44
      $region43: #{bottleneck_forward.1} parent=11 // pred_region
        _
      $region44: #{bottleneck_forward.1} parent=11 // pred_fallthru
        _
      // Predicated region
      $region45: #{bottleneck_forward.1} parent=11 // pred_check
        %p376 = pneg %p246
      $region46: #{bottleneck_forward.1} parent=11 // pred_check_branch
        %378 = sbr.rel (%p376) target = $region48
      $region47: #{bottleneck_forward.1} parent=11 // pred_region
        _
      $region48: #{bottleneck_forward.1} parent=11 // pred_fallthru
        _
      // Predicated region
      $region49: #{bottleneck_forward.1} parent=11 // pred_check
        %p379 = pneg %p267
      $region50: #{bottleneck_forward.1} parent=11 // pred_check_branch
        %381 = sbr.rel (%p379) target = $region52
      $region51: #{bottleneck_forward.1} parent=11 // pred_region
        _
      $region52: #{bottleneck_forward.1} parent=11 // pred_fallthru
        _
      // Predicated region
      $region53: #{bottleneck_forward.1} parent=11 // pred_check
        %p382 = pneg %p288
      $region54: #{bottleneck_forward.1} parent=11 // pred_check_branch
        %384 = sbr.rel (%p382) target = $region56
      $region55: #{bottleneck_forward.1} parent=11 // pred_region
        _
      $region56: #{bottleneck_forward.1} parent=11 // pred_fallthru
        _
      // Predicated region
      $region57: #{bottleneck_forward.1} parent=11 // pred_check
        %p385 = pneg %p309
      $region58: #{bottleneck_forward.1} parent=11 // pred_check_branch
        %387 = sbr.rel (%p385) target = $region60
      $region59: #{bottleneck_forward.1} parent=11 // pred_region
        _
      $region60: #{bottleneck_forward.1} parent=11 // pred_fallthru
        _
    $region12: #{bottleneck_forward.1} parent=5 // pred_fallthru
      _
    %p388 = scmp.lt.s32.totalorder %s19, 2
    // Predicated region
    $region61: #{bottleneck_forward.1} parent=5 // pred_check
      %p389 = pneg %p388
    $region62: #{bottleneck_forward.1} parent=5 // pred_check_branch
      %391 = sbr.rel (%p389) target = $region64
    $region63: #{bottleneck_forward.1} parent=5 // pred_region
      // Predicated region
      $region65: #{bottleneck_forward.1} parent=63 // pred_check
        %p392 = pneg %p51
      $region66: #{bottleneck_forward.1} parent=63 // pred_check_branch
        %394 = sbr.rel (%p392) target = $region68
      $region67: #{bottleneck_forward.1} parent=63 // pred_region
        %p395 = scmp.lt.s32.totalorder %s26, 1
        %s396 = scalar_select %p395, %s26, 1
        %s397 = smul.addr %s396, 54
        %s398 = smul.addr %s397, 4
        %s399 = scalar_lea.vmem %s0, %s398
      $region68: #{bottleneck_forward.1} parent=63 // pred_fallthru
        _
    $region64: #{bottleneck_forward.1} parent=5 // pred_fallthru
      _
    %p400 = scmp.le.s32.totalorder 1, %s19
    %p401 = scmp.lt.s32.totalorder %s19, 3
    %p402 = pnand %p400, %p401
    %p403 = pneg %p402
    // Predicated region
    $region69: #{bottleneck_forward.1} parent=5 // pred_check
      _
    $region70: #{bottleneck_forward.1} parent=5 // pred_check_branch
      %405 = sbr.rel (%p402) target = $region72
    $region71: #{bottleneck_forward.1} parent=5 // pred_region
      %s406 = ssub.s32 %s19, 1
      %p407 = scmp.lt.s32.totalorder %s28, 1
      %s408 = scalar_select %p407, %s28, 1
      %s409 = smul.addr %s408, 54
      %s410 = smul.addr %s409, 4
      %s411 = scalar_lea.vmem %s0, %s410
      %p412 = pneg %p57
      %p413 = pneg %p54
      %p414 = pneg %p78
      %p415 = pneg %p75
      %p416 = pneg %p99
      %p417 = pneg %p96
      %p418 = pneg %p120
      %p419 = pneg %p117
      %p420 = pneg %p141
      %p421 = pneg %p138
      %p422 = pneg %p162
      %p423 = pneg %p159
      %p424 = pneg %p183
      %p425 = pneg %p180
      %p426 = pneg %p204
      %p427 = pneg %p201
      %p428 = pneg %p225
      %p429 = pneg %p222
      %p430 = pneg %p246
      %p431 = pneg %p243
      %p432 = pneg %p267
      %p433 = pneg %p264
      %p434 = pneg %p288
      %p435 = pneg %p285
      %p436 = pneg %p309
      %p437 = pneg %p306
      %p438 = pneg %p337
      %p439 = pneg %p334
      %s440 = smul.u32 16, %s29
      %p441 = scmp.lt.s32.totalorder %s28, 1
      %s442 = scalar_select %p441, %s28, 1
      %p443 = scmp.lt.s32.totalorder %s440, 15
      %s444 = scalar_select %p443, %s440, 15
      %s445 = smul.addr %s444, 2
      %s446 = smul.addr %s442, 32
      %s447 = sadd.s32 %s445, %s446
      %s448 = smul.addr %s447, 4
      %s449 = scalar_lea.vmem %s13, %s448
      %p450 = scmp.lt.s32.totalorder %s28, 1
      %s451 = scalar_select %p450, %s28, 1
      %s452 = smul.addr %s451, 54
      %s453 = smul.addr %s452, 4
      %s454 = scalar_lea.vmem %s0, %s453
      %s455 = smul.u32 16, %s29
      %p456 = scmp.lt.s32.totalorder %s28, 1
      %s457 = scalar_select %p456, %s28, 1
      %p458 = scmp.lt.s32.totalorder %s455, 15
      %s459 = scalar_select %p458, %s455, 15
      %s460 = smul.addr %s459, 2
      %s461 = smul.addr %s457, 32
      %s462 = sadd.s32 %s460, %s461
      %s463 = smul.addr %s462, 4
      %s464 = scalar_lea.vmem %s13, %s463
      %s465 = smul.u32 16, %s29
      %s467 = smul.u32 %s29, 16
      %v468 = vld [vmem:[%s2] sm:$0x1]
      %v469 = vld [vmem:[%s3] sm:$0x1]
      %v470 = vstv %s467
      %v471 = vadd.s32 %v470, 1
      %v472 = vadd.s32 %v470, 2
      %v473 = vadd.s32 %v470, 3
      %v474 = vadd.s32 %v470, 4
      %v475 = vadd.s32 %v470, 5
      %v476 = vadd.s32 %v470, 6
      %v477 = vadd.s32 %v470, 7
      %v478 = vadd.s32 %v470, 8
      %v479 = vadd.s32 %v470, 9
      %v480 = vadd.s32 %v470, 10
      %v481 = vadd.s32 %v470, 11
      %v482 = vadd.s32 %v470, 12
      %v483 = vadd.s32 %v470, 13
      %v484 = vadd.s32 %v470, 14
      %v485 = vadd.s32 %v470, 15
      %v486 = vadd.s32 %v470, 16
      %v487 = vadd.s32 %v470, 17
      %vm488 = vcmp.ge.s32.totalorder %v470, 1
      %vm489 = vcmp.ge.s32.totalorder %v471, 1
      %vm490 = vcmp.ge.s32.totalorder %v472, 1
      %vm491 = vcmp.ge.s32.totalorder %v473, 1
      %vm492 = vcmp.ge.s32.totalorder %v474, 1
      %vm493 = vcmp.ge.s32.totalorder %v475, 1
      %vm494 = vcmp.ge.s32.totalorder %v476, 1
      %vm495 = vcmp.ge.s32.totalorder %v477, 1
      %vm496 = vcmp.ge.s32.totalorder %v478, 1
      %vm497 = vcmp.ge.s32.totalorder %v479, 1
      %vm498 = vcmp.ge.s32.totalorder %v480, 1
      %vm499 = vcmp.ge.s32.totalorder %v481, 1
      %vm500 = vcmp.ge.s32.totalorder %v482, 1
      %vm501 = vcmp.ge.s32.totalorder %v483, 1
      %vm502 = vcmp.ge.s32.totalorder %v484, 1
      %vm503 = vcmp.ge.s32.totalorder %v485, 1
      %vm504 = vcmp.ge.s32.totalorder %v486, 1
      %vm505 = vcmp.ge.s32.totalorder %v487, 1
      %vm506 = vcmp.le.s32.totalorder %v470, 16
      %vm507 = vcmp.le.s32.totalorder %v471, 16
      %vm508 = vcmp.le.s32.totalorder %v472, 16
      %vm509 = vcmp.le.s32.totalorder %v473, 16
      %vm510 = vcmp.le.s32.totalorder %v474, 16
      %vm511 = vcmp.le.s32.totalorder %v475, 16
      %vm512 = vcmp.le.s32.totalorder %v476, 16
      %vm513 = vcmp.le.s32.totalorder %v477, 16
      %vm514 = vcmp.le.s32.totalorder %v478, 16
      %vm515 = vcmp.le.s32.totalorder %v479, 16
      %vm516 = vcmp.le.s32.totalorder %v480, 16
      %vm517 = vcmp.le.s32.totalorder %v481, 16
      %vm518 = vcmp.le.s32.totalorder %v482, 16
      %vm519 = vcmp.le.s32.totalorder %v483, 16
      %vm520 = vcmp.le.s32.totalorder %v484, 16
      %vm521 = vcmp.le.s32.totalorder %v485, 16
      %vm522 = vcmp.le.s32.totalorder %v486, 16
      %vm523 = vcmp.le.s32.totalorder %v487, 16
      %vm524 = vmand %vm488, %vm506
      %vm525 = vmand %vm489, %vm507
      %vm526 = vmand %vm490, %vm508
      %vm527 = vmand %vm491, %vm509
      %vm528 = vmand %vm492, %vm510
      %vm529 = vmand %vm493, %vm511
      %vm530 = vmand %vm494, %vm512
      %vm531 = vmand %vm495, %vm513
      %vm532 = vmand %vm496, %vm514
      %vm533 = vmand %vm497, %vm515
      %vm534 = vmand %vm498, %vm516
      %vm535 = vmand %vm499, %vm517
      %vm536 = vmand %vm500, %vm518
      %vm537 = vmand %vm501, %vm519
      %vm538 = vmand %vm502, %vm520
      %vm539 = vmand %vm503, %vm521
      %vm540 = vmand %vm504, %vm522
      %vm541 = vmand %vm505, %vm523
      %v542 = vsel %vm524, 1, 0
      %v543 = vsel %vm525, 1, 0
      %v544 = vsel %vm526, 1, 0
      %v545 = vsel %vm527, 1, 0
      %v546 = vsel %vm528, 1, 0
      %v547 = vsel %vm529, 1, 0
      %v548 = vsel %vm530, 1, 0
      %v549 = vsel %vm531, 1, 0
      %v550 = vsel %vm532, 1, 0
      %v551 = vsel %vm533, 1, 0
      %v552 = vsel %vm534, 1, 0
      %v553 = vsel %vm535, 1, 0
      %v554 = vsel %vm536, 1, 0
      %v555 = vsel %vm537, 1, 0
      %v556 = vsel %vm538, 1, 0
      %v557 = vsel %vm539, 1, 0
      %v558 = vsel %vm540, 1, 0
      %v559 = vsel %vm541, 1, 0
      %v560 = vcvt.s32.f32 %v542
      %v561 = vcvt.s32.f32 %v543
      %v562 = vcvt.s32.f32 %v544
      %v563 = vcvt.s32.f32 %v545
      %v564 = vcvt.s32.f32 %v546
      %v565 = vcvt.s32.f32 %v547
      %v566 = vcvt.s32.f32 %v548
      %v567 = vcvt.s32.f32 %v549
      %v568 = vcvt.s32.f32 %v550
      %v569 = vcvt.s32.f32 %v551
      %v570 = vcvt.s32.f32 %v552
      %v571 = vcvt.s32.f32 %v553
      %v572 = vcvt.s32.f32 %v554
      %v573 = vcvt.s32.f32 %v555
      %v574 = vcvt.s32.f32 %v556
      %v575 = vcvt.s32.f32 %v557
      %v576 = vcvt.s32.f32 %v558
      %v577 = vcvt.s32.f32 %v559
      %v578 = vlaneseq
      %v579 = vshrl.u32 %v578, 7
      %v580 = vadd.s32 %v579, 8
      %v581 = vadd.s32 %v579, 16
      %vm582 = vcmp.ge.s32.totalorder %v579, 1
      %vm583 = vcmp.ge.s32.totalorder %v580, 1
      %vm584 = vcmp.ge.s32.totalorder %v581, 1
      %vm585 = vcmp.le.s32.totalorder %v579, 16
      %vm586 = vcmp.le.s32.totalorder %v580, 16
      %vm587 = vcmp.le.s32.totalorder %v581, 16
      %vm588 = vmand %vm582, %vm585
      %vm589 = vmand %vm583, %vm586
      %vm590 = vmand %vm584, %vm587
      %v591 = vsel %vm588, 1, 0
      %v592 = vsel %vm589, 1, 0
      %v593 = vsel %vm590, 1, 0
      %v594 = vcvt.s32.f32 %v591
      %v595 = vcvt.s32.f32 %v592
      %v596 = vcvt.s32.f32 %v593
      %v597 = vmul.f32 %v560, %v594
      %v598 = vmul.f32 %v560, %v595
      %v599 = vmul.f32 %v560, %v596
      %v600 = vmul.f32 %v561, %v594
      %v601 = vmul.f32 %v561, %v595
      %v602 = vmul.f32 %v561, %v596
      %v603 = vmul.f32 %v562, %v594
      %v604 = vmul.f32 %v562, %v595
      %v605 = vmul.f32 %v562, %v596
      %v606 = vmul.f32 %v563, %v594
      %v607 = vmul.f32 %v563, %v595
      %v608 = vmul.f32 %v563, %v596
      %v609 = vmul.f32 %v564, %v594
      %v610 = vmul.f32 %v564, %v595
      %v611 = vmul.f32 %v564, %v596
      %v612 = vmul.f32 %v565, %v594
      %v613 = vmul.f32 %v565, %v595
      %v614 = vmul.f32 %v565, %v596
      %v615 = vmul.f32 %v566, %v594
      %v616 = vmul.f32 %v566, %v595
      %v617 = vmul.f32 %v566, %v596
      %v618 = vmul.f32 %v567, %v594
      %v619 = vmul.f32 %v567, %v595
      %v620 = vmul.f32 %v567, %v596
      %v621 = vmul.f32 %v568, %v594
      %v622 = vmul.f32 %v568, %v595
      %v623 = vmul.f32 %v568, %v596
      %v624 = vmul.f32 %v569, %v594
      %v625 = vmul.f32 %v569, %v595
      %v626 = vmul.f32 %v569, %v596
      %v627 = vmul.f32 %v570, %v594
      %v628 = vmul.f32 %v570, %v595
      %v629 = vmul.f32 %v570, %v596
      %v630 = vmul.f32 %v571, %v594
      %v631 = vmul.f32 %v571, %v595
      %v632 = vmul.f32 %v571, %v596
      %v633 = vmul.f32 %v572, %v594
      %v634 = vmul.f32 %v572, %v595
      %v635 = vmul.f32 %v572, %v596
      %v636 = vmul.f32 %v573, %v594
      %v637 = vmul.f32 %v573, %v595
      %v638 = vmul.f32 %v573, %v596
      %v639 = vmul.f32 %v574, %v594
      %v640 = vmul.f32 %v574, %v595
      %v641 = vmul.f32 %v574, %v596
      %v642 = vmul.f32 %v575, %v594
      %v643 = vmul.f32 %v575, %v595
      %v644 = vmul.f32 %v575, %v596
      %v645 = vmul.f32 %v576, %v594
      %v646 = vmul.f32 %v576, %v595
      %v647 = vmul.f32 %v576, %v596
      %v648 = vmul.f32 %v577, %v594
      %v649 = vmul.f32 %v577, %v595
      %v650 = vmul.f32 %v577, %v596
      %s651 = smul.u32 %s467, 3
      %s652 = smul.addr %s651, 4
      %s653 = scalar_lea.vmem %s454, %s652
      %v654 = vld [vmem:[%s653] sm:$0xf]
      %v655 = vld [vmem:[%s653 + $0x4] sm:$0xf]
      %v656 = vld [vmem:[%s653 + $0x8] sm:$0x1]
      %v657 = vld [vmem:[%s653 + $0xc] sm:$0xf]
      %v658 = vld [vmem:[%s653 + $0x10] sm:$0xf]
      %v659 = vld [vmem:[%s653 + $0x14] sm:$0x1]
      %v660 = vld [vmem:[%s653 + $0x18] sm:$0xf]
      %v661 = vld [vmem:[%s653 + $0x1c] sm:$0xf]
      %v662 = vld [vmem:[%s653 + $0x20] sm:$0x1]
      %v663 = vld [vmem:[%s653 + $0x24] sm:$0xf]
      %v664 = vld [vmem:[%s653 + $0x28] sm:$0xf]
      %v665 = vld [vmem:[%s653 + $0x2c] sm:$0x1]
      %v666 = vld [vmem:[%s653 + $0x30] sm:$0xf]
      %v667 = vld [vmem:[%s653 + $0x34] sm:$0xf]
      %v668 = vld [vmem:[%s653 + $0x38] sm:$0x1]
      %v669 = vld [vmem:[%s653 + $0x3c] sm:$0xf]
      %v670 = vld [vmem:[%s653 + $0x40] sm:$0xf]
      %v671 = vld [vmem:[%s653 + $0x44] sm:$0x1]
      %v672 = vld [vmem:[%s653 + $0x48] sm:$0xf]
      %v673 = vld [vmem:[%s653 + $0x4c] sm:$0xf]
      %v674 = vld [vmem:[%s653 + $0x50] sm:$0x1]
      %v675 = vld [vmem:[%s653 + $0x54] sm:$0xf]
      %v676 = vld [vmem:[%s653 + $0x58] sm:$0xf]
      %v677 = vld [vmem:[%s653 + $0x5c] sm:$0x1]
      %v678 = vld [vmem:[%s653 + $0x60] sm:$0xf]
      %v679 = vld [vmem:[%s653 + $0x64] sm:$0xf]
      %v680 = vld [vmem:[%s653 + $0x68] sm:$0x1]
      %v681 = vld [vmem:[%s653 + $0x6c] sm:$0xf]
      %v682 = vld [vmem:[%s653 + $0x70] sm:$0xf]
      %v683 = vld [vmem:[%s653 + $0x74] sm:$0x1]
      %v684 = vld [vmem:[%s653 + $0x78] sm:$0xf]
      %v685 = vld [vmem:[%s653 + $0x7c] sm:$0xf]
      %v686 = vld [vmem:[%s653 + $0x80] sm:$0x1]
      %v687 = vld [vmem:[%s653 + $0x84] sm:$0xf]
      %v688 = vld [vmem:[%s653 + $0x88] sm:$0xf]
      %v689 = vld [vmem:[%s653 + $0x8c] sm:$0x1]
      %v690 = vld [vmem:[%s653 + $0x90] sm:$0xf]
      %v691 = vld [vmem:[%s653 + $0x94] sm:$0xf]
      %v692 = vld [vmem:[%s653 + $0x98] sm:$0x1]
      %v693 = vld [vmem:[%s653 + $0x9c] sm:$0xf]
      %v694 = vld [vmem:[%s653 + $0xa0] sm:$0xf]
      %v695 = vld [vmem:[%s653 + $0xa4] sm:$0x1]
      %v696 = vld [vmem:[%s653 + $0xa8] sm:$0xf]
      %v697 = vld [vmem:[%s653 + $0xac] sm:$0xf]
      %v698 = vld [vmem:[%s653 + $0xb0] sm:$0x1]
      %v699 = vld [vmem:[%s653 + $0xb4] sm:$0xf]
      %v700 = vld [vmem:[%s653 + $0xb8] sm:$0xf]
      %v701 = vld [vmem:[%s653 + $0xbc] sm:$0x1]
      %v702 = vld [vmem:[%s653 + $0xc0] sm:$0xf]
      %v703 = vld [vmem:[%s653 + $0xc4] sm:$0xf]
      %v704 = vld [vmem:[%s653 + $0xc8] sm:$0x1]
      %v705 = vld [vmem:[%s653 + $0xcc] sm:$0xf]
      %v706 = vld [vmem:[%s653 + $0xd0] sm:$0xf]
      %v707 = vld [vmem:[%s653 + $0xd4] sm:$0x1]
      %v763 = vunpack.c.l.s4 1966171168
      %v764 = vunpack.c.0.s8 %v763
      %v765 = vlaneseq
      %v766 = vshrl.u32 %v765, 7
      %v767 = vsub.s32 %v764, %v766
      %v768 = vrot.slane %v654, %v767
      %v769 = vcombine.high %v768, %v768
      %v771 = vunpack.c.l.s4 1966171168
      %v772 = vunpack.c.0.s8 %v771
      %v773 = vlaneseq
      %v774 = vshrl.u32 %v773, 7
      %v775 = vsub.s32 %v772, %v774
      %v776 = vrot.slane %v768, %v775
      %v778 = vunpack.c.l.s4 1966171168
      %v779 = vunpack.c.0.s8 %v778
      %v780 = vlaneseq
      %v781 = vshrl.u32 %v780, 7
      %v782 = vsub.s32 %v779, %v781
      %v783 = vrot.slane %v769, %v782
      %v784 = vcombine.high %v776, %v776
      %v785 = vcombine.high %v783, %v783
      %v787 = vunpack.c.l.s4 1966171168
      %v788 = vunpack.c.0.s8 %v787
      %v789 = vlaneseq
      %v790 = vshrl.u32 %v789, 7
      %v791 = vsub.s32 %v788, %v790
      %v792 = vrot.slane %v655, %v791
      %v793 = vcombine.high %v792, %v792
      %v795 = vunpack.c.l.s4 1966171168
      %v796 = vunpack.c.0.s8 %v795
      %v797 = vlaneseq
      %v798 = vshrl.u32 %v797, 7
      %v799 = vsub.s32 %v796, %v798
      %v800 = vrot.slane %v792, %v799
      %v802 = vunpack.c.l.s4 1966171168
      %v803 = vunpack.c.0.s8 %v802
      %v804 = vlaneseq
      %v805 = vshrl.u32 %v804, 7
      %v806 = vsub.s32 %v803, %v805
      %v807 = vrot.slane %v793, %v806
      %v808 = vcombine.high %v800, %v800
      %v809 = vcombine.high %v807, %v807
      %v811 = vunpack.c.l.s4 1966171168
      %v812 = vunpack.c.0.s8 %v811
      %v813 = vlaneseq
      %v814 = vshrl.u32 %v813, 7
      %v815 = vsub.s32 %v812, %v814
      %v816 = vrot.slane %v656, %v815
      %v818 = vunpack.c.l.s4 1966171168
      %v819 = vunpack.c.0.s8 %v818
      %v820 = vlaneseq
      %v821 = vshrl.u32 %v820, 7
      %v822 = vsub.s32 %v819, %v821
      %v823 = vrot.slane %v816, %v822
      %v825 = vunpack.c.l.s4 1966171168
      %v826 = vunpack.c.0.s8 %v825
      %v827 = vlaneseq
      %v828 = vshrl.u32 %v827, 7
      %v829 = vsub.s32 %v826, %v828
      %v830 = vrot.slane %v657, %v829
      %v831 = vcombine.high %v830, %v830
      %v833 = vunpack.c.l.s4 1966171168
      %v834 = vunpack.c.0.s8 %v833
      %v835 = vlaneseq
      %v836 = vshrl.u32 %v835, 7
      %v837 = vsub.s32 %v834, %v836
      %v838 = vrot.slane %v830, %v837
      %v840 = vunpack.c.l.s4 1966171168
      %v841 = vunpack.c.0.s8 %v840
      %v842 = vlaneseq
      %v843 = vshrl.u32 %v842, 7
      %v844 = vsub.s32 %v841, %v843
      %v845 = vrot.slane %v831, %v844
      %v846 = vcombine.high %v838, %v838
      %v847 = vcombine.high %v845, %v845
      %v849 = vunpack.c.l.s4 1966171168
      %v850 = vunpack.c.0.s8 %v849
      %v851 = vlaneseq
      %v852 = vshrl.u32 %v851, 7
      %v853 = vsub.s32 %v850, %v852
      %v854 = vrot.slane %v658, %v853
      %v855 = vcombine.high %v854, %v854
      %v857 = vunpack.c.l.s4 1966171168
      %v858 = vunpack.c.0.s8 %v857
      %v859 = vlaneseq
      %v860 = vshrl.u32 %v859, 7
      %v861 = vsub.s32 %v858, %v860
      %v862 = vrot.slane %v854, %v861
      %v864 = vunpack.c.l.s4 1966171168
      %v865 = vunpack.c.0.s8 %v864
      %v866 = vlaneseq
      %v867 = vshrl.u32 %v866, 7
      %v868 = vsub.s32 %v865, %v867
      %v869 = vrot.slane %v855, %v868
      %v870 = vcombine.high %v862, %v862
      %v871 = vcombine.high %v869, %v869
      %v873 = vunpack.c.l.s4 1966171168
      %v874 = vunpack.c.0.s8 %v873
      %v875 = vlaneseq
      %v876 = vshrl.u32 %v875, 7
      %v877 = vsub.s32 %v874, %v876
      %v878 = vrot.slane %v659, %v877
      %v880 = vunpack.c.l.s4 1966171168
      %v881 = vunpack.c.0.s8 %v880
      %v882 = vlaneseq
      %v883 = vshrl.u32 %v882, 7
      %v884 = vsub.s32 %v881, %v883
      %v885 = vrot.slane %v878, %v884
      %v887 = vunpack.c.l.s4 1966171168
      %v888 = vunpack.c.0.s8 %v887
      %v889 = vlaneseq
      %v890 = vshrl.u32 %v889, 7
      %v891 = vsub.s32 %v888, %v890
      %v892 = vrot.slane %v660, %v891
      %v893 = vcombine.high %v892, %v892
      %v895 = vunpack.c.l.s4 1966171168
      %v896 = vunpack.c.0.s8 %v895
      %v897 = vlaneseq
      %v898 = vshrl.u32 %v897, 7
      %v899 = vsub.s32 %v896, %v898
      %v900 = vrot.slane %v892, %v899
      %v902 = vunpack.c.l.s4 1966171168
      %v903 = vunpack.c.0.s8 %v902
      %v904 = vlaneseq
      %v905 = vshrl.u32 %v904, 7
      %v906 = vsub.s32 %v903, %v905
      %v907 = vrot.slane %v893, %v906
      %v908 = vcombine.high %v900, %v900
      %v909 = vcombine.high %v907, %v907
      %v911 = vunpack.c.l.s4 1966171168
      %v912 = vunpack.c.0.s8 %v911
      %v913 = vlaneseq
      %v914 = vshrl.u32 %v913, 7
      %v915 = vsub.s32 %v912, %v914
      %v916 = vrot.slane %v661, %v915
      %v917 = vcombine.high %v916, %v916
      %v919 = vunpack.c.l.s4 1966171168
      %v920 = vunpack.c.0.s8 %v919
      %v921 = vlaneseq
      %v922 = vshrl.u32 %v921, 7
      %v923 = vsub.s32 %v920, %v922
      %v924 = vrot.slane %v916, %v923
      %v926 = vunpack.c.l.s4 1966171168
      %v927 = vunpack.c.0.s8 %v926
      %v928 = vlaneseq
      %v929 = vshrl.u32 %v928, 7
      %v930 = vsub.s32 %v927, %v929
      %v931 = vrot.slane %v917, %v930
      %v932 = vcombine.high %v924, %v924
      %v933 = vcombine.high %v931, %v931
      %v935 = vunpack.c.l.s4 1966171168
      %v936 = vunpack.c.0.s8 %v935
      %v937 = vlaneseq
      %v938 = vshrl.u32 %v937, 7
      %v939 = vsub.s32 %v936, %v938
      %v940 = vrot.slane %v662, %v939
      %v942 = vunpack.c.l.s4 1966171168
      %v943 = vunpack.c.0.s8 %v942
      %v944 = vlaneseq
      %v945 = vshrl.u32 %v944, 7
      %v946 = vsub.s32 %v943, %v945
      %v947 = vrot.slane %v940, %v946
      %v949 = vunpack.c.l.s4 1966171168
      %v950 = vunpack.c.0.s8 %v949
      %v951 = vlaneseq
      %v952 = vshrl.u32 %v951, 7
      %v953 = vsub.s32 %v950, %v952
      %v954 = vrot.slane %v663, %v953
      %v955 = vcombine.high %v954, %v954
      %v957 = vunpack.c.l.s4 1966171168
      %v958 = vunpack.c.0.s8 %v957
      %v959 = vlaneseq
      %v960 = vshrl.u32 %v959, 7
      %v961 = vsub.s32 %v958, %v960
      %v962 = vrot.slane %v954, %v961
      %v964 = vunpack.c.l.s4 1966171168
      %v965 = vunpack.c.0.s8 %v964
      %v966 = vlaneseq
      %v967 = vshrl.u32 %v966, 7
      %v968 = vsub.s32 %v965, %v967
      %v969 = vrot.slane %v955, %v968
      %v970 = vcombine.high %v962, %v962
      %v971 = vcombine.high %v969, %v969
      %v973 = vunpack.c.l.s4 1966171168
      %v974 = vunpack.c.0.s8 %v973
      %v975 = vlaneseq
      %v976 = vshrl.u32 %v975, 7
      %v977 = vsub.s32 %v974, %v976
      %v978 = vrot.slane %v664, %v977
      %v979 = vcombine.high %v978, %v978
      %v981 = vunpack.c.l.s4 1966171168
      %v982 = vunpack.c.0.s8 %v981
      %v983 = vlaneseq
      %v984 = vshrl.u32 %v983, 7
      %v985 = vsub.s32 %v982, %v984
      %v986 = vrot.slane %v978, %v985
      %v988 = vunpack.c.l.s4 1966171168
      %v989 = vunpack.c.0.s8 %v988
      %v990 = vlaneseq
      %v991 = vshrl.u32 %v990, 7
      %v992 = vsub.s32 %v989, %v991
      %v993 = vrot.slane %v979, %v992
      %v994 = vcombine.high %v986, %v986
      %v995 = vcombine.high %v993, %v993
      %v997 = vunpack.c.l.s4 1966171168
      %v998 = vunpack.c.0.s8 %v997
      %v999 = vlaneseq
      %v1000 = vshrl.u32 %v999, 7
      %v1001 = vsub.s32 %v998, %v1000
      %v1002 = vrot.slane %v665, %v1001
      %v1004 = vunpack.c.l.s4 1966171168
      %v1005 = vunpack.c.0.s8 %v1004
      %v1006 = vlaneseq
      %v1007 = vshrl.u32 %v1006, 7
      %v1008 = vsub.s32 %v1005, %v1007
      %v1009 = vrot.slane %v1002, %v1008
      %v1011 = vunpack.c.l.s4 1966171168
      %v1012 = vunpack.c.0.s8 %v1011
      %v1013 = vlaneseq
      %v1014 = vshrl.u32 %v1013, 7
      %v1015 = vsub.s32 %v1012, %v1014
      %v1016 = vrot.slane %v666, %v1015
      %v1017 = vcombine.high %v1016, %v1016
      %v1019 = vunpack.c.l.s4 1966171168
      %v1020 = vunpack.c.0.s8 %v1019
      %v1021 = vlaneseq
      %v1022 = vshrl.u32 %v1021, 7
      %v1023 = vsub.s32 %v1020, %v1022
      %v1024 = vrot.slane %v1016, %v1023
      %v1026 = vunpack.c.l.s4 1966171168
      %v1027 = vunpack.c.0.s8 %v1026
      %v1028 = vlaneseq
      %v1029 = vshrl.u32 %v1028, 7
      %v1030 = vsub.s32 %v1027, %v1029
      %v1031 = vrot.slane %v1017, %v1030
      %v1032 = vcombine.high %v1024, %v1024
      %v1033 = vcombine.high %v1031, %v1031
      %v1035 = vunpack.c.l.s4 1966171168
      %v1036 = vunpack.c.0.s8 %v1035
      %v1037 = vlaneseq
      %v1038 = vshrl.u32 %v1037, 7
      %v1039 = vsub.s32 %v1036, %v1038
      %v1040 = vrot.slane %v667, %v1039
      %v1041 = vcombine.high %v1040, %v1040
      %v1043 = vunpack.c.l.s4 1966171168
      %v1044 = vunpack.c.0.s8 %v1043
      %v1045 = vlaneseq
      %v1046 = vshrl.u32 %v1045, 7
      %v1047 = vsub.s32 %v1044, %v1046
      %v1048 = vrot.slane %v1040, %v1047
      %v1050 = vunpack.c.l.s4 1966171168
      %v1051 = vunpack.c.0.s8 %v1050
      %v1052 = vlaneseq
      %v1053 = vshrl.u32 %v1052, 7
      %v1054 = vsub.s32 %v1051, %v1053
      %v1055 = vrot.slane %v1041, %v1054
      %v1056 = vcombine.high %v1048, %v1048
      %v1057 = vcombine.high %v1055, %v1055
      %v1059 = vunpack.c.l.s4 1966171168
      %v1060 = vunpack.c.0.s8 %v1059
      %v1061 = vlaneseq
      %v1062 = vshrl.u32 %v1061, 7
      %v1063 = vsub.s32 %v1060, %v1062
      %v1064 = vrot.slane %v668, %v1063
      %v1066 = vunpack.c.l.s4 1966171168
      %v1067 = vunpack.c.0.s8 %v1066
      %v1068 = vlaneseq
      %v1069 = vshrl.u32 %v1068, 7
      %v1070 = vsub.s32 %v1067, %v1069
      %v1071 = vrot.slane %v1064, %v1070
      %v1073 = vunpack.c.l.s4 1966171168
      %v1074 = vunpack.c.0.s8 %v1073
      %v1075 = vlaneseq
      %v1076 = vshrl.u32 %v1075, 7
      %v1077 = vsub.s32 %v1074, %v1076
      %v1078 = vrot.slane %v669, %v1077
      %v1079 = vcombine.high %v1078, %v1078
      %v1081 = vunpack.c.l.s4 1966171168
      %v1082 = vunpack.c.0.s8 %v1081
      %v1083 = vlaneseq
      %v1084 = vshrl.u32 %v1083, 7
      %v1085 = vsub.s32 %v1082, %v1084
      %v1086 = vrot.slane %v1078, %v1085
      %v1088 = vunpack.c.l.s4 1966171168
      %v1089 = vunpack.c.0.s8 %v1088
      %v1090 = vlaneseq
      %v1091 = vshrl.u32 %v1090, 7
      %v1092 = vsub.s32 %v1089, %v1091
      %v1093 = vrot.slane %v1079, %v1092
      %v1094 = vcombine.high %v1086, %v1086
      %v1095 = vcombine.high %v1093, %v1093
      %v1097 = vunpack.c.l.s4 1966171168
      %v1098 = vunpack.c.0.s8 %v1097
      %v1099 = vlaneseq
      %v1100 = vshrl.u32 %v1099, 7
      %v1101 = vsub.s32 %v1098, %v1100
      %v1102 = vrot.slane %v670, %v1101
      %v1103 = vcombine.high %v1102, %v1102
      %v1105 = vunpack.c.l.s4 1966171168
      %v1106 = vunpack.c.0.s8 %v1105
      %v1107 = vlaneseq
      %v1108 = vshrl.u32 %v1107, 7
      %v1109 = vsub.s32 %v1106, %v1108
      %v1110 = vrot.slane %v1102, %v1109
      %v1112 = vunpack.c.l.s4 1966171168
      %v1113 = vunpack.c.0.s8 %v1112
      %v1114 = vlaneseq
      %v1115 = vshrl.u32 %v1114, 7
      %v1116 = vsub.s32 %v1113, %v1115
      %v1117 = vrot.slane %v1103, %v1116
      %v1118 = vcombine.high %v1110, %v1110
      %v1119 = vcombine.high %v1117, %v1117
      %v1121 = vunpack.c.l.s4 1966171168
      %v1122 = vunpack.c.0.s8 %v1121
      %v1123 = vlaneseq
      %v1124 = vshrl.u32 %v1123, 7
      %v1125 = vsub.s32 %v1122, %v1124
      %v1126 = vrot.slane %v671, %v1125
      %v1128 = vunpack.c.l.s4 1966171168
      %v1129 = vunpack.c.0.s8 %v1128
      %v1130 = vlaneseq
      %v1131 = vshrl.u32 %v1130, 7
      %v1132 = vsub.s32 %v1129, %v1131
      %v1133 = vrot.slane %v1126, %v1132
      %v1135 = vunpack.c.l.s4 1966171168
      %v1136 = vunpack.c.0.s8 %v1135
      %v1137 = vlaneseq
      %v1138 = vshrl.u32 %v1137, 7
      %v1139 = vsub.s32 %v1136, %v1138
      %v1140 = vrot.slane %v672, %v1139
      %v1141 = vcombine.high %v1140, %v1140
      %v1143 = vunpack.c.l.s4 1966171168
      %v1144 = vunpack.c.0.s8 %v1143
      %v1145 = vlaneseq
      %v1146 = vshrl.u32 %v1145, 7
      %v1147 = vsub.s32 %v1144, %v1146
      %v1148 = vrot.slane %v1140, %v1147
      %v1150 = vunpack.c.l.s4 1966171168
      %v1151 = vunpack.c.0.s8 %v1150
      %v1152 = vlaneseq
      %v1153 = vshrl.u32 %v1152, 7
      %v1154 = vsub.s32 %v1151, %v1153
      %v1155 = vrot.slane %v1141, %v1154
      %v1156 = vcombine.high %v1148, %v1148
      %v1157 = vcombine.high %v1155, %v1155
      %v1159 = vunpack.c.l.s4 1966171168
      %v1160 = vunpack.c.0.s8 %v1159
      %v1161 = vlaneseq
      %v1162 = vshrl.u32 %v1161, 7
      %v1163 = vsub.s32 %v1160, %v1162
      %v1164 = vrot.slane %v673, %v1163
      %v1165 = vcombine.high %v1164, %v1164
      %v1167 = vunpack.c.l.s4 1966171168
      %v1168 = vunpack.c.0.s8 %v1167
      %v1169 = vlaneseq
      %v1170 = vshrl.u32 %v1169, 7
      %v1171 = vsub.s32 %v1168, %v1170
      %v1172 = vrot.slane %v1164, %v1171
      %v1174 = vunpack.c.l.s4 1966171168
      %v1175 = vunpack.c.0.s8 %v1174
      %v1176 = vlaneseq
      %v1177 = vshrl.u32 %v1176, 7
      %v1178 = vsub.s32 %v1175, %v1177
      %v1179 = vrot.slane %v1165, %v1178
      %v1180 = vcombine.high %v1172, %v1172
      %v1181 = vcombine.high %v1179, %v1179
      %v1183 = vunpack.c.l.s4 1966171168
      %v1184 = vunpack.c.0.s8 %v1183
      %v1185 = vlaneseq
      %v1186 = vshrl.u32 %v1185, 7
      %v1187 = vsub.s32 %v1184, %v1186
      %v1188 = vrot.slane %v674, %v1187
      %v1190 = vunpack.c.l.s4 1966171168
      %v1191 = vunpack.c.0.s8 %v1190
      %v1192 = vlaneseq
      %v1193 = vshrl.u32 %v1192, 7
      %v1194 = vsub.s32 %v1191, %v1193
      %v1195 = vrot.slane %v1188, %v1194
      %v1197 = vunpack.c.l.s4 1966171168
      %v1198 = vunpack.c.0.s8 %v1197
      %v1199 = vlaneseq
      %v1200 = vshrl.u32 %v1199, 7
      %v1201 = vsub.s32 %v1198, %v1200
      %v1202 = vrot.slane %v675, %v1201
      %v1203 = vcombine.high %v1202, %v1202
      %v1205 = vunpack.c.l.s4 1966171168
      %v1206 = vunpack.c.0.s8 %v1205
      %v1207 = vlaneseq
      %v1208 = vshrl.u32 %v1207, 7
      %v1209 = vsub.s32 %v1206, %v1208
      %v1210 = vrot.slane %v1202, %v1209
      %v1212 = vunpack.c.l.s4 1966171168
      %v1213 = vunpack.c.0.s8 %v1212
      %v1214 = vlaneseq
      %v1215 = vshrl.u32 %v1214, 7
      %v1216 = vsub.s32 %v1213, %v1215
      %v1217 = vrot.slane %v1203, %v1216
      %v1218 = vcombine.high %v1210, %v1210
      %v1219 = vcombine.high %v1217, %v1217
      %v1221 = vunpack.c.l.s4 1966171168
      %v1222 = vunpack.c.0.s8 %v1221
      %v1223 = vlaneseq
      %v1224 = vshrl.u32 %v1223, 7
      %v1225 = vsub.s32 %v1222, %v1224
      %v1226 = vrot.slane %v676, %v1225
      %v1227 = vcombine.high %v1226, %v1226
      %v1229 = vunpack.c.l.s4 1966171168
      %v1230 = vunpack.c.0.s8 %v1229
      %v1231 = vlaneseq
      %v1232 = vshrl.u32 %v1231, 7
      %v1233 = vsub.s32 %v1230, %v1232
      %v1234 = vrot.slane %v1226, %v1233
      %v1236 = vunpack.c.l.s4 1966171168
      %v1237 = vunpack.c.0.s8 %v1236
      %v1238 = vlaneseq
      %v1239 = vshrl.u32 %v1238, 7
      %v1240 = vsub.s32 %v1237, %v1239
      %v1241 = vrot.slane %v1227, %v1240
      %v1242 = vcombine.high %v1234, %v1234
      %v1243 = vcombine.high %v1241, %v1241
      %v1245 = vunpack.c.l.s4 1966171168
      %v1246 = vunpack.c.0.s8 %v1245
      %v1247 = vlaneseq
      %v1248 = vshrl.u32 %v1247, 7
      %v1249 = vsub.s32 %v1246, %v1248
      %v1250 = vrot.slane %v677, %v1249
      %v1252 = vunpack.c.l.s4 1966171168
      %v1253 = vunpack.c.0.s8 %v1252
      %v1254 = vlaneseq
      %v1255 = vshrl.u32 %v1254, 7
      %v1256 = vsub.s32 %v1253, %v1255
      %v1257 = vrot.slane %v1250, %v1256
      %v1259 = vunpack.c.l.s4 1966171168
      %v1260 = vunpack.c.0.s8 %v1259
      %v1261 = vlaneseq
      %v1262 = vshrl.u32 %v1261, 7
      %v1263 = vsub.s32 %v1260, %v1262
      %v1264 = vrot.slane %v678, %v1263
      %v1265 = vcombine.high %v1264, %v1264
      %v1267 = vunpack.c.l.s4 1966171168
      %v1268 = vunpack.c.0.s8 %v1267
      %v1269 = vlaneseq
      %v1270 = vshrl.u32 %v1269, 7
      %v1271 = vsub.s32 %v1268, %v1270
      %v1272 = vrot.slane %v1264, %v1271
      %v1274 = vunpack.c.l.s4 1966171168
      %v1275 = vunpack.c.0.s8 %v1274
      %v1276 = vlaneseq
      %v1277 = vshrl.u32 %v1276, 7
      %v1278 = vsub.s32 %v1275, %v1277
      %v1279 = vrot.slane %v1265, %v1278
      %v1280 = vcombine.high %v1272, %v1272
      %v1281 = vcombine.high %v1279, %v1279
      %v1283 = vunpack.c.l.s4 1966171168
      %v1284 = vunpack.c.0.s8 %v1283
      %v1285 = vlaneseq
      %v1286 = vshrl.u32 %v1285, 7
      %v1287 = vsub.s32 %v1284, %v1286
      %v1288 = vrot.slane %v679, %v1287
      %v1289 = vcombine.high %v1288, %v1288
      %v1291 = vunpack.c.l.s4 1966171168
      %v1292 = vunpack.c.0.s8 %v1291
      %v1293 = vlaneseq
      %v1294 = vshrl.u32 %v1293, 7
      %v1295 = vsub.s32 %v1292, %v1294
      %v1296 = vrot.slane %v1288, %v1295
      %v1298 = vunpack.c.l.s4 1966171168
      %v1299 = vunpack.c.0.s8 %v1298
      %v1300 = vlaneseq
      %v1301 = vshrl.u32 %v1300, 7
      %v1302 = vsub.s32 %v1299, %v1301
      %v1303 = vrot.slane %v1289, %v1302
      %v1304 = vcombine.high %v1296, %v1296
      %v1305 = vcombine.high %v1303, %v1303
      %v1307 = vunpack.c.l.s4 1966171168
      %v1308 = vunpack.c.0.s8 %v1307
      %v1309 = vlaneseq
      %v1310 = vshrl.u32 %v1309, 7
      %v1311 = vsub.s32 %v1308, %v1310
      %v1312 = vrot.slane %v680, %v1311
      %v1314 = vunpack.c.l.s4 1966171168
      %v1315 = vunpack.c.0.s8 %v1314
      %v1316 = vlaneseq
      %v1317 = vshrl.u32 %v1316, 7
      %v1318 = vsub.s32 %v1315, %v1317
      %v1319 = vrot.slane %v1312, %v1318
      %v1321 = vunpack.c.l.s4 1966171168
      %v1322 = vunpack.c.0.s8 %v1321
      %v1323 = vlaneseq
      %v1324 = vshrl.u32 %v1323, 7
      %v1325 = vsub.s32 %v1322, %v1324
      %v1326 = vrot.slane %v681, %v1325
      %v1327 = vcombine.high %v1326, %v1326
      %v1329 = vunpack.c.l.s4 1966171168
      %v1330 = vunpack.c.0.s8 %v1329
      %v1331 = vlaneseq
      %v1332 = vshrl.u32 %v1331, 7
      %v1333 = vsub.s32 %v1330, %v1332
      %v1334 = vrot.slane %v1326, %v1333
      %v1336 = vunpack.c.l.s4 1966171168
      %v1337 = vunpack.c.0.s8 %v1336
      %v1338 = vlaneseq
      %v1339 = vshrl.u32 %v1338, 7
      %v1340 = vsub.s32 %v1337, %v1339
      %v1341 = vrot.slane %v1327, %v1340
      %v1342 = vcombine.high %v1334, %v1334
      %v1343 = vcombine.high %v1341, %v1341
      %v1345 = vunpack.c.l.s4 1966171168
      %v1346 = vunpack.c.0.s8 %v1345
      %v1347 = vlaneseq
      %v1348 = vshrl.u32 %v1347, 7
      %v1349 = vsub.s32 %v1346, %v1348
      %v1350 = vrot.slane %v682, %v1349
      %v1351 = vcombine.high %v1350, %v1350
      %v1353 = vunpack.c.l.s4 1966171168
      %v1354 = vunpack.c.0.s8 %v1353
      %v1355 = vlaneseq
      %v1356 = vshrl.u32 %v1355, 7
      %v1357 = vsub.s32 %v1354, %v1356
      %v1358 = vrot.slane %v1350, %v1357
      %v1360 = vunpack.c.l.s4 1966171168
      %v1361 = vunpack.c.0.s8 %v1360
      %v1362 = vlaneseq
      %v1363 = vshrl.u32 %v1362, 7
      %v1364 = vsub.s32 %v1361, %v1363
      %v1365 = vrot.slane %v1351, %v1364
      %v1366 = vcombine.high %v1358, %v1358
      %v1367 = vcombine.high %v1365, %v1365
      %v1369 = vunpack.c.l.s4 1966171168
      %v1370 = vunpack.c.0.s8 %v1369
      %v1371 = vlaneseq
      %v1372 = vshrl.u32 %v1371, 7
      %v1373 = vsub.s32 %v1370, %v1372
      %v1374 = vrot.slane %v683, %v1373
      %v1376 = vunpack.c.l.s4 1966171168
      %v1377 = vunpack.c.0.s8 %v1376
      %v1378 = vlaneseq
      %v1379 = vshrl.u32 %v1378, 7
      %v1380 = vsub.s32 %v1377, %v1379
      %v1381 = vrot.slane %v1374, %v1380
      %v1383 = vunpack.c.l.s4 1966171168
      %v1384 = vunpack.c.0.s8 %v1383
      %v1385 = vlaneseq
      %v1386 = vshrl.u32 %v1385, 7
      %v1387 = vsub.s32 %v1384, %v1386
      %v1388 = vrot.slane %v684, %v1387
      %v1389 = vcombine.high %v1388, %v1388
      %v1391 = vunpack.c.l.s4 1966171168
      %v1392 = vunpack.c.0.s8 %v1391
      %v1393 = vlaneseq
      %v1394 = vshrl.u32 %v1393, 7
      %v1395 = vsub.s32 %v1392, %v1394
      %v1396 = vrot.slane %v1388, %v1395
      %v1398 = vunpack.c.l.s4 1966171168
      %v1399 = vunpack.c.0.s8 %v1398
      %v1400 = vlaneseq
      %v1401 = vshrl.u32 %v1400, 7
      %v1402 = vsub.s32 %v1399, %v1401
      %v1403 = vrot.slane %v1389, %v1402
      %v1404 = vcombine.high %v1396, %v1396
      %v1405 = vcombine.high %v1403, %v1403
      %v1407 = vunpack.c.l.s4 1966171168
      %v1408 = vunpack.c.0.s8 %v1407
      %v1409 = vlaneseq
      %v1410 = vshrl.u32 %v1409, 7
      %v1411 = vsub.s32 %v1408, %v1410
      %v1412 = vrot.slane %v685, %v1411
      %v1413 = vcombine.high %v1412, %v1412
      %v1415 = vunpack.c.l.s4 1966171168
      %v1416 = vunpack.c.0.s8 %v1415
      %v1417 = vlaneseq
      %v1418 = vshrl.u32 %v1417, 7
      %v1419 = vsub.s32 %v1416, %v1418
      %v1420 = vrot.slane %v1412, %v1419
      %v1422 = vunpack.c.l.s4 1966171168
      %v1423 = vunpack.c.0.s8 %v1422
      %v1424 = vlaneseq
      %v1425 = vshrl.u32 %v1424, 7
      %v1426 = vsub.s32 %v1423, %v1425
      %v1427 = vrot.slane %v1413, %v1426
      %v1428 = vcombine.high %v1420, %v1420
      %v1429 = vcombine.high %v1427, %v1427
      %v1431 = vunpack.c.l.s4 1966171168
      %v1432 = vunpack.c.0.s8 %v1431
      %v1433 = vlaneseq
      %v1434 = vshrl.u32 %v1433, 7
      %v1435 = vsub.s32 %v1432, %v1434
      %v1436 = vrot.slane %v686, %v1435
      %v1438 = vunpack.c.l.s4 1966171168
      %v1439 = vunpack.c.0.s8 %v1438
      %v1440 = vlaneseq
      %v1441 = vshrl.u32 %v1440, 7
      %v1442 = vsub.s32 %v1439, %v1441
      %v1443 = vrot.slane %v1436, %v1442
      %v1445 = vunpack.c.l.s4 1966171168
      %v1446 = vunpack.c.0.s8 %v1445
      %v1447 = vlaneseq
      %v1448 = vshrl.u32 %v1447, 7
      %v1449 = vsub.s32 %v1446, %v1448
      %v1450 = vrot.slane %v687, %v1449
      %v1451 = vcombine.high %v1450, %v1450
      %v1453 = vunpack.c.l.s4 1966171168
      %v1454 = vunpack.c.0.s8 %v1453
      %v1455 = vlaneseq
      %v1456 = vshrl.u32 %v1455, 7
      %v1457 = vsub.s32 %v1454, %v1456
      %v1458 = vrot.slane %v1450, %v1457
      %v1460 = vunpack.c.l.s4 1966171168
      %v1461 = vunpack.c.0.s8 %v1460
      %v1462 = vlaneseq
      %v1463 = vshrl.u32 %v1462, 7
      %v1464 = vsub.s32 %v1461, %v1463
      %v1465 = vrot.slane %v1451, %v1464
      %v1466 = vcombine.high %v1458, %v1458
      %v1467 = vcombine.high %v1465, %v1465
      %v1469 = vunpack.c.l.s4 1966171168
      %v1470 = vunpack.c.0.s8 %v1469
      %v1471 = vlaneseq
      %v1472 = vshrl.u32 %v1471, 7
      %v1473 = vsub.s32 %v1470, %v1472
      %v1474 = vrot.slane %v688, %v1473
      %v1475 = vcombine.high %v1474, %v1474
      %v1477 = vunpack.c.l.s4 1966171168
      %v1478 = vunpack.c.0.s8 %v1477
      %v1479 = vlaneseq
      %v1480 = vshrl.u32 %v1479, 7
      %v1481 = vsub.s32 %v1478, %v1480
      %v1482 = vrot.slane %v1474, %v1481
      %v1484 = vunpack.c.l.s4 1966171168
      %v1485 = vunpack.c.0.s8 %v1484
      %v1486 = vlaneseq
      %v1487 = vshrl.u32 %v1486, 7
      %v1488 = vsub.s32 %v1485, %v1487
      %v1489 = vrot.slane %v1475, %v1488
      %v1490 = vcombine.high %v1482, %v1482
      %v1491 = vcombine.high %v1489, %v1489
      %v1493 = vunpack.c.l.s4 1966171168
      %v1494 = vunpack.c.0.s8 %v1493
      %v1495 = vlaneseq
      %v1496 = vshrl.u32 %v1495, 7
      %v1497 = vsub.s32 %v1494, %v1496
      %v1498 = vrot.slane %v689, %v1497
      %v1500 = vunpack.c.l.s4 1966171168
      %v1501 = vunpack.c.0.s8 %v1500
      %v1502 = vlaneseq
      %v1503 = vshrl.u32 %v1502, 7
      %v1504 = vsub.s32 %v1501, %v1503
      %v1505 = vrot.slane %v1498, %v1504
      %v1507 = vunpack.c.l.s4 1966171168
      %v1508 = vunpack.c.0.s8 %v1507
      %v1509 = vlaneseq
      %v1510 = vshrl.u32 %v1509, 7
      %v1511 = vsub.s32 %v1508, %v1510
      %v1512 = vrot.slane %v690, %v1511
      %v1513 = vcombine.high %v1512, %v1512
      %v1515 = vunpack.c.l.s4 1966171168
      %v1516 = vunpack.c.0.s8 %v1515
      %v1517 = vlaneseq
      %v1518 = vshrl.u32 %v1517, 7
      %v1519 = vsub.s32 %v1516, %v1518
      %v1520 = vrot.slane %v1512, %v1519
      %v1522 = vunpack.c.l.s4 1966171168
      %v1523 = vunpack.c.0.s8 %v1522
      %v1524 = vlaneseq
      %v1525 = vshrl.u32 %v1524, 7
      %v1526 = vsub.s32 %v1523, %v1525
      %v1527 = vrot.slane %v1513, %v1526
      %v1528 = vcombine.high %v1520, %v1520
      %v1529 = vcombine.high %v1527, %v1527
      %v1531 = vunpack.c.l.s4 1966171168
      %v1532 = vunpack.c.0.s8 %v1531
      %v1533 = vlaneseq
      %v1534 = vshrl.u32 %v1533, 7
      %v1535 = vsub.s32 %v1532, %v1534
      %v1536 = vrot.slane %v691, %v1535
      %v1537 = vcombine.high %v1536, %v1536
      %v1539 = vunpack.c.l.s4 1966171168
      %v1540 = vunpack.c.0.s8 %v1539
      %v1541 = vlaneseq
      %v1542 = vshrl.u32 %v1541, 7
      %v1543 = vsub.s32 %v1540, %v1542
      %v1544 = vrot.slane %v1536, %v1543
      %v1546 = vunpack.c.l.s4 1966171168
      %v1547 = vunpack.c.0.s8 %v1546
      %v1548 = vlaneseq
      %v1549 = vshrl.u32 %v1548, 7
      %v1550 = vsub.s32 %v1547, %v1549
      %v1551 = vrot.slane %v1537, %v1550
      %v1552 = vcombine.high %v1544, %v1544
      %v1553 = vcombine.high %v1551, %v1551
      %v1555 = vunpack.c.l.s4 1966171168
      %v1556 = vunpack.c.0.s8 %v1555
      %v1557 = vlaneseq
      %v1558 = vshrl.u32 %v1557, 7
      %v1559 = vsub.s32 %v1556, %v1558
      %v1560 = vrot.slane %v692, %v1559
      %v1562 = vunpack.c.l.s4 1966171168
      %v1563 = vunpack.c.0.s8 %v1562
      %v1564 = vlaneseq
      %v1565 = vshrl.u32 %v1564, 7
      %v1566 = vsub.s32 %v1563, %v1565
      %v1567 = vrot.slane %v1560, %v1566
      %v1569 = vunpack.c.l.s4 1966171168
      %v1570 = vunpack.c.0.s8 %v1569
      %v1571 = vlaneseq
      %v1572 = vshrl.u32 %v1571, 7
      %v1573 = vsub.s32 %v1570, %v1572
      %v1574 = vrot.slane %v693, %v1573
      %v1575 = vcombine.high %v1574, %v1574
      %v1577 = vunpack.c.l.s4 1966171168
      %v1578 = vunpack.c.0.s8 %v1577
      %v1579 = vlaneseq
      %v1580 = vshrl.u32 %v1579, 7
      %v1581 = vsub.s32 %v1578, %v1580
      %v1582 = vrot.slane %v1574, %v1581
      %v1584 = vunpack.c.l.s4 1966171168
      %v1585 = vunpack.c.0.s8 %v1584
      %v1586 = vlaneseq
      %v1587 = vshrl.u32 %v1586, 7
      %v1588 = vsub.s32 %v1585, %v1587
      %v1589 = vrot.slane %v1575, %v1588
      %v1590 = vcombine.high %v1582, %v1582
      %v1591 = vcombine.high %v1589, %v1589
      %v1593 = vunpack.c.l.s4 1966171168
      %v1594 = vunpack.c.0.s8 %v1593
      %v1595 = vlaneseq
      %v1596 = vshrl.u32 %v1595, 7
      %v1597 = vsub.s32 %v1594, %v1596
      %v1598 = vrot.slane %v694, %v1597
      %v1599 = vcombine.high %v1598, %v1598
      %v1601 = vunpack.c.l.s4 1966171168
      %v1602 = vunpack.c.0.s8 %v1601
      %v1603 = vlaneseq
      %v1604 = vshrl.u32 %v1603, 7
      %v1605 = vsub.s32 %v1602, %v1604
      %v1606 = vrot.slane %v1598, %v1605
      %v1608 = vunpack.c.l.s4 1966171168
      %v1609 = vunpack.c.0.s8 %v1608
      %v1610 = vlaneseq
      %v1611 = vshrl.u32 %v1610, 7
      %v1612 = vsub.s32 %v1609, %v1611
      %v1613 = vrot.slane %v1599, %v1612
      %v1614 = vcombine.high %v1606, %v1606
      %v1615 = vcombine.high %v1613, %v1613
      %v1617 = vunpack.c.l.s4 1966171168
      %v1618 = vunpack.c.0.s8 %v1617
      %v1619 = vlaneseq
      %v1620 = vshrl.u32 %v1619, 7
      %v1621 = vsub.s32 %v1618, %v1620
      %v1622 = vrot.slane %v695, %v1621
      %v1624 = vunpack.c.l.s4 1966171168
      %v1625 = vunpack.c.0.s8 %v1624
      %v1626 = vlaneseq
      %v1627 = vshrl.u32 %v1626, 7
      %v1628 = vsub.s32 %v1625, %v1627
      %v1629 = vrot.slane %v1622, %v1628
      %v1631 = vunpack.c.l.s4 1966171168
      %v1632 = vunpack.c.0.s8 %v1631
      %v1633 = vlaneseq
      %v1634 = vshrl.u32 %v1633, 7
      %v1635 = vsub.s32 %v1632, %v1634
      %v1636 = vrot.slane %v696, %v1635
      %v1637 = vcombine.high %v1636, %v1636
      %v1639 = vunpack.c.l.s4 1966171168
      %v1640 = vunpack.c.0.s8 %v1639
      %v1641 = vlaneseq
      %v1642 = vshrl.u32 %v1641, 7
      %v1643 = vsub.s32 %v1640, %v1642
      %v1644 = vrot.slane %v1636, %v1643
      %v1646 = vunpack.c.l.s4 1966171168
      %v1647 = vunpack.c.0.s8 %v1646
      %v1648 = vlaneseq
      %v1649 = vshrl.u32 %v1648, 7
      %v1650 = vsub.s32 %v1647, %v1649
      %v1651 = vrot.slane %v1637, %v1650
      %v1652 = vcombine.high %v1644, %v1644
      %v1653 = vcombine.high %v1651, %v1651
      %v1655 = vunpack.c.l.s4 1966171168
      %v1656 = vunpack.c.0.s8 %v1655
      %v1657 = vlaneseq
      %v1658 = vshrl.u32 %v1657, 7
      %v1659 = vsub.s32 %v1656, %v1658
      %v1660 = vrot.slane %v697, %v1659
      %v1661 = vcombine.high %v1660, %v1660
      %v1663 = vunpack.c.l.s4 1966171168
      %v1664 = vunpack.c.0.s8 %v1663
      %v1665 = vlaneseq
      %v1666 = vshrl.u32 %v1665, 7
      %v1667 = vsub.s32 %v1664, %v1666
      %v1668 = vrot.slane %v1660, %v1667
      %v1670 = vunpack.c.l.s4 1966171168
      %v1671 = vunpack.c.0.s8 %v1670
      %v1672 = vlaneseq
      %v1673 = vshrl.u32 %v1672, 7
      %v1674 = vsub.s32 %v1671, %v1673
      %v1675 = vrot.slane %v1661, %v1674
      %v1676 = vcombine.high %v1668, %v1668
      %v1677 = vcombine.high %v1675, %v1675
      %v1679 = vunpack.c.l.s4 1966171168
      %v1680 = vunpack.c.0.s8 %v1679
      %v1681 = vlaneseq
      %v1682 = vshrl.u32 %v1681, 7
      %v1683 = vsub.s32 %v1680, %v1682
      %v1684 = vrot.slane %v698, %v1683
      %v1686 = vunpack.c.l.s4 1966171168
      %v1687 = vunpack.c.0.s8 %v1686
      %v1688 = vlaneseq
      %v1689 = vshrl.u32 %v1688, 7
      %v1690 = vsub.s32 %v1687, %v1689
      %v1691 = vrot.slane %v1684, %v1690
      %v1693 = vunpack.c.l.s4 1966171168
      %v1694 = vunpack.c.0.s8 %v1693
      %v1695 = vlaneseq
      %v1696 = vshrl.u32 %v1695, 7
      %v1697 = vsub.s32 %v1694, %v1696
      %v1698 = vrot.slane %v699, %v1697
      %v1699 = vcombine.high %v1698, %v1698
      %v1701 = vunpack.c.l.s4 1966171168
      %v1702 = vunpack.c.0.s8 %v1701
      %v1703 = vlaneseq
      %v1704 = vshrl.u32 %v1703, 7
      %v1705 = vsub.s32 %v1702, %v1704
      %v1706 = vrot.slane %v1698, %v1705
      %v1708 = vunpack.c.l.s4 1966171168
      %v1709 = vunpack.c.0.s8 %v1708
      %v1710 = vlaneseq
      %v1711 = vshrl.u32 %v1710, 7
      %v1712 = vsub.s32 %v1709, %v1711
      %v1713 = vrot.slane %v1699, %v1712
      %v1714 = vcombine.high %v1706, %v1706
      %v1715 = vcombine.high %v1713, %v1713
      %v1717 = vunpack.c.l.s4 1966171168
      %v1718 = vunpack.c.0.s8 %v1717
      %v1719 = vlaneseq
      %v1720 = vshrl.u32 %v1719, 7
      %v1721 = vsub.s32 %v1718, %v1720
      %v1722 = vrot.slane %v700, %v1721
      %v1723 = vcombine.high %v1722, %v1722
      %v1725 = vunpack.c.l.s4 1966171168
      %v1726 = vunpack.c.0.s8 %v1725
      %v1727 = vlaneseq
      %v1728 = vshrl.u32 %v1727, 7
      %v1729 = vsub.s32 %v1726, %v1728
      %v1730 = vrot.slane %v1722, %v1729
      %v1732 = vunpack.c.l.s4 1966171168
      %v1733 = vunpack.c.0.s8 %v1732
      %v1734 = vlaneseq
      %v1735 = vshrl.u32 %v1734, 7
      %v1736 = vsub.s32 %v1733, %v1735
      %v1737 = vrot.slane %v1723, %v1736
      %v1738 = vcombine.high %v1730, %v1730
      %v1739 = vcombine.high %v1737, %v1737
      %v1741 = vunpack.c.l.s4 1966171168
      %v1742 = vunpack.c.0.s8 %v1741
      %v1743 = vlaneseq
      %v1744 = vshrl.u32 %v1743, 7
      %v1745 = vsub.s32 %v1742, %v1744
      %v1746 = vrot.slane %v701, %v1745
      %v1748 = vunpack.c.l.s4 1966171168
      %v1749 = vunpack.c.0.s8 %v1748
      %v1750 = vlaneseq
      %v1751 = vshrl.u32 %v1750, 7
      %v1752 = vsub.s32 %v1749, %v1751
      %v1753 = vrot.slane %v1746, %v1752
      %v1755 = vunpack.c.l.s4 1966171168
      %v1756 = vunpack.c.0.s8 %v1755
      %v1757 = vlaneseq
      %v1758 = vshrl.u32 %v1757, 7
      %v1759 = vsub.s32 %v1756, %v1758
      %v1760 = vrot.slane %v702, %v1759
      %v1761 = vcombine.high %v1760, %v1760
      %v1763 = vunpack.c.l.s4 1966171168
      %v1764 = vunpack.c.0.s8 %v1763
      %v1765 = vlaneseq
      %v1766 = vshrl.u32 %v1765, 7
      %v1767 = vsub.s32 %v1764, %v1766
      %v1768 = vrot.slane %v1760, %v1767
      %v1770 = vunpack.c.l.s4 1966171168
      %v1771 = vunpack.c.0.s8 %v1770
      %v1772 = vlaneseq
      %v1773 = vshrl.u32 %v1772, 7
      %v1774 = vsub.s32 %v1771, %v1773
      %v1775 = vrot.slane %v1761, %v1774
      %v1776 = vcombine.high %v1768, %v1768
      %v1777 = vcombine.high %v1775, %v1775
      %v1779 = vunpack.c.l.s4 1966171168
      %v1780 = vunpack.c.0.s8 %v1779
      %v1781 = vlaneseq
      %v1782 = vshrl.u32 %v1781, 7
      %v1783 = vsub.s32 %v1780, %v1782
      %v1784 = vrot.slane %v703, %v1783
      %v1785 = vcombine.high %v1784, %v1784
      %v1787 = vunpack.c.l.s4 1966171168
      %v1788 = vunpack.c.0.s8 %v1787
      %v1789 = vlaneseq
      %v1790 = vshrl.u32 %v1789, 7
      %v1791 = vsub.s32 %v1788, %v1790
      %v1792 = vrot.slane %v1784, %v1791
      %v1794 = vunpack.c.l.s4 1966171168
      %v1795 = vunpack.c.0.s8 %v1794
      %v1796 = vlaneseq
      %v1797 = vshrl.u32 %v1796, 7
      %v1798 = vsub.s32 %v1795, %v1797
      %v1799 = vrot.slane %v1785, %v1798
      %v1800 = vcombine.high %v1792, %v1792
      %v1801 = vcombine.high %v1799, %v1799
      %v1803 = vunpack.c.l.s4 1966171168
      %v1804 = vunpack.c.0.s8 %v1803
      %v1805 = vlaneseq
      %v1806 = vshrl.u32 %v1805, 7
      %v1807 = vsub.s32 %v1804, %v1806
      %v1808 = vrot.slane %v704, %v1807
      %v1810 = vunpack.c.l.s4 1966171168
      %v1811 = vunpack.c.0.s8 %v1810
      %v1812 = vlaneseq
      %v1813 = vshrl.u32 %v1812, 7
      %v1814 = vsub.s32 %v1811, %v1813
      %v1815 = vrot.slane %v1808, %v1814
      %v1817 = vunpack.c.l.s4 1966171168
      %v1818 = vunpack.c.0.s8 %v1817
      %v1819 = vlaneseq
      %v1820 = vshrl.u32 %v1819, 7
      %v1821 = vsub.s32 %v1818, %v1820
      %v1822 = vrot.slane %v705, %v1821
      %v1823 = vcombine.high %v1822, %v1822
      %v1825 = vunpack.c.l.s4 1966171168
      %v1826 = vunpack.c.0.s8 %v1825
      %v1827 = vlaneseq
      %v1828 = vshrl.u32 %v1827, 7
      %v1829 = vsub.s32 %v1826, %v1828
      %v1830 = vrot.slane %v1822, %v1829
      %v1832 = vunpack.c.l.s4 1966171168
      %v1833 = vunpack.c.0.s8 %v1832
      %v1834 = vlaneseq
      %v1835 = vshrl.u32 %v1834, 7
      %v1836 = vsub.s32 %v1833, %v1835
      %v1837 = vrot.slane %v1823, %v1836
      %v1838 = vcombine.high %v1830, %v1830
      %v1839 = vcombine.high %v1837, %v1837
      %v1841 = vunpack.c.l.s4 1966171168
      %v1842 = vunpack.c.0.s8 %v1841
      %v1843 = vlaneseq
      %v1844 = vshrl.u32 %v1843, 7
      %v1845 = vsub.s32 %v1842, %v1844
      %v1846 = vrot.slane %v706, %v1845
      %v1847 = vcombine.high %v1846, %v1846
      %v1849 = vunpack.c.l.s4 1966171168
      %v1850 = vunpack.c.0.s8 %v1849
      %v1851 = vlaneseq
      %v1852 = vshrl.u32 %v1851, 7
      %v1853 = vsub.s32 %v1850, %v1852
      %v1854 = vrot.slane %v1846, %v1853
      %v1856 = vunpack.c.l.s4 1966171168
      %v1857 = vunpack.c.0.s8 %v1856
      %v1858 = vlaneseq
      %v1859 = vshrl.u32 %v1858, 7
      %v1860 = vsub.s32 %v1857, %v1859
      %v1861 = vrot.slane %v1847, %v1860
      %v1862 = vcombine.high %v1854, %v1854
      %v1863 = vcombine.high %v1861, %v1861
      %v1865 = vunpack.c.l.s4 1966171168
      %v1866 = vunpack.c.0.s8 %v1865
      %v1867 = vlaneseq
      %v1868 = vshrl.u32 %v1867, 7
      %v1869 = vsub.s32 %v1866, %v1868
      %v1870 = vrot.slane %v707, %v1869
      %v1872 = vunpack.c.l.s4 1966171168
      %v1873 = vunpack.c.0.s8 %v1872
      %v1874 = vlaneseq
      %v1875 = vshrl.u32 %v1874, 7
      %v1876 = vsub.s32 %v1873, %v1875
      %v1877 = vrot.slane %v1870, %v1876
      %v1878 = vld [vmem:[%s1] sm:$0x3]
      %v1879 = vcombine.low %v776, %v783
      %v1880 = vcombine.low %v784, %v785
      %v1881 = vcombine.low %v800, %v807
      %v1882 = vcombine.low %v808, %v809
      %v1884 = vunpack.c.l.s4 1966171168
      %v1885 = vunpack.c.0.s8 %v1884
      %v1886 = vlaneseq
      %v1887 = vshrl.u32 %v1886, 7
      %v1888 = vsub.s32 %v1885, %v1887
      %v1889 = vrot.slane %v1879, %v1888
      %v1891 = vunpack.c.l.s4 1966171168
      %v1892 = vunpack.c.0.s8 %v1891
      %v1893 = vlaneseq
      %v1894 = vshrl.u32 %v1893, 7
      %v1895 = vsub.s32 %v1892, %v1894
      %v1896 = vrot.slane %v1880, %v1895
      %v1898 = vunpack.c.l.s4 1966171168
      %v1899 = vunpack.c.0.s8 %v1898
      %v1900 = vlaneseq
      %v1901 = vshrl.u32 %v1900, 7
      %v1902 = vsub.s32 %v1899, %v1901
      %v1903 = vrot.slane %v1881, %v1902
      %v1905 = vunpack.c.l.s4 1966171168
      %v1906 = vunpack.c.0.s8 %v1905
      %v1907 = vlaneseq
      %v1908 = vshrl.u32 %v1907, 7
      %v1909 = vsub.s32 %v1906, %v1908
      %v1910 = vrot.slane %v1882, %v1909
      %v1911 = vcombine.low %v1889, %v1896
      %v1912 = vcombine.low %v1903, %v1910
      %v1914 = vunpack.c.l.s4 1966171168
      %v1915 = vunpack.c.0.s8 %v1914
      %v1916 = vlaneseq
      %v1917 = vshrl.u32 %v1916, 7
      %v1918 = vsub.s32 %v1915, %v1917
      %v1919 = vrot.slane %v1911, %v1918
      %v1921 = vunpack.c.l.s4 1966171168
      %v1922 = vunpack.c.0.s8 %v1921
      %v1923 = vlaneseq
      %v1924 = vshrl.u32 %v1923, 7
      %v1925 = vsub.s32 %v1922, %v1924
      %v1926 = vrot.slane %v1912, %v1925
      %v1927 = vcombine.low %v1919, %v1926
      %v1928 = vcombine.low %v823, %v838
      %v1929 = vcombine.low %v845, %v846
      %v1930 = vcombine.low %v847, %v862
      %v1931 = vcombine.low %v869, %v870
      %v1933 = vunpack.c.l.s4 1966171168
      %v1934 = vunpack.c.0.s8 %v1933
      %v1935 = vlaneseq
      %v1936 = vshrl.u32 %v1935, 7
      %v1937 = vsub.s32 %v1934, %v1936
      %v1938 = vrot.slane %v1928, %v1937
      %v1940 = vunpack.c.l.s4 1966171168
      %v1941 = vunpack.c.0.s8 %v1940
      %v1942 = vlaneseq
      %v1943 = vshrl.u32 %v1942, 7
      %v1944 = vsub.s32 %v1941, %v1943
      %v1945 = vrot.slane %v1929, %v1944
      %v1947 = vunpack.c.l.s4 1966171168
      %v1948 = vunpack.c.0.s8 %v1947
      %v1949 = vlaneseq
      %v1950 = vshrl.u32 %v1949, 7
      %v1951 = vsub.s32 %v1948, %v1950
      %v1952 = vrot.slane %v1930, %v1951
      %v1954 = vunpack.c.l.s4 1966171168
      %v1955 = vunpack.c.0.s8 %v1954
      %v1956 = vlaneseq
      %v1957 = vshrl.u32 %v1956, 7
      %v1958 = vsub.s32 %v1955, %v1957
      %v1959 = vrot.slane %v1931, %v1958
      %v1960 = vcombine.low %v1938, %v1945
      %v1961 = vcombine.low %v1952, %v1959
      %v1963 = vunpack.c.l.s4 1966171168
      %v1964 = vunpack.c.0.s8 %v1963
      %v1965 = vlaneseq
      %v1966 = vshrl.u32 %v1965, 7
      %v1967 = vsub.s32 %v1964, %v1966
      %v1968 = vrot.slane %v1960, %v1967
      %v1970 = vunpack.c.l.s4 1966171168
      %v1971 = vunpack.c.0.s8 %v1970
      %v1972 = vlaneseq
      %v1973 = vshrl.u32 %v1972, 7
      %v1974 = vsub.s32 %v1971, %v1973
      %v1975 = vrot.slane %v1961, %v1974
      %v1976 = vcombine.low %v1968, %v1975
      %v1977 = vcombine.low %v871, %v885
      %v1978 = vcombine.low %v900, %v907
      %v1979 = vcombine.low %v908, %v909
      %v1980 = vcombine.low %v924, %v931
      %v1982 = vunpack.c.l.s4 1966171168
      %v1983 = vunpack.c.0.s8 %v1982
      %v1984 = vlaneseq
      %v1985 = vshrl.u32 %v1984, 7
      %v1986 = vsub.s32 %v1983, %v1985
      %v1987 = vrot.slane %v1977, %v1986
      %v1989 = vunpack.c.l.s4 1966171168
      %v1990 = vunpack.c.0.s8 %v1989
      %v1991 = vlaneseq
      %v1992 = vshrl.u32 %v1991, 7
      %v1993 = vsub.s32 %v1990, %v1992
      %v1994 = vrot.slane %v1978, %v1993
      %v1996 = vunpack.c.l.s4 1966171168
      %v1997 = vunpack.c.0.s8 %v1996
      %v1998 = vlaneseq
      %v1999 = vshrl.u32 %v1998, 7
      %v2000 = vsub.s32 %v1997, %v1999
      %v2001 = vrot.slane %v1979, %v2000
      %v2003 = vunpack.c.l.s4 1966171168
      %v2004 = vunpack.c.0.s8 %v2003
      %v2005 = vlaneseq
      %v2006 = vshrl.u32 %v2005, 7
      %v2007 = vsub.s32 %v2004, %v2006
      %v2008 = vrot.slane %v1980, %v2007
      %v2009 = vcombine.low %v1987, %v1994
      %v2010 = vcombine.low %v2001, %v2008
      %v2012 = vunpack.c.l.s4 1966171168
      %v2013 = vunpack.c.0.s8 %v2012
      %v2014 = vlaneseq
      %v2015 = vshrl.u32 %v2014, 7
      %v2016 = vsub.s32 %v2013, %v2015
      %v2017 = vrot.slane %v2009, %v2016
      %v2019 = vunpack.c.l.s4 1966171168
      %v2020 = vunpack.c.0.s8 %v2019
      %v2021 = vlaneseq
      %v2022 = vshrl.u32 %v2021, 7
      %v2023 = vsub.s32 %v2020, %v2022
      %v2024 = vrot.slane %v2010, %v2023
      %v2025 = vcombine.low %v2017, %v2024
      %v2026 = vcombine.low %v932, %v933
      %v2027 = vcombine.low %v947, %v962
      %v2028 = vcombine.low %v969, %v970
      %v2029 = vcombine.low %v971, %v986
      %v2031 = vunpack.c.l.s4 1966171168
      %v2032 = vunpack.c.0.s8 %v2031
      %v2033 = vlaneseq
      %v2034 = vshrl.u32 %v2033, 7
      %v2035 = vsub.s32 %v2032, %v2034
      %v2036 = vrot.slane %v2026, %v2035
      %v2038 = vunpack.c.l.s4 1966171168
      %v2039 = vunpack.c.0.s8 %v2038
      %v2040 = vlaneseq
      %v2041 = vshrl.u32 %v2040, 7
      %v2042 = vsub.s32 %v2039, %v2041
      %v2043 = vrot.slane %v2027, %v2042
      %v2045 = vunpack.c.l.s4 1966171168
      %v2046 = vunpack.c.0.s8 %v2045
      %v2047 = vlaneseq
      %v2048 = vshrl.u32 %v2047, 7
      %v2049 = vsub.s32 %v2046, %v2048
      %v2050 = vrot.slane %v2028, %v2049
      %v2052 = vunpack.c.l.s4 1966171168
      %v2053 = vunpack.c.0.s8 %v2052
      %v2054 = vlaneseq
      %v2055 = vshrl.u32 %v2054, 7
      %v2056 = vsub.s32 %v2053, %v2055
      %v2057 = vrot.slane %v2029, %v2056
      %v2058 = vcombine.low %v2036, %v2043
      %v2059 = vcombine.low %v2050, %v2057
      %v2061 = vunpack.c.l.s4 1966171168
      %v2062 = vunpack.c.0.s8 %v2061
      %v2063 = vlaneseq
      %v2064 = vshrl.u32 %v2063, 7
      %v2065 = vsub.s32 %v2062, %v2064
      %v2066 = vrot.slane %v2058, %v2065
      %v2068 = vunpack.c.l.s4 1966171168
      %v2069 = vunpack.c.0.s8 %v2068
      %v2070 = vlaneseq
      %v2071 = vshrl.u32 %v2070, 7
      %v2072 = vsub.s32 %v2069, %v2071
      %v2073 = vrot.slane %v2059, %v2072
      %v2074 = vcombine.low %v2066, %v2073
      %v2075 = vcombine.low %v993, %v994
      %v2076 = vcombine.low %v995, %v1009
      %v2077 = vcombine.low %v1024, %v1031
      %v2078 = vcombine.low %v1032, %v1033
      %v2080 = vunpack.c.l.s4 1966171168
      %v2081 = vunpack.c.0.s8 %v2080
      %v2082 = vlaneseq
      %v2083 = vshrl.u32 %v2082, 7
      %v2084 = vsub.s32 %v2081, %v2083
      %v2085 = vrot.slane %v2075, %v2084
      %v2087 = vunpack.c.l.s4 1966171168
      %v2088 = vunpack.c.0.s8 %v2087
      %v2089 = vlaneseq
      %v2090 = vshrl.u32 %v2089, 7
      %v2091 = vsub.s32 %v2088, %v2090
      %v2092 = vrot.slane %v2076, %v2091
      %v2094 = vunpack.c.l.s4 1966171168
      %v2095 = vunpack.c.0.s8 %v2094
      %v2096 = vlaneseq
      %v2097 = vshrl.u32 %v2096, 7
      %v2098 = vsub.s32 %v2095, %v2097
      %v2099 = vrot.slane %v2077, %v2098
      %v2101 = vunpack.c.l.s4 1966171168
      %v2102 = vunpack.c.0.s8 %v2101
      %v2103 = vlaneseq
      %v2104 = vshrl.u32 %v2103, 7
      %v2105 = vsub.s32 %v2102, %v2104
      %v2106 = vrot.slane %v2078, %v2105
      %v2107 = vcombine.low %v2085, %v2092
      %v2108 = vcombine.low %v2099, %v2106
      %v2110 = vunpack.c.l.s4 1966171168
      %v2111 = vunpack.c.0.s8 %v2110
      %v2112 = vlaneseq
      %v2113 = vshrl.u32 %v2112, 7
      %v2114 = vsub.s32 %v2111, %v2113
      %v2115 = vrot.slane %v2107, %v2114
      %v2117 = vunpack.c.l.s4 1966171168
      %v2118 = vunpack.c.0.s8 %v2117
      %v2119 = vlaneseq
      %v2120 = vshrl.u32 %v2119, 7
      %v2121 = vsub.s32 %v2118, %v2120
      %v2122 = vrot.slane %v2108, %v2121
      %v2123 = vcombine.low %v2115, %v2122
      %v2124 = vcombine.low %v1048, %v1055
      %v2125 = vcombine.low %v1056, %v1057
      %v2126 = vcombine.low %v1071, %v1086
      %v2127 = vcombine.low %v1093, %v1094
      %v2129 = vunpack.c.l.s4 1966171168
      %v2130 = vunpack.c.0.s8 %v2129
      %v2131 = vlaneseq
      %v2132 = vshrl.u32 %v2131, 7
      %v2133 = vsub.s32 %v2130, %v2132
      %v2134 = vrot.slane %v2124, %v2133
      %v2136 = vunpack.c.l.s4 1966171168
      %v2137 = vunpack.c.0.s8 %v2136
      %v2138 = vlaneseq
      %v2139 = vshrl.u32 %v2138, 7
      %v2140 = vsub.s32 %v2137, %v2139
      %v2141 = vrot.slane %v2125, %v2140
      %v2143 = vunpack.c.l.s4 1966171168
      %v2144 = vunpack.c.0.s8 %v2143
      %v2145 = vlaneseq
      %v2146 = vshrl.u32 %v2145, 7
      %v2147 = vsub.s32 %v2144, %v2146
      %v2148 = vrot.slane %v2126, %v2147
      %v2150 = vunpack.c.l.s4 1966171168
      %v2151 = vunpack.c.0.s8 %v2150
      %v2152 = vlaneseq
      %v2153 = vshrl.u32 %v2152, 7
      %v2154 = vsub.s32 %v2151, %v2153
      %v2155 = vrot.slane %v2127, %v2154
      %v2156 = vcombine.low %v2134, %v2141
      %v2157 = vcombine.low %v2148, %v2155
      %v2159 = vunpack.c.l.s4 1966171168
      %v2160 = vunpack.c.0.s8 %v2159
      %v2161 = vlaneseq
      %v2162 = vshrl.u32 %v2161, 7
      %v2163 = vsub.s32 %v2160, %v2162
      %v2164 = vrot.slane %v2156, %v2163
      %v2166 = vunpack.c.l.s4 1966171168
      %v2167 = vunpack.c.0.s8 %v2166
      %v2168 = vlaneseq
      %v2169 = vshrl.u32 %v2168, 7
      %v2170 = vsub.s32 %v2167, %v2169
      %v2171 = vrot.slane %v2157, %v2170
      %v2172 = vcombine.low %v2164, %v2171
      %v2173 = vcombine.low %v1095, %v1110
      %v2174 = vcombine.low %v1117, %v1118
      %v2175 = vcombine.low %v1119, %v1133
      %v2176 = vcombine.low %v1148, %v1155
      %v2178 = vunpack.c.l.s4 1966171168
      %v2179 = vunpack.c.0.s8 %v2178
      %v2180 = vlaneseq
      %v2181 = vshrl.u32 %v2180, 7
      %v2182 = vsub.s32 %v2179, %v2181
      %v2183 = vrot.slane %v2173, %v2182
      %v2185 = vunpack.c.l.s4 1966171168
      %v2186 = vunpack.c.0.s8 %v2185
      %v2187 = vlaneseq
      %v2188 = vshrl.u32 %v2187, 7
      %v2189 = vsub.s32 %v2186, %v2188
      %v2190 = vrot.slane %v2174, %v2189
      %v2192 = vunpack.c.l.s4 1966171168
      %v2193 = vunpack.c.0.s8 %v2192
      %v2194 = vlaneseq
      %v2195 = vshrl.u32 %v2194, 7
      %v2196 = vsub.s32 %v2193, %v2195
      %v2197 = vrot.slane %v2175, %v2196
      %v2199 = vunpack.c.l.s4 1966171168
      %v2200 = vunpack.c.0.s8 %v2199
      %v2201 = vlaneseq
      %v2202 = vshrl.u32 %v2201, 7
      %v2203 = vsub.s32 %v2200, %v2202
      %v2204 = vrot.slane %v2176, %v2203
      %v2205 = vcombine.low %v2183, %v2190
      %v2206 = vcombine.low %v2197, %v2204
      %v2208 = vunpack.c.l.s4 1966171168
      %v2209 = vunpack.c.0.s8 %v2208
      %v2210 = vlaneseq
      %v2211 = vshrl.u32 %v2210, 7
      %v2212 = vsub.s32 %v2209, %v2211
      %v2213 = vrot.slane %v2205, %v2212
      %v2215 = vunpack.c.l.s4 1966171168
      %v2216 = vunpack.c.0.s8 %v2215
      %v2217 = vlaneseq
      %v2218 = vshrl.u32 %v2217, 7
      %v2219 = vsub.s32 %v2216, %v2218
      %v2220 = vrot.slane %v2206, %v2219
      %v2221 = vcombine.low %v2213, %v2220
      %v2222 = vcombine.low %v1156, %v1157
      %v2223 = vcombine.low %v1172, %v1179
      %v2224 = vcombine.low %v1180, %v1181
      %v2225 = vcombine.low %v1195, %v1210
      %v2227 = vunpack.c.l.s4 1966171168
      %v2228 = vunpack.c.0.s8 %v2227
      %v2229 = vlaneseq
      %v2230 = vshrl.u32 %v2229, 7
      %v2231 = vsub.s32 %v2228, %v2230
      %v2232 = vrot.slane %v2222, %v2231
      %v2234 = vunpack.c.l.s4 1966171168
      %v2235 = vunpack.c.0.s8 %v2234
      %v2236 = vlaneseq
      %v2237 = vshrl.u32 %v2236, 7
      %v2238 = vsub.s32 %v2235, %v2237
      %v2239 = vrot.slane %v2223, %v2238
      %v2241 = vunpack.c.l.s4 1966171168
      %v2242 = vunpack.c.0.s8 %v2241
      %v2243 = vlaneseq
      %v2244 = vshrl.u32 %v2243, 7
      %v2245 = vsub.s32 %v2242, %v2244
      %v2246 = vrot.slane %v2224, %v2245
      %v2248 = vunpack.c.l.s4 1966171168
      %v2249 = vunpack.c.0.s8 %v2248
      %v2250 = vlaneseq
      %v2251 = vshrl.u32 %v2250, 7
      %v2252 = vsub.s32 %v2249, %v2251
      %v2253 = vrot.slane %v2225, %v2252
      %v2254 = vcombine.low %v2232, %v2239
      %v2255 = vcombine.low %v2246, %v2253
      %v2257 = vunpack.c.l.s4 1966171168
      %v2258 = vunpack.c.0.s8 %v2257
      %v2259 = vlaneseq
      %v2260 = vshrl.u32 %v2259, 7
      %v2261 = vsub.s32 %v2258, %v2260
      %v2262 = vrot.slane %v2254, %v2261
      %v2264 = vunpack.c.l.s4 1966171168
      %v2265 = vunpack.c.0.s8 %v2264
      %v2266 = vlaneseq
      %v2267 = vshrl.u32 %v2266, 7
      %v2268 = vsub.s32 %v2265, %v2267
      %v2269 = vrot.slane %v2255, %v2268
      %v2270 = vcombine.low %v2262, %v2269
      %v2271 = vcombine.low %v1217, %v1218
      %v2272 = vcombine.low %v1219, %v1234
      %v2273 = vcombine.low %v1241, %v1242
      %v2274 = vcombine.low %v1243, %v1257
      %v2276 = vunpack.c.l.s4 1966171168
      %v2277 = vunpack.c.0.s8 %v2276
      %v2278 = vlaneseq
      %v2279 = vshrl.u32 %v2278, 7
      %v2280 = vsub.s32 %v2277, %v2279
      %v2281 = vrot.slane %v2271, %v2280
      %v2283 = vunpack.c.l.s4 1966171168
      %v2284 = vunpack.c.0.s8 %v2283
      %v2285 = vlaneseq
      %v2286 = vshrl.u32 %v2285, 7
      %v2287 = vsub.s32 %v2284, %v2286
      %v2288 = vrot.slane %v2272, %v2287
      %v2290 = vunpack.c.l.s4 1966171168
      %v2291 = vunpack.c.0.s8 %v2290
      %v2292 = vlaneseq
      %v2293 = vshrl.u32 %v2292, 7
      %v2294 = vsub.s32 %v2291, %v2293
      %v2295 = vrot.slane %v2273, %v2294
      %v2297 = vunpack.c.l.s4 1966171168
      %v2298 = vunpack.c.0.s8 %v2297
      %v2299 = vlaneseq
      %v2300 = vshrl.u32 %v2299, 7
      %v2301 = vsub.s32 %v2298, %v2300
      %v2302 = vrot.slane %v2274, %v2301
      %v2303 = vcombine.low %v2281, %v2288
      %v2304 = vcombine.low %v2295, %v2302
      %v2306 = vunpack.c.l.s4 1966171168
      %v2307 = vunpack.c.0.s8 %v2306
      %v2308 = vlaneseq
      %v2309 = vshrl.u32 %v2308, 7
      %v2310 = vsub.s32 %v2307, %v2309
      %v2311 = vrot.slane %v2303, %v2310
      %v2313 = vunpack.c.l.s4 1966171168
      %v2314 = vunpack.c.0.s8 %v2313
      %v2315 = vlaneseq
      %v2316 = vshrl.u32 %v2315, 7
      %v2317 = vsub.s32 %v2314, %v2316
      %v2318 = vrot.slane %v2304, %v2317
      %v2319 = vcombine.low %v2311, %v2318
      %v2320 = vcombine.low %v1272, %v1279
      %v2321 = vcombine.low %v1280, %v1281
      %v2322 = vcombine.low %v1296, %v1303
      %v2323 = vcombine.low %v1304, %v1305
      %v2325 = vunpack.c.l.s4 1966171168
      %v2326 = vunpack.c.0.s8 %v2325
      %v2327 = vlaneseq
      %v2328 = vshrl.u32 %v2327, 7
      %v2329 = vsub.s32 %v2326, %v2328
      %v2330 = vrot.slane %v2320, %v2329
      %v2332 = vunpack.c.l.s4 1966171168
      %v2333 = vunpack.c.0.s8 %v2332
      %v2334 = vlaneseq
      %v2335 = vshrl.u32 %v2334, 7
      %v2336 = vsub.s32 %v2333, %v2335
      %v2337 = vrot.slane %v2321, %v2336
      %v2339 = vunpack.c.l.s4 1966171168
      %v2340 = vunpack.c.0.s8 %v2339
      %v2341 = vlaneseq
      %v2342 = vshrl.u32 %v2341, 7
      %v2343 = vsub.s32 %v2340, %v2342
      %v2344 = vrot.slane %v2322, %v2343
      %v2346 = vunpack.c.l.s4 1966171168
      %v2347 = vunpack.c.0.s8 %v2346
      %v2348 = vlaneseq
      %v2349 = vshrl.u32 %v2348, 7
      %v2350 = vsub.s32 %v2347, %v2349
      %v2351 = vrot.slane %v2323, %v2350
      %v2352 = vcombine.low %v2330, %v2337
      %v2353 = vcombine.low %v2344, %v2351
      %v2355 = vunpack.c.l.s4 1966171168
      %v2356 = vunpack.c.0.s8 %v2355
      %v2357 = vlaneseq
      %v2358 = vshrl.u32 %v2357, 7
      %v2359 = vsub.s32 %v2356, %v2358
      %v2360 = vrot.slane %v2352, %v2359
      %v2362 = vunpack.c.l.s4 1966171168
      %v2363 = vunpack.c.0.s8 %v2362
      %v2364 = vlaneseq
      %v2365 = vshrl.u32 %v2364, 7
      %v2366 = vsub.s32 %v2363, %v2365
      %v2367 = vrot.slane %v2353, %v2366
      %v2368 = vcombine.low %v2360, %v2367
      %v2369 = vcombine.low %v1319, %v1334
      %v2370 = vcombine.low %v1341, %v1342
      %v2371 = vcombine.low %v1343, %v1358
      %v2372 = vcombine.low %v1365, %v1366
      %v2374 = vunpack.c.l.s4 1966171168
      %v2375 = vunpack.c.0.s8 %v2374
      %v2376 = vlaneseq
      %v2377 = vshrl.u32 %v2376, 7
      %v2378 = vsub.s32 %v2375, %v2377
      %v2379 = vrot.slane %v2369, %v2378
      %v2381 = vunpack.c.l.s4 1966171168
      %v2382 = vunpack.c.0.s8 %v2381
      %v2383 = vlaneseq
      %v2384 = vshrl.u32 %v2383, 7
      %v2385 = vsub.s32 %v2382, %v2384
      %v2386 = vrot.slane %v2370, %v2385
      %v2388 = vunpack.c.l.s4 1966171168
      %v2389 = vunpack.c.0.s8 %v2388
      %v2390 = vlaneseq
      %v2391 = vshrl.u32 %v2390, 7
      %v2392 = vsub.s32 %v2389, %v2391
      %v2393 = vrot.slane %v2371, %v2392
      %v2395 = vunpack.c.l.s4 1966171168
      %v2396 = vunpack.c.0.s8 %v2395
      %v2397 = vlaneseq
      %v2398 = vshrl.u32 %v2397, 7
      %v2399 = vsub.s32 %v2396, %v2398
      %v2400 = vrot.slane %v2372, %v2399
      %v2401 = vcombine.low %v2379, %v2386
      %v2402 = vcombine.low %v2393, %v2400
      %v2404 = vunpack.c.l.s4 1966171168
      %v2405 = vunpack.c.0.s8 %v2404
      %v2406 = vlaneseq
      %v2407 = vshrl.u32 %v2406, 7
      %v2408 = vsub.s32 %v2405, %v2407
      %v2409 = vrot.slane %v2401, %v2408
      %v2411 = vunpack.c.l.s4 1966171168
      %v2412 = vunpack.c.0.s8 %v2411
      %v2413 = vlaneseq
      %v2414 = vshrl.u32 %v2413, 7
      %v2415 = vsub.s32 %v2412, %v2414
      %v2416 = vrot.slane %v2402, %v2415
      %v2417 = vcombine.low %v2409, %v2416
      %v2418 = vcombine.low %v1367, %v1381
      %v2419 = vcombine.low %v1396, %v1403
      %v2420 = vcombine.low %v1404, %v1405
      %v2421 = vcombine.low %v1420, %v1427
      %v2423 = vunpack.c.l.s4 1966171168
      %v2424 = vunpack.c.0.s8 %v2423
      %v2425 = vlaneseq
      %v2426 = vshrl.u32 %v2425, 7
      %v2427 = vsub.s32 %v2424, %v2426
      %v2428 = vrot.slane %v2418, %v2427
      %v2430 = vunpack.c.l.s4 1966171168
      %v2431 = vunpack.c.0.s8 %v2430
      %v2432 = vlaneseq
      %v2433 = vshrl.u32 %v2432, 7
      %v2434 = vsub.s32 %v2431, %v2433
      %v2435 = vrot.slane %v2419, %v2434
      %v2437 = vunpack.c.l.s4 1966171168
      %v2438 = vunpack.c.0.s8 %v2437
      %v2439 = vlaneseq
      %v2440 = vshrl.u32 %v2439, 7
      %v2441 = vsub.s32 %v2438, %v2440
      %v2442 = vrot.slane %v2420, %v2441
      %v2444 = vunpack.c.l.s4 1966171168
      %v2445 = vunpack.c.0.s8 %v2444
      %v2446 = vlaneseq
      %v2447 = vshrl.u32 %v2446, 7
      %v2448 = vsub.s32 %v2445, %v2447
      %v2449 = vrot.slane %v2421, %v2448
      %v2450 = vcombine.low %v2428, %v2435
      %v2451 = vcombine.low %v2442, %v2449
      %v2453 = vunpack.c.l.s4 1966171168
      %v2454 = vunpack.c.0.s8 %v2453
      %v2455 = vlaneseq
      %v2456 = vshrl.u32 %v2455, 7
      %v2457 = vsub.s32 %v2454, %v2456
      %v2458 = vrot.slane %v2450, %v2457
      %v2460 = vunpack.c.l.s4 1966171168
      %v2461 = vunpack.c.0.s8 %v2460
      %v2462 = vlaneseq
      %v2463 = vshrl.u32 %v2462, 7
      %v2464 = vsub.s32 %v2461, %v2463
      %v2465 = vrot.slane %v2451, %v2464
      %v2466 = vcombine.low %v2458, %v2465
      %v2467 = vcombine.low %v1428, %v1429
      %v2468 = vcombine.low %v1443, %v1458
      %v2469 = vcombine.low %v1465, %v1466
      %v2470 = vcombine.low %v1467, %v1482
      %v2472 = vunpack.c.l.s4 1966171168
      %v2473 = vunpack.c.0.s8 %v2472
      %v2474 = vlaneseq
      %v2475 = vshrl.u32 %v2474, 7
      %v2476 = vsub.s32 %v2473, %v2475
      %v2477 = vrot.slane %v2467, %v2476
      %v2479 = vunpack.c.l.s4 1966171168
      %v2480 = vunpack.c.0.s8 %v2479
      %v2481 = vlaneseq
      %v2482 = vshrl.u32 %v2481, 7
      %v2483 = vsub.s32 %v2480, %v2482
      %v2484 = vrot.slane %v2468, %v2483
      %v2486 = vunpack.c.l.s4 1966171168
      %v2487 = vunpack.c.0.s8 %v2486
      %v2488 = vlaneseq
      %v2489 = vshrl.u32 %v2488, 7
      %v2490 = vsub.s32 %v2487, %v2489
      %v2491 = vrot.slane %v2469, %v2490
      %v2493 = vunpack.c.l.s4 1966171168
      %v2494 = vunpack.c.0.s8 %v2493
      %v2495 = vlaneseq
      %v2496 = vshrl.u32 %v2495, 7
      %v2497 = vsub.s32 %v2494, %v2496
      %v2498 = vrot.slane %v2470, %v2497
      %v2499 = vcombine.low %v2477, %v2484
      %v2500 = vcombine.low %v2491, %v2498
      %v2502 = vunpack.c.l.s4 1966171168
      %v2503 = vunpack.c.0.s8 %v2502
      %v2504 = vlaneseq
      %v2505 = vshrl.u32 %v2504, 7
      %v2506 = vsub.s32 %v2503, %v2505
      %v2507 = vrot.slane %v2499, %v2506
      %v2509 = vunpack.c.l.s4 1966171168
      %v2510 = vunpack.c.0.s8 %v2509
      %v2511 = vlaneseq
      %v2512 = vshrl.u32 %v2511, 7
      %v2513 = vsub.s32 %v2510, %v2512
      %v2514 = vrot.slane %v2500, %v2513
      %v2515 = vcombine.low %v2507, %v2514
      %v2516 = vcombine.low %v1489, %v1490
      %v2517 = vcombine.low %v1491, %v1505
      %v2518 = vcombine.low %v1520, %v1527
      %v2519 = vcombine.low %v1528, %v1529
      %v2521 = vunpack.c.l.s4 1966171168
      %v2522 = vunpack.c.0.s8 %v2521
      %v2523 = vlaneseq
      %v2524 = vshrl.u32 %v2523, 7
      %v2525 = vsub.s32 %v2522, %v2524
      %v2526 = vrot.slane %v2516, %v2525
      %v2528 = vunpack.c.l.s4 1966171168
      %v2529 = vunpack.c.0.s8 %v2528
      %v2530 = vlaneseq
      %v2531 = vshrl.u32 %v2530, 7
      %v2532 = vsub.s32 %v2529, %v2531
      %v2533 = vrot.slane %v2517, %v2532
      %v2535 = vunpack.c.l.s4 1966171168
      %v2536 = vunpack.c.0.s8 %v2535
      %v2537 = vlaneseq
      %v2538 = vshrl.u32 %v2537, 7
      %v2539 = vsub.s32 %v2536, %v2538
      %v2540 = vrot.slane %v2518, %v2539
      %v2542 = vunpack.c.l.s4 1966171168
      %v2543 = vunpack.c.0.s8 %v2542
      %v2544 = vlaneseq
      %v2545 = vshrl.u32 %v2544, 7
      %v2546 = vsub.s32 %v2543, %v2545
      %v2547 = vrot.slane %v2519, %v2546
      %v2548 = vcombine.low %v2526, %v2533
      %v2549 = vcombine.low %v2540, %v2547
      %v2551 = vunpack.c.l.s4 1966171168
      %v2552 = vunpack.c.0.s8 %v2551
      %v2553 = vlaneseq
      %v2554 = vshrl.u32 %v2553, 7
      %v2555 = vsub.s32 %v2552, %v2554
      %v2556 = vrot.slane %v2548, %v2555
      %v2558 = vunpack.c.l.s4 1966171168
      %v2559 = vunpack.c.0.s8 %v2558
      %v2560 = vlaneseq
      %v2561 = vshrl.u32 %v2560, 7
      %v2562 = vsub.s32 %v2559, %v2561
      %v2563 = vrot.slane %v2549, %v2562
      %v2564 = vcombine.low %v2556, %v2563
      %v2565 = vcombine.low %v1544, %v1551
      %v2566 = vcombine.low %v1552, %v1553
      %v2567 = vcombine.low %v1567, %v1582
      %v2568 = vcombine.low %v1589, %v1590
      %v2570 = vunpack.c.l.s4 1966171168
      %v2571 = vunpack.c.0.s8 %v2570
      %v2572 = vlaneseq
      %v2573 = vshrl.u32 %v2572, 7
      %v2574 = vsub.s32 %v2571, %v2573
      %v2575 = vrot.slane %v2565, %v2574
      %v2577 = vunpack.c.l.s4 1966171168
      %v2578 = vunpack.c.0.s8 %v2577
      %v2579 = vlaneseq
      %v2580 = vshrl.u32 %v2579, 7
      %v2581 = vsub.s32 %v2578, %v2580
      %v2582 = vrot.slane %v2566, %v2581
      %v2584 = vunpack.c.l.s4 1966171168
      %v2585 = vunpack.c.0.s8 %v2584
      %v2586 = vlaneseq
      %v2587 = vshrl.u32 %v2586, 7
      %v2588 = vsub.s32 %v2585, %v2587
      %v2589 = vrot.slane %v2567, %v2588
      %v2591 = vunpack.c.l.s4 1966171168
      %v2592 = vunpack.c.0.s8 %v2591
      %v2593 = vlaneseq
      %v2594 = vshrl.u32 %v2593, 7
      %v2595 = vsub.s32 %v2592, %v2594
      %v2596 = vrot.slane %v2568, %v2595
      %v2597 = vcombine.low %v2575, %v2582
      %v2598 = vcombine.low %v2589, %v2596
      %v2600 = vunpack.c.l.s4 1966171168
      %v2601 = vunpack.c.0.s8 %v2600
      %v2602 = vlaneseq
      %v2603 = vshrl.u32 %v2602, 7
      %v2604 = vsub.s32 %v2601, %v2603
      %v2605 = vrot.slane %v2597, %v2604
      %v2607 = vunpack.c.l.s4 1966171168
      %v2608 = vunpack.c.0.s8 %v2607
      %v2609 = vlaneseq
      %v2610 = vshrl.u32 %v2609, 7
      %v2611 = vsub.s32 %v2608, %v2610
      %v2612 = vrot.slane %v2598, %v2611
      %v2613 = vcombine.low %v2605, %v2612
      %v2614 = vcombine.low %v1591, %v1606
      %v2615 = vcombine.low %v1613, %v1614
      %v2616 = vcombine.low %v1615, %v1629
      %v2617 = vcombine.low %v1644, %v1651
      %v2619 = vunpack.c.l.s4 1966171168
      %v2620 = vunpack.c.0.s8 %v2619
      %v2621 = vlaneseq
      %v2622 = vshrl.u32 %v2621, 7
      %v2623 = vsub.s32 %v2620, %v2622
      %v2624 = vrot.slane %v2614, %v2623
      %v2626 = vunpack.c.l.s4 1966171168
      %v2627 = vunpack.c.0.s8 %v2626
      %v2628 = vlaneseq
      %v2629 = vshrl.u32 %v2628, 7
      %v2630 = vsub.s32 %v2627, %v2629
      %v2631 = vrot.slane %v2615, %v2630
      %v2633 = vunpack.c.l.s4 1966171168
      %v2634 = vunpack.c.0.s8 %v2633
      %v2635 = vlaneseq
      %v2636 = vshrl.u32 %v2635, 7
      %v2637 = vsub.s32 %v2634, %v2636
      %v2638 = vrot.slane %v2616, %v2637
      %v2640 = vunpack.c.l.s4 1966171168
      %v2641 = vunpack.c.0.s8 %v2640
      %v2642 = vlaneseq
      %v2643 = vshrl.u32 %v2642, 7
      %v2644 = vsub.s32 %v2641, %v2643
      %v2645 = vrot.slane %v2617, %v2644
      %v2646 = vcombine.low %v2624, %v2631
      %v2647 = vcombine.low %v2638, %v2645
      %v2649 = vunpack.c.l.s4 1966171168
      %v2650 = vunpack.c.0.s8 %v2649
      %v2651 = vlaneseq
      %v2652 = vshrl.u32 %v2651, 7
      %v2653 = vsub.s32 %v2650, %v2652
      %v2654 = vrot.slane %v2646, %v2653
      %v2656 = vunpack.c.l.s4 1966171168
      %v2657 = vunpack.c.0.s8 %v2656
      %v2658 = vlaneseq
      %v2659 = vshrl.u32 %v2658, 7
      %v2660 = vsub.s32 %v2657, %v2659
      %v2661 = vrot.slane %v2647, %v2660
      %v2662 = vcombine.low %v2654, %v2661
      %v2663 = vcombine.low %v1652, %v1653
      %v2664 = vcombine.low %v1668, %v1675
      %v2665 = vcombine.low %v1676, %v1677
      %v2666 = vcombine.low %v1691, %v1706
      %v2668 = vunpack.c.l.s4 1966171168
      %v2669 = vunpack.c.0.s8 %v2668
      %v2670 = vlaneseq
      %v2671 = vshrl.u32 %v2670, 7
      %v2672 = vsub.s32 %v2669, %v2671
      %v2673 = vrot.slane %v2663, %v2672
      %v2675 = vunpack.c.l.s4 1966171168
      %v2676 = vunpack.c.0.s8 %v2675
      %v2677 = vlaneseq
      %v2678 = vshrl.u32 %v2677, 7
      %v2679 = vsub.s32 %v2676, %v2678
      %v2680 = vrot.slane %v2664, %v2679
      %v2682 = vunpack.c.l.s4 1966171168
      %v2683 = vunpack.c.0.s8 %v2682
      %v2684 = vlaneseq
      %v2685 = vshrl.u32 %v2684, 7
      %v2686 = vsub.s32 %v2683, %v2685
      %v2687 = vrot.slane %v2665, %v2686
      %v2689 = vunpack.c.l.s4 1966171168
      %v2690 = vunpack.c.0.s8 %v2689
      %v2691 = vlaneseq
      %v2692 = vshrl.u32 %v2691, 7
      %v2693 = vsub.s32 %v2690, %v2692
      %v2694 = vrot.slane %v2666, %v2693
      %v2695 = vcombine.low %v2673, %v2680
      %v2696 = vcombine.low %v2687, %v2694
      %v2698 = vunpack.c.l.s4 1966171168
      %v2699 = vunpack.c.0.s8 %v2698
      %v2700 = vlaneseq
      %v2701 = vshrl.u32 %v2700, 7
      %v2702 = vsub.s32 %v2699, %v2701
      %v2703 = vrot.slane %v2695, %v2702
      %v2705 = vunpack.c.l.s4 1966171168
      %v2706 = vunpack.c.0.s8 %v2705
      %v2707 = vlaneseq
      %v2708 = vshrl.u32 %v2707, 7
      %v2709 = vsub.s32 %v2706, %v2708
      %v2710 = vrot.slane %v2696, %v2709
      %v2711 = vcombine.low %v2703, %v2710
      %v2712 = vcombine.low %v1713, %v1714
      %v2713 = vcombine.low %v1715, %v1730
      %v2714 = vcombine.low %v1737, %v1738
      %v2715 = vcombine.low %v1739, %v1753
      %v2717 = vunpack.c.l.s4 1966171168
      %v2718 = vunpack.c.0.s8 %v2717
      %v2719 = vlaneseq
      %v2720 = vshrl.u32 %v2719, 7
      %v2721 = vsub.s32 %v2718, %v2720
      %v2722 = vrot.slane %v2712, %v2721
      %v2724 = vunpack.c.l.s4 1966171168
      %v2725 = vunpack.c.0.s8 %v2724
      %v2726 = vlaneseq
      %v2727 = vshrl.u32 %v2726, 7
      %v2728 = vsub.s32 %v2725, %v2727
      %v2729 = vrot.slane %v2713, %v2728
      %v2731 = vunpack.c.l.s4 1966171168
      %v2732 = vunpack.c.0.s8 %v2731
      %v2733 = vlaneseq
      %v2734 = vshrl.u32 %v2733, 7
      %v2735 = vsub.s32 %v2732, %v2734
      %v2736 = vrot.slane %v2714, %v2735
      %v2738 = vunpack.c.l.s4 1966171168
      %v2739 = vunpack.c.0.s8 %v2738
      %v2740 = vlaneseq
      %v2741 = vshrl.u32 %v2740, 7
      %v2742 = vsub.s32 %v2739, %v2741
      %v2743 = vrot.slane %v2715, %v2742
      %v2744 = vcombine.low %v2722, %v2729
      %v2745 = vcombine.low %v2736, %v2743
      %v2747 = vunpack.c.l.s4 1966171168
      %v2748 = vunpack.c.0.s8 %v2747
      %v2749 = vlaneseq
      %v2750 = vshrl.u32 %v2749, 7
      %v2751 = vsub.s32 %v2748, %v2750
      %v2752 = vrot.slane %v2744, %v2751
      %v2754 = vunpack.c.l.s4 1966171168
      %v2755 = vunpack.c.0.s8 %v2754
      %v2756 = vlaneseq
      %v2757 = vshrl.u32 %v2756, 7
      %v2758 = vsub.s32 %v2755, %v2757
      %v2759 = vrot.slane %v2745, %v2758
      %v2760 = vcombine.low %v2752, %v2759
      %v2761 = vcombine.low %v1768, %v1775
      %v2762 = vcombine.low %v1776, %v1777
      %v2763 = vcombine.low %v1792, %v1799
      %v2764 = vcombine.low %v1800, %v1801
      %v2766 = vunpack.c.l.s4 1966171168
      %v2767 = vunpack.c.0.s8 %v2766
      %v2768 = vlaneseq
      %v2769 = vshrl.u32 %v2768, 7
      %v2770 = vsub.s32 %v2767, %v2769
      %v2771 = vrot.slane %v2761, %v2770
      %v2773 = vunpack.c.l.s4 1966171168
      %v2774 = vunpack.c.0.s8 %v2773
      %v2775 = vlaneseq
      %v2776 = vshrl.u32 %v2775, 7
      %v2777 = vsub.s32 %v2774, %v2776
      %v2778 = vrot.slane %v2762, %v2777
      %v2780 = vunpack.c.l.s4 1966171168
      %v2781 = vunpack.c.0.s8 %v2780
      %v2782 = vlaneseq
      %v2783 = vshrl.u32 %v2782, 7
      %v2784 = vsub.s32 %v2781, %v2783
      %v2785 = vrot.slane %v2763, %v2784
      %v2787 = vunpack.c.l.s4 1966171168
      %v2788 = vunpack.c.0.s8 %v2787
      %v2789 = vlaneseq
      %v2790 = vshrl.u32 %v2789, 7
      %v2791 = vsub.s32 %v2788, %v2790
      %v2792 = vrot.slane %v2764, %v2791
      %v2793 = vcombine.low %v2771, %v2778
      %v2794 = vcombine.low %v2785, %v2792
      %v2796 = vunpack.c.l.s4 1966171168
      %v2797 = vunpack.c.0.s8 %v2796
      %v2798 = vlaneseq
      %v2799 = vshrl.u32 %v2798, 7
      %v2800 = vsub.s32 %v2797, %v2799
      %v2801 = vrot.slane %v2793, %v2800
      %v2803 = vunpack.c.l.s4 1966171168
      %v2804 = vunpack.c.0.s8 %v2803
      %v2805 = vlaneseq
      %v2806 = vshrl.u32 %v2805, 7
      %v2807 = vsub.s32 %v2804, %v2806
      %v2808 = vrot.slane %v2794, %v2807
      %v2809 = vcombine.low %v2801, %v2808
      %v2810 = vcombine.low %v1815, %v1830
      %v2811 = vcombine.low %v1837, %v1838
      %v2812 = vcombine.low %v1839, %v1854
      %v2813 = vcombine.low %v1861, %v1862
      %v2815 = vunpack.c.l.s4 1966171168
      %v2816 = vunpack.c.0.s8 %v2815
      %v2817 = vlaneseq
      %v2818 = vshrl.u32 %v2817, 7
      %v2819 = vsub.s32 %v2816, %v2818
      %v2820 = vrot.slane %v2810, %v2819
      %v2822 = vunpack.c.l.s4 1966171168
      %v2823 = vunpack.c.0.s8 %v2822
      %v2824 = vlaneseq
      %v2825 = vshrl.u32 %v2824, 7
      %v2826 = vsub.s32 %v2823, %v2825
      %v2827 = vrot.slane %v2811, %v2826
      %v2829 = vunpack.c.l.s4 1966171168
      %v2830 = vunpack.c.0.s8 %v2829
      %v2831 = vlaneseq
      %v2832 = vshrl.u32 %v2831, 7
      %v2833 = vsub.s32 %v2830, %v2832
      %v2834 = vrot.slane %v2812, %v2833
      %v2836 = vunpack.c.l.s4 1966171168
      %v2837 = vunpack.c.0.s8 %v2836
      %v2838 = vlaneseq
      %v2839 = vshrl.u32 %v2838, 7
      %v2840 = vsub.s32 %v2837, %v2839
      %v2841 = vrot.slane %v2813, %v2840
      %v2842 = vcombine.low %v2820, %v2827
      %v2843 = vcombine.low %v2834, %v2841
      %v2845 = vunpack.c.l.s4 1966171168
      %v2846 = vunpack.c.0.s8 %v2845
      %v2847 = vlaneseq
      %v2848 = vshrl.u32 %v2847, 7
      %v2849 = vsub.s32 %v2846, %v2848
      %v2850 = vrot.slane %v2842, %v2849
      %v2852 = vunpack.c.l.s4 1966171168
      %v2853 = vunpack.c.0.s8 %v2852
      %v2854 = vlaneseq
      %v2855 = vshrl.u32 %v2854, 7
      %v2856 = vsub.s32 %v2853, %v2855
      %v2857 = vrot.slane %v2843, %v2856
      %v2858 = vcombine.low %v2850, %v2857
      %v2859 = vcombine.low %v1863, %v1877
      %v2861 = vunpack.c.l.s4 1966171168
      %v2862 = vunpack.c.0.s8 %v2861
      %v2863 = vlaneseq
      %v2864 = vshrl.u32 %v2863, 7
      %v2865 = vsub.s32 %v2862, %v2864
      %v2866 = vrot.slane %v2859, %v2865
      %v2868 = vunpack.c.l.s4 1966171168
      %v2869 = vunpack.c.0.s8 %v2868
      %v2870 = vlaneseq
      %v2871 = vshrl.u32 %v2870, 7
      %v2872 = vsub.s32 %v2869, %v2871
      %v2873 = vrot.slane %v2866, %v2872
      %vm2874 = vcmask 31744
      %v2876 = vsel %vm2874, %v1927, 0
      %v2879 = vsel %vm2874, %v1976, 0
      %v2882 = vsel %vm2874, %v2025, 0
      %v2885 = vsel %vm2874, %v2074, 0
      %v2888 = vsel %vm2874, %v2123, 0
      %v2891 = vsel %vm2874, %v2172, 0
      %v2894 = vsel %vm2874, %v2221, 0
      %v2897 = vsel %vm2874, %v2270, 0
      %v2900 = vsel %vm2874, %v2319, 0
      %v2903 = vsel %vm2874, %v2368, 0
      %v2906 = vsel %vm2874, %v2417, 0
      %v2909 = vsel %vm2874, %v2466, 0
      %v2912 = vsel %vm2874, %v2515, 0
      %v2915 = vsel %vm2874, %v2564, 0
      %v2918 = vsel %vm2874, %v2613, 0
      %v2921 = vsel %vm2874, %v2662, 0
      %v2924 = vsel %vm2874, %v2711, 0
      %v2927 = vsel %vm2874, %v2760, 0
      %v2930 = vsel %vm2874, %v2809, 0
      %v2933 = vsel %vm2874, %v2858, 0
      %v2936 = vsel %vm2874, %v2873, 0
      %vm2938 = vcmask 1041408
      %v2940 = vsel %vm2938, %v1878, 0
      %2942 = vmatprep.subr.bf16.mxu0 0
      %2943 = vmatpush1.bf16.msra.mxu0 0
      %2944 = vmatprep.subr.bf16.mxu0 0
      %2945 = vmatpush1.bf16.msra.mxu0 0
      %2946 = vmatprep.subr.bf16.mxu0 0
      %2947 = vmatpush1.bf16.msra.mxu0 0
      %2948 = vmatprep.subr.bf16.mxu0 0
      %2949 = vmatpush1.bf16.msra.mxu0 0
      %2950 = vmatprep.subr.bf16.mxu0 0
      %2951 = vmatpush1.bf16.msra.mxu0 0
      %2952 = vmatprep.subr.bf16.mxu0 0
      %2953 = vmatpush1.bf16.msra.mxu0 0
      %2954 = vmatprep.subr.bf16.mxu0 0
      %2955 = vmatpush1.bf16.msra.mxu0 0
      %2956 = vmatprep.subr.bf16.mxu0 0
      %2957 = vmatpush1.bf16.msra.mxu0 %v2940
      %2958 = vmatprep.subr.bf16.mxu0 0
      %2959 = vmatpush2.bf16.msra.mxu0 0
      %2960 = vmatprep.subr.bf16.mxu0 0
      %2961 = vmatpush2.bf16.msra.mxu0 0
      %2962 = vmatprep.subr.bf16.mxu0 0
      %2963 = vmatpush2.bf16.msra.mxu0 0
      %2964 = vmatprep.subr.bf16.mxu0 0
      %2965 = vmatpush2.bf16.msra.mxu0 0
      %2966 = vmatprep.subr.bf16.mxu0 0
      %2967 = vmatpush2.bf16.msra.mxu0 0
      %2968 = vmatprep.subr.bf16.mxu0 0
      %2969 = vmatpush2.bf16.msra.mxu0 0
      %2970 = vmatprep.subr.bf16.mxu0 0
      %2971 = vmatpush2.bf16.msra.mxu0 0
      %2972 = vmatprep.subr.bf16.mxu0 0
      %2973 = vmatpush2.bf16.msra.mxu0 0
      %2974 = vmatprep.mubr.bf16.mxu0 0
      %2975 = vmatmul.mubr.bf16.gmra.mxu0 %v2876
      %v2976 = vpop.f32.mrf.mxu0
      %v2977 = vadd.f32 0.0, %v2976
      %v2978 = vpop.f32.mrf.mxu0
      %v2979 = vpop.f32.mrf.mxu0
      %v2980 = vadd.f32 0.0, %v2979
      %v2981 = vpop.f32.mrf.mxu0
      %2982 = vmatprep.mubr.bf16.mxu0 0
      %2983 = vmatmul.mubr.bf16.gmra.mxu0 %v2879
      %v2984 = vpop.f32.mrf.mxu0
      %v2985 = vadd.f32 0.0, %v2984
      %v2986 = vpop.f32.mrf.mxu0
      %v2987 = vpop.f32.mrf.mxu0
      %v2988 = vadd.f32 0.0, %v2987
      %v2989 = vpop.f32.mrf.mxu0
      %2990 = vmatprep.mubr.bf16.mxu0 0
      %2991 = vmatmul.mubr.bf16.gmra.mxu0 %v2882
      %v2992 = vpop.f32.mrf.mxu0
      %v2993 = vadd.f32 0.0, %v2992
      %v2994 = vpop.f32.mrf.mxu0
      %v2995 = vpop.f32.mrf.mxu0
      %v2996 = vadd.f32 0.0, %v2995
      %v2997 = vpop.f32.mrf.mxu0
      %2998 = vmatprep.mubr.bf16.mxu0 0
      %2999 = vmatmul.mubr.bf16.gmra.mxu0 %v2885
      %v3000 = vpop.f32.mrf.mxu0
      %v3001 = vadd.f32 0.0, %v3000
      %v3002 = vpop.f32.mrf.mxu0
      %v3003 = vpop.f32.mrf.mxu0
      %v3004 = vadd.f32 0.0, %v3003
      %v3005 = vpop.f32.mrf.mxu0
      %3006 = vmatprep.mubr.bf16.mxu0 0
      %3007 = vmatmul.mubr.bf16.gmra.mxu0 %v2888
      %v3008 = vpop.f32.mrf.mxu0
      %v3009 = vadd.f32 0.0, %v3008
      %v3010 = vpop.f32.mrf.mxu0
      %v3011 = vpop.f32.mrf.mxu0
      %v3012 = vadd.f32 0.0, %v3011
      %v3013 = vpop.f32.mrf.mxu0
      %3014 = vmatprep.mubr.bf16.mxu0 0
      %3015 = vmatmul.mubr.bf16.gmra.mxu0 %v2891
      %v3016 = vpop.f32.mrf.mxu0
      %v3017 = vadd.f32 0.0, %v3016
      %v3018 = vpop.f32.mrf.mxu0
      %v3019 = vpop.f32.mrf.mxu0
      %v3020 = vadd.f32 0.0, %v3019
      %v3021 = vpop.f32.mrf.mxu0
      %3022 = vmatprep.mubr.bf16.mxu0 0
      %3023 = vmatmul.mubr.bf16.gmra.mxu0 %v2894
      %v3024 = vpop.f32.mrf.mxu0
      %v3025 = vadd.f32 0.0, %v3024
      %v3026 = vpop.f32.mrf.mxu0
      %v3027 = vpop.f32.mrf.mxu0
      %v3028 = vadd.f32 0.0, %v3027
      %v3029 = vpop.f32.mrf.mxu0
      %3030 = vmatprep.mubr.bf16.mxu0 0
      %3031 = vmatmul.mubr.bf16.gmra.mxu0 %v2897
      %v3032 = vpop.f32.mrf.mxu0
      %v3033 = vadd.f32 0.0, %v3032
      %v3034 = vpop.f32.mrf.mxu0
      %v3035 = vpop.f32.mrf.mxu0
      %v3036 = vadd.f32 0.0, %v3035
      %v3037 = vpop.f32.mrf.mxu0
      %3038 = vmatprep.mubr.bf16.mxu0 0
      %3039 = vmatmul.mubr.bf16.gmra.mxu0 %v2900
      %v3040 = vpop.f32.mrf.mxu0
      %v3041 = vadd.f32 0.0, %v3040
      %v3042 = vpop.f32.mrf.mxu0
      %v3043 = vpop.f32.mrf.mxu0
      %v3044 = vadd.f32 0.0, %v3043
      %v3045 = vpop.f32.mrf.mxu0
      %3046 = vmatprep.mubr.bf16.mxu0 0
      %3047 = vmatmul.mubr.bf16.gmra.mxu0 %v2903
      %v3048 = vpop.f32.mrf.mxu0
      %v3049 = vadd.f32 0.0, %v3048
      %v3050 = vpop.f32.mrf.mxu0
      %v3051 = vpop.f32.mrf.mxu0
      %v3052 = vadd.f32 0.0, %v3051
      %v3053 = vpop.f32.mrf.mxu0
      %3054 = vmatprep.mubr.bf16.mxu0 0
      %3055 = vmatmul.mubr.bf16.gmra.mxu0 %v2906
      %v3056 = vpop.f32.mrf.mxu0
      %v3057 = vadd.f32 0.0, %v3056
      %v3058 = vpop.f32.mrf.mxu0
      %v3059 = vpop.f32.mrf.mxu0
      %v3060 = vadd.f32 0.0, %v3059
      %v3061 = vpop.f32.mrf.mxu0
      %3062 = vmatprep.mubr.bf16.mxu0 0
      %3063 = vmatmul.mubr.bf16.gmra.mxu0 %v2909
      %v3064 = vpop.f32.mrf.mxu0
      %v3065 = vadd.f32 0.0, %v3064
      %v3066 = vpop.f32.mrf.mxu0
      %v3067 = vpop.f32.mrf.mxu0
      %v3068 = vadd.f32 0.0, %v3067
      %v3069 = vpop.f32.mrf.mxu0
      %3070 = vmatprep.mubr.bf16.mxu0 0
      %3071 = vmatmul.mubr.bf16.gmra.mxu0 %v2912
      %v3072 = vpop.f32.mrf.mxu0
      %v3073 = vadd.f32 0.0, %v3072
      %v3074 = vpop.f32.mrf.mxu0
      %v3075 = vpop.f32.mrf.mxu0
      %v3076 = vadd.f32 0.0, %v3075
      %v3077 = vpop.f32.mrf.mxu0
      %3078 = vmatprep.mubr.bf16.mxu0 0
      %3079 = vmatmul.mubr.bf16.gmra.mxu0 %v2915
      %v3080 = vpop.f32.mrf.mxu0
      %v3081 = vadd.f32 0.0, %v3080
      %v3082 = vpop.f32.mrf.mxu0
      %v3083 = vpop.f32.mrf.mxu0
      %v3084 = vadd.f32 0.0, %v3083
      %v3085 = vpop.f32.mrf.mxu0
      %3086 = vmatprep.mubr.bf16.mxu0 0
      %3087 = vmatmul.mubr.bf16.gmra.mxu0 %v2918
      %v3088 = vpop.f32.mrf.mxu0
      %v3089 = vadd.f32 0.0, %v3088
      %v3090 = vpop.f32.mrf.mxu0
      %v3091 = vpop.f32.mrf.mxu0
      %v3092 = vadd.f32 0.0, %v3091
      %v3093 = vpop.f32.mrf.mxu0
      %3094 = vmatprep.mubr.bf16.mxu0 0
      %3095 = vmatmul.mubr.bf16.gmra.mxu0 %v2921
      %v3096 = vpop.f32.mrf.mxu0
      %v3097 = vadd.f32 0.0, %v3096
      %v3098 = vpop.f32.mrf.mxu0
      %v3099 = vpop.f32.mrf.mxu0
      %v3100 = vadd.f32 0.0, %v3099
      %v3101 = vpop.f32.mrf.mxu0
      %3102 = vmatprep.mubr.bf16.mxu0 0
      %3103 = vmatmul.mubr.bf16.gmra.mxu0 %v2924
      %v3104 = vpop.f32.mrf.mxu0
      %v3105 = vadd.f32 0.0, %v3104
      %v3106 = vpop.f32.mrf.mxu0
      %v3107 = vpop.f32.mrf.mxu0
      %v3108 = vadd.f32 0.0, %v3107
      %v3109 = vpop.f32.mrf.mxu0
      %3110 = vmatprep.mubr.bf16.mxu0 0
      %3111 = vmatmul.mubr.bf16.gmra.mxu0 %v2927
      %v3112 = vpop.f32.mrf.mxu0
      %v3113 = vadd.f32 0.0, %v3112
      %v3114 = vpop.f32.mrf.mxu0
      %v3115 = vpop.f32.mrf.mxu0
      %v3116 = vadd.f32 0.0, %v3115
      %v3117 = vpop.f32.mrf.mxu0
      %3118 = vmatprep.mubr.bf16.mxu0 0
      %3119 = vmatmul.mubr.bf16.gmra.mxu0 %v2930
      %v3120 = vpop.f32.mrf.mxu0
      %v3121 = vadd.f32 0.0, %v3120
      %v3122 = vpop.f32.mrf.mxu0
      %v3123 = vpop.f32.mrf.mxu0
      %v3124 = vadd.f32 0.0, %v3123
      %v3125 = vpop.f32.mrf.mxu0
      %3126 = vmatprep.mubr.bf16.mxu0 0
      %3127 = vmatmul.mubr.bf16.gmra.mxu0 %v2933
      %v3128 = vpop.f32.mrf.mxu0
      %v3129 = vadd.f32 0.0, %v3128
      %v3130 = vpop.f32.mrf.mxu0
      %v3131 = vpop.f32.mrf.mxu0
      %v3132 = vadd.f32 0.0, %v3131
      %v3133 = vpop.f32.mrf.mxu0
      %3134 = vmatprep.mubr.bf16.mxu0 0
      %3135 = vmatmul.mubr.bf16.gmra.mxu0 %v2936
      %v3136 = vpop.f32.mrf.mxu0
      %v3137 = vadd.f32 0.0, %v3136
      %v3138 = vpop.f32.mrf.mxu0
      %v3139 = vpop.f32.mrf.mxu0
      %v3140 = vpop.f32.mrf.mxu0
      %3141 = vdwg.mxu0
      %v3143 = vlaneseq
      %v3144 = vshrl.u32 %v3143, 7
      %v3145 = vsub.s32 0, %v3144
      %v3146 = vrot.slane %v468, %v3145
      %v3148 = vmul.f32 %v2977, %v3146
      %v3149 = vmul.f32 %v2980, %v3146
      %v3150 = vmul.f32 %v2985, %v3146
      %v3151 = vmul.f32 %v2988, %v3146
      %v3152 = vmul.f32 %v2993, %v3146
      %v3153 = vmul.f32 %v2996, %v3146
      %v3154 = vmul.f32 %v3001, %v3146
      %v3155 = vmul.f32 %v3004, %v3146
      %v3156 = vmul.f32 %v3009, %v3146
      %v3157 = vmul.f32 %v3012, %v3146
      %v3158 = vmul.f32 %v3017, %v3146
      %v3159 = vmul.f32 %v3020, %v3146
      %v3160 = vmul.f32 %v3025, %v3146
      %v3161 = vmul.f32 %v3028, %v3146
      %v3162 = vmul.f32 %v3033, %v3146
      %v3163 = vmul.f32 %v3036, %v3146
      %v3164 = vmul.f32 %v3041, %v3146
      %v3165 = vmul.f32 %v3044, %v3146
      %v3166 = vmul.f32 %v3049, %v3146
      %v3167 = vmul.f32 %v3052, %v3146
      %v3168 = vmul.f32 %v3057, %v3146
      %v3169 = vmul.f32 %v3060, %v3146
      %v3170 = vmul.f32 %v3065, %v3146
      %v3171 = vmul.f32 %v3068, %v3146
      %v3172 = vmul.f32 %v3073, %v3146
      %v3173 = vmul.f32 %v3076, %v3146
      %v3174 = vmul.f32 %v3081, %v3146
      %v3175 = vmul.f32 %v3084, %v3146
      %v3176 = vmul.f32 %v3089, %v3146
      %v3177 = vmul.f32 %v3092, %v3146
      %v3178 = vmul.f32 %v3097, %v3146
      %v3179 = vmul.f32 %v3100, %v3146
      %v3180 = vmul.f32 %v3105, %v3146
      %v3181 = vmul.f32 %v3108, %v3146
      %v3182 = vmul.f32 %v3113, %v3146
      %v3183 = vmul.f32 %v3116, %v3146
      %v3184 = vmul.f32 %v3121, %v3146
      %v3185 = vmul.f32 %v3124, %v3146
      %v3186 = vmul.f32 %v3129, %v3146
      %v3187 = vmul.f32 %v3132, %v3146
      %v3188 = vmul.f32 %v3137, %v3146
      %v3190 = vlaneseq
      %v3191 = vshrl.u32 %v3190, 7
      %v3192 = vsub.s32 0, %v3191
      %v3193 = vrot.slane %v469, %v3192
      %v3195 = vadd.f32 %v3148, %v3193
      %v3196 = vadd.f32 %v3149, %v3193
      %v3197 = vadd.f32 %v3150, %v3193
      %v3198 = vadd.f32 %v3151, %v3193
      %v3199 = vadd.f32 %v3152, %v3193
      %v3200 = vadd.f32 %v3153, %v3193
      %v3201 = vadd.f32 %v3154, %v3193
      %v3202 = vadd.f32 %v3155, %v3193
      %v3203 = vadd.f32 %v3156, %v3193
      %v3204 = vadd.f32 %v3157, %v3193
      %v3205 = vadd.f32 %v3158, %v3193
      %v3206 = vadd.f32 %v3159, %v3193
      %v3207 = vadd.f32 %v3160, %v3193
      %v3208 = vadd.f32 %v3161, %v3193
      %v3209 = vadd.f32 %v3162, %v3193
      %v3210 = vadd.f32 %v3163, %v3193
      %v3211 = vadd.f32 %v3164, %v3193
      %v3212 = vadd.f32 %v3165, %v3193
      %v3213 = vadd.f32 %v3166, %v3193
      %v3214 = vadd.f32 %v3167, %v3193
      %v3215 = vadd.f32 %v3168, %v3193
      %v3216 = vadd.f32 %v3169, %v3193
      %v3217 = vadd.f32 %v3170, %v3193
      %v3218 = vadd.f32 %v3171, %v3193
      %v3219 = vadd.f32 %v3172, %v3193
      %v3220 = vadd.f32 %v3173, %v3193
      %v3221 = vadd.f32 %v3174, %v3193
      %v3222 = vadd.f32 %v3175, %v3193
      %v3223 = vadd.f32 %v3176, %v3193
      %v3224 = vadd.f32 %v3177, %v3193
      %v3225 = vadd.f32 %v3178, %v3193
      %v3226 = vadd.f32 %v3179, %v3193
      %v3227 = vadd.f32 %v3180, %v3193
      %v3228 = vadd.f32 %v3181, %v3193
      %v3229 = vadd.f32 %v3182, %v3193
      %v3230 = vadd.f32 %v3183, %v3193
      %v3231 = vadd.f32 %v3184, %v3193
      %v3232 = vadd.f32 %v3185, %v3193
      %v3233 = vadd.f32 %v3186, %v3193
      %v3234 = vadd.f32 %v3187, %v3193
      %v3235 = vadd.f32 %v3188, %v3193
      %v3236 = vmax.f32 %v3195, 0.0
      %v3237 = vmax.f32 %v3196, 0.0
      %v3238 = vmax.f32 %v3197, 0.0
      %v3239 = vmax.f32 %v3198, 0.0
      %v3240 = vmax.f32 %v3199, 0.0
      %v3241 = vmax.f32 %v3200, 0.0
      %v3242 = vmax.f32 %v3201, 0.0
      %v3243 = vmax.f32 %v3202, 0.0
      %v3244 = vmax.f32 %v3203, 0.0
      %v3245 = vmax.f32 %v3204, 0.0
      %v3246 = vmax.f32 %v3205, 0.0
      %v3247 = vmax.f32 %v3206, 0.0
      %v3248 = vmax.f32 %v3207, 0.0
      %v3249 = vmax.f32 %v3208, 0.0
      %v3250 = vmax.f32 %v3209, 0.0
      %v3251 = vmax.f32 %v3210, 0.0
      %v3252 = vmax.f32 %v3211, 0.0
      %v3253 = vmax.f32 %v3212, 0.0
      %v3254 = vmax.f32 %v3213, 0.0
      %v3255 = vmax.f32 %v3214, 0.0
      %v3256 = vmax.f32 %v3215, 0.0
      %v3257 = vmax.f32 %v3216, 0.0
      %v3258 = vmax.f32 %v3217, 0.0
      %v3259 = vmax.f32 %v3218, 0.0
      %v3260 = vmax.f32 %v3219, 0.0
      %v3261 = vmax.f32 %v3220, 0.0
      %v3262 = vmax.f32 %v3221, 0.0
      %v3263 = vmax.f32 %v3222, 0.0
      %v3264 = vmax.f32 %v3223, 0.0
      %v3265 = vmax.f32 %v3224, 0.0
      %v3266 = vmax.f32 %v3225, 0.0
      %v3267 = vmax.f32 %v3226, 0.0
      %v3268 = vmax.f32 %v3227, 0.0
      %v3269 = vmax.f32 %v3228, 0.0
      %v3270 = vmax.f32 %v3229, 0.0
      %v3271 = vmax.f32 %v3230, 0.0
      %v3272 = vmax.f32 %v3231, 0.0
      %v3273 = vmax.f32 %v3232, 0.0
      %v3274 = vmax.f32 %v3233, 0.0
      %v3275 = vmax.f32 %v3234, 0.0
      %v3276 = vmax.f32 %v3235, 0.0
      %v3318 = vcombine.high %v3236, %v3236
      %v3320 = vunpack.c.l.s4 1983009808
      %v3321 = vunpack.c.0.s8 %v3320
      %v3322 = vlaneseq
      %v3323 = vshrl.u32 %v3322, 7
      %v3324 = vsub.s32 %v3321, %v3323
      %v3325 = vrot.slane %v3236, %v3324
      %v3327 = vunpack.c.l.s4 1983009808
      %v3328 = vunpack.c.0.s8 %v3327
      %v3329 = vlaneseq
      %v3330 = vshrl.u32 %v3329, 7
      %v3331 = vsub.s32 %v3328, %v3330
      %v3332 = vrot.slane %v3318, %v3331
      %v3333 = vcombine.high %v3325, %v3325
      %v3334 = vcombine.high %v3332, %v3332
      %v3335 = vcombine.high %v3237, %v3237
      %v3337 = vunpack.c.l.s4 1983009808
      %v3338 = vunpack.c.0.s8 %v3337
      %v3339 = vlaneseq
      %v3340 = vshrl.u32 %v3339, 7
      %v3341 = vsub.s32 %v3338, %v3340
      %v3342 = vrot.slane %v3237, %v3341
      %v3344 = vunpack.c.l.s4 1983009808
      %v3345 = vunpack.c.0.s8 %v3344
      %v3346 = vlaneseq
      %v3347 = vshrl.u32 %v3346, 7
      %v3348 = vsub.s32 %v3345, %v3347
      %v3349 = vrot.slane %v3335, %v3348
      %v3350 = vcombine.high %v3342, %v3342
      %v3351 = vcombine.high %v3349, %v3349
      %v3352 = vcombine.high %v3238, %v3238
      %v3354 = vunpack.c.l.s4 1983009808
      %v3355 = vunpack.c.0.s8 %v3354
      %v3356 = vlaneseq
      %v3357 = vshrl.u32 %v3356, 7
      %v3358 = vsub.s32 %v3355, %v3357
      %v3359 = vrot.slane %v3238, %v3358
      %v3361 = vunpack.c.l.s4 1983009808
      %v3362 = vunpack.c.0.s8 %v3361
      %v3363 = vlaneseq
      %v3364 = vshrl.u32 %v3363, 7
      %v3365 = vsub.s32 %v3362, %v3364
      %v3366 = vrot.slane %v3352, %v3365
      %v3367 = vcombine.high %v3359, %v3359
      %v3368 = vcombine.high %v3366, %v3366
      %v3369 = vcombine.high %v3239, %v3239
      %v3371 = vunpack.c.l.s4 1983009808
      %v3372 = vunpack.c.0.s8 %v3371
      %v3373 = vlaneseq
      %v3374 = vshrl.u32 %v3373, 7
      %v3375 = vsub.s32 %v3372, %v3374
      %v3376 = vrot.slane %v3239, %v3375
      %v3378 = vunpack.c.l.s4 1983009808
      %v3379 = vunpack.c.0.s8 %v3378
      %v3380 = vlaneseq
      %v3381 = vshrl.u32 %v3380, 7
      %v3382 = vsub.s32 %v3379, %v3381
      %v3383 = vrot.slane %v3369, %v3382
      %v3384 = vcombine.high %v3376, %v3376
      %v3385 = vcombine.high %v3383, %v3383
      %v3386 = vcombine.high %v3240, %v3240
      %v3388 = vunpack.c.l.s4 1983009808
      %v3389 = vunpack.c.0.s8 %v3388
      %v3390 = vlaneseq
      %v3391 = vshrl.u32 %v3390, 7
      %v3392 = vsub.s32 %v3389, %v3391
      %v3393 = vrot.slane %v3240, %v3392
      %v3395 = vunpack.c.l.s4 1983009808
      %v3396 = vunpack.c.0.s8 %v3395
      %v3397 = vlaneseq
      %v3398 = vshrl.u32 %v3397, 7
      %v3399 = vsub.s32 %v3396, %v3398
      %v3400 = vrot.slane %v3386, %v3399
      %v3401 = vcombine.high %v3393, %v3393
      %v3402 = vcombine.high %v3400, %v3400
      %v3403 = vcombine.high %v3241, %v3241
      %v3405 = vunpack.c.l.s4 1983009808
      %v3406 = vunpack.c.0.s8 %v3405
      %v3407 = vlaneseq
      %v3408 = vshrl.u32 %v3407, 7
      %v3409 = vsub.s32 %v3406, %v3408
      %v3410 = vrot.slane %v3241, %v3409
      %v3412 = vunpack.c.l.s4 1983009808
      %v3413 = vunpack.c.0.s8 %v3412
      %v3414 = vlaneseq
      %v3415 = vshrl.u32 %v3414, 7
      %v3416 = vsub.s32 %v3413, %v3415
      %v3417 = vrot.slane %v3403, %v3416
      %v3418 = vcombine.high %v3410, %v3410
      %v3419 = vcombine.high %v3417, %v3417
      %v3420 = vcombine.high %v3242, %v3242
      %v3422 = vunpack.c.l.s4 1983009808
      %v3423 = vunpack.c.0.s8 %v3422
      %v3424 = vlaneseq
      %v3425 = vshrl.u32 %v3424, 7
      %v3426 = vsub.s32 %v3423, %v3425
      %v3427 = vrot.slane %v3242, %v3426
      %v3429 = vunpack.c.l.s4 1983009808
      %v3430 = vunpack.c.0.s8 %v3429
      %v3431 = vlaneseq
      %v3432 = vshrl.u32 %v3431, 7
      %v3433 = vsub.s32 %v3430, %v3432
      %v3434 = vrot.slane %v3420, %v3433
      %v3435 = vcombine.high %v3427, %v3427
      %v3436 = vcombine.high %v3434, %v3434
      %v3437 = vcombine.high %v3243, %v3243
      %v3439 = vunpack.c.l.s4 1983009808
      %v3440 = vunpack.c.0.s8 %v3439
      %v3441 = vlaneseq
      %v3442 = vshrl.u32 %v3441, 7
      %v3443 = vsub.s32 %v3440, %v3442
      %v3444 = vrot.slane %v3243, %v3443
      %v3446 = vunpack.c.l.s4 1983009808
      %v3447 = vunpack.c.0.s8 %v3446
      %v3448 = vlaneseq
      %v3449 = vshrl.u32 %v3448, 7
      %v3450 = vsub.s32 %v3447, %v3449
      %v3451 = vrot.slane %v3437, %v3450
      %v3452 = vcombine.high %v3444, %v3444
      %v3453 = vcombine.high %v3451, %v3451
      %v3454 = vcombine.high %v3244, %v3244
      %v3456 = vunpack.c.l.s4 1983009808
      %v3457 = vunpack.c.0.s8 %v3456
      %v3458 = vlaneseq
      %v3459 = vshrl.u32 %v3458, 7
      %v3460 = vsub.s32 %v3457, %v3459
      %v3461 = vrot.slane %v3244, %v3460
      %v3463 = vunpack.c.l.s4 1983009808
      %v3464 = vunpack.c.0.s8 %v3463
      %v3465 = vlaneseq
      %v3466 = vshrl.u32 %v3465, 7
      %v3467 = vsub.s32 %v3464, %v3466
      %v3468 = vrot.slane %v3454, %v3467
      %v3469 = vcombine.high %v3461, %v3461
      %v3470 = vcombine.high %v3468, %v3468
      %v3471 = vcombine.high %v3245, %v3245
      %v3473 = vunpack.c.l.s4 1983009808
      %v3474 = vunpack.c.0.s8 %v3473
      %v3475 = vlaneseq
      %v3476 = vshrl.u32 %v3475, 7
      %v3477 = vsub.s32 %v3474, %v3476
      %v3478 = vrot.slane %v3245, %v3477
      %v3480 = vunpack.c.l.s4 1983009808
      %v3481 = vunpack.c.0.s8 %v3480
      %v3482 = vlaneseq
      %v3483 = vshrl.u32 %v3482, 7
      %v3484 = vsub.s32 %v3481, %v3483
      %v3485 = vrot.slane %v3471, %v3484
      %v3486 = vcombine.high %v3478, %v3478
      %v3487 = vcombine.high %v3485, %v3485
      %v3488 = vcombine.high %v3246, %v3246
      %v3490 = vunpack.c.l.s4 1983009808
      %v3491 = vunpack.c.0.s8 %v3490
      %v3492 = vlaneseq
      %v3493 = vshrl.u32 %v3492, 7
      %v3494 = vsub.s32 %v3491, %v3493
      %v3495 = vrot.slane %v3246, %v3494
      %v3497 = vunpack.c.l.s4 1983009808
      %v3498 = vunpack.c.0.s8 %v3497
      %v3499 = vlaneseq
      %v3500 = vshrl.u32 %v3499, 7
      %v3501 = vsub.s32 %v3498, %v3500
      %v3502 = vrot.slane %v3488, %v3501
      %v3503 = vcombine.high %v3495, %v3495
      %v3504 = vcombine.high %v3502, %v3502
      %v3505 = vcombine.high %v3247, %v3247
      %v3507 = vunpack.c.l.s4 1983009808
      %v3508 = vunpack.c.0.s8 %v3507
      %v3509 = vlaneseq
      %v3510 = vshrl.u32 %v3509, 7
      %v3511 = vsub.s32 %v3508, %v3510
      %v3512 = vrot.slane %v3247, %v3511
      %v3514 = vunpack.c.l.s4 1983009808
      %v3515 = vunpack.c.0.s8 %v3514
      %v3516 = vlaneseq
      %v3517 = vshrl.u32 %v3516, 7
      %v3518 = vsub.s32 %v3515, %v3517
      %v3519 = vrot.slane %v3505, %v3518
      %v3520 = vcombine.high %v3512, %v3512
      %v3521 = vcombine.high %v3519, %v3519
      %v3522 = vcombine.high %v3248, %v3248
      %v3524 = vunpack.c.l.s4 1983009808
      %v3525 = vunpack.c.0.s8 %v3524
      %v3526 = vlaneseq
      %v3527 = vshrl.u32 %v3526, 7
      %v3528 = vsub.s32 %v3525, %v3527
      %v3529 = vrot.slane %v3248, %v3528
      %v3531 = vunpack.c.l.s4 1983009808
      %v3532 = vunpack.c.0.s8 %v3531
      %v3533 = vlaneseq
      %v3534 = vshrl.u32 %v3533, 7
      %v3535 = vsub.s32 %v3532, %v3534
      %v3536 = vrot.slane %v3522, %v3535
      %v3537 = vcombine.high %v3529, %v3529
      %v3538 = vcombine.high %v3536, %v3536
      %v3539 = vcombine.high %v3249, %v3249
      %v3541 = vunpack.c.l.s4 1983009808
      %v3542 = vunpack.c.0.s8 %v3541
      %v3543 = vlaneseq
      %v3544 = vshrl.u32 %v3543, 7
      %v3545 = vsub.s32 %v3542, %v3544
      %v3546 = vrot.slane %v3249, %v3545
      %v3548 = vunpack.c.l.s4 1983009808
      %v3549 = vunpack.c.0.s8 %v3548
      %v3550 = vlaneseq
      %v3551 = vshrl.u32 %v3550, 7
      %v3552 = vsub.s32 %v3549, %v3551
      %v3553 = vrot.slane %v3539, %v3552
      %v3554 = vcombine.high %v3546, %v3546
      %v3555 = vcombine.high %v3553, %v3553
      %v3556 = vcombine.high %v3250, %v3250
      %v3558 = vunpack.c.l.s4 1983009808
      %v3559 = vunpack.c.0.s8 %v3558
      %v3560 = vlaneseq
      %v3561 = vshrl.u32 %v3560, 7
      %v3562 = vsub.s32 %v3559, %v3561
      %v3563 = vrot.slane %v3250, %v3562
      %v3565 = vunpack.c.l.s4 1983009808
      %v3566 = vunpack.c.0.s8 %v3565
      %v3567 = vlaneseq
      %v3568 = vshrl.u32 %v3567, 7
      %v3569 = vsub.s32 %v3566, %v3568
      %v3570 = vrot.slane %v3556, %v3569
      %v3571 = vcombine.high %v3563, %v3563
      %v3572 = vcombine.high %v3570, %v3570
      %v3573 = vcombine.high %v3251, %v3251
      %v3575 = vunpack.c.l.s4 1983009808
      %v3576 = vunpack.c.0.s8 %v3575
      %v3577 = vlaneseq
      %v3578 = vshrl.u32 %v3577, 7
      %v3579 = vsub.s32 %v3576, %v3578
      %v3580 = vrot.slane %v3251, %v3579
      %v3582 = vunpack.c.l.s4 1983009808
      %v3583 = vunpack.c.0.s8 %v3582
      %v3584 = vlaneseq
      %v3585 = vshrl.u32 %v3584, 7
      %v3586 = vsub.s32 %v3583, %v3585
      %v3587 = vrot.slane %v3573, %v3586
      %v3588 = vcombine.high %v3580, %v3580
      %v3589 = vcombine.high %v3587, %v3587
      %v3590 = vcombine.high %v3252, %v3252
      %v3592 = vunpack.c.l.s4 1983009808
      %v3593 = vunpack.c.0.s8 %v3592
      %v3594 = vlaneseq
      %v3595 = vshrl.u32 %v3594, 7
      %v3596 = vsub.s32 %v3593, %v3595
      %v3597 = vrot.slane %v3252, %v3596
      %v3599 = vunpack.c.l.s4 1983009808
      %v3600 = vunpack.c.0.s8 %v3599
      %v3601 = vlaneseq
      %v3602 = vshrl.u32 %v3601, 7
      %v3603 = vsub.s32 %v3600, %v3602
      %v3604 = vrot.slane %v3590, %v3603
      %v3605 = vcombine.high %v3597, %v3597
      %v3606 = vcombine.high %v3604, %v3604
      %v3607 = vcombine.high %v3253, %v3253
      %v3609 = vunpack.c.l.s4 1983009808
      %v3610 = vunpack.c.0.s8 %v3609
      %v3611 = vlaneseq
      %v3612 = vshrl.u32 %v3611, 7
      %v3613 = vsub.s32 %v3610, %v3612
      %v3614 = vrot.slane %v3253, %v3613
      %v3616 = vunpack.c.l.s4 1983009808
      %v3617 = vunpack.c.0.s8 %v3616
      %v3618 = vlaneseq
      %v3619 = vshrl.u32 %v3618, 7
      %v3620 = vsub.s32 %v3617, %v3619
      %v3621 = vrot.slane %v3607, %v3620
      %v3622 = vcombine.high %v3614, %v3614
      %v3623 = vcombine.high %v3621, %v3621
      %v3624 = vcombine.high %v3254, %v3254
      %v3626 = vunpack.c.l.s4 1983009808
      %v3627 = vunpack.c.0.s8 %v3626
      %v3628 = vlaneseq
      %v3629 = vshrl.u32 %v3628, 7
      %v3630 = vsub.s32 %v3627, %v3629
      %v3631 = vrot.slane %v3254, %v3630
      %v3633 = vunpack.c.l.s4 1983009808
      %v3634 = vunpack.c.0.s8 %v3633
      %v3635 = vlaneseq
      %v3636 = vshrl.u32 %v3635, 7
      %v3637 = vsub.s32 %v3634, %v3636
      %v3638 = vrot.slane %v3624, %v3637
      %v3639 = vcombine.high %v3631, %v3631
      %v3640 = vcombine.high %v3638, %v3638
      %v3641 = vcombine.high %v3255, %v3255
      %v3643 = vunpack.c.l.s4 1983009808
      %v3644 = vunpack.c.0.s8 %v3643
      %v3645 = vlaneseq
      %v3646 = vshrl.u32 %v3645, 7
      %v3647 = vsub.s32 %v3644, %v3646
      %v3648 = vrot.slane %v3255, %v3647
      %v3650 = vunpack.c.l.s4 1983009808
      %v3651 = vunpack.c.0.s8 %v3650
      %v3652 = vlaneseq
      %v3653 = vshrl.u32 %v3652, 7
      %v3654 = vsub.s32 %v3651, %v3653
      %v3655 = vrot.slane %v3641, %v3654
      %v3656 = vcombine.high %v3648, %v3648
      %v3657 = vcombine.high %v3655, %v3655
      %v3658 = vcombine.high %v3256, %v3256
      %v3660 = vunpack.c.l.s4 1983009808
      %v3661 = vunpack.c.0.s8 %v3660
      %v3662 = vlaneseq
      %v3663 = vshrl.u32 %v3662, 7
      %v3664 = vsub.s32 %v3661, %v3663
      %v3665 = vrot.slane %v3256, %v3664
      %v3667 = vunpack.c.l.s4 1983009808
      %v3668 = vunpack.c.0.s8 %v3667
      %v3669 = vlaneseq
      %v3670 = vshrl.u32 %v3669, 7
      %v3671 = vsub.s32 %v3668, %v3670
      %v3672 = vrot.slane %v3658, %v3671
      %v3673 = vcombine.high %v3665, %v3665
      %v3674 = vcombine.high %v3672, %v3672
      %v3675 = vcombine.high %v3257, %v3257
      %v3677 = vunpack.c.l.s4 1983009808
      %v3678 = vunpack.c.0.s8 %v3677
      %v3679 = vlaneseq
      %v3680 = vshrl.u32 %v3679, 7
      %v3681 = vsub.s32 %v3678, %v3680
      %v3682 = vrot.slane %v3257, %v3681
      %v3684 = vunpack.c.l.s4 1983009808
      %v3685 = vunpack.c.0.s8 %v3684
      %v3686 = vlaneseq
      %v3687 = vshrl.u32 %v3686, 7
      %v3688 = vsub.s32 %v3685, %v3687
      %v3689 = vrot.slane %v3675, %v3688
      %v3690 = vcombine.high %v3682, %v3682
      %v3691 = vcombine.high %v3689, %v3689
      %v3692 = vcombine.high %v3258, %v3258
      %v3694 = vunpack.c.l.s4 1983009808
      %v3695 = vunpack.c.0.s8 %v3694
      %v3696 = vlaneseq
      %v3697 = vshrl.u32 %v3696, 7
      %v3698 = vsub.s32 %v3695, %v3697
      %v3699 = vrot.slane %v3258, %v3698
      %v3701 = vunpack.c.l.s4 1983009808
      %v3702 = vunpack.c.0.s8 %v3701
      %v3703 = vlaneseq
      %v3704 = vshrl.u32 %v3703, 7
      %v3705 = vsub.s32 %v3702, %v3704
      %v3706 = vrot.slane %v3692, %v3705
      %v3707 = vcombine.high %v3699, %v3699
      %v3708 = vcombine.high %v3706, %v3706
      %v3709 = vcombine.high %v3259, %v3259
      %v3711 = vunpack.c.l.s4 1983009808
      %v3712 = vunpack.c.0.s8 %v3711
      %v3713 = vlaneseq
      %v3714 = vshrl.u32 %v3713, 7
      %v3715 = vsub.s32 %v3712, %v3714
      %v3716 = vrot.slane %v3259, %v3715
      %v3718 = vunpack.c.l.s4 1983009808
      %v3719 = vunpack.c.0.s8 %v3718
      %v3720 = vlaneseq
      %v3721 = vshrl.u32 %v3720, 7
      %v3722 = vsub.s32 %v3719, %v3721
      %v3723 = vrot.slane %v3709, %v3722
      %v3724 = vcombine.high %v3716, %v3716
      %v3725 = vcombine.high %v3723, %v3723
      %v3726 = vcombine.high %v3260, %v3260
      %v3728 = vunpack.c.l.s4 1983009808
      %v3729 = vunpack.c.0.s8 %v3728
      %v3730 = vlaneseq
      %v3731 = vshrl.u32 %v3730, 7
      %v3732 = vsub.s32 %v3729, %v3731
      %v3733 = vrot.slane %v3260, %v3732
      %v3735 = vunpack.c.l.s4 1983009808
      %v3736 = vunpack.c.0.s8 %v3735
      %v3737 = vlaneseq
      %v3738 = vshrl.u32 %v3737, 7
      %v3739 = vsub.s32 %v3736, %v3738
      %v3740 = vrot.slane %v3726, %v3739
      %v3741 = vcombine.high %v3733, %v3733
      %v3742 = vcombine.high %v3740, %v3740
      %v3743 = vcombine.high %v3261, %v3261
      %v3745 = vunpack.c.l.s4 1983009808
      %v3746 = vunpack.c.0.s8 %v3745
      %v3747 = vlaneseq
      %v3748 = vshrl.u32 %v3747, 7
      %v3749 = vsub.s32 %v3746, %v3748
      %v3750 = vrot.slane %v3261, %v3749
      %v3752 = vunpack.c.l.s4 1983009808
      %v3753 = vunpack.c.0.s8 %v3752
      %v3754 = vlaneseq
      %v3755 = vshrl.u32 %v3754, 7
      %v3756 = vsub.s32 %v3753, %v3755
      %v3757 = vrot.slane %v3743, %v3756
      %v3758 = vcombine.high %v3750, %v3750
      %v3759 = vcombine.high %v3757, %v3757
      %v3760 = vcombine.high %v3262, %v3262
      %v3762 = vunpack.c.l.s4 1983009808
      %v3763 = vunpack.c.0.s8 %v3762
      %v3764 = vlaneseq
      %v3765 = vshrl.u32 %v3764, 7
      %v3766 = vsub.s32 %v3763, %v3765
      %v3767 = vrot.slane %v3262, %v3766
      %v3769 = vunpack.c.l.s4 1983009808
      %v3770 = vunpack.c.0.s8 %v3769
      %v3771 = vlaneseq
      %v3772 = vshrl.u32 %v3771, 7
      %v3773 = vsub.s32 %v3770, %v3772
      %v3774 = vrot.slane %v3760, %v3773
      %v3775 = vcombine.high %v3767, %v3767
      %v3776 = vcombine.high %v3774, %v3774
      %v3777 = vcombine.high %v3263, %v3263
      %v3779 = vunpack.c.l.s4 1983009808
      %v3780 = vunpack.c.0.s8 %v3779
      %v3781 = vlaneseq
      %v3782 = vshrl.u32 %v3781, 7
      %v3783 = vsub.s32 %v3780, %v3782
      %v3784 = vrot.slane %v3263, %v3783
      %v3786 = vunpack.c.l.s4 1983009808
      %v3787 = vunpack.c.0.s8 %v3786
      %v3788 = vlaneseq
      %v3789 = vshrl.u32 %v3788, 7
      %v3790 = vsub.s32 %v3787, %v3789
      %v3791 = vrot.slane %v3777, %v3790
      %v3792 = vcombine.high %v3784, %v3784
      %v3793 = vcombine.high %v3791, %v3791
      %v3794 = vcombine.high %v3264, %v3264
      %v3796 = vunpack.c.l.s4 1983009808
      %v3797 = vunpack.c.0.s8 %v3796
      %v3798 = vlaneseq
      %v3799 = vshrl.u32 %v3798, 7
      %v3800 = vsub.s32 %v3797, %v3799
      %v3801 = vrot.slane %v3264, %v3800
      %v3803 = vunpack.c.l.s4 1983009808
      %v3804 = vunpack.c.0.s8 %v3803
      %v3805 = vlaneseq
      %v3806 = vshrl.u32 %v3805, 7
      %v3807 = vsub.s32 %v3804, %v3806
      %v3808 = vrot.slane %v3794, %v3807
      %v3809 = vcombine.high %v3801, %v3801
      %v3810 = vcombine.high %v3808, %v3808
      %v3811 = vcombine.high %v3265, %v3265
      %v3813 = vunpack.c.l.s4 1983009808
      %v3814 = vunpack.c.0.s8 %v3813
      %v3815 = vlaneseq
      %v3816 = vshrl.u32 %v3815, 7
      %v3817 = vsub.s32 %v3814, %v3816
      %v3818 = vrot.slane %v3265, %v3817
      %v3820 = vunpack.c.l.s4 1983009808
      %v3821 = vunpack.c.0.s8 %v3820
      %v3822 = vlaneseq
      %v3823 = vshrl.u32 %v3822, 7
      %v3824 = vsub.s32 %v3821, %v3823
      %v3825 = vrot.slane %v3811, %v3824
      %v3826 = vcombine.high %v3818, %v3818
      %v3827 = vcombine.high %v3825, %v3825
      %v3828 = vcombine.high %v3266, %v3266
      %v3830 = vunpack.c.l.s4 1983009808
      %v3831 = vunpack.c.0.s8 %v3830
      %v3832 = vlaneseq
      %v3833 = vshrl.u32 %v3832, 7
      %v3834 = vsub.s32 %v3831, %v3833
      %v3835 = vrot.slane %v3266, %v3834
      %v3837 = vunpack.c.l.s4 1983009808
      %v3838 = vunpack.c.0.s8 %v3837
      %v3839 = vlaneseq
      %v3840 = vshrl.u32 %v3839, 7
      %v3841 = vsub.s32 %v3838, %v3840
      %v3842 = vrot.slane %v3828, %v3841
      %v3843 = vcombine.high %v3835, %v3835
      %v3844 = vcombine.high %v3842, %v3842
      %v3845 = vcombine.high %v3267, %v3267
      %v3847 = vunpack.c.l.s4 1983009808
      %v3848 = vunpack.c.0.s8 %v3847
      %v3849 = vlaneseq
      %v3850 = vshrl.u32 %v3849, 7
      %v3851 = vsub.s32 %v3848, %v3850
      %v3852 = vrot.slane %v3267, %v3851
      %v3854 = vunpack.c.l.s4 1983009808
      %v3855 = vunpack.c.0.s8 %v3854
      %v3856 = vlaneseq
      %v3857 = vshrl.u32 %v3856, 7
      %v3858 = vsub.s32 %v3855, %v3857
      %v3859 = vrot.slane %v3845, %v3858
      %v3860 = vcombine.high %v3852, %v3852
      %v3861 = vcombine.high %v3859, %v3859
      %v3862 = vcombine.high %v3268, %v3268
      %v3864 = vunpack.c.l.s4 1983009808
      %v3865 = vunpack.c.0.s8 %v3864
      %v3866 = vlaneseq
      %v3867 = vshrl.u32 %v3866, 7
      %v3868 = vsub.s32 %v3865, %v3867
      %v3869 = vrot.slane %v3268, %v3868
      %v3871 = vunpack.c.l.s4 1983009808
      %v3872 = vunpack.c.0.s8 %v3871
      %v3873 = vlaneseq
      %v3874 = vshrl.u32 %v3873, 7
      %v3875 = vsub.s32 %v3872, %v3874
      %v3876 = vrot.slane %v3862, %v3875
      %v3877 = vcombine.high %v3869, %v3869
      %v3878 = vcombine.high %v3876, %v3876
      %v3879 = vcombine.high %v3269, %v3269
      %v3881 = vunpack.c.l.s4 1983009808
      %v3882 = vunpack.c.0.s8 %v3881
      %v3883 = vlaneseq
      %v3884 = vshrl.u32 %v3883, 7
      %v3885 = vsub.s32 %v3882, %v3884
      %v3886 = vrot.slane %v3269, %v3885
      %v3888 = vunpack.c.l.s4 1983009808
      %v3889 = vunpack.c.0.s8 %v3888
      %v3890 = vlaneseq
      %v3891 = vshrl.u32 %v3890, 7
      %v3892 = vsub.s32 %v3889, %v3891
      %v3893 = vrot.slane %v3879, %v3892
      %v3894 = vcombine.high %v3886, %v3886
      %v3895 = vcombine.high %v3893, %v3893
      %v3896 = vcombine.high %v3270, %v3270
      %v3898 = vunpack.c.l.s4 1983009808
      %v3899 = vunpack.c.0.s8 %v3898
      %v3900 = vlaneseq
      %v3901 = vshrl.u32 %v3900, 7
      %v3902 = vsub.s32 %v3899, %v3901
      %v3903 = vrot.slane %v3270, %v3902
      %v3905 = vunpack.c.l.s4 1983009808
      %v3906 = vunpack.c.0.s8 %v3905
      %v3907 = vlaneseq
      %v3908 = vshrl.u32 %v3907, 7
      %v3909 = vsub.s32 %v3906, %v3908
      %v3910 = vrot.slane %v3896, %v3909
      %v3911 = vcombine.high %v3903, %v3903
      %v3912 = vcombine.high %v3910, %v3910
      %v3913 = vcombine.high %v3271, %v3271
      %v3915 = vunpack.c.l.s4 1983009808
      %v3916 = vunpack.c.0.s8 %v3915
      %v3917 = vlaneseq
      %v3918 = vshrl.u32 %v3917, 7
      %v3919 = vsub.s32 %v3916, %v3918
      %v3920 = vrot.slane %v3271, %v3919
      %v3922 = vunpack.c.l.s4 1983009808
      %v3923 = vunpack.c.0.s8 %v3922
      %v3924 = vlaneseq
      %v3925 = vshrl.u32 %v3924, 7
      %v3926 = vsub.s32 %v3923, %v3925
      %v3927 = vrot.slane %v3913, %v3926
      %v3928 = vcombine.high %v3920, %v3920
      %v3929 = vcombine.high %v3927, %v3927
      %v3930 = vcombine.high %v3272, %v3272
      %v3932 = vunpack.c.l.s4 1983009808
      %v3933 = vunpack.c.0.s8 %v3932
      %v3934 = vlaneseq
      %v3935 = vshrl.u32 %v3934, 7
      %v3936 = vsub.s32 %v3933, %v3935
      %v3937 = vrot.slane %v3272, %v3936
      %v3939 = vunpack.c.l.s4 1983009808
      %v3940 = vunpack.c.0.s8 %v3939
      %v3941 = vlaneseq
      %v3942 = vshrl.u32 %v3941, 7
      %v3943 = vsub.s32 %v3940, %v3942
      %v3944 = vrot.slane %v3930, %v3943
      %v3945 = vcombine.high %v3937, %v3937
      %v3946 = vcombine.high %v3944, %v3944
      %v3947 = vcombine.high %v3273, %v3273
      %v3949 = vunpack.c.l.s4 1983009808
      %v3950 = vunpack.c.0.s8 %v3949
      %v3951 = vlaneseq
      %v3952 = vshrl.u32 %v3951, 7
      %v3953 = vsub.s32 %v3950, %v3952
      %v3954 = vrot.slane %v3273, %v3953
      %v3956 = vunpack.c.l.s4 1983009808
      %v3957 = vunpack.c.0.s8 %v3956
      %v3958 = vlaneseq
      %v3959 = vshrl.u32 %v3958, 7
      %v3960 = vsub.s32 %v3957, %v3959
      %v3961 = vrot.slane %v3947, %v3960
      %v3962 = vcombine.high %v3954, %v3954
      %v3963 = vcombine.high %v3961, %v3961
      %v3964 = vcombine.high %v3274, %v3274
      %v3966 = vunpack.c.l.s4 1983009808
      %v3967 = vunpack.c.0.s8 %v3966
      %v3968 = vlaneseq
      %v3969 = vshrl.u32 %v3968, 7
      %v3970 = vsub.s32 %v3967, %v3969
      %v3971 = vrot.slane %v3274, %v3970
      %v3973 = vunpack.c.l.s4 1983009808
      %v3974 = vunpack.c.0.s8 %v3973
      %v3975 = vlaneseq
      %v3976 = vshrl.u32 %v3975, 7
      %v3977 = vsub.s32 %v3974, %v3976
      %v3978 = vrot.slane %v3964, %v3977
      %v3979 = vcombine.high %v3971, %v3971
      %v3980 = vcombine.high %v3978, %v3978
      %v3981 = vcombine.high %v3275, %v3275
      %v3983 = vunpack.c.l.s4 1983009808
      %v3984 = vunpack.c.0.s8 %v3983
      %v3985 = vlaneseq
      %v3986 = vshrl.u32 %v3985, 7
      %v3987 = vsub.s32 %v3984, %v3986
      %v3988 = vrot.slane %v3275, %v3987
      %v3990 = vunpack.c.l.s4 1983009808
      %v3991 = vunpack.c.0.s8 %v3990
      %v3992 = vlaneseq
      %v3993 = vshrl.u32 %v3992, 7
      %v3994 = vsub.s32 %v3991, %v3993
      %v3995 = vrot.slane %v3981, %v3994
      %v3996 = vcombine.high %v3988, %v3988
      %v3997 = vcombine.high %v3995, %v3995
      %v3999 = vunpack.c.l.s4 1983009808
      %v4000 = vunpack.c.0.s8 %v3999
      %v4001 = vlaneseq
      %v4002 = vshrl.u32 %v4001, 7
      %v4003 = vsub.s32 %v4000, %v4002
      %v4004 = vrot.slane %v3276, %v4003
      %v4005 = vcombine.high %v4004, %v4004
      %v4223 = vunpack.c.l.s4 269488144
      %v4224 = vunpack.c.0.s8 %v4223
      %v4225 = vlaneseq
      %v4226 = vshrl.u32 %v4225, 7
      %v4227 = vsub.s32 %v4224, %v4226
      %v4228 = vrot.slane %v597, %v4227
      %v4230 = vunpack.c.l.s4 842150450
      %v4231 = vunpack.c.0.s8 %v4230
      %v4232 = vlaneseq
      %v4233 = vshrl.u32 %v4232, 7
      %v4234 = vsub.s32 %v4231, %v4233
      %v4235 = vrot.slane %v597, %v4234
      %v4237 = vunpack.c.l.s4 1414812756
      %v4238 = vunpack.c.0.s8 %v4237
      %v4239 = vlaneseq
      %v4240 = vshrl.u32 %v4239, 7
      %v4241 = vsub.s32 %v4238, %v4240
      %v4242 = vrot.slane %v597, %v4241
      %v4244 = vunpack.c.l.s4 1987475062
      %v4245 = vunpack.c.0.s8 %v4244
      %v4246 = vlaneseq
      %v4247 = vshrl.u32 %v4246, 7
      %v4248 = vsub.s32 %v4245, %v4247
      %v4249 = vrot.slane %v597, %v4248
      %v4251 = vunpack.c.l.s4 269488144
      %v4252 = vunpack.c.0.s8 %v4251
      %v4253 = vlaneseq
      %v4254 = vshrl.u32 %v4253, 7
      %v4255 = vsub.s32 %v4252, %v4254
      %v4256 = vrot.slane %v598, %v4255
      %v4258 = vunpack.c.l.s4 842150450
      %v4259 = vunpack.c.0.s8 %v4258
      %v4260 = vlaneseq
      %v4261 = vshrl.u32 %v4260, 7
      %v4262 = vsub.s32 %v4259, %v4261
      %v4263 = vrot.slane %v598, %v4262
      %v4265 = vunpack.c.l.s4 1414812756
      %v4266 = vunpack.c.0.s8 %v4265
      %v4267 = vlaneseq
      %v4268 = vshrl.u32 %v4267, 7
      %v4269 = vsub.s32 %v4266, %v4268
      %v4270 = vrot.slane %v598, %v4269
      %v4272 = vunpack.c.l.s4 1987475062
      %v4273 = vunpack.c.0.s8 %v4272
      %v4274 = vlaneseq
      %v4275 = vshrl.u32 %v4274, 7
      %v4276 = vsub.s32 %v4273, %v4275
      %v4277 = vrot.slane %v598, %v4276
      %v4279 = vunpack.c.l.s4 269488144
      %v4280 = vunpack.c.0.s8 %v4279
      %v4281 = vlaneseq
      %v4282 = vshrl.u32 %v4281, 7
      %v4283 = vsub.s32 %v4280, %v4282
      %v4284 = vrot.slane %v599, %v4283
      %v4286 = vunpack.c.l.s4 269488144
      %v4287 = vunpack.c.0.s8 %v4286
      %v4288 = vlaneseq
      %v4289 = vshrl.u32 %v4288, 7
      %v4290 = vsub.s32 %v4287, %v4289
      %v4291 = vrot.slane %v600, %v4290
      %v4293 = vunpack.c.l.s4 842150450
      %v4294 = vunpack.c.0.s8 %v4293
      %v4295 = vlaneseq
      %v4296 = vshrl.u32 %v4295, 7
      %v4297 = vsub.s32 %v4294, %v4296
      %v4298 = vrot.slane %v600, %v4297
      %v4300 = vunpack.c.l.s4 1414812756
      %v4301 = vunpack.c.0.s8 %v4300
      %v4302 = vlaneseq
      %v4303 = vshrl.u32 %v4302, 7
      %v4304 = vsub.s32 %v4301, %v4303
      %v4305 = vrot.slane %v600, %v4304
      %v4307 = vunpack.c.l.s4 1987475062
      %v4308 = vunpack.c.0.s8 %v4307
      %v4309 = vlaneseq
      %v4310 = vshrl.u32 %v4309, 7
      %v4311 = vsub.s32 %v4308, %v4310
      %v4312 = vrot.slane %v600, %v4311
      %v4314 = vunpack.c.l.s4 269488144
      %v4315 = vunpack.c.0.s8 %v4314
      %v4316 = vlaneseq
      %v4317 = vshrl.u32 %v4316, 7
      %v4318 = vsub.s32 %v4315, %v4317
      %v4319 = vrot.slane %v601, %v4318
      %v4321 = vunpack.c.l.s4 842150450
      %v4322 = vunpack.c.0.s8 %v4321
      %v4323 = vlaneseq
      %v4324 = vshrl.u32 %v4323, 7
      %v4325 = vsub.s32 %v4322, %v4324
      %v4326 = vrot.slane %v601, %v4325
      %v4328 = vunpack.c.l.s4 1414812756
      %v4329 = vunpack.c.0.s8 %v4328
      %v4330 = vlaneseq
      %v4331 = vshrl.u32 %v4330, 7
      %v4332 = vsub.s32 %v4329, %v4331
      %v4333 = vrot.slane %v601, %v4332
      %v4335 = vunpack.c.l.s4 1987475062
      %v4336 = vunpack.c.0.s8 %v4335
      %v4337 = vlaneseq
      %v4338 = vshrl.u32 %v4337, 7
      %v4339 = vsub.s32 %v4336, %v4338
      %v4340 = vrot.slane %v601, %v4339
      %v4342 = vunpack.c.l.s4 269488144
      %v4343 = vunpack.c.0.s8 %v4342
      %v4344 = vlaneseq
      %v4345 = vshrl.u32 %v4344, 7
      %v4346 = vsub.s32 %v4343, %v4345
      %v4347 = vrot.slane %v602, %v4346
      %v4349 = vunpack.c.l.s4 269488144
      %v4350 = vunpack.c.0.s8 %v4349
      %v4351 = vlaneseq
      %v4352 = vshrl.u32 %v4351, 7
      %v4353 = vsub.s32 %v4350, %v4352
      %v4354 = vrot.slane %v603, %v4353
      %v4356 = vunpack.c.l.s4 842150450
      %v4357 = vunpack.c.0.s8 %v4356
      %v4358 = vlaneseq
      %v4359 = vshrl.u32 %v4358, 7
      %v4360 = vsub.s32 %v4357, %v4359
      %v4361 = vrot.slane %v603, %v4360
      %v4363 = vunpack.c.l.s4 1414812756
      %v4364 = vunpack.c.0.s8 %v4363
      %v4365 = vlaneseq
      %v4366 = vshrl.u32 %v4365, 7
      %v4367 = vsub.s32 %v4364, %v4366
      %v4368 = vrot.slane %v603, %v4367
      %v4370 = vunpack.c.l.s4 1987475062
      %v4371 = vunpack.c.0.s8 %v4370
      %v4372 = vlaneseq
      %v4373 = vshrl.u32 %v4372, 7
      %v4374 = vsub.s32 %v4371, %v4373
      %v4375 = vrot.slane %v603, %v4374
      %v4377 = vunpack.c.l.s4 269488144
      %v4378 = vunpack.c.0.s8 %v4377
      %v4379 = vlaneseq
      %v4380 = vshrl.u32 %v4379, 7
      %v4381 = vsub.s32 %v4378, %v4380
      %v4382 = vrot.slane %v604, %v4381
      %v4384 = vunpack.c.l.s4 842150450
      %v4385 = vunpack.c.0.s8 %v4384
      %v4386 = vlaneseq
      %v4387 = vshrl.u32 %v4386, 7
      %v4388 = vsub.s32 %v4385, %v4387
      %v4389 = vrot.slane %v604, %v4388
      %v4391 = vunpack.c.l.s4 1414812756
      %v4392 = vunpack.c.0.s8 %v4391
      %v4393 = vlaneseq
      %v4394 = vshrl.u32 %v4393, 7
      %v4395 = vsub.s32 %v4392, %v4394
      %v4396 = vrot.slane %v604, %v4395
      %v4398 = vunpack.c.l.s4 1987475062
      %v4399 = vunpack.c.0.s8 %v4398
      %v4400 = vlaneseq
      %v4401 = vshrl.u32 %v4400, 7
      %v4402 = vsub.s32 %v4399, %v4401
      %v4403 = vrot.slane %v604, %v4402
      %v4405 = vunpack.c.l.s4 269488144
      %v4406 = vunpack.c.0.s8 %v4405
      %v4407 = vlaneseq
      %v4408 = vshrl.u32 %v4407, 7
      %v4409 = vsub.s32 %v4406, %v4408
      %v4410 = vrot.slane %v605, %v4409
      %v4412 = vunpack.c.l.s4 269488144
      %v4413 = vunpack.c.0.s8 %v4412
      %v4414 = vlaneseq
      %v4415 = vshrl.u32 %v4414, 7
      %v4416 = vsub.s32 %v4413, %v4415
      %v4417 = vrot.slane %v606, %v4416
      %v4419 = vunpack.c.l.s4 842150450
      %v4420 = vunpack.c.0.s8 %v4419
      %v4421 = vlaneseq
      %v4422 = vshrl.u32 %v4421, 7
      %v4423 = vsub.s32 %v4420, %v4422
      %v4424 = vrot.slane %v606, %v4423
      %v4426 = vunpack.c.l.s4 1414812756
      %v4427 = vunpack.c.0.s8 %v4426
      %v4428 = vlaneseq
      %v4429 = vshrl.u32 %v4428, 7
      %v4430 = vsub.s32 %v4427, %v4429
      %v4431 = vrot.slane %v606, %v4430
      %v4433 = vunpack.c.l.s4 1987475062
      %v4434 = vunpack.c.0.s8 %v4433
      %v4435 = vlaneseq
      %v4436 = vshrl.u32 %v4435, 7
      %v4437 = vsub.s32 %v4434, %v4436
      %v4438 = vrot.slane %v606, %v4437
      %v4440 = vunpack.c.l.s4 269488144
      %v4441 = vunpack.c.0.s8 %v4440
      %v4442 = vlaneseq
      %v4443 = vshrl.u32 %v4442, 7
      %v4444 = vsub.s32 %v4441, %v4443
      %v4445 = vrot.slane %v607, %v4444
      %v4447 = vunpack.c.l.s4 842150450
      %v4448 = vunpack.c.0.s8 %v4447
      %v4449 = vlaneseq
      %v4450 = vshrl.u32 %v4449, 7
      %v4451 = vsub.s32 %v4448, %v4450
      %v4452 = vrot.slane %v607, %v4451
      %v4454 = vunpack.c.l.s4 1414812756
      %v4455 = vunpack.c.0.s8 %v4454
      %v4456 = vlaneseq
      %v4457 = vshrl.u32 %v4456, 7
      %v4458 = vsub.s32 %v4455, %v4457
      %v4459 = vrot.slane %v607, %v4458
      %v4461 = vunpack.c.l.s4 1987475062
      %v4462 = vunpack.c.0.s8 %v4461
      %v4463 = vlaneseq
      %v4464 = vshrl.u32 %v4463, 7
      %v4465 = vsub.s32 %v4462, %v4464
      %v4466 = vrot.slane %v607, %v4465
      %v4468 = vunpack.c.l.s4 269488144
      %v4469 = vunpack.c.0.s8 %v4468
      %v4470 = vlaneseq
      %v4471 = vshrl.u32 %v4470, 7
      %v4472 = vsub.s32 %v4469, %v4471
      %v4473 = vrot.slane %v608, %v4472
      %v4475 = vunpack.c.l.s4 269488144
      %v4476 = vunpack.c.0.s8 %v4475
      %v4477 = vlaneseq
      %v4478 = vshrl.u32 %v4477, 7
      %v4479 = vsub.s32 %v4476, %v4478
      %v4480 = vrot.slane %v609, %v4479
      %v4482 = vunpack.c.l.s4 842150450
      %v4483 = vunpack.c.0.s8 %v4482
      %v4484 = vlaneseq
      %v4485 = vshrl.u32 %v4484, 7
      %v4486 = vsub.s32 %v4483, %v4485
      %v4487 = vrot.slane %v609, %v4486
      %v4489 = vunpack.c.l.s4 1414812756
      %v4490 = vunpack.c.0.s8 %v4489
      %v4491 = vlaneseq
      %v4492 = vshrl.u32 %v4491, 7
      %v4493 = vsub.s32 %v4490, %v4492
      %v4494 = vrot.slane %v609, %v4493
      %v4496 = vunpack.c.l.s4 1987475062
      %v4497 = vunpack.c.0.s8 %v4496
      %v4498 = vlaneseq
      %v4499 = vshrl.u32 %v4498, 7
      %v4500 = vsub.s32 %v4497, %v4499
      %v4501 = vrot.slane %v609, %v4500
      %v4503 = vunpack.c.l.s4 269488144
      %v4504 = vunpack.c.0.s8 %v4503
      %v4505 = vlaneseq
      %v4506 = vshrl.u32 %v4505, 7
      %v4507 = vsub.s32 %v4504, %v4506
      %v4508 = vrot.slane %v610, %v4507
      %v4510 = vunpack.c.l.s4 842150450
      %v4511 = vunpack.c.0.s8 %v4510
      %v4512 = vlaneseq
      %v4513 = vshrl.u32 %v4512, 7
      %v4514 = vsub.s32 %v4511, %v4513
      %v4515 = vrot.slane %v610, %v4514
      %v4517 = vunpack.c.l.s4 1414812756
      %v4518 = vunpack.c.0.s8 %v4517
      %v4519 = vlaneseq
      %v4520 = vshrl.u32 %v4519, 7
      %v4521 = vsub.s32 %v4518, %v4520
      %v4522 = vrot.slane %v610, %v4521
      %v4524 = vunpack.c.l.s4 1987475062
      %v4525 = vunpack.c.0.s8 %v4524
      %v4526 = vlaneseq
      %v4527 = vshrl.u32 %v4526, 7
      %v4528 = vsub.s32 %v4525, %v4527
      %v4529 = vrot.slane %v610, %v4528
      %v4531 = vunpack.c.l.s4 269488144
      %v4532 = vunpack.c.0.s8 %v4531
      %v4533 = vlaneseq
      %v4534 = vshrl.u32 %v4533, 7
      %v4535 = vsub.s32 %v4532, %v4534
      %v4536 = vrot.slane %v611, %v4535
      %v4538 = vunpack.c.l.s4 269488144
      %v4539 = vunpack.c.0.s8 %v4538
      %v4540 = vlaneseq
      %v4541 = vshrl.u32 %v4540, 7
      %v4542 = vsub.s32 %v4539, %v4541
      %v4543 = vrot.slane %v612, %v4542
      %v4545 = vunpack.c.l.s4 842150450
      %v4546 = vunpack.c.0.s8 %v4545
      %v4547 = vlaneseq
      %v4548 = vshrl.u32 %v4547, 7
      %v4549 = vsub.s32 %v4546, %v4548
      %v4550 = vrot.slane %v612, %v4549
      %v4552 = vunpack.c.l.s4 1414812756
      %v4553 = vunpack.c.0.s8 %v4552
      %v4554 = vlaneseq
      %v4555 = vshrl.u32 %v4554, 7
      %v4556 = vsub.s32 %v4553, %v4555
      %v4557 = vrot.slane %v612, %v4556
      %v4559 = vunpack.c.l.s4 1987475062
      %v4560 = vunpack.c.0.s8 %v4559
      %v4561 = vlaneseq
      %v4562 = vshrl.u32 %v4561, 7
      %v4563 = vsub.s32 %v4560, %v4562
      %v4564 = vrot.slane %v612, %v4563
      %v4566 = vunpack.c.l.s4 269488144
      %v4567 = vunpack.c.0.s8 %v4566
      %v4568 = vlaneseq
      %v4569 = vshrl.u32 %v4568, 7
      %v4570 = vsub.s32 %v4567, %v4569
      %v4571 = vrot.slane %v613, %v4570
      %v4573 = vunpack.c.l.s4 842150450
      %v4574 = vunpack.c.0.s8 %v4573
      %v4575 = vlaneseq
      %v4576 = vshrl.u32 %v4575, 7
      %v4577 = vsub.s32 %v4574, %v4576
      %v4578 = vrot.slane %v613, %v4577
      %v4580 = vunpack.c.l.s4 1414812756
      %v4581 = vunpack.c.0.s8 %v4580
      %v4582 = vlaneseq
      %v4583 = vshrl.u32 %v4582, 7
      %v4584 = vsub.s32 %v4581, %v4583
      %v4585 = vrot.slane %v613, %v4584
      %v4587 = vunpack.c.l.s4 1987475062
      %v4588 = vunpack.c.0.s8 %v4587
      %v4589 = vlaneseq
      %v4590 = vshrl.u32 %v4589, 7
      %v4591 = vsub.s32 %v4588, %v4590
      %v4592 = vrot.slane %v613, %v4591
      %v4594 = vunpack.c.l.s4 269488144
      %v4595 = vunpack.c.0.s8 %v4594
      %v4596 = vlaneseq
      %v4597 = vshrl.u32 %v4596, 7
      %v4598 = vsub.s32 %v4595, %v4597
      %v4599 = vrot.slane %v614, %v4598
      %v4601 = vunpack.c.l.s4 269488144
      %v4602 = vunpack.c.0.s8 %v4601
      %v4603 = vlaneseq
      %v4604 = vshrl.u32 %v4603, 7
      %v4605 = vsub.s32 %v4602, %v4604
      %v4606 = vrot.slane %v615, %v4605
      %v4608 = vunpack.c.l.s4 842150450
      %v4609 = vunpack.c.0.s8 %v4608
      %v4610 = vlaneseq
      %v4611 = vshrl.u32 %v4610, 7
      %v4612 = vsub.s32 %v4609, %v4611
      %v4613 = vrot.slane %v615, %v4612
      %v4615 = vunpack.c.l.s4 1414812756
      %v4616 = vunpack.c.0.s8 %v4615
      %v4617 = vlaneseq
      %v4618 = vshrl.u32 %v4617, 7
      %v4619 = vsub.s32 %v4616, %v4618
      %v4620 = vrot.slane %v615, %v4619
      %v4622 = vunpack.c.l.s4 1987475062
      %v4623 = vunpack.c.0.s8 %v4622
      %v4624 = vlaneseq
      %v4625 = vshrl.u32 %v4624, 7
      %v4626 = vsub.s32 %v4623, %v4625
      %v4627 = vrot.slane %v615, %v4626
      %v4629 = vunpack.c.l.s4 269488144
      %v4630 = vunpack.c.0.s8 %v4629
      %v4631 = vlaneseq
      %v4632 = vshrl.u32 %v4631, 7
      %v4633 = vsub.s32 %v4630, %v4632
      %v4634 = vrot.slane %v616, %v4633
      %v4636 = vunpack.c.l.s4 842150450
      %v4637 = vunpack.c.0.s8 %v4636
      %v4638 = vlaneseq
      %v4639 = vshrl.u32 %v4638, 7
      %v4640 = vsub.s32 %v4637, %v4639
      %v4641 = vrot.slane %v616, %v4640
      %v4643 = vunpack.c.l.s4 1414812756
      %v4644 = vunpack.c.0.s8 %v4643
      %v4645 = vlaneseq
      %v4646 = vshrl.u32 %v4645, 7
      %v4647 = vsub.s32 %v4644, %v4646
      %v4648 = vrot.slane %v616, %v4647
      %v4650 = vunpack.c.l.s4 1987475062
      %v4651 = vunpack.c.0.s8 %v4650
      %v4652 = vlaneseq
      %v4653 = vshrl.u32 %v4652, 7
      %v4654 = vsub.s32 %v4651, %v4653
      %v4655 = vrot.slane %v616, %v4654
      %v4657 = vunpack.c.l.s4 269488144
      %v4658 = vunpack.c.0.s8 %v4657
      %v4659 = vlaneseq
      %v4660 = vshrl.u32 %v4659, 7
      %v4661 = vsub.s32 %v4658, %v4660
      %v4662 = vrot.slane %v617, %v4661
      %v4664 = vunpack.c.l.s4 269488144
      %v4665 = vunpack.c.0.s8 %v4664
      %v4666 = vlaneseq
      %v4667 = vshrl.u32 %v4666, 7
      %v4668 = vsub.s32 %v4665, %v4667
      %v4669 = vrot.slane %v618, %v4668
      %v4671 = vunpack.c.l.s4 842150450
      %v4672 = vunpack.c.0.s8 %v4671
      %v4673 = vlaneseq
      %v4674 = vshrl.u32 %v4673, 7
      %v4675 = vsub.s32 %v4672, %v4674
      %v4676 = vrot.slane %v618, %v4675
      %v4678 = vunpack.c.l.s4 1414812756
      %v4679 = vunpack.c.0.s8 %v4678
      %v4680 = vlaneseq
      %v4681 = vshrl.u32 %v4680, 7
      %v4682 = vsub.s32 %v4679, %v4681
      %v4683 = vrot.slane %v618, %v4682
      %v4685 = vunpack.c.l.s4 1987475062
      %v4686 = vunpack.c.0.s8 %v4685
      %v4687 = vlaneseq
      %v4688 = vshrl.u32 %v4687, 7
      %v4689 = vsub.s32 %v4686, %v4688
      %v4690 = vrot.slane %v618, %v4689
      %v4692 = vunpack.c.l.s4 269488144
      %v4693 = vunpack.c.0.s8 %v4692
      %v4694 = vlaneseq
      %v4695 = vshrl.u32 %v4694, 7
      %v4696 = vsub.s32 %v4693, %v4695
      %v4697 = vrot.slane %v619, %v4696
      %v4699 = vunpack.c.l.s4 842150450
      %v4700 = vunpack.c.0.s8 %v4699
      %v4701 = vlaneseq
      %v4702 = vshrl.u32 %v4701, 7
      %v4703 = vsub.s32 %v4700, %v4702
      %v4704 = vrot.slane %v619, %v4703
      %v4706 = vunpack.c.l.s4 1414812756
      %v4707 = vunpack.c.0.s8 %v4706
      %v4708 = vlaneseq
      %v4709 = vshrl.u32 %v4708, 7
      %v4710 = vsub.s32 %v4707, %v4709
      %v4711 = vrot.slane %v619, %v4710
      %v4713 = vunpack.c.l.s4 1987475062
      %v4714 = vunpack.c.0.s8 %v4713
      %v4715 = vlaneseq
      %v4716 = vshrl.u32 %v4715, 7
      %v4717 = vsub.s32 %v4714, %v4716
      %v4718 = vrot.slane %v619, %v4717
      %v4720 = vunpack.c.l.s4 269488144
      %v4721 = vunpack.c.0.s8 %v4720
      %v4722 = vlaneseq
      %v4723 = vshrl.u32 %v4722, 7
      %v4724 = vsub.s32 %v4721, %v4723
      %v4725 = vrot.slane %v620, %v4724
      %v4727 = vunpack.c.l.s4 269488144
      %v4728 = vunpack.c.0.s8 %v4727
      %v4729 = vlaneseq
      %v4730 = vshrl.u32 %v4729, 7
      %v4731 = vsub.s32 %v4728, %v4730
      %v4732 = vrot.slane %v621, %v4731
      %v4734 = vunpack.c.l.s4 842150450
      %v4735 = vunpack.c.0.s8 %v4734
      %v4736 = vlaneseq
      %v4737 = vshrl.u32 %v4736, 7
      %v4738 = vsub.s32 %v4735, %v4737
      %v4739 = vrot.slane %v621, %v4738
      %v4741 = vunpack.c.l.s4 1414812756
      %v4742 = vunpack.c.0.s8 %v4741
      %v4743 = vlaneseq
      %v4744 = vshrl.u32 %v4743, 7
      %v4745 = vsub.s32 %v4742, %v4744
      %v4746 = vrot.slane %v621, %v4745
      %v4748 = vunpack.c.l.s4 1987475062
      %v4749 = vunpack.c.0.s8 %v4748
      %v4750 = vlaneseq
      %v4751 = vshrl.u32 %v4750, 7
      %v4752 = vsub.s32 %v4749, %v4751
      %v4753 = vrot.slane %v621, %v4752
      %v4755 = vunpack.c.l.s4 269488144
      %v4756 = vunpack.c.0.s8 %v4755
      %v4757 = vlaneseq
      %v4758 = vshrl.u32 %v4757, 7
      %v4759 = vsub.s32 %v4756, %v4758
      %v4760 = vrot.slane %v622, %v4759
      %v4762 = vunpack.c.l.s4 842150450
      %v4763 = vunpack.c.0.s8 %v4762
      %v4764 = vlaneseq
      %v4765 = vshrl.u32 %v4764, 7
      %v4766 = vsub.s32 %v4763, %v4765
      %v4767 = vrot.slane %v622, %v4766
      %v4769 = vunpack.c.l.s4 1414812756
      %v4770 = vunpack.c.0.s8 %v4769
      %v4771 = vlaneseq
      %v4772 = vshrl.u32 %v4771, 7
      %v4773 = vsub.s32 %v4770, %v4772
      %v4774 = vrot.slane %v622, %v4773
      %v4776 = vunpack.c.l.s4 1987475062
      %v4777 = vunpack.c.0.s8 %v4776
      %v4778 = vlaneseq
      %v4779 = vshrl.u32 %v4778, 7
      %v4780 = vsub.s32 %v4777, %v4779
      %v4781 = vrot.slane %v622, %v4780
      %v4783 = vunpack.c.l.s4 269488144
      %v4784 = vunpack.c.0.s8 %v4783
      %v4785 = vlaneseq
      %v4786 = vshrl.u32 %v4785, 7
      %v4787 = vsub.s32 %v4784, %v4786
      %v4788 = vrot.slane %v623, %v4787
      %v4790 = vunpack.c.l.s4 269488144
      %v4791 = vunpack.c.0.s8 %v4790
      %v4792 = vlaneseq
      %v4793 = vshrl.u32 %v4792, 7
      %v4794 = vsub.s32 %v4791, %v4793
      %v4795 = vrot.slane %v624, %v4794
      %v4797 = vunpack.c.l.s4 842150450
      %v4798 = vunpack.c.0.s8 %v4797
      %v4799 = vlaneseq
      %v4800 = vshrl.u32 %v4799, 7
      %v4801 = vsub.s32 %v4798, %v4800
      %v4802 = vrot.slane %v624, %v4801
      %v4804 = vunpack.c.l.s4 1414812756
      %v4805 = vunpack.c.0.s8 %v4804
      %v4806 = vlaneseq
      %v4807 = vshrl.u32 %v4806, 7
      %v4808 = vsub.s32 %v4805, %v4807
      %v4809 = vrot.slane %v624, %v4808
      %v4811 = vunpack.c.l.s4 1987475062
      %v4812 = vunpack.c.0.s8 %v4811
      %v4813 = vlaneseq
      %v4814 = vshrl.u32 %v4813, 7
      %v4815 = vsub.s32 %v4812, %v4814
      %v4816 = vrot.slane %v624, %v4815
      %v4818 = vunpack.c.l.s4 269488144
      %v4819 = vunpack.c.0.s8 %v4818
      %v4820 = vlaneseq
      %v4821 = vshrl.u32 %v4820, 7
      %v4822 = vsub.s32 %v4819, %v4821
      %v4823 = vrot.slane %v625, %v4822
      %v4825 = vunpack.c.l.s4 842150450
      %v4826 = vunpack.c.0.s8 %v4825
      %v4827 = vlaneseq
      %v4828 = vshrl.u32 %v4827, 7
      %v4829 = vsub.s32 %v4826, %v4828
      %v4830 = vrot.slane %v625, %v4829
      %v4832 = vunpack.c.l.s4 1414812756
      %v4833 = vunpack.c.0.s8 %v4832
      %v4834 = vlaneseq
      %v4835 = vshrl.u32 %v4834, 7
      %v4836 = vsub.s32 %v4833, %v4835
      %v4837 = vrot.slane %v625, %v4836
      %v4839 = vunpack.c.l.s4 1987475062
      %v4840 = vunpack.c.0.s8 %v4839
      %v4841 = vlaneseq
      %v4842 = vshrl.u32 %v4841, 7
      %v4843 = vsub.s32 %v4840, %v4842
      %v4844 = vrot.slane %v625, %v4843
      %v4846 = vunpack.c.l.s4 269488144
      %v4847 = vunpack.c.0.s8 %v4846
      %v4848 = vlaneseq
      %v4849 = vshrl.u32 %v4848, 7
      %v4850 = vsub.s32 %v4847, %v4849
      %v4851 = vrot.slane %v626, %v4850
      %v4853 = vunpack.c.l.s4 269488144
      %v4854 = vunpack.c.0.s8 %v4853
      %v4855 = vlaneseq
      %v4856 = vshrl.u32 %v4855, 7
      %v4857 = vsub.s32 %v4854, %v4856
      %v4858 = vrot.slane %v627, %v4857
      %v4860 = vunpack.c.l.s4 842150450
      %v4861 = vunpack.c.0.s8 %v4860
      %v4862 = vlaneseq
      %v4863 = vshrl.u32 %v4862, 7
      %v4864 = vsub.s32 %v4861, %v4863
      %v4865 = vrot.slane %v627, %v4864
      %v4867 = vunpack.c.l.s4 1414812756
      %v4868 = vunpack.c.0.s8 %v4867
      %v4869 = vlaneseq
      %v4870 = vshrl.u32 %v4869, 7
      %v4871 = vsub.s32 %v4868, %v4870
      %v4872 = vrot.slane %v627, %v4871
      %v4874 = vunpack.c.l.s4 1987475062
      %v4875 = vunpack.c.0.s8 %v4874
      %v4876 = vlaneseq
      %v4877 = vshrl.u32 %v4876, 7
      %v4878 = vsub.s32 %v4875, %v4877
      %v4879 = vrot.slane %v627, %v4878
      %v4881 = vunpack.c.l.s4 269488144
      %v4882 = vunpack.c.0.s8 %v4881
      %v4883 = vlaneseq
      %v4884 = vshrl.u32 %v4883, 7
      %v4885 = vsub.s32 %v4882, %v4884
      %v4886 = vrot.slane %v628, %v4885
      %v4888 = vunpack.c.l.s4 842150450
      %v4889 = vunpack.c.0.s8 %v4888
      %v4890 = vlaneseq
      %v4891 = vshrl.u32 %v4890, 7
      %v4892 = vsub.s32 %v4889, %v4891
      %v4893 = vrot.slane %v628, %v4892
      %v4895 = vunpack.c.l.s4 1414812756
      %v4896 = vunpack.c.0.s8 %v4895
      %v4897 = vlaneseq
      %v4898 = vshrl.u32 %v4897, 7
      %v4899 = vsub.s32 %v4896, %v4898
      %v4900 = vrot.slane %v628, %v4899
      %v4902 = vunpack.c.l.s4 1987475062
      %v4903 = vunpack.c.0.s8 %v4902
      %v4904 = vlaneseq
      %v4905 = vshrl.u32 %v4904, 7
      %v4906 = vsub.s32 %v4903, %v4905
      %v4907 = vrot.slane %v628, %v4906
      %v4909 = vunpack.c.l.s4 269488144
      %v4910 = vunpack.c.0.s8 %v4909
      %v4911 = vlaneseq
      %v4912 = vshrl.u32 %v4911, 7
      %v4913 = vsub.s32 %v4910, %v4912
      %v4914 = vrot.slane %v629, %v4913
      %v4916 = vunpack.c.l.s4 269488144
      %v4917 = vunpack.c.0.s8 %v4916
      %v4918 = vlaneseq
      %v4919 = vshrl.u32 %v4918, 7
      %v4920 = vsub.s32 %v4917, %v4919
      %v4921 = vrot.slane %v630, %v4920
      %v4923 = vunpack.c.l.s4 842150450
      %v4924 = vunpack.c.0.s8 %v4923
      %v4925 = vlaneseq
      %v4926 = vshrl.u32 %v4925, 7
      %v4927 = vsub.s32 %v4924, %v4926
      %v4928 = vrot.slane %v630, %v4927
      %v4930 = vunpack.c.l.s4 1414812756
      %v4931 = vunpack.c.0.s8 %v4930
      %v4932 = vlaneseq
      %v4933 = vshrl.u32 %v4932, 7
      %v4934 = vsub.s32 %v4931, %v4933
      %v4935 = vrot.slane %v630, %v4934
      %v4937 = vunpack.c.l.s4 1987475062
      %v4938 = vunpack.c.0.s8 %v4937
      %v4939 = vlaneseq
      %v4940 = vshrl.u32 %v4939, 7
      %v4941 = vsub.s32 %v4938, %v4940
      %v4942 = vrot.slane %v630, %v4941
      %v4944 = vunpack.c.l.s4 269488144
      %v4945 = vunpack.c.0.s8 %v4944
      %v4946 = vlaneseq
      %v4947 = vshrl.u32 %v4946, 7
      %v4948 = vsub.s32 %v4945, %v4947
      %v4949 = vrot.slane %v631, %v4948
      %v4951 = vunpack.c.l.s4 842150450
      %v4952 = vunpack.c.0.s8 %v4951
      %v4953 = vlaneseq
      %v4954 = vshrl.u32 %v4953, 7
      %v4955 = vsub.s32 %v4952, %v4954
      %v4956 = vrot.slane %v631, %v4955
      %v4958 = vunpack.c.l.s4 1414812756
      %v4959 = vunpack.c.0.s8 %v4958
      %v4960 = vlaneseq
      %v4961 = vshrl.u32 %v4960, 7
      %v4962 = vsub.s32 %v4959, %v4961
      %v4963 = vrot.slane %v631, %v4962
      %v4965 = vunpack.c.l.s4 1987475062
      %v4966 = vunpack.c.0.s8 %v4965
      %v4967 = vlaneseq
      %v4968 = vshrl.u32 %v4967, 7
      %v4969 = vsub.s32 %v4966, %v4968
      %v4970 = vrot.slane %v631, %v4969
      %v4972 = vunpack.c.l.s4 269488144
      %v4973 = vunpack.c.0.s8 %v4972
      %v4974 = vlaneseq
      %v4975 = vshrl.u32 %v4974, 7
      %v4976 = vsub.s32 %v4973, %v4975
      %v4977 = vrot.slane %v632, %v4976
      %v4979 = vunpack.c.l.s4 269488144
      %v4980 = vunpack.c.0.s8 %v4979
      %v4981 = vlaneseq
      %v4982 = vshrl.u32 %v4981, 7
      %v4983 = vsub.s32 %v4980, %v4982
      %v4984 = vrot.slane %v633, %v4983
      %v4986 = vunpack.c.l.s4 842150450
      %v4987 = vunpack.c.0.s8 %v4986
      %v4988 = vlaneseq
      %v4989 = vshrl.u32 %v4988, 7
      %v4990 = vsub.s32 %v4987, %v4989
      %v4991 = vrot.slane %v633, %v4990
      %v4993 = vunpack.c.l.s4 1414812756
      %v4994 = vunpack.c.0.s8 %v4993
      %v4995 = vlaneseq
      %v4996 = vshrl.u32 %v4995, 7
      %v4997 = vsub.s32 %v4994, %v4996
      %v4998 = vrot.slane %v633, %v4997
      %v5000 = vunpack.c.l.s4 1987475062
      %v5001 = vunpack.c.0.s8 %v5000
      %v5002 = vlaneseq
      %v5003 = vshrl.u32 %v5002, 7
      %v5004 = vsub.s32 %v5001, %v5003
      %v5005 = vrot.slane %v633, %v5004
      %v5007 = vunpack.c.l.s4 269488144
      %v5008 = vunpack.c.0.s8 %v5007
      %v5009 = vlaneseq
      %v5010 = vshrl.u32 %v5009, 7
      %v5011 = vsub.s32 %v5008, %v5010
      %v5012 = vrot.slane %v634, %v5011
      %v5014 = vunpack.c.l.s4 842150450
      %v5015 = vunpack.c.0.s8 %v5014
      %v5016 = vlaneseq
      %v5017 = vshrl.u32 %v5016, 7
      %v5018 = vsub.s32 %v5015, %v5017
      %v5019 = vrot.slane %v634, %v5018
      %v5021 = vunpack.c.l.s4 1414812756
      %v5022 = vunpack.c.0.s8 %v5021
      %v5023 = vlaneseq
      %v5024 = vshrl.u32 %v5023, 7
      %v5025 = vsub.s32 %v5022, %v5024
      %v5026 = vrot.slane %v634, %v5025
      %v5028 = vunpack.c.l.s4 1987475062
      %v5029 = vunpack.c.0.s8 %v5028
      %v5030 = vlaneseq
      %v5031 = vshrl.u32 %v5030, 7
      %v5032 = vsub.s32 %v5029, %v5031
      %v5033 = vrot.slane %v634, %v5032
      %v5035 = vunpack.c.l.s4 269488144
      %v5036 = vunpack.c.0.s8 %v5035
      %v5037 = vlaneseq
      %v5038 = vshrl.u32 %v5037, 7
      %v5039 = vsub.s32 %v5036, %v5038
      %v5040 = vrot.slane %v635, %v5039
      %v5042 = vunpack.c.l.s4 269488144
      %v5043 = vunpack.c.0.s8 %v5042
      %v5044 = vlaneseq
      %v5045 = vshrl.u32 %v5044, 7
      %v5046 = vsub.s32 %v5043, %v5045
      %v5047 = vrot.slane %v636, %v5046
      %v5049 = vunpack.c.l.s4 842150450
      %v5050 = vunpack.c.0.s8 %v5049
      %v5051 = vlaneseq
      %v5052 = vshrl.u32 %v5051, 7
      %v5053 = vsub.s32 %v5050, %v5052
      %v5054 = vrot.slane %v636, %v5053
      %v5056 = vunpack.c.l.s4 1414812756
      %v5057 = vunpack.c.0.s8 %v5056
      %v5058 = vlaneseq
      %v5059 = vshrl.u32 %v5058, 7
      %v5060 = vsub.s32 %v5057, %v5059
      %v5061 = vrot.slane %v636, %v5060
      %v5063 = vunpack.c.l.s4 1987475062
      %v5064 = vunpack.c.0.s8 %v5063
      %v5065 = vlaneseq
      %v5066 = vshrl.u32 %v5065, 7
      %v5067 = vsub.s32 %v5064, %v5066
      %v5068 = vrot.slane %v636, %v5067
      %v5070 = vunpack.c.l.s4 269488144
      %v5071 = vunpack.c.0.s8 %v5070
      %v5072 = vlaneseq
      %v5073 = vshrl.u32 %v5072, 7
      %v5074 = vsub.s32 %v5071, %v5073
      %v5075 = vrot.slane %v637, %v5074
      %v5077 = vunpack.c.l.s4 842150450
      %v5078 = vunpack.c.0.s8 %v5077
      %v5079 = vlaneseq
      %v5080 = vshrl.u32 %v5079, 7
      %v5081 = vsub.s32 %v5078, %v5080
      %v5082 = vrot.slane %v637, %v5081
      %v5084 = vunpack.c.l.s4 1414812756
      %v5085 = vunpack.c.0.s8 %v5084
      %v5086 = vlaneseq
      %v5087 = vshrl.u32 %v5086, 7
      %v5088 = vsub.s32 %v5085, %v5087
      %v5089 = vrot.slane %v637, %v5088
      %v5091 = vunpack.c.l.s4 1987475062
      %v5092 = vunpack.c.0.s8 %v5091
      %v5093 = vlaneseq
      %v5094 = vshrl.u32 %v5093, 7
      %v5095 = vsub.s32 %v5092, %v5094
      %v5096 = vrot.slane %v637, %v5095
      %v5098 = vunpack.c.l.s4 269488144
      %v5099 = vunpack.c.0.s8 %v5098
      %v5100 = vlaneseq
      %v5101 = vshrl.u32 %v5100, 7
      %v5102 = vsub.s32 %v5099, %v5101
      %v5103 = vrot.slane %v638, %v5102
      %v5105 = vunpack.c.l.s4 269488144
      %v5106 = vunpack.c.0.s8 %v5105
      %v5107 = vlaneseq
      %v5108 = vshrl.u32 %v5107, 7
      %v5109 = vsub.s32 %v5106, %v5108
      %v5110 = vrot.slane %v639, %v5109
      %v5112 = vunpack.c.l.s4 842150450
      %v5113 = vunpack.c.0.s8 %v5112
      %v5114 = vlaneseq
      %v5115 = vshrl.u32 %v5114, 7
      %v5116 = vsub.s32 %v5113, %v5115
      %v5117 = vrot.slane %v639, %v5116
      %v5119 = vunpack.c.l.s4 1414812756
      %v5120 = vunpack.c.0.s8 %v5119
      %v5121 = vlaneseq
      %v5122 = vshrl.u32 %v5121, 7
      %v5123 = vsub.s32 %v5120, %v5122
      %v5124 = vrot.slane %v639, %v5123
      %v5126 = vunpack.c.l.s4 1987475062
      %v5127 = vunpack.c.0.s8 %v5126
      %v5128 = vlaneseq
      %v5129 = vshrl.u32 %v5128, 7
      %v5130 = vsub.s32 %v5127, %v5129
      %v5131 = vrot.slane %v639, %v5130
      %v5133 = vunpack.c.l.s4 269488144
      %v5134 = vunpack.c.0.s8 %v5133
      %v5135 = vlaneseq
      %v5136 = vshrl.u32 %v5135, 7
      %v5137 = vsub.s32 %v5134, %v5136
      %v5138 = vrot.slane %v640, %v5137
      %v5140 = vunpack.c.l.s4 842150450
      %v5141 = vunpack.c.0.s8 %v5140
      %v5142 = vlaneseq
      %v5143 = vshrl.u32 %v5142, 7
      %v5144 = vsub.s32 %v5141, %v5143
      %v5145 = vrot.slane %v640, %v5144
      %v5147 = vunpack.c.l.s4 1414812756
      %v5148 = vunpack.c.0.s8 %v5147
      %v5149 = vlaneseq
      %v5150 = vshrl.u32 %v5149, 7
      %v5151 = vsub.s32 %v5148, %v5150
      %v5152 = vrot.slane %v640, %v5151
      %v5154 = vunpack.c.l.s4 1987475062
      %v5155 = vunpack.c.0.s8 %v5154
      %v5156 = vlaneseq
      %v5157 = vshrl.u32 %v5156, 7
      %v5158 = vsub.s32 %v5155, %v5157
      %v5159 = vrot.slane %v640, %v5158
      %v5161 = vunpack.c.l.s4 269488144
      %v5162 = vunpack.c.0.s8 %v5161
      %v5163 = vlaneseq
      %v5164 = vshrl.u32 %v5163, 7
      %v5165 = vsub.s32 %v5162, %v5164
      %v5166 = vrot.slane %v641, %v5165
      %v5168 = vunpack.c.l.s4 269488144
      %v5169 = vunpack.c.0.s8 %v5168
      %v5170 = vlaneseq
      %v5171 = vshrl.u32 %v5170, 7
      %v5172 = vsub.s32 %v5169, %v5171
      %v5173 = vrot.slane %v642, %v5172
      %v5175 = vunpack.c.l.s4 842150450
      %v5176 = vunpack.c.0.s8 %v5175
      %v5177 = vlaneseq
      %v5178 = vshrl.u32 %v5177, 7
      %v5179 = vsub.s32 %v5176, %v5178
      %v5180 = vrot.slane %v642, %v5179
      %v5182 = vunpack.c.l.s4 1414812756
      %v5183 = vunpack.c.0.s8 %v5182
      %v5184 = vlaneseq
      %v5185 = vshrl.u32 %v5184, 7
      %v5186 = vsub.s32 %v5183, %v5185
      %v5187 = vrot.slane %v642, %v5186
      %v5189 = vunpack.c.l.s4 1987475062
      %v5190 = vunpack.c.0.s8 %v5189
      %v5191 = vlaneseq
      %v5192 = vshrl.u32 %v5191, 7
      %v5193 = vsub.s32 %v5190, %v5192
      %v5194 = vrot.slane %v642, %v5193
      %v5196 = vunpack.c.l.s4 269488144
      %v5197 = vunpack.c.0.s8 %v5196
      %v5198 = vlaneseq
      %v5199 = vshrl.u32 %v5198, 7
      %v5200 = vsub.s32 %v5197, %v5199
      %v5201 = vrot.slane %v643, %v5200
      %v5203 = vunpack.c.l.s4 842150450
      %v5204 = vunpack.c.0.s8 %v5203
      %v5205 = vlaneseq
      %v5206 = vshrl.u32 %v5205, 7
      %v5207 = vsub.s32 %v5204, %v5206
      %v5208 = vrot.slane %v643, %v5207
      %v5210 = vunpack.c.l.s4 1414812756
      %v5211 = vunpack.c.0.s8 %v5210
      %v5212 = vlaneseq
      %v5213 = vshrl.u32 %v5212, 7
      %v5214 = vsub.s32 %v5211, %v5213
      %v5215 = vrot.slane %v643, %v5214
      %v5217 = vunpack.c.l.s4 1987475062
      %v5218 = vunpack.c.0.s8 %v5217
      %v5219 = vlaneseq
      %v5220 = vshrl.u32 %v5219, 7
      %v5221 = vsub.s32 %v5218, %v5220
      %v5222 = vrot.slane %v643, %v5221
      %v5224 = vunpack.c.l.s4 269488144
      %v5225 = vunpack.c.0.s8 %v5224
      %v5226 = vlaneseq
      %v5227 = vshrl.u32 %v5226, 7
      %v5228 = vsub.s32 %v5225, %v5227
      %v5229 = vrot.slane %v644, %v5228
      %v5231 = vunpack.c.l.s4 269488144
      %v5232 = vunpack.c.0.s8 %v5231
      %v5233 = vlaneseq
      %v5234 = vshrl.u32 %v5233, 7
      %v5235 = vsub.s32 %v5232, %v5234
      %v5236 = vrot.slane %v645, %v5235
      %v5238 = vunpack.c.l.s4 842150450
      %v5239 = vunpack.c.0.s8 %v5238
      %v5240 = vlaneseq
      %v5241 = vshrl.u32 %v5240, 7
      %v5242 = vsub.s32 %v5239, %v5241
      %v5243 = vrot.slane %v645, %v5242
      %v5245 = vunpack.c.l.s4 1414812756
      %v5246 = vunpack.c.0.s8 %v5245
      %v5247 = vlaneseq
      %v5248 = vshrl.u32 %v5247, 7
      %v5249 = vsub.s32 %v5246, %v5248
      %v5250 = vrot.slane %v645, %v5249
      %v5252 = vunpack.c.l.s4 1987475062
      %v5253 = vunpack.c.0.s8 %v5252
      %v5254 = vlaneseq
      %v5255 = vshrl.u32 %v5254, 7
      %v5256 = vsub.s32 %v5253, %v5255
      %v5257 = vrot.slane %v645, %v5256
      %v5259 = vunpack.c.l.s4 269488144
      %v5260 = vunpack.c.0.s8 %v5259
      %v5261 = vlaneseq
      %v5262 = vshrl.u32 %v5261, 7
      %v5263 = vsub.s32 %v5260, %v5262
      %v5264 = vrot.slane %v646, %v5263
      %v5266 = vunpack.c.l.s4 842150450
      %v5267 = vunpack.c.0.s8 %v5266
      %v5268 = vlaneseq
      %v5269 = vshrl.u32 %v5268, 7
      %v5270 = vsub.s32 %v5267, %v5269
      %v5271 = vrot.slane %v646, %v5270
      %v5273 = vunpack.c.l.s4 1414812756
      %v5274 = vunpack.c.0.s8 %v5273
      %v5275 = vlaneseq
      %v5276 = vshrl.u32 %v5275, 7
      %v5277 = vsub.s32 %v5274, %v5276
      %v5278 = vrot.slane %v646, %v5277
      %v5280 = vunpack.c.l.s4 1987475062
      %v5281 = vunpack.c.0.s8 %v5280
      %v5282 = vlaneseq
      %v5283 = vshrl.u32 %v5282, 7
      %v5284 = vsub.s32 %v5281, %v5283
      %v5285 = vrot.slane %v646, %v5284
      %v5287 = vunpack.c.l.s4 269488144
      %v5288 = vunpack.c.0.s8 %v5287
      %v5289 = vlaneseq
      %v5290 = vshrl.u32 %v5289, 7
      %v5291 = vsub.s32 %v5288, %v5290
      %v5292 = vrot.slane %v647, %v5291
      %v5294 = vunpack.c.l.s4 269488144
      %v5295 = vunpack.c.0.s8 %v5294
      %v5296 = vlaneseq
      %v5297 = vshrl.u32 %v5296, 7
      %v5298 = vsub.s32 %v5295, %v5297
      %v5299 = vrot.slane %v648, %v5298
      %v5301 = vunpack.c.l.s4 842150450
      %v5302 = vunpack.c.0.s8 %v5301
      %v5303 = vlaneseq
      %v5304 = vshrl.u32 %v5303, 7
      %v5305 = vsub.s32 %v5302, %v5304
      %v5306 = vrot.slane %v648, %v5305
      %v5308 = vunpack.c.l.s4 1414812756
      %v5309 = vunpack.c.0.s8 %v5308
      %v5310 = vlaneseq
      %v5311 = vshrl.u32 %v5310, 7
      %v5312 = vsub.s32 %v5309, %v5311
      %v5313 = vrot.slane %v648, %v5312
      %v5315 = vunpack.c.l.s4 1987475062
      %v5316 = vunpack.c.0.s8 %v5315
      %v5317 = vlaneseq
      %v5318 = vshrl.u32 %v5317, 7
      %v5319 = vsub.s32 %v5316, %v5318
      %v5320 = vrot.slane %v648, %v5319
      %v5322 = vunpack.c.l.s4 269488144
      %v5323 = vunpack.c.0.s8 %v5322
      %v5324 = vlaneseq
      %v5325 = vshrl.u32 %v5324, 7
      %v5326 = vsub.s32 %v5323, %v5325
      %v5327 = vrot.slane %v649, %v5326
      %v5329 = vunpack.c.l.s4 842150450
      %v5330 = vunpack.c.0.s8 %v5329
      %v5331 = vlaneseq
      %v5332 = vshrl.u32 %v5331, 7
      %v5333 = vsub.s32 %v5330, %v5332
      %v5334 = vrot.slane %v649, %v5333
      %v5336 = vunpack.c.l.s4 1414812756
      %v5337 = vunpack.c.0.s8 %v5336
      %v5338 = vlaneseq
      %v5339 = vshrl.u32 %v5338, 7
      %v5340 = vsub.s32 %v5337, %v5339
      %v5341 = vrot.slane %v649, %v5340
      %v5343 = vunpack.c.l.s4 1987475062
      %v5344 = vunpack.c.0.s8 %v5343
      %v5345 = vlaneseq
      %v5346 = vshrl.u32 %v5345, 7
      %v5347 = vsub.s32 %v5344, %v5346
      %v5348 = vrot.slane %v649, %v5347
      %v5350 = vunpack.c.l.s4 269488144
      %v5351 = vunpack.c.0.s8 %v5350
      %v5352 = vlaneseq
      %v5353 = vshrl.u32 %v5352, 7
      %v5354 = vsub.s32 %v5351, %v5353
      %v5355 = vrot.slane %v650, %v5354
      %v5518 = vmul.f32 %v3325, %v4228
      %v5519 = vmul.f32 %v3333, %v4235
      %v5520 = vmul.f32 %v3332, %v4242
      %v5521 = vmul.f32 %v3334, %v4249
      %v5522 = vmul.f32 %v3342, %v4256
      %v5523 = vmul.f32 %v3350, %v4263
      %v5524 = vmul.f32 %v3349, %v4270
      %v5525 = vmul.f32 %v3351, %v4277
      %v5526 = vmul.f32 %v3359, %v4284
      %v5527 = vmul.f32 %v3367, %v4291
      %v5528 = vmul.f32 %v3366, %v4298
      %v5529 = vmul.f32 %v3368, %v4305
      %v5530 = vmul.f32 %v3376, %v4312
      %v5531 = vmul.f32 %v3384, %v4319
      %v5532 = vmul.f32 %v3383, %v4326
      %v5533 = vmul.f32 %v3385, %v4333
      %v5534 = vmul.f32 %v3393, %v4340
      %v5535 = vmul.f32 %v3401, %v4347
      %v5536 = vmul.f32 %v3400, %v4354
      %v5537 = vmul.f32 %v3402, %v4361
      %v5538 = vmul.f32 %v3410, %v4368
      %v5539 = vmul.f32 %v3418, %v4375
      %v5540 = vmul.f32 %v3417, %v4382
      %v5541 = vmul.f32 %v3419, %v4389
      %v5542 = vmul.f32 %v3427, %v4396
      %v5543 = vmul.f32 %v3435, %v4403
      %v5544 = vmul.f32 %v3434, %v4410
      %v5545 = vmul.f32 %v3436, %v4417
      %v5546 = vmul.f32 %v3444, %v4424
      %v5547 = vmul.f32 %v3452, %v4431
      %v5548 = vmul.f32 %v3451, %v4438
      %v5549 = vmul.f32 %v3453, %v4445
      %v5550 = vmul.f32 %v3461, %v4452
      %v5551 = vmul.f32 %v3469, %v4459
      %v5552 = vmul.f32 %v3468, %v4466
      %v5553 = vmul.f32 %v3470, %v4473
      %v5554 = vmul.f32 %v3478, %v4480
      %v5555 = vmul.f32 %v3486, %v4487
      %v5556 = vmul.f32 %v3485, %v4494
      %v5557 = vmul.f32 %v3487, %v4501
      %v5558 = vmul.f32 %v3495, %v4508
      %v5559 = vmul.f32 %v3503, %v4515
      %v5560 = vmul.f32 %v3502, %v4522
      %v5561 = vmul.f32 %v3504, %v4529
      %v5562 = vmul.f32 %v3512, %v4536
      %v5563 = vmul.f32 %v3520, %v4543
      %v5564 = vmul.f32 %v3519, %v4550
      %v5565 = vmul.f32 %v3521, %v4557
      %v5566 = vmul.f32 %v3529, %v4564
      %v5567 = vmul.f32 %v3537, %v4571
      %v5568 = vmul.f32 %v3536, %v4578
      %v5569 = vmul.f32 %v3538, %v4585
      %v5570 = vmul.f32 %v3546, %v4592
      %v5571 = vmul.f32 %v3554, %v4599
      %v5572 = vmul.f32 %v3553, %v4606
      %v5573 = vmul.f32 %v3555, %v4613
      %v5574 = vmul.f32 %v3563, %v4620
      %v5575 = vmul.f32 %v3571, %v4627
      %v5576 = vmul.f32 %v3570, %v4634
      %v5577 = vmul.f32 %v3572, %v4641
      %v5578 = vmul.f32 %v3580, %v4648
      %v5579 = vmul.f32 %v3588, %v4655
      %v5580 = vmul.f32 %v3587, %v4662
      %v5581 = vmul.f32 %v3589, %v4669
      %v5582 = vmul.f32 %v3597, %v4676
      %v5583 = vmul.f32 %v3605, %v4683
      %v5584 = vmul.f32 %v3604, %v4690
      %v5585 = vmul.f32 %v3606, %v4697
      %v5586 = vmul.f32 %v3614, %v4704
      %v5587 = vmul.f32 %v3622, %v4711
      %v5588 = vmul.f32 %v3621, %v4718
      %v5589 = vmul.f32 %v3623, %v4725
      %v5590 = vmul.f32 %v3631, %v4732
      %v5591 = vmul.f32 %v3639, %v4739
      %v5592 = vmul.f32 %v3638, %v4746
      %v5593 = vmul.f32 %v3640, %v4753
      %v5594 = vmul.f32 %v3648, %v4760
      %v5595 = vmul.f32 %v3656, %v4767
      %v5596 = vmul.f32 %v3655, %v4774
      %v5597 = vmul.f32 %v3657, %v4781
      %v5598 = vmul.f32 %v3665, %v4788
      %v5599 = vmul.f32 %v3673, %v4795
      %v5600 = vmul.f32 %v3672, %v4802
      %v5601 = vmul.f32 %v3674, %v4809
      %v5602 = vmul.f32 %v3682, %v4816
      %v5603 = vmul.f32 %v3690, %v4823
      %v5604 = vmul.f32 %v3689, %v4830
      %v5605 = vmul.f32 %v3691, %v4837
      %v5606 = vmul.f32 %v3699, %v4844
      %v5607 = vmul.f32 %v3707, %v4851
      %v5608 = vmul.f32 %v3706, %v4858
      %v5609 = vmul.f32 %v3708, %v4865
      %v5610 = vmul.f32 %v3716, %v4872
      %v5611 = vmul.f32 %v3724, %v4879
      %v5612 = vmul.f32 %v3723, %v4886
      %v5613 = vmul.f32 %v3725, %v4893
      %v5614 = vmul.f32 %v3733, %v4900
      %v5615 = vmul.f32 %v3741, %v4907
      %v5616 = vmul.f32 %v3740, %v4914
      %v5617 = vmul.f32 %v3742, %v4921
      %v5618 = vmul.f32 %v3750, %v4928
      %v5619 = vmul.f32 %v3758, %v4935
      %v5620 = vmul.f32 %v3757, %v4942
      %v5621 = vmul.f32 %v3759, %v4949
      %v5622 = vmul.f32 %v3767, %v4956
      %v5623 = vmul.f32 %v3775, %v4963
      %v5624 = vmul.f32 %v3774, %v4970
      %v5625 = vmul.f32 %v3776, %v4977
      %v5626 = vmul.f32 %v3784, %v4984
      %v5627 = vmul.f32 %v3792, %v4991
      %v5628 = vmul.f32 %v3791, %v4998
      %v5629 = vmul.f32 %v3793, %v5005
      %v5630 = vmul.f32 %v3801, %v5012
      %v5631 = vmul.f32 %v3809, %v5019
      %v5632 = vmul.f32 %v3808, %v5026
      %v5633 = vmul.f32 %v3810, %v5033
      %v5634 = vmul.f32 %v3818, %v5040
      %v5635 = vmul.f32 %v3826, %v5047
      %v5636 = vmul.f32 %v3825, %v5054
      %v5637 = vmul.f32 %v3827, %v5061
      %v5638 = vmul.f32 %v3835, %v5068
      %v5639 = vmul.f32 %v3843, %v5075
      %v5640 = vmul.f32 %v3842, %v5082
      %v5641 = vmul.f32 %v3844, %v5089
      %v5642 = vmul.f32 %v3852, %v5096
      %v5643 = vmul.f32 %v3860, %v5103
      %v5644 = vmul.f32 %v3859, %v5110
      %v5645 = vmul.f32 %v3861, %v5117
      %v5646 = vmul.f32 %v3869, %v5124
      %v5647 = vmul.f32 %v3877, %v5131
      %v5648 = vmul.f32 %v3876, %v5138
      %v5649 = vmul.f32 %v3878, %v5145
      %v5650 = vmul.f32 %v3886, %v5152
      %v5651 = vmul.f32 %v3894, %v5159
      %v5652 = vmul.f32 %v3893, %v5166
      %v5653 = vmul.f32 %v3895, %v5173
      %v5654 = vmul.f32 %v3903, %v5180
      %v5655 = vmul.f32 %v3911, %v5187
      %v5656 = vmul.f32 %v3910, %v5194
      %v5657 = vmul.f32 %v3912, %v5201
      %v5658 = vmul.f32 %v3920, %v5208
      %v5659 = vmul.f32 %v3928, %v5215
      %v5660 = vmul.f32 %v3927, %v5222
      %v5661 = vmul.f32 %v3929, %v5229
      %v5662 = vmul.f32 %v3937, %v5236
      %v5663 = vmul.f32 %v3945, %v5243
      %v5664 = vmul.f32 %v3944, %v5250
      %v5665 = vmul.f32 %v3946, %v5257
      %v5666 = vmul.f32 %v3954, %v5264
      %v5667 = vmul.f32 %v3962, %v5271
      %v5668 = vmul.f32 %v3961, %v5278
      %v5669 = vmul.f32 %v3963, %v5285
      %v5670 = vmul.f32 %v3971, %v5292
      %v5671 = vmul.f32 %v3979, %v5299
      %v5672 = vmul.f32 %v3978, %v5306
      %v5673 = vmul.f32 %v3980, %v5313
      %v5674 = vmul.f32 %v3988, %v5320
      %v5675 = vmul.f32 %v3996, %v5327
      %v5676 = vmul.f32 %v3995, %v5334
      %v5677 = vmul.f32 %v3997, %v5341
      %v5678 = vmul.f32 %v4004, %v5348
      %v5679 = vmul.f32 %v4005, %v5355
      %v5842 = vcombine.low %v5518, %v5519
      %v5843 = vcombine.low %v5520, %v5521
      %v5845 = vunpack.c.l.s4 1983009808
      %v5846 = vunpack.c.0.s8 %v5845
      %v5847 = vlaneseq
      %v5848 = vshrl.u32 %v5847, 7
      %v5849 = vsub.s32 %v5846, %v5848
      %v5850 = vrot.slane %v5842, %v5849
      %v5852 = vunpack.c.l.s4 1983009808
      %v5853 = vunpack.c.0.s8 %v5852
      %v5854 = vlaneseq
      %v5855 = vshrl.u32 %v5854, 7
      %v5856 = vsub.s32 %v5853, %v5855
      %v5857 = vrot.slane %v5843, %v5856
      %v5858 = vcombine.low %v5850, %v5857
      %v5859 = vcombine.low %v5522, %v5523
      %v5860 = vcombine.low %v5524, %v5525
      %v5862 = vunpack.c.l.s4 1983009808
      %v5863 = vunpack.c.0.s8 %v5862
      %v5864 = vlaneseq
      %v5865 = vshrl.u32 %v5864, 7
      %v5866 = vsub.s32 %v5863, %v5865
      %v5867 = vrot.slane %v5859, %v5866
      %v5869 = vunpack.c.l.s4 1983009808
      %v5870 = vunpack.c.0.s8 %v5869
      %v5871 = vlaneseq
      %v5872 = vshrl.u32 %v5871, 7
      %v5873 = vsub.s32 %v5870, %v5872
      %v5874 = vrot.slane %v5860, %v5873
      %v5875 = vcombine.low %v5867, %v5874
      %v5877 = vunpack.c.l.s4 1983009808
      %v5878 = vunpack.c.0.s8 %v5877
      %v5879 = vlaneseq
      %v5880 = vshrl.u32 %v5879, 7
      %v5881 = vsub.s32 %v5878, %v5880
      %v5882 = vrot.slane %v5526, %v5881
      %v5883 = vcombine.low %v5527, %v5528
      %v5884 = vcombine.low %v5529, %v5530
      %v5886 = vunpack.c.l.s4 1983009808
      %v5887 = vunpack.c.0.s8 %v5886
      %v5888 = vlaneseq
      %v5889 = vshrl.u32 %v5888, 7
      %v5890 = vsub.s32 %v5887, %v5889
      %v5891 = vrot.slane %v5883, %v5890
      %v5893 = vunpack.c.l.s4 1983009808
      %v5894 = vunpack.c.0.s8 %v5893
      %v5895 = vlaneseq
      %v5896 = vshrl.u32 %v5895, 7
      %v5897 = vsub.s32 %v5894, %v5896
      %v5898 = vrot.slane %v5884, %v5897
      %v5899 = vcombine.low %v5891, %v5898
      %v5900 = vcombine.low %v5531, %v5532
      %v5901 = vcombine.low %v5533, %v5534
      %v5903 = vunpack.c.l.s4 1983009808
      %v5904 = vunpack.c.0.s8 %v5903
      %v5905 = vlaneseq
      %v5906 = vshrl.u32 %v5905, 7
      %v5907 = vsub.s32 %v5904, %v5906
      %v5908 = vrot.slane %v5900, %v5907
      %v5910 = vunpack.c.l.s4 1983009808
      %v5911 = vunpack.c.0.s8 %v5910
      %v5912 = vlaneseq
      %v5913 = vshrl.u32 %v5912, 7
      %v5914 = vsub.s32 %v5911, %v5913
      %v5915 = vrot.slane %v5901, %v5914
      %v5916 = vcombine.low %v5908, %v5915
      %v5918 = vunpack.c.l.s4 1983009808
      %v5919 = vunpack.c.0.s8 %v5918
      %v5920 = vlaneseq
      %v5921 = vshrl.u32 %v5920, 7
      %v5922 = vsub.s32 %v5919, %v5921
      %v5923 = vrot.slane %v5535, %v5922
      %v5924 = vcombine.low %v5536, %v5537
      %v5925 = vcombine.low %v5538, %v5539
      %v5927 = vunpack.c.l.s4 1983009808
      %v5928 = vunpack.c.0.s8 %v5927
      %v5929 = vlaneseq
      %v5930 = vshrl.u32 %v5929, 7
      %v5931 = vsub.s32 %v5928, %v5930
      %v5932 = vrot.slane %v5924, %v5931
      %v5934 = vunpack.c.l.s4 1983009808
      %v5935 = vunpack.c.0.s8 %v5934
      %v5936 = vlaneseq
      %v5937 = vshrl.u32 %v5936, 7
      %v5938 = vsub.s32 %v5935, %v5937
      %v5939 = vrot.slane %v5925, %v5938
      %v5940 = vcombine.low %v5932, %v5939
      %v5941 = vcombine.low %v5540, %v5541
      %v5942 = vcombine.low %v5542, %v5543
      %v5944 = vunpack.c.l.s4 1983009808
      %v5945 = vunpack.c.0.s8 %v5944
      %v5946 = vlaneseq
      %v5947 = vshrl.u32 %v5946, 7
      %v5948 = vsub.s32 %v5945, %v5947
      %v5949 = vrot.slane %v5941, %v5948
      %v5951 = vunpack.c.l.s4 1983009808
      %v5952 = vunpack.c.0.s8 %v5951
      %v5953 = vlaneseq
      %v5954 = vshrl.u32 %v5953, 7
      %v5955 = vsub.s32 %v5952, %v5954
      %v5956 = vrot.slane %v5942, %v5955
      %v5957 = vcombine.low %v5949, %v5956
      %v5959 = vunpack.c.l.s4 1983009808
      %v5960 = vunpack.c.0.s8 %v5959
      %v5961 = vlaneseq
      %v5962 = vshrl.u32 %v5961, 7
      %v5963 = vsub.s32 %v5960, %v5962
      %v5964 = vrot.slane %v5544, %v5963
      %v5965 = vcombine.low %v5545, %v5546
      %v5966 = vcombine.low %v5547, %v5548
      %v5968 = vunpack.c.l.s4 1983009808
      %v5969 = vunpack.c.0.s8 %v5968
      %v5970 = vlaneseq
      %v5971 = vshrl.u32 %v5970, 7
      %v5972 = vsub.s32 %v5969, %v5971
      %v5973 = vrot.slane %v5965, %v5972
      %v5975 = vunpack.c.l.s4 1983009808
      %v5976 = vunpack.c.0.s8 %v5975
      %v5977 = vlaneseq
      %v5978 = vshrl.u32 %v5977, 7
      %v5979 = vsub.s32 %v5976, %v5978
      %v5980 = vrot.slane %v5966, %v5979
      %v5981 = vcombine.low %v5973, %v5980
      %v5982 = vcombine.low %v5549, %v5550
      %v5983 = vcombine.low %v5551, %v5552
      %v5985 = vunpack.c.l.s4 1983009808
      %v5986 = vunpack.c.0.s8 %v5985
      %v5987 = vlaneseq
      %v5988 = vshrl.u32 %v5987, 7
      %v5989 = vsub.s32 %v5986, %v5988
      %v5990 = vrot.slane %v5982, %v5989
      %v5992 = vunpack.c.l.s4 1983009808
      %v5993 = vunpack.c.0.s8 %v5992
      %v5994 = vlaneseq
      %v5995 = vshrl.u32 %v5994, 7
      %v5996 = vsub.s32 %v5993, %v5995
      %v5997 = vrot.slane %v5983, %v5996
      %v5998 = vcombine.low %v5990, %v5997
      %v6000 = vunpack.c.l.s4 1983009808
      %v6001 = vunpack.c.0.s8 %v6000
      %v6002 = vlaneseq
      %v6003 = vshrl.u32 %v6002, 7
      %v6004 = vsub.s32 %v6001, %v6003
      %v6005 = vrot.slane %v5553, %v6004
      %v6006 = vcombine.low %v5554, %v5555
      %v6007 = vcombine.low %v5556, %v5557
      %v6009 = vunpack.c.l.s4 1983009808
      %v6010 = vunpack.c.0.s8 %v6009
      %v6011 = vlaneseq
      %v6012 = vshrl.u32 %v6011, 7
      %v6013 = vsub.s32 %v6010, %v6012
      %v6014 = vrot.slane %v6006, %v6013
      %v6016 = vunpack.c.l.s4 1983009808
      %v6017 = vunpack.c.0.s8 %v6016
      %v6018 = vlaneseq
      %v6019 = vshrl.u32 %v6018, 7
      %v6020 = vsub.s32 %v6017, %v6019
      %v6021 = vrot.slane %v6007, %v6020
      %v6022 = vcombine.low %v6014, %v6021
      %v6023 = vcombine.low %v5558, %v5559
      %v6024 = vcombine.low %v5560, %v5561
      %v6026 = vunpack.c.l.s4 1983009808
      %v6027 = vunpack.c.0.s8 %v6026
      %v6028 = vlaneseq
      %v6029 = vshrl.u32 %v6028, 7
      %v6030 = vsub.s32 %v6027, %v6029
      %v6031 = vrot.slane %v6023, %v6030
      %v6033 = vunpack.c.l.s4 1983009808
      %v6034 = vunpack.c.0.s8 %v6033
      %v6035 = vlaneseq
      %v6036 = vshrl.u32 %v6035, 7
      %v6037 = vsub.s32 %v6034, %v6036
      %v6038 = vrot.slane %v6024, %v6037
      %v6039 = vcombine.low %v6031, %v6038
      %v6041 = vunpack.c.l.s4 1983009808
      %v6042 = vunpack.c.0.s8 %v6041
      %v6043 = vlaneseq
      %v6044 = vshrl.u32 %v6043, 7
      %v6045 = vsub.s32 %v6042, %v6044
      %v6046 = vrot.slane %v5562, %v6045
      %v6047 = vcombine.low %v5563, %v5564
      %v6048 = vcombine.low %v5565, %v5566
      %v6050 = vunpack.c.l.s4 1983009808
      %v6051 = vunpack.c.0.s8 %v6050
      %v6052 = vlaneseq
      %v6053 = vshrl.u32 %v6052, 7
      %v6054 = vsub.s32 %v6051, %v6053
      %v6055 = vrot.slane %v6047, %v6054
      %v6057 = vunpack.c.l.s4 1983009808
      %v6058 = vunpack.c.0.s8 %v6057
      %v6059 = vlaneseq
      %v6060 = vshrl.u32 %v6059, 7
      %v6061 = vsub.s32 %v6058, %v6060
      %v6062 = vrot.slane %v6048, %v6061
      %v6063 = vcombine.low %v6055, %v6062
      %v6064 = vcombine.low %v5567, %v5568
      %v6065 = vcombine.low %v5569, %v5570
      %v6067 = vunpack.c.l.s4 1983009808
      %v6068 = vunpack.c.0.s8 %v6067
      %v6069 = vlaneseq
      %v6070 = vshrl.u32 %v6069, 7
      %v6071 = vsub.s32 %v6068, %v6070
      %v6072 = vrot.slane %v6064, %v6071
      %v6074 = vunpack.c.l.s4 1983009808
      %v6075 = vunpack.c.0.s8 %v6074
      %v6076 = vlaneseq
      %v6077 = vshrl.u32 %v6076, 7
      %v6078 = vsub.s32 %v6075, %v6077
      %v6079 = vrot.slane %v6065, %v6078
      %v6080 = vcombine.low %v6072, %v6079
      %v6082 = vunpack.c.l.s4 1983009808
      %v6083 = vunpack.c.0.s8 %v6082
      %v6084 = vlaneseq
      %v6085 = vshrl.u32 %v6084, 7
      %v6086 = vsub.s32 %v6083, %v6085
      %v6087 = vrot.slane %v5571, %v6086
      %v6088 = vcombine.low %v5572, %v5573
      %v6089 = vcombine.low %v5574, %v5575
      %v6091 = vunpack.c.l.s4 1983009808
      %v6092 = vunpack.c.0.s8 %v6091
      %v6093 = vlaneseq
      %v6094 = vshrl.u32 %v6093, 7
      %v6095 = vsub.s32 %v6092, %v6094
      %v6096 = vrot.slane %v6088, %v6095
      %v6098 = vunpack.c.l.s4 1983009808
      %v6099 = vunpack.c.0.s8 %v6098
      %v6100 = vlaneseq
      %v6101 = vshrl.u32 %v6100, 7
      %v6102 = vsub.s32 %v6099, %v6101
      %v6103 = vrot.slane %v6089, %v6102
      %v6104 = vcombine.low %v6096, %v6103
      %v6105 = vcombine.low %v5576, %v5577
      %v6106 = vcombine.low %v5578, %v5579
      %v6108 = vunpack.c.l.s4 1983009808
      %v6109 = vunpack.c.0.s8 %v6108
      %v6110 = vlaneseq
      %v6111 = vshrl.u32 %v6110, 7
      %v6112 = vsub.s32 %v6109, %v6111
      %v6113 = vrot.slane %v6105, %v6112
      %v6115 = vunpack.c.l.s4 1983009808
      %v6116 = vunpack.c.0.s8 %v6115
      %v6117 = vlaneseq
      %v6118 = vshrl.u32 %v6117, 7
      %v6119 = vsub.s32 %v6116, %v6118
      %v6120 = vrot.slane %v6106, %v6119
      %v6121 = vcombine.low %v6113, %v6120
      %v6123 = vunpack.c.l.s4 1983009808
      %v6124 = vunpack.c.0.s8 %v6123
      %v6125 = vlaneseq
      %v6126 = vshrl.u32 %v6125, 7
      %v6127 = vsub.s32 %v6124, %v6126
      %v6128 = vrot.slane %v5580, %v6127
      %v6129 = vcombine.low %v5581, %v5582
      %v6130 = vcombine.low %v5583, %v5584
      %v6132 = vunpack.c.l.s4 1983009808
      %v6133 = vunpack.c.0.s8 %v6132
      %v6134 = vlaneseq
      %v6135 = vshrl.u32 %v6134, 7
      %v6136 = vsub.s32 %v6133, %v6135
      %v6137 = vrot.slane %v6129, %v6136
      %v6139 = vunpack.c.l.s4 1983009808
      %v6140 = vunpack.c.0.s8 %v6139
      %v6141 = vlaneseq
      %v6142 = vshrl.u32 %v6141, 7
      %v6143 = vsub.s32 %v6140, %v6142
      %v6144 = vrot.slane %v6130, %v6143
      %v6145 = vcombine.low %v6137, %v6144
      %v6146 = vcombine.low %v5585, %v5586
      %v6147 = vcombine.low %v5587, %v5588
      %v6149 = vunpack.c.l.s4 1983009808
      %v6150 = vunpack.c.0.s8 %v6149
      %v6151 = vlaneseq
      %v6152 = vshrl.u32 %v6151, 7
      %v6153 = vsub.s32 %v6150, %v6152
      %v6154 = vrot.slane %v6146, %v6153
      %v6156 = vunpack.c.l.s4 1983009808
      %v6157 = vunpack.c.0.s8 %v6156
      %v6158 = vlaneseq
      %v6159 = vshrl.u32 %v6158, 7
      %v6160 = vsub.s32 %v6157, %v6159
      %v6161 = vrot.slane %v6147, %v6160
      %v6162 = vcombine.low %v6154, %v6161
      %v6164 = vunpack.c.l.s4 1983009808
      %v6165 = vunpack.c.0.s8 %v6164
      %v6166 = vlaneseq
      %v6167 = vshrl.u32 %v6166, 7
      %v6168 = vsub.s32 %v6165, %v6167
      %v6169 = vrot.slane %v5589, %v6168
      %v6170 = vcombine.low %v5590, %v5591
      %v6171 = vcombine.low %v5592, %v5593
      %v6173 = vunpack.c.l.s4 1983009808
      %v6174 = vunpack.c.0.s8 %v6173
      %v6175 = vlaneseq
      %v6176 = vshrl.u32 %v6175, 7
      %v6177 = vsub.s32 %v6174, %v6176
      %v6178 = vrot.slane %v6170, %v6177
      %v6180 = vunpack.c.l.s4 1983009808
      %v6181 = vunpack.c.0.s8 %v6180
      %v6182 = vlaneseq
      %v6183 = vshrl.u32 %v6182, 7
      %v6184 = vsub.s32 %v6181, %v6183
      %v6185 = vrot.slane %v6171, %v6184
      %v6186 = vcombine.low %v6178, %v6185
      %v6187 = vcombine.low %v5594, %v5595
      %v6188 = vcombine.low %v5596, %v5597
      %v6190 = vunpack.c.l.s4 1983009808
      %v6191 = vunpack.c.0.s8 %v6190
      %v6192 = vlaneseq
      %v6193 = vshrl.u32 %v6192, 7
      %v6194 = vsub.s32 %v6191, %v6193
      %v6195 = vrot.slane %v6187, %v6194
      %v6197 = vunpack.c.l.s4 1983009808
      %v6198 = vunpack.c.0.s8 %v6197
      %v6199 = vlaneseq
      %v6200 = vshrl.u32 %v6199, 7
      %v6201 = vsub.s32 %v6198, %v6200
      %v6202 = vrot.slane %v6188, %v6201
      %v6203 = vcombine.low %v6195, %v6202
      %v6205 = vunpack.c.l.s4 1983009808
      %v6206 = vunpack.c.0.s8 %v6205
      %v6207 = vlaneseq
      %v6208 = vshrl.u32 %v6207, 7
      %v6209 = vsub.s32 %v6206, %v6208
      %v6210 = vrot.slane %v5598, %v6209
      %v6211 = vcombine.low %v5599, %v5600
      %v6212 = vcombine.low %v5601, %v5602
      %v6214 = vunpack.c.l.s4 1983009808
      %v6215 = vunpack.c.0.s8 %v6214
      %v6216 = vlaneseq
      %v6217 = vshrl.u32 %v6216, 7
      %v6218 = vsub.s32 %v6215, %v6217
      %v6219 = vrot.slane %v6211, %v6218
      %v6221 = vunpack.c.l.s4 1983009808
      %v6222 = vunpack.c.0.s8 %v6221
      %v6223 = vlaneseq
      %v6224 = vshrl.u32 %v6223, 7
      %v6225 = vsub.s32 %v6222, %v6224
      %v6226 = vrot.slane %v6212, %v6225
      %v6227 = vcombine.low %v6219, %v6226
      %v6228 = vcombine.low %v5603, %v5604
      %v6229 = vcombine.low %v5605, %v5606
      %v6231 = vunpack.c.l.s4 1983009808
      %v6232 = vunpack.c.0.s8 %v6231
      %v6233 = vlaneseq
      %v6234 = vshrl.u32 %v6233, 7
      %v6235 = vsub.s32 %v6232, %v6234
      %v6236 = vrot.slane %v6228, %v6235
      %v6238 = vunpack.c.l.s4 1983009808
      %v6239 = vunpack.c.0.s8 %v6238
      %v6240 = vlaneseq
      %v6241 = vshrl.u32 %v6240, 7
      %v6242 = vsub.s32 %v6239, %v6241
      %v6243 = vrot.slane %v6229, %v6242
      %v6244 = vcombine.low %v6236, %v6243
      %v6246 = vunpack.c.l.s4 1983009808
      %v6247 = vunpack.c.0.s8 %v6246
      %v6248 = vlaneseq
      %v6249 = vshrl.u32 %v6248, 7
      %v6250 = vsub.s32 %v6247, %v6249
      %v6251 = vrot.slane %v5607, %v6250
      %v6252 = vcombine.low %v5608, %v5609
      %v6253 = vcombine.low %v5610, %v5611
      %v6255 = vunpack.c.l.s4 1983009808
      %v6256 = vunpack.c.0.s8 %v6255
      %v6257 = vlaneseq
      %v6258 = vshrl.u32 %v6257, 7
      %v6259 = vsub.s32 %v6256, %v6258
      %v6260 = vrot.slane %v6252, %v6259
      %v6262 = vunpack.c.l.s4 1983009808
      %v6263 = vunpack.c.0.s8 %v6262
      %v6264 = vlaneseq
      %v6265 = vshrl.u32 %v6264, 7
      %v6266 = vsub.s32 %v6263, %v6265
      %v6267 = vrot.slane %v6253, %v6266
      %v6268 = vcombine.low %v6260, %v6267
      %v6269 = vcombine.low %v5612, %v5613
      %v6270 = vcombine.low %v5614, %v5615
      %v6272 = vunpack.c.l.s4 1983009808
      %v6273 = vunpack.c.0.s8 %v6272
      %v6274 = vlaneseq
      %v6275 = vshrl.u32 %v6274, 7
      %v6276 = vsub.s32 %v6273, %v6275
      %v6277 = vrot.slane %v6269, %v6276
      %v6279 = vunpack.c.l.s4 1983009808
      %v6280 = vunpack.c.0.s8 %v6279
      %v6281 = vlaneseq
      %v6282 = vshrl.u32 %v6281, 7
      %v6283 = vsub.s32 %v6280, %v6282
      %v6284 = vrot.slane %v6270, %v6283
      %v6285 = vcombine.low %v6277, %v6284
      %v6287 = vunpack.c.l.s4 1983009808
      %v6288 = vunpack.c.0.s8 %v6287
      %v6289 = vlaneseq
      %v6290 = vshrl.u32 %v6289, 7
      %v6291 = vsub.s32 %v6288, %v6290
      %v6292 = vrot.slane %v5616, %v6291
      %v6293 = vcombine.low %v5617, %v5618
      %v6294 = vcombine.low %v5619, %v5620
      %v6296 = vunpack.c.l.s4 1983009808
      %v6297 = vunpack.c.0.s8 %v6296
      %v6298 = vlaneseq
      %v6299 = vshrl.u32 %v6298, 7
      %v6300 = vsub.s32 %v6297, %v6299
      %v6301 = vrot.slane %v6293, %v6300
      %v6303 = vunpack.c.l.s4 1983009808
      %v6304 = vunpack.c.0.s8 %v6303
      %v6305 = vlaneseq
      %v6306 = vshrl.u32 %v6305, 7
      %v6307 = vsub.s32 %v6304, %v6306
      %v6308 = vrot.slane %v6294, %v6307
      %v6309 = vcombine.low %v6301, %v6308
      %v6310 = vcombine.low %v5621, %v5622
      %v6311 = vcombine.low %v5623, %v5624
      %v6313 = vunpack.c.l.s4 1983009808
      %v6314 = vunpack.c.0.s8 %v6313
      %v6315 = vlaneseq
      %v6316 = vshrl.u32 %v6315, 7
      %v6317 = vsub.s32 %v6314, %v6316
      %v6318 = vrot.slane %v6310, %v6317
      %v6320 = vunpack.c.l.s4 1983009808
      %v6321 = vunpack.c.0.s8 %v6320
      %v6322 = vlaneseq
      %v6323 = vshrl.u32 %v6322, 7
      %v6324 = vsub.s32 %v6321, %v6323
      %v6325 = vrot.slane %v6311, %v6324
      %v6326 = vcombine.low %v6318, %v6325
      %v6328 = vunpack.c.l.s4 1983009808
      %v6329 = vunpack.c.0.s8 %v6328
      %v6330 = vlaneseq
      %v6331 = vshrl.u32 %v6330, 7
      %v6332 = vsub.s32 %v6329, %v6331
      %v6333 = vrot.slane %v5625, %v6332
      %v6334 = vcombine.low %v5626, %v5627
      %v6335 = vcombine.low %v5628, %v5629
      %v6337 = vunpack.c.l.s4 1983009808
      %v6338 = vunpack.c.0.s8 %v6337
      %v6339 = vlaneseq
      %v6340 = vshrl.u32 %v6339, 7
      %v6341 = vsub.s32 %v6338, %v6340
      %v6342 = vrot.slane %v6334, %v6341
      %v6344 = vunpack.c.l.s4 1983009808
      %v6345 = vunpack.c.0.s8 %v6344
      %v6346 = vlaneseq
      %v6347 = vshrl.u32 %v6346, 7
      %v6348 = vsub.s32 %v6345, %v6347
      %v6349 = vrot.slane %v6335, %v6348
      %v6350 = vcombine.low %v6342, %v6349
      %v6351 = vcombine.low %v5630, %v5631
      %v6352 = vcombine.low %v5632, %v5633
      %v6354 = vunpack.c.l.s4 1983009808
      %v6355 = vunpack.c.0.s8 %v6354
      %v6356 = vlaneseq
      %v6357 = vshrl.u32 %v6356, 7
      %v6358 = vsub.s32 %v6355, %v6357
      %v6359 = vrot.slane %v6351, %v6358
      %v6361 = vunpack.c.l.s4 1983009808
      %v6362 = vunpack.c.0.s8 %v6361
      %v6363 = vlaneseq
      %v6364 = vshrl.u32 %v6363, 7
      %v6365 = vsub.s32 %v6362, %v6364
      %v6366 = vrot.slane %v6352, %v6365
      %v6367 = vcombine.low %v6359, %v6366
      %v6369 = vunpack.c.l.s4 1983009808
      %v6370 = vunpack.c.0.s8 %v6369
      %v6371 = vlaneseq
      %v6372 = vshrl.u32 %v6371, 7
      %v6373 = vsub.s32 %v6370, %v6372
      %v6374 = vrot.slane %v5634, %v6373
      %v6375 = vcombine.low %v5635, %v5636
      %v6376 = vcombine.low %v5637, %v5638
      %v6378 = vunpack.c.l.s4 1983009808
      %v6379 = vunpack.c.0.s8 %v6378
      %v6380 = vlaneseq
      %v6381 = vshrl.u32 %v6380, 7
      %v6382 = vsub.s32 %v6379, %v6381
      %v6383 = vrot.slane %v6375, %v6382
      %v6385 = vunpack.c.l.s4 1983009808
      %v6386 = vunpack.c.0.s8 %v6385
      %v6387 = vlaneseq
      %v6388 = vshrl.u32 %v6387, 7
      %v6389 = vsub.s32 %v6386, %v6388
      %v6390 = vrot.slane %v6376, %v6389
      %v6391 = vcombine.low %v6383, %v6390
      %v6392 = vcombine.low %v5639, %v5640
      %v6393 = vcombine.low %v5641, %v5642
      %v6395 = vunpack.c.l.s4 1983009808
      %v6396 = vunpack.c.0.s8 %v6395
      %v6397 = vlaneseq
      %v6398 = vshrl.u32 %v6397, 7
      %v6399 = vsub.s32 %v6396, %v6398
      %v6400 = vrot.slane %v6392, %v6399
      %v6402 = vunpack.c.l.s4 1983009808
      %v6403 = vunpack.c.0.s8 %v6402
      %v6404 = vlaneseq
      %v6405 = vshrl.u32 %v6404, 7
      %v6406 = vsub.s32 %v6403, %v6405
      %v6407 = vrot.slane %v6393, %v6406
      %v6408 = vcombine.low %v6400, %v6407
      %v6410 = vunpack.c.l.s4 1983009808
      %v6411 = vunpack.c.0.s8 %v6410
      %v6412 = vlaneseq
      %v6413 = vshrl.u32 %v6412, 7
      %v6414 = vsub.s32 %v6411, %v6413
      %v6415 = vrot.slane %v5643, %v6414
      %v6416 = vcombine.low %v5644, %v5645
      %v6417 = vcombine.low %v5646, %v5647
      %v6419 = vunpack.c.l.s4 1983009808
      %v6420 = vunpack.c.0.s8 %v6419
      %v6421 = vlaneseq
      %v6422 = vshrl.u32 %v6421, 7
      %v6423 = vsub.s32 %v6420, %v6422
      %v6424 = vrot.slane %v6416, %v6423
      %v6426 = vunpack.c.l.s4 1983009808
      %v6427 = vunpack.c.0.s8 %v6426
      %v6428 = vlaneseq
      %v6429 = vshrl.u32 %v6428, 7
      %v6430 = vsub.s32 %v6427, %v6429
      %v6431 = vrot.slane %v6417, %v6430
      %v6432 = vcombine.low %v6424, %v6431
      %v6433 = vcombine.low %v5648, %v5649
      %v6434 = vcombine.low %v5650, %v5651
      %v6436 = vunpack.c.l.s4 1983009808
      %v6437 = vunpack.c.0.s8 %v6436
      %v6438 = vlaneseq
      %v6439 = vshrl.u32 %v6438, 7
      %v6440 = vsub.s32 %v6437, %v6439
      %v6441 = vrot.slane %v6433, %v6440
      %v6443 = vunpack.c.l.s4 1983009808
      %v6444 = vunpack.c.0.s8 %v6443
      %v6445 = vlaneseq
      %v6446 = vshrl.u32 %v6445, 7
      %v6447 = vsub.s32 %v6444, %v6446
      %v6448 = vrot.slane %v6434, %v6447
      %v6449 = vcombine.low %v6441, %v6448
      %v6451 = vunpack.c.l.s4 1983009808
      %v6452 = vunpack.c.0.s8 %v6451
      %v6453 = vlaneseq
      %v6454 = vshrl.u32 %v6453, 7
      %v6455 = vsub.s32 %v6452, %v6454
      %v6456 = vrot.slane %v5652, %v6455
      %v6457 = vcombine.low %v5653, %v5654
      %v6458 = vcombine.low %v5655, %v5656
      %v6460 = vunpack.c.l.s4 1983009808
      %v6461 = vunpack.c.0.s8 %v6460
      %v6462 = vlaneseq
      %v6463 = vshrl.u32 %v6462, 7
      %v6464 = vsub.s32 %v6461, %v6463
      %v6465 = vrot.slane %v6457, %v6464
      %v6467 = vunpack.c.l.s4 1983009808
      %v6468 = vunpack.c.0.s8 %v6467
      %v6469 = vlaneseq
      %v6470 = vshrl.u32 %v6469, 7
      %v6471 = vsub.s32 %v6468, %v6470
      %v6472 = vrot.slane %v6458, %v6471
      %v6473 = vcombine.low %v6465, %v6472
      %v6474 = vcombine.low %v5657, %v5658
      %v6475 = vcombine.low %v5659, %v5660
      %v6477 = vunpack.c.l.s4 1983009808
      %v6478 = vunpack.c.0.s8 %v6477
      %v6479 = vlaneseq
      %v6480 = vshrl.u32 %v6479, 7
      %v6481 = vsub.s32 %v6478, %v6480
      %v6482 = vrot.slane %v6474, %v6481
      %v6484 = vunpack.c.l.s4 1983009808
      %v6485 = vunpack.c.0.s8 %v6484
      %v6486 = vlaneseq
      %v6487 = vshrl.u32 %v6486, 7
      %v6488 = vsub.s32 %v6485, %v6487
      %v6489 = vrot.slane %v6475, %v6488
      %v6490 = vcombine.low %v6482, %v6489
      %v6492 = vunpack.c.l.s4 1983009808
      %v6493 = vunpack.c.0.s8 %v6492
      %v6494 = vlaneseq
      %v6495 = vshrl.u32 %v6494, 7
      %v6496 = vsub.s32 %v6493, %v6495
      %v6497 = vrot.slane %v5661, %v6496
      %v6498 = vcombine.low %v5662, %v5663
      %v6499 = vcombine.low %v5664, %v5665
      %v6501 = vunpack.c.l.s4 1983009808
      %v6502 = vunpack.c.0.s8 %v6501
      %v6503 = vlaneseq
      %v6504 = vshrl.u32 %v6503, 7
      %v6505 = vsub.s32 %v6502, %v6504
      %v6506 = vrot.slane %v6498, %v6505
      %v6508 = vunpack.c.l.s4 1983009808
      %v6509 = vunpack.c.0.s8 %v6508
      %v6510 = vlaneseq
      %v6511 = vshrl.u32 %v6510, 7
      %v6512 = vsub.s32 %v6509, %v6511
      %v6513 = vrot.slane %v6499, %v6512
      %v6514 = vcombine.low %v6506, %v6513
      %v6515 = vcombine.low %v5666, %v5667
      %v6516 = vcombine.low %v5668, %v5669
      %v6518 = vunpack.c.l.s4 1983009808
      %v6519 = vunpack.c.0.s8 %v6518
      %v6520 = vlaneseq
      %v6521 = vshrl.u32 %v6520, 7
      %v6522 = vsub.s32 %v6519, %v6521
      %v6523 = vrot.slane %v6515, %v6522
      %v6525 = vunpack.c.l.s4 1983009808
      %v6526 = vunpack.c.0.s8 %v6525
      %v6527 = vlaneseq
      %v6528 = vshrl.u32 %v6527, 7
      %v6529 = vsub.s32 %v6526, %v6528
      %v6530 = vrot.slane %v6516, %v6529
      %v6531 = vcombine.low %v6523, %v6530
      %v6533 = vunpack.c.l.s4 1983009808
      %v6534 = vunpack.c.0.s8 %v6533
      %v6535 = vlaneseq
      %v6536 = vshrl.u32 %v6535, 7
      %v6537 = vsub.s32 %v6534, %v6536
      %v6538 = vrot.slane %v5670, %v6537
      %v6539 = vcombine.low %v5671, %v5672
      %v6540 = vcombine.low %v5673, %v5674
      %v6542 = vunpack.c.l.s4 1983009808
      %v6543 = vunpack.c.0.s8 %v6542
      %v6544 = vlaneseq
      %v6545 = vshrl.u32 %v6544, 7
      %v6546 = vsub.s32 %v6543, %v6545
      %v6547 = vrot.slane %v6539, %v6546
      %v6549 = vunpack.c.l.s4 1983009808
      %v6550 = vunpack.c.0.s8 %v6549
      %v6551 = vlaneseq
      %v6552 = vshrl.u32 %v6551, 7
      %v6553 = vsub.s32 %v6550, %v6552
      %v6554 = vrot.slane %v6540, %v6553
      %v6555 = vcombine.low %v6547, %v6554
      %v6556 = vcombine.low %v5675, %v5676
      %v6557 = vcombine.low %v5677, %v5678
      %v6559 = vunpack.c.l.s4 1983009808
      %v6560 = vunpack.c.0.s8 %v6559
      %v6561 = vlaneseq
      %v6562 = vshrl.u32 %v6561, 7
      %v6563 = vsub.s32 %v6560, %v6562
      %v6564 = vrot.slane %v6556, %v6563
      %v6566 = vunpack.c.l.s4 1983009808
      %v6567 = vunpack.c.0.s8 %v6566
      %v6568 = vlaneseq
      %v6569 = vshrl.u32 %v6568, 7
      %v6570 = vsub.s32 %v6567, %v6569
      %v6571 = vrot.slane %v6557, %v6570
      %v6572 = vcombine.low %v6564, %v6571
      %v6574 = vunpack.c.l.s4 1983009808
      %v6575 = vunpack.c.0.s8 %v6574
      %v6576 = vlaneseq
      %v6577 = vshrl.u32 %v6576, 7
      %v6578 = vsub.s32 %v6575, %v6577
      %v6579 = vrot.slane %v5679, %v6578
      %v6634 = vpack.c.bf16 %v5875, %v5858
      %v6635 = vpack.c.bf16 %v5882, %v5882
      %v6636 = vpack.c.bf16 %v5916, %v5899
      %v6637 = vpack.c.bf16 %v5923, %v5923
      %v6638 = vpack.c.bf16 %v5957, %v5940
      %v6639 = vpack.c.bf16 %v5964, %v5964
      %v6640 = vpack.c.bf16 %v5998, %v5981
      %v6641 = vpack.c.bf16 %v6005, %v6005
      %v6642 = vpack.c.bf16 %v6039, %v6022
      %v6643 = vpack.c.bf16 %v6046, %v6046
      %v6644 = vpack.c.bf16 %v6080, %v6063
      %v6645 = vpack.c.bf16 %v6087, %v6087
      %v6646 = vpack.c.bf16 %v6121, %v6104
      %v6647 = vpack.c.bf16 %v6128, %v6128
      %v6648 = vpack.c.bf16 %v6162, %v6145
      %v6649 = vpack.c.bf16 %v6169, %v6169
      %v6650 = vpack.c.bf16 %v6203, %v6186
      %v6651 = vpack.c.bf16 %v6210, %v6210
      %v6652 = vpack.c.bf16 %v6244, %v6227
      %v6653 = vpack.c.bf16 %v6251, %v6251
      %v6654 = vpack.c.bf16 %v6285, %v6268
      %v6655 = vpack.c.bf16 %v6292, %v6292
      %v6656 = vpack.c.bf16 %v6326, %v6309
      %v6657 = vpack.c.bf16 %v6333, %v6333
      %v6658 = vpack.c.bf16 %v6367, %v6350
      %v6659 = vpack.c.bf16 %v6374, %v6374
      %v6660 = vpack.c.bf16 %v6408, %v6391
      %v6661 = vpack.c.bf16 %v6415, %v6415
      %v6662 = vpack.c.bf16 %v6449, %v6432
      %v6663 = vpack.c.bf16 %v6456, %v6456
      %v6664 = vpack.c.bf16 %v6490, %v6473
      %v6665 = vpack.c.bf16 %v6497, %v6497
      %v6666 = vpack.c.bf16 %v6531, %v6514
      %v6667 = vpack.c.bf16 %v6538, %v6538
      %v6668 = vpack.c.bf16 %v6572, %v6555
      %v6669 = vpack.c.bf16 %v6579, %v6579
      %v6670 = vld [vmem:[%s4] sm:$0x3]
      %vm6671 = vsmask.f32 7424
      %v6673 = vshrl.u32 %v6634, 16
      %v6675 = vshll.u32 %v6634, 16
      %v6677 = vrot.slane %v6675, 1
      %v6678 = vor.u32 %v6673, %v6677
      %v6680 = vshll.u32 %v6635, 16
      %v6682 = vrot.slane %v6680, 1
      %v6683 = vsel %vm6671, %v6678, %v6682
      %v6685 = vshrl.u32 %v6636, 16
      %v6687 = vshll.u32 %v6636, 16
      %v6689 = vrot.slane %v6687, 1
      %v6690 = vor.u32 %v6685, %v6689
      %v6692 = vshll.u32 %v6637, 16
      %v6694 = vrot.slane %v6692, 1
      %v6695 = vsel %vm6671, %v6690, %v6694
      %v6697 = vshrl.u32 %v6638, 16
      %v6699 = vshll.u32 %v6638, 16
      %v6701 = vrot.slane %v6699, 1
      %v6702 = vor.u32 %v6697, %v6701
      %v6704 = vshll.u32 %v6639, 16
      %v6706 = vrot.slane %v6704, 1
      %v6707 = vsel %vm6671, %v6702, %v6706
      %v6709 = vshrl.u32 %v6640, 16
      %v6711 = vshll.u32 %v6640, 16
      %v6713 = vrot.slane %v6711, 1
      %v6714 = vor.u32 %v6709, %v6713
      %v6716 = vshll.u32 %v6641, 16
      %v6718 = vrot.slane %v6716, 1
      %v6719 = vsel %vm6671, %v6714, %v6718
      %v6721 = vshrl.u32 %v6642, 16
      %v6723 = vshll.u32 %v6642, 16
      %v6725 = vrot.slane %v6723, 1
      %v6726 = vor.u32 %v6721, %v6725
      %v6728 = vshll.u32 %v6643, 16
      %v6730 = vrot.slane %v6728, 1
      %v6731 = vsel %vm6671, %v6726, %v6730
      %v6733 = vshrl.u32 %v6644, 16
      %v6735 = vshll.u32 %v6644, 16
      %v6737 = vrot.slane %v6735, 1
      %v6738 = vor.u32 %v6733, %v6737
      %v6740 = vshll.u32 %v6645, 16
      %v6742 = vrot.slane %v6740, 1
      %v6743 = vsel %vm6671, %v6738, %v6742
      %v6745 = vshrl.u32 %v6646, 16
      %v6747 = vshll.u32 %v6646, 16
      %v6749 = vrot.slane %v6747, 1
      %v6750 = vor.u32 %v6745, %v6749
      %v6752 = vshll.u32 %v6647, 16
      %v6754 = vrot.slane %v6752, 1
      %v6755 = vsel %vm6671, %v6750, %v6754
      %v6757 = vshrl.u32 %v6648, 16
      %v6759 = vshll.u32 %v6648, 16
      %v6761 = vrot.slane %v6759, 1
      %v6762 = vor.u32 %v6757, %v6761
      %v6764 = vshll.u32 %v6649, 16
      %v6766 = vrot.slane %v6764, 1
      %v6767 = vsel %vm6671, %v6762, %v6766
      %v6769 = vshrl.u32 %v6650, 16
      %v6771 = vshll.u32 %v6650, 16
      %v6773 = vrot.slane %v6771, 1
      %v6774 = vor.u32 %v6769, %v6773
      %v6776 = vshll.u32 %v6651, 16
      %v6778 = vrot.slane %v6776, 1
      %v6779 = vsel %vm6671, %v6774, %v6778
      %v6781 = vshrl.u32 %v6652, 16
      %v6783 = vshll.u32 %v6652, 16
      %v6785 = vrot.slane %v6783, 1
      %v6786 = vor.u32 %v6781, %v6785
      %v6788 = vshll.u32 %v6653, 16
      %v6790 = vrot.slane %v6788, 1
      %v6791 = vsel %vm6671, %v6786, %v6790
      %v6793 = vshrl.u32 %v6654, 16
      %v6795 = vshll.u32 %v6654, 16
      %v6797 = vrot.slane %v6795, 1
      %v6798 = vor.u32 %v6793, %v6797
      %v6800 = vshll.u32 %v6655, 16
      %v6802 = vrot.slane %v6800, 1
      %v6803 = vsel %vm6671, %v6798, %v6802
      %v6805 = vshrl.u32 %v6656, 16
      %v6807 = vshll.u32 %v6656, 16
      %v6809 = vrot.slane %v6807, 1
      %v6810 = vor.u32 %v6805, %v6809
      %v6812 = vshll.u32 %v6657, 16
      %v6814 = vrot.slane %v6812, 1
      %v6815 = vsel %vm6671, %v6810, %v6814
      %v6817 = vshrl.u32 %v6658, 16
      %v6819 = vshll.u32 %v6658, 16
      %v6821 = vrot.slane %v6819, 1
      %v6822 = vor.u32 %v6817, %v6821
      %v6824 = vshll.u32 %v6659, 16
      %v6826 = vrot.slane %v6824, 1
      %v6827 = vsel %vm6671, %v6822, %v6826
      %v6829 = vshrl.u32 %v6660, 16
      %v6831 = vshll.u32 %v6660, 16
      %v6833 = vrot.slane %v6831, 1
      %v6834 = vor.u32 %v6829, %v6833
      %v6836 = vshll.u32 %v6661, 16
      %v6838 = vrot.slane %v6836, 1
      %v6839 = vsel %vm6671, %v6834, %v6838
      %v6841 = vshrl.u32 %v6662, 16
      %v6843 = vshll.u32 %v6662, 16
      %v6845 = vrot.slane %v6843, 1
      %v6846 = vor.u32 %v6841, %v6845
      %v6848 = vshll.u32 %v6663, 16
      %v6850 = vrot.slane %v6848, 1
      %v6851 = vsel %vm6671, %v6846, %v6850
      %v6853 = vshrl.u32 %v6664, 16
      %v6855 = vshll.u32 %v6664, 16
      %v6857 = vrot.slane %v6855, 1
      %v6858 = vor.u32 %v6853, %v6857
      %v6860 = vshll.u32 %v6665, 16
      %v6862 = vrot.slane %v6860, 1
      %v6863 = vsel %vm6671, %v6858, %v6862
      %s6864 = scalar_lea.vmem %s4, 2
      %v6865 = vld [vmem:[%s6864] sm:$0x3]
      %v6867 = vsel %vm2874, %v6683, 0
      %v6870 = vsel %vm2874, %v6695, 0
      %v6873 = vsel %vm2874, %v6707, 0
      %v6876 = vsel %vm2874, %v6719, 0
      %v6879 = vsel %vm2874, %v6731, 0
      %v6882 = vsel %vm2874, %v6743, 0
      %v6885 = vsel %vm2874, %v6755, 0
      %v6888 = vsel %vm2874, %v6767, 0
      %v6891 = vsel %vm2874, %v6779, 0
      %v6894 = vsel %vm2874, %v6791, 0
      %v6897 = vsel %vm2874, %v6803, 0
      %v6900 = vsel %vm2874, %v6815, 0
      %v6903 = vsel %vm2874, %v6827, 0
      %v6906 = vsel %vm2874, %v6839, 0
      %v6909 = vsel %vm2874, %v6851, 0
      %v6912 = vsel %vm2874, %v6863, 0
      %v6915 = vsel %vm2938, %v6865, 0
      %6917 = vmatprep.subr.bf16.mxu0 0
      %6918 = vmatpush1.bf16.msra.mxu0 0
      %6919 = vmatprep.subr.bf16.mxu0 0
      %6920 = vmatpush1.bf16.msra.mxu0 0
      %6921 = vmatprep.subr.bf16.mxu0 0
      %6922 = vmatpush1.bf16.msra.mxu0 0
      %6923 = vmatprep.subr.bf16.mxu0 0
      %6924 = vmatpush1.bf16.msra.mxu0 0
      %6925 = vmatprep.subr.bf16.mxu0 0
      %6926 = vmatpush1.bf16.msra.mxu0 0
      %6927 = vmatprep.subr.bf16.mxu0 0
      %6928 = vmatpush1.bf16.msra.mxu0 0
      %6929 = vmatprep.subr.bf16.mxu0 0
      %6930 = vmatpush1.bf16.msra.mxu0 0
      %6931 = vmatprep.subr.bf16.mxu0 0
      %6932 = vmatpush1.bf16.msra.mxu0 %v6915
      %6933 = vmatprep.subr.bf16.mxu0 0
      %6934 = vmatpush2.bf16.msra.mxu0 0
      %6935 = vmatprep.subr.bf16.mxu0 0
      %6936 = vmatpush2.bf16.msra.mxu0 0
      %6937 = vmatprep.subr.bf16.mxu0 0
      %6938 = vmatpush2.bf16.msra.mxu0 0
      %6939 = vmatprep.subr.bf16.mxu0 0
      %6940 = vmatpush2.bf16.msra.mxu0 0
      %6941 = vmatprep.subr.bf16.mxu0 0
      %6942 = vmatpush2.bf16.msra.mxu0 0
      %6943 = vmatprep.subr.bf16.mxu0 0
      %6944 = vmatpush2.bf16.msra.mxu0 0
      %6945 = vmatprep.subr.bf16.mxu0 0
      %6946 = vmatpush2.bf16.msra.mxu0 0
      %6947 = vmatprep.subr.bf16.mxu0 0
      %6948 = vmatpush2.bf16.msra.mxu0 0
      %6949 = vmatprep.mubr.bf16.mxu0 0
      %6950 = vmatmul.mubr.bf16.gmra.mxu0 %v6867
      %v6951 = vpop.f32.mrf.mxu0
      %v6952 = vadd.f32 0.0, %v6951
      %v6953 = vpop.f32.mrf.mxu0
      %v6954 = vpop.f32.mrf.mxu0
      %v6955 = vadd.f32 0.0, %v6954
      %v6956 = vpop.f32.mrf.mxu0
      %6957 = vmatprep.mubr.bf16.mxu0 0
      %6958 = vmatmul.mubr.bf16.gmra.mxu0 %v6870
      %v6959 = vpop.f32.mrf.mxu0
      %v6960 = vadd.f32 0.0, %v6959
      %v6961 = vpop.f32.mrf.mxu0
      %v6962 = vpop.f32.mrf.mxu0
      %v6963 = vadd.f32 0.0, %v6962
      %v6964 = vpop.f32.mrf.mxu0
      %6965 = vmatprep.mubr.bf16.mxu0 0
      %6966 = vmatmul.mubr.bf16.gmra.mxu0 %v6873
      %v6967 = vpop.f32.mrf.mxu0
      %v6968 = vadd.f32 0.0, %v6967
      %v6969 = vpop.f32.mrf.mxu0
      %v6970 = vpop.f32.mrf.mxu0
      %v6971 = vadd.f32 0.0, %v6970
      %v6972 = vpop.f32.mrf.mxu0
      %6973 = vmatprep.mubr.bf16.mxu0 0
      %6974 = vmatmul.mubr.bf16.gmra.mxu0 %v6876
      %v6975 = vpop.f32.mrf.mxu0
      %v6976 = vadd.f32 0.0, %v6975
      %v6977 = vpop.f32.mrf.mxu0
      %v6978 = vpop.f32.mrf.mxu0
      %v6979 = vadd.f32 0.0, %v6978
      %v6980 = vpop.f32.mrf.mxu0
      %6981 = vmatprep.mubr.bf16.mxu0 0
      %6982 = vmatmul.mubr.bf16.gmra.mxu0 %v6879
      %v6983 = vpop.f32.mrf.mxu0
      %v6984 = vadd.f32 0.0, %v6983
      %v6985 = vpop.f32.mrf.mxu0
      %v6986 = vpop.f32.mrf.mxu0
      %v6987 = vadd.f32 0.0, %v6986
      %v6988 = vpop.f32.mrf.mxu0
      %6989 = vmatprep.mubr.bf16.mxu0 0
      %6990 = vmatmul.mubr.bf16.gmra.mxu0 %v6882
      %v6991 = vpop.f32.mrf.mxu0
      %v6992 = vadd.f32 0.0, %v6991
      %v6993 = vpop.f32.mrf.mxu0
      %v6994 = vpop.f32.mrf.mxu0
      %v6995 = vadd.f32 0.0, %v6994
      %v6996 = vpop.f32.mrf.mxu0
      %6997 = vmatprep.mubr.bf16.mxu0 0
      %6998 = vmatmul.mubr.bf16.gmra.mxu0 %v6885
      %v6999 = vpop.f32.mrf.mxu0
      %v7000 = vadd.f32 0.0, %v6999
      %v7001 = vpop.f32.mrf.mxu0
      %v7002 = vpop.f32.mrf.mxu0
      %v7003 = vadd.f32 0.0, %v7002
      %v7004 = vpop.f32.mrf.mxu0
      %7005 = vmatprep.mubr.bf16.mxu0 0
      %7006 = vmatmul.mubr.bf16.gmra.mxu0 %v6888
      %v7007 = vpop.f32.mrf.mxu0
      %v7008 = vadd.f32 0.0, %v7007
      %v7009 = vpop.f32.mrf.mxu0
      %v7010 = vpop.f32.mrf.mxu0
      %v7011 = vadd.f32 0.0, %v7010
      %v7012 = vpop.f32.mrf.mxu0
      %7013 = vmatprep.mubr.bf16.mxu0 0
      %7014 = vmatmul.mubr.bf16.gmra.mxu0 %v6891
      %v7015 = vpop.f32.mrf.mxu0
      %v7016 = vadd.f32 0.0, %v7015
      %v7017 = vpop.f32.mrf.mxu0
      %v7018 = vpop.f32.mrf.mxu0
      %v7019 = vadd.f32 0.0, %v7018
      %v7020 = vpop.f32.mrf.mxu0
      %7021 = vmatprep.mubr.bf16.mxu0 0
      %7022 = vmatmul.mubr.bf16.gmra.mxu0 %v6894
      %v7023 = vpop.f32.mrf.mxu0
      %v7024 = vadd.f32 0.0, %v7023
      %v7025 = vpop.f32.mrf.mxu0
      %v7026 = vpop.f32.mrf.mxu0
      %v7027 = vadd.f32 0.0, %v7026
      %v7028 = vpop.f32.mrf.mxu0
      %7029 = vmatprep.mubr.bf16.mxu0 0
      %7030 = vmatmul.mubr.bf16.gmra.mxu0 %v6897
      %v7031 = vpop.f32.mrf.mxu0
      %v7032 = vadd.f32 0.0, %v7031
      %v7033 = vpop.f32.mrf.mxu0
      %v7034 = vpop.f32.mrf.mxu0
      %v7035 = vadd.f32 0.0, %v7034
      %v7036 = vpop.f32.mrf.mxu0
      %7037 = vmatprep.mubr.bf16.mxu0 0
      %7038 = vmatmul.mubr.bf16.gmra.mxu0 %v6900
      %v7039 = vpop.f32.mrf.mxu0
      %v7040 = vadd.f32 0.0, %v7039
      %v7041 = vpop.f32.mrf.mxu0
      %v7042 = vpop.f32.mrf.mxu0
      %v7043 = vadd.f32 0.0, %v7042
      %v7044 = vpop.f32.mrf.mxu0
      %7045 = vmatprep.mubr.bf16.mxu0 0
      %7046 = vmatmul.mubr.bf16.gmra.mxu0 %v6903
      %v7047 = vpop.f32.mrf.mxu0
      %v7048 = vadd.f32 0.0, %v7047
      %v7049 = vpop.f32.mrf.mxu0
      %v7050 = vpop.f32.mrf.mxu0
      %v7051 = vadd.f32 0.0, %v7050
      %v7052 = vpop.f32.mrf.mxu0
      %7053 = vmatprep.mubr.bf16.mxu0 0
      %7054 = vmatmul.mubr.bf16.gmra.mxu0 %v6906
      %v7055 = vpop.f32.mrf.mxu0
      %v7056 = vadd.f32 0.0, %v7055
      %v7057 = vpop.f32.mrf.mxu0
      %v7058 = vpop.f32.mrf.mxu0
      %v7059 = vadd.f32 0.0, %v7058
      %v7060 = vpop.f32.mrf.mxu0
      %7061 = vmatprep.mubr.bf16.mxu0 0
      %7062 = vmatmul.mubr.bf16.gmra.mxu0 %v6909
      %v7063 = vpop.f32.mrf.mxu0
      %v7064 = vadd.f32 0.0, %v7063
      %v7065 = vpop.f32.mrf.mxu0
      %v7066 = vpop.f32.mrf.mxu0
      %v7067 = vadd.f32 0.0, %v7066
      %v7068 = vpop.f32.mrf.mxu0
      %7069 = vmatprep.mubr.bf16.mxu0 0
      %7070 = vmatmul.mubr.bf16.gmra.mxu0 %v6912
      %v7071 = vpop.f32.mrf.mxu0
      %v7072 = vadd.f32 0.0, %v7071
      %v7073 = vpop.f32.mrf.mxu0
      %v7074 = vpop.f32.mrf.mxu0
      %v7075 = vadd.f32 0.0, %v7074
      %v7076 = vpop.f32.mrf.mxu0
      %7077 = vdwg.mxu0
      %v7078 = vsel %vm2874, %v6634, 0
      %v7080 = vsel %vm2874, %v6636, 0
      %v7082 = vsel %vm2874, %v6638, 0
      %v7084 = vsel %vm2874, %v6640, 0
      %v7086 = vsel %vm2874, %v6642, 0
      %v7088 = vsel %vm2874, %v6644, 0
      %v7090 = vsel %vm2874, %v6646, 0
      %v7092 = vsel %vm2874, %v6648, 0
      %v7094 = vsel %vm2874, %v6650, 0
      %v7096 = vsel %vm2874, %v6652, 0
      %v7098 = vsel %vm2874, %v6654, 0
      %v7100 = vsel %vm2874, %v6656, 0
      %v7102 = vsel %vm2874, %v6658, 0
      %v7104 = vsel %vm2874, %v6660, 0
      %v7106 = vsel %vm2874, %v6662, 0
      %v7108 = vsel %vm2874, %v6664, 0
      %v7111 = vsel %vm2938, %v6670, 0
      %7113 = vmatprep.subr.bf16.mxu0 0
      %7114 = vmatpush1.bf16.msra.mxu0 0
      %7115 = vmatprep.subr.bf16.mxu0 0
      %7116 = vmatpush1.bf16.msra.mxu0 0
      %7117 = vmatprep.subr.bf16.mxu0 0
      %7118 = vmatpush1.bf16.msra.mxu0 0
      %7119 = vmatprep.subr.bf16.mxu0 0
      %7120 = vmatpush1.bf16.msra.mxu0 0
      %7121 = vmatprep.subr.bf16.mxu0 0
      %7122 = vmatpush1.bf16.msra.mxu0 0
      %7123 = vmatprep.subr.bf16.mxu0 0
      %7124 = vmatpush1.bf16.msra.mxu0 0
      %7125 = vmatprep.subr.bf16.mxu0 0
      %7126 = vmatpush1.bf16.msra.mxu0 0
      %7127 = vmatprep.subr.bf16.mxu0 0
      %7128 = vmatpush1.bf16.msra.mxu0 %v7111
      %7129 = vmatprep.subr.bf16.mxu0 0
      %7130 = vmatpush2.bf16.msra.mxu0 0
      %7131 = vmatprep.subr.bf16.mxu0 0
      %7132 = vmatpush2.bf16.msra.mxu0 0
      %7133 = vmatprep.subr.bf16.mxu0 0
      %7134 = vmatpush2.bf16.msra.mxu0 0
      %7135 = vmatprep.subr.bf16.mxu0 0
      %7136 = vmatpush2.bf16.msra.mxu0 0
      %7137 = vmatprep.subr.bf16.mxu0 0
      %7138 = vmatpush2.bf16.msra.mxu0 0
      %7139 = vmatprep.subr.bf16.mxu0 0
      %7140 = vmatpush2.bf16.msra.mxu0 0
      %7141 = vmatprep.subr.bf16.mxu0 0
      %7142 = vmatpush2.bf16.msra.mxu0 0
      %7143 = vmatprep.subr.bf16.mxu0 0
      %7144 = vmatpush2.bf16.msra.mxu0 0
      %7145 = vmatprep.mubr.bf16.mxu0 0
      %7146 = vmatmul.mubr.bf16.gmra.mxu0 %v7078
      %v7147 = vpop.f32.mrf.mxu0
      %v7148 = vadd.f32 %v6952, %v7147
      %v7149 = vpop.f32.mrf.mxu0
      %v7150 = vpop.f32.mrf.mxu0
      %v7151 = vadd.f32 %v6955, %v7150
      %v7152 = vpop.f32.mrf.mxu0
      %7153 = vmatprep.mubr.bf16.mxu0 0
      %7154 = vmatmul.mubr.bf16.gmra.mxu0 %v7080
      %v7155 = vpop.f32.mrf.mxu0
      %v7156 = vadd.f32 %v6960, %v7155
      %v7157 = vpop.f32.mrf.mxu0
      %v7158 = vpop.f32.mrf.mxu0
      %v7159 = vadd.f32 %v6963, %v7158
      %v7160 = vpop.f32.mrf.mxu0
      %7161 = vmatprep.mubr.bf16.mxu0 0
      %7162 = vmatmul.mubr.bf16.gmra.mxu0 %v7082
      %v7163 = vpop.f32.mrf.mxu0
      %v7164 = vadd.f32 %v6968, %v7163
      %v7165 = vpop.f32.mrf.mxu0
      %v7166 = vpop.f32.mrf.mxu0
      %v7167 = vadd.f32 %v6971, %v7166
      %v7168 = vpop.f32.mrf.mxu0
      %7169 = vmatprep.mubr.bf16.mxu0 0
      %7170 = vmatmul.mubr.bf16.gmra.mxu0 %v7084
      %v7171 = vpop.f32.mrf.mxu0
      %v7172 = vadd.f32 %v6976, %v7171
      %v7173 = vpop.f32.mrf.mxu0
      %v7174 = vpop.f32.mrf.mxu0
      %v7175 = vadd.f32 %v6979, %v7174
      %v7176 = vpop.f32.mrf.mxu0
      %7177 = vmatprep.mubr.bf16.mxu0 0
      %7178 = vmatmul.mubr.bf16.gmra.mxu0 %v7086
      %v7179 = vpop.f32.mrf.mxu0
      %v7180 = vadd.f32 %v6984, %v7179
      %v7181 = vpop.f32.mrf.mxu0
      %v7182 = vpop.f32.mrf.mxu0
      %v7183 = vadd.f32 %v6987, %v7182
      %v7184 = vpop.f32.mrf.mxu0
      %7185 = vmatprep.mubr.bf16.mxu0 0
      %7186 = vmatmul.mubr.bf16.gmra.mxu0 %v7088
      %v7187 = vpop.f32.mrf.mxu0
      %v7188 = vadd.f32 %v6992, %v7187
      %v7189 = vpop.f32.mrf.mxu0
      %v7190 = vpop.f32.mrf.mxu0
      %v7191 = vadd.f32 %v6995, %v7190
      %v7192 = vpop.f32.mrf.mxu0
      %7193 = vmatprep.mubr.bf16.mxu0 0
      %7194 = vmatmul.mubr.bf16.gmra.mxu0 %v7090
      %v7195 = vpop.f32.mrf.mxu0
      %v7196 = vadd.f32 %v7000, %v7195
      %v7197 = vpop.f32.mrf.mxu0
      %v7198 = vpop.f32.mrf.mxu0
      %v7199 = vadd.f32 %v7003, %v7198
      %v7200 = vpop.f32.mrf.mxu0
      %7201 = vmatprep.mubr.bf16.mxu0 0
      %7202 = vmatmul.mubr.bf16.gmra.mxu0 %v7092
      %v7203 = vpop.f32.mrf.mxu0
      %v7204 = vadd.f32 %v7008, %v7203
      %v7205 = vpop.f32.mrf.mxu0
      %v7206 = vpop.f32.mrf.mxu0
      %v7207 = vadd.f32 %v7011, %v7206
      %v7208 = vpop.f32.mrf.mxu0
      %7209 = vmatprep.mubr.bf16.mxu0 0
      %7210 = vmatmul.mubr.bf16.gmra.mxu0 %v7094
      %v7211 = vpop.f32.mrf.mxu0
      %v7212 = vadd.f32 %v7016, %v7211
      %v7213 = vpop.f32.mrf.mxu0
      %v7214 = vpop.f32.mrf.mxu0
      %v7215 = vadd.f32 %v7019, %v7214
      %v7216 = vpop.f32.mrf.mxu0
      %7217 = vmatprep.mubr.bf16.mxu0 0
      %7218 = vmatmul.mubr.bf16.gmra.mxu0 %v7096
      %v7219 = vpop.f32.mrf.mxu0
      %v7220 = vadd.f32 %v7024, %v7219
      %v7221 = vpop.f32.mrf.mxu0
      %v7222 = vpop.f32.mrf.mxu0
      %v7223 = vadd.f32 %v7027, %v7222
      %v7224 = vpop.f32.mrf.mxu0
      %7225 = vmatprep.mubr.bf16.mxu0 0
      %7226 = vmatmul.mubr.bf16.gmra.mxu0 %v7098
      %v7227 = vpop.f32.mrf.mxu0
      %v7228 = vadd.f32 %v7032, %v7227
      %v7229 = vpop.f32.mrf.mxu0
      %v7230 = vpop.f32.mrf.mxu0
      %v7231 = vadd.f32 %v7035, %v7230
      %v7232 = vpop.f32.mrf.mxu0
      %7233 = vmatprep.mubr.bf16.mxu0 0
      %7234 = vmatmul.mubr.bf16.gmra.mxu0 %v7100
      %v7235 = vpop.f32.mrf.mxu0
      %v7236 = vadd.f32 %v7040, %v7235
      %v7237 = vpop.f32.mrf.mxu0
      %v7238 = vpop.f32.mrf.mxu0
      %v7239 = vadd.f32 %v7043, %v7238
      %v7240 = vpop.f32.mrf.mxu0
      %7241 = vmatprep.mubr.bf16.mxu0 0
      %7242 = vmatmul.mubr.bf16.gmra.mxu0 %v7102
      %v7243 = vpop.f32.mrf.mxu0
      %v7244 = vadd.f32 %v7048, %v7243
      %v7245 = vpop.f32.mrf.mxu0
      %v7246 = vpop.f32.mrf.mxu0
      %v7247 = vadd.f32 %v7051, %v7246
      %v7248 = vpop.f32.mrf.mxu0
      %7249 = vmatprep.mubr.bf16.mxu0 0
      %7250 = vmatmul.mubr.bf16.gmra.mxu0 %v7104
      %v7251 = vpop.f32.mrf.mxu0
      %v7252 = vadd.f32 %v7056, %v7251
      %v7253 = vpop.f32.mrf.mxu0
      %v7254 = vpop.f32.mrf.mxu0
      %v7255 = vadd.f32 %v7059, %v7254
      %v7256 = vpop.f32.mrf.mxu0
      %7257 = vmatprep.mubr.bf16.mxu0 0
      %7258 = vmatmul.mubr.bf16.gmra.mxu0 %v7106
      %v7259 = vpop.f32.mrf.mxu0
      %v7260 = vadd.f32 %v7064, %v7259
      %v7261 = vpop.f32.mrf.mxu0
      %v7262 = vpop.f32.mrf.mxu0
      %v7263 = vadd.f32 %v7067, %v7262
      %v7264 = vpop.f32.mrf.mxu0
      %7265 = vmatprep.mubr.bf16.mxu0 0
      %7266 = vmatmul.mubr.bf16.gmra.mxu0 %v7108
      %v7267 = vpop.f32.mrf.mxu0
      %v7268 = vadd.f32 %v7072, %v7267
      %v7269 = vpop.f32.mrf.mxu0
      %v7270 = vpop.f32.mrf.mxu0
      %v7271 = vadd.f32 %v7075, %v7270
      %v7272 = vpop.f32.mrf.mxu0
      %7273 = vdwg.mxu0
      %vm7306 = vcmask 1046528
      %v7307 = vrot.slane %v6634, 1
      %v7308 = vrot.slane %v6635, 1
      %v7309 = vsel %vm7306, %v7307, %v7308
      %v7310 = vrot.slane %v6636, 1
      %v7311 = vrot.slane %v6637, 1
      %v7312 = vsel %vm7306, %v7310, %v7311
      %v7313 = vrot.slane %v6638, 1
      %v7314 = vrot.slane %v6639, 1
      %v7315 = vsel %vm7306, %v7313, %v7314
      %v7316 = vrot.slane %v6640, 1
      %v7317 = vrot.slane %v6641, 1
      %v7318 = vsel %vm7306, %v7316, %v7317
      %v7319 = vrot.slane %v6642, 1
      %v7320 = vrot.slane %v6643, 1
      %v7321 = vsel %vm7306, %v7319, %v7320
      %v7322 = vrot.slane %v6644, 1
      %v7323 = vrot.slane %v6645, 1
      %v7324 = vsel %vm7306, %v7322, %v7323
      %v7325 = vrot.slane %v6646, 1
      %v7326 = vrot.slane %v6647, 1
      %v7327 = vsel %vm7306, %v7325, %v7326
      %v7328 = vrot.slane %v6648, 1
      %v7329 = vrot.slane %v6649, 1
      %v7330 = vsel %vm7306, %v7328, %v7329
      %v7331 = vrot.slane %v6650, 1
      %v7332 = vrot.slane %v6651, 1
      %v7333 = vsel %vm7306, %v7331, %v7332
      %v7334 = vrot.slane %v6652, 1
      %v7335 = vrot.slane %v6653, 1
      %v7336 = vsel %vm7306, %v7334, %v7335
      %v7337 = vrot.slane %v6654, 1
      %v7338 = vrot.slane %v6655, 1
      %v7339 = vsel %vm7306, %v7337, %v7338
      %v7340 = vrot.slane %v6656, 1
      %v7341 = vrot.slane %v6657, 1
      %v7342 = vsel %vm7306, %v7340, %v7341
      %v7343 = vrot.slane %v6658, 1
      %v7344 = vrot.slane %v6659, 1
      %v7345 = vsel %vm7306, %v7343, %v7344
      %v7346 = vrot.slane %v6660, 1
      %v7347 = vrot.slane %v6661, 1
      %v7348 = vsel %vm7306, %v7346, %v7347
      %v7349 = vrot.slane %v6662, 1
      %v7350 = vrot.slane %v6663, 1
      %v7351 = vsel %vm7306, %v7349, %v7350
      %v7352 = vrot.slane %v6664, 1
      %v7353 = vrot.slane %v6665, 1
      %v7354 = vsel %vm7306, %v7352, %v7353
      %s7355 = scalar_lea.vmem %s4, 4
      %v7356 = vld [vmem:[%s7355] sm:$0x3]
      %v7358 = vsel %vm2874, %v7309, 0
      %v7361 = vsel %vm2874, %v7312, 0
      %v7364 = vsel %vm2874, %v7315, 0
      %v7367 = vsel %vm2874, %v7318, 0
      %v7370 = vsel %vm2874, %v7321, 0
      %v7373 = vsel %vm2874, %v7324, 0
      %v7376 = vsel %vm2874, %v7327, 0
      %v7379 = vsel %vm2874, %v7330, 0
      %v7382 = vsel %vm2874, %v7333, 0
      %v7385 = vsel %vm2874, %v7336, 0
      %v7388 = vsel %vm2874, %v7339, 0
      %v7391 = vsel %vm2874, %v7342, 0
      %v7394 = vsel %vm2874, %v7345, 0
      %v7397 = vsel %vm2874, %v7348, 0
      %v7400 = vsel %vm2874, %v7351, 0
      %v7403 = vsel %vm2874, %v7354, 0
      %v7406 = vsel %vm2938, %v7356, 0
      %7408 = vmatprep.subr.bf16.mxu0 0
      %7409 = vmatpush1.bf16.msra.mxu0 0
      %7410 = vmatprep.subr.bf16.mxu0 0
      %7411 = vmatpush1.bf16.msra.mxu0 0
      %7412 = vmatprep.subr.bf16.mxu0 0
      %7413 = vmatpush1.bf16.msra.mxu0 0
      %7414 = vmatprep.subr.bf16.mxu0 0
      %7415 = vmatpush1.bf16.msra.mxu0 0
      %7416 = vmatprep.subr.bf16.mxu0 0
      %7417 = vmatpush1.bf16.msra.mxu0 0
      %7418 = vmatprep.subr.bf16.mxu0 0
      %7419 = vmatpush1.bf16.msra.mxu0 0
      %7420 = vmatprep.subr.bf16.mxu0 0
      %7421 = vmatpush1.bf16.msra.mxu0 0
      %7422 = vmatprep.subr.bf16.mxu0 0
      %7423 = vmatpush1.bf16.msra.mxu0 %v7406
      %7424 = vmatprep.subr.bf16.mxu0 0
      %7425 = vmatpush2.bf16.msra.mxu0 0
      %7426 = vmatprep.subr.bf16.mxu0 0
      %7427 = vmatpush2.bf16.msra.mxu0 0
      %7428 = vmatprep.subr.bf16.mxu0 0
      %7429 = vmatpush2.bf16.msra.mxu0 0
      %7430 = vmatprep.subr.bf16.mxu0 0
      %7431 = vmatpush2.bf16.msra.mxu0 0
      %7432 = vmatprep.subr.bf16.mxu0 0
      %7433 = vmatpush2.bf16.msra.mxu0 0
      %7434 = vmatprep.subr.bf16.mxu0 0
      %7435 = vmatpush2.bf16.msra.mxu0 0
      %7436 = vmatprep.subr.bf16.mxu0 0
      %7437 = vmatpush2.bf16.msra.mxu0 0
      %7438 = vmatprep.subr.bf16.mxu0 0
      %7439 = vmatpush2.bf16.msra.mxu0 0
      %7440 = vmatprep.mubr.bf16.mxu0 0
      %7441 = vmatmul.mubr.bf16.gmra.mxu0 %v7358
      %v7442 = vpop.f32.mrf.mxu0
      %v7443 = vadd.f32 0.0, %v7442
      %v7444 = vpop.f32.mrf.mxu0
      %v7445 = vpop.f32.mrf.mxu0
      %v7446 = vadd.f32 0.0, %v7445
      %v7447 = vpop.f32.mrf.mxu0
      %7448 = vmatprep.mubr.bf16.mxu0 0
      %7449 = vmatmul.mubr.bf16.gmra.mxu0 %v7361
      %v7450 = vpop.f32.mrf.mxu0
      %v7451 = vadd.f32 0.0, %v7450
      %v7452 = vpop.f32.mrf.mxu0
      %v7453 = vpop.f32.mrf.mxu0
      %v7454 = vadd.f32 0.0, %v7453
      %v7455 = vpop.f32.mrf.mxu0
      %7456 = vmatprep.mubr.bf16.mxu0 0
      %7457 = vmatmul.mubr.bf16.gmra.mxu0 %v7364
      %v7458 = vpop.f32.mrf.mxu0
      %v7459 = vadd.f32 0.0, %v7458
      %v7460 = vpop.f32.mrf.mxu0
      %v7461 = vpop.f32.mrf.mxu0
      %v7462 = vadd.f32 0.0, %v7461
      %v7463 = vpop.f32.mrf.mxu0
      %7464 = vmatprep.mubr.bf16.mxu0 0
      %7465 = vmatmul.mubr.bf16.gmra.mxu0 %v7367
      %v7466 = vpop.f32.mrf.mxu0
      %v7467 = vadd.f32 0.0, %v7466
      %v7468 = vpop.f32.mrf.mxu0
      %v7469 = vpop.f32.mrf.mxu0
      %v7470 = vadd.f32 0.0, %v7469
      %v7471 = vpop.f32.mrf.mxu0
      %7472 = vmatprep.mubr.bf16.mxu0 0
      %7473 = vmatmul.mubr.bf16.gmra.mxu0 %v7370
      %v7474 = vpop.f32.mrf.mxu0
      %v7475 = vadd.f32 0.0, %v7474
      %v7476 = vpop.f32.mrf.mxu0
      %v7477 = vpop.f32.mrf.mxu0
      %v7478 = vadd.f32 0.0, %v7477
      %v7479 = vpop.f32.mrf.mxu0
      %7480 = vmatprep.mubr.bf16.mxu0 0
      %7481 = vmatmul.mubr.bf16.gmra.mxu0 %v7373
      %v7482 = vpop.f32.mrf.mxu0
      %v7483 = vadd.f32 0.0, %v7482
      %v7484 = vpop.f32.mrf.mxu0
      %v7485 = vpop.f32.mrf.mxu0
      %v7486 = vadd.f32 0.0, %v7485
      %v7487 = vpop.f32.mrf.mxu0
      %7488 = vmatprep.mubr.bf16.mxu0 0
      %7489 = vmatmul.mubr.bf16.gmra.mxu0 %v7376
      %v7490 = vpop.f32.mrf.mxu0
      %v7491 = vadd.f32 0.0, %v7490
      %v7492 = vpop.f32.mrf.mxu0
      %v7493 = vpop.f32.mrf.mxu0
      %v7494 = vadd.f32 0.0, %v7493
      %v7495 = vpop.f32.mrf.mxu0
      %7496 = vmatprep.mubr.bf16.mxu0 0
      %7497 = vmatmul.mubr.bf16.gmra.mxu0 %v7379
      %v7498 = vpop.f32.mrf.mxu0
      %v7499 = vadd.f32 0.0, %v7498
      %v7500 = vpop.f32.mrf.mxu0
      %v7501 = vpop.f32.mrf.mxu0
      %v7502 = vadd.f32 0.0, %v7501
      %v7503 = vpop.f32.mrf.mxu0
      %7504 = vmatprep.mubr.bf16.mxu0 0
      %7505 = vmatmul.mubr.bf16.gmra.mxu0 %v7382
      %v7506 = vpop.f32.mrf.mxu0
      %v7507 = vadd.f32 0.0, %v7506
      %v7508 = vpop.f32.mrf.mxu0
      %v7509 = vpop.f32.mrf.mxu0
      %v7510 = vadd.f32 0.0, %v7509
      %v7511 = vpop.f32.mrf.mxu0
      %7512 = vmatprep.mubr.bf16.mxu0 0
      %7513 = vmatmul.mubr.bf16.gmra.mxu0 %v7385
      %v7514 = vpop.f32.mrf.mxu0
      %v7515 = vadd.f32 0.0, %v7514
      %v7516 = vpop.f32.mrf.mxu0
      %v7517 = vpop.f32.mrf.mxu0
      %v7518 = vadd.f32 0.0, %v7517
      %v7519 = vpop.f32.mrf.mxu0
      %7520 = vmatprep.mubr.bf16.mxu0 0
      %7521 = vmatmul.mubr.bf16.gmra.mxu0 %v7388
      %v7522 = vpop.f32.mrf.mxu0
      %v7523 = vadd.f32 0.0, %v7522
      %v7524 = vpop.f32.mrf.mxu0
      %v7525 = vpop.f32.mrf.mxu0
      %v7526 = vadd.f32 0.0, %v7525
      %v7527 = vpop.f32.mrf.mxu0
      %7528 = vmatprep.mubr.bf16.mxu0 0
      %7529 = vmatmul.mubr.bf16.gmra.mxu0 %v7391
      %v7530 = vpop.f32.mrf.mxu0
      %v7531 = vadd.f32 0.0, %v7530
      %v7532 = vpop.f32.mrf.mxu0
      %v7533 = vpop.f32.mrf.mxu0
      %v7534 = vadd.f32 0.0, %v7533
      %v7535 = vpop.f32.mrf.mxu0
      %7536 = vmatprep.mubr.bf16.mxu0 0
      %7537 = vmatmul.mubr.bf16.gmra.mxu0 %v7394
      %v7538 = vpop.f32.mrf.mxu0
      %v7539 = vadd.f32 0.0, %v7538
      %v7540 = vpop.f32.mrf.mxu0
      %v7541 = vpop.f32.mrf.mxu0
      %v7542 = vadd.f32 0.0, %v7541
      %v7543 = vpop.f32.mrf.mxu0
      %7544 = vmatprep.mubr.bf16.mxu0 0
      %7545 = vmatmul.mubr.bf16.gmra.mxu0 %v7397
      %v7546 = vpop.f32.mrf.mxu0
      %v7547 = vadd.f32 0.0, %v7546
      %v7548 = vpop.f32.mrf.mxu0
      %v7549 = vpop.f32.mrf.mxu0
      %v7550 = vadd.f32 0.0, %v7549
      %v7551 = vpop.f32.mrf.mxu0
      %7552 = vmatprep.mubr.bf16.mxu0 0
      %7553 = vmatmul.mubr.bf16.gmra.mxu0 %v7400
      %v7554 = vpop.f32.mrf.mxu0
      %v7555 = vadd.f32 0.0, %v7554
      %v7556 = vpop.f32.mrf.mxu0
      %v7557 = vpop.f32.mrf.mxu0
      %v7558 = vadd.f32 0.0, %v7557
      %v7559 = vpop.f32.mrf.mxu0
      %7560 = vmatprep.mubr.bf16.mxu0 0
      %7561 = vmatmul.mubr.bf16.gmra.mxu0 %v7403
      %v7562 = vpop.f32.mrf.mxu0
      %v7563 = vadd.f32 0.0, %v7562
      %v7564 = vpop.f32.mrf.mxu0
      %v7565 = vpop.f32.mrf.mxu0
      %v7566 = vadd.f32 0.0, %v7565
      %v7567 = vpop.f32.mrf.mxu0
      %7568 = vdwg.mxu0
      %v7569 = vadd.f32 %v7148, %v7443
      %v7570 = vadd.f32 %v7151, %v7446
      %v7571 = vadd.f32 %v7156, %v7451
      %v7572 = vadd.f32 %v7159, %v7454
      %v7573 = vadd.f32 %v7164, %v7459
      %v7574 = vadd.f32 %v7167, %v7462
      %v7575 = vadd.f32 %v7172, %v7467
      %v7576 = vadd.f32 %v7175, %v7470
      %v7577 = vadd.f32 %v7180, %v7475
      %v7578 = vadd.f32 %v7183, %v7478
      %v7579 = vadd.f32 %v7188, %v7483
      %v7580 = vadd.f32 %v7191, %v7486
      %v7581 = vadd.f32 %v7196, %v7491
      %v7582 = vadd.f32 %v7199, %v7494
      %v7583 = vadd.f32 %v7204, %v7499
      %v7584 = vadd.f32 %v7207, %v7502
      %v7585 = vadd.f32 %v7212, %v7507
      %v7586 = vadd.f32 %v7215, %v7510
      %v7587 = vadd.f32 %v7220, %v7515
      %v7588 = vadd.f32 %v7223, %v7518
      %v7589 = vadd.f32 %v7228, %v7523
      %v7590 = vadd.f32 %v7231, %v7526
      %v7591 = vadd.f32 %v7236, %v7531
      %v7592 = vadd.f32 %v7239, %v7534
      %v7593 = vadd.f32 %v7244, %v7539
      %v7594 = vadd.f32 %v7247, %v7542
      %v7595 = vadd.f32 %v7252, %v7547
      %v7596 = vadd.f32 %v7255, %v7550
      %v7597 = vadd.f32 %v7260, %v7555
      %v7598 = vadd.f32 %v7263, %v7558
      %v7599 = vadd.f32 %v7268, %v7563
      %v7600 = vadd.f32 %v7271, %v7566
      %s7601 = scalar_lea.vmem %s4, 6
      %v7602 = vld [vmem:[%s7601] sm:$0x3]
      %v7604 = vsel %vm2874, %v6666, 0
      %v7607 = vsel %vm2938, %v7602, 0
      %7609 = vmatprep.subr.bf16.mxu0 0
      %7610 = vmatpush1.bf16.msra.mxu0 0
      %7611 = vmatprep.subr.bf16.mxu0 0
      %7612 = vmatpush1.bf16.msra.mxu0 0
      %7613 = vmatprep.subr.bf16.mxu0 0
      %7614 = vmatpush1.bf16.msra.mxu0 0
      %7615 = vmatprep.subr.bf16.mxu0 0
      %7616 = vmatpush1.bf16.msra.mxu0 0
      %7617 = vmatprep.subr.bf16.mxu0 0
      %7618 = vmatpush1.bf16.msra.mxu0 0
      %7619 = vmatprep.subr.bf16.mxu0 0
      %7620 = vmatpush1.bf16.msra.mxu0 0
      %7621 = vmatprep.subr.bf16.mxu0 0
      %7622 = vmatpush1.bf16.msra.mxu0 0
      %7623 = vmatprep.subr.bf16.mxu0 0
      %7624 = vmatpush1.bf16.msra.mxu0 %v7607
      %7625 = vmatprep.subr.bf16.mxu0 0
      %7626 = vmatpush2.bf16.msra.mxu0 0
      %7627 = vmatprep.subr.bf16.mxu0 0
      %7628 = vmatpush2.bf16.msra.mxu0 0
      %7629 = vmatprep.subr.bf16.mxu0 0
      %7630 = vmatpush2.bf16.msra.mxu0 0
      %7631 = vmatprep.subr.bf16.mxu0 0
      %7632 = vmatpush2.bf16.msra.mxu0 0
      %7633 = vmatprep.subr.bf16.mxu0 0
      %7634 = vmatpush2.bf16.msra.mxu0 0
      %7635 = vmatprep.subr.bf16.mxu0 0
      %7636 = vmatpush2.bf16.msra.mxu0 0
      %7637 = vmatprep.subr.bf16.mxu0 0
      %7638 = vmatpush2.bf16.msra.mxu0 0
      %7639 = vmatprep.subr.bf16.mxu0 0
      %7640 = vmatpush2.bf16.msra.mxu0 0
      %7641 = vmatprep.mubr.bf16.mxu0 0
      %7642 = vmatmul.mubr.bf16.gmra.mxu0 %v7080
      %v7643 = vpop.f32.mrf.mxu0
      %v7644 = vadd.f32 0.0, %v7643
      %v7645 = vpop.f32.mrf.mxu0
      %v7646 = vpop.f32.mrf.mxu0
      %v7647 = vadd.f32 0.0, %v7646
      %v7648 = vpop.f32.mrf.mxu0
      %7649 = vmatprep.mubr.bf16.mxu0 0
      %7650 = vmatmul.mubr.bf16.gmra.mxu0 %v7082
      %v7651 = vpop.f32.mrf.mxu0
      %v7652 = vadd.f32 0.0, %v7651
      %v7653 = vpop.f32.mrf.mxu0
      %v7654 = vpop.f32.mrf.mxu0
      %v7655 = vadd.f32 0.0, %v7654
      %v7656 = vpop.f32.mrf.mxu0
      %7657 = vmatprep.mubr.bf16.mxu0 0
      %7658 = vmatmul.mubr.bf16.gmra.mxu0 %v7084
      %v7659 = vpop.f32.mrf.mxu0
      %v7660 = vadd.f32 0.0, %v7659
      %v7661 = vpop.f32.mrf.mxu0
      %v7662 = vpop.f32.mrf.mxu0
      %v7663 = vadd.f32 0.0, %v7662
      %v7664 = vpop.f32.mrf.mxu0
      %7665 = vmatprep.mubr.bf16.mxu0 0
      %7666 = vmatmul.mubr.bf16.gmra.mxu0 %v7086
      %v7667 = vpop.f32.mrf.mxu0
      %v7668 = vadd.f32 0.0, %v7667
      %v7669 = vpop.f32.mrf.mxu0
      %v7670 = vpop.f32.mrf.mxu0
      %v7671 = vadd.f32 0.0, %v7670
      %v7672 = vpop.f32.mrf.mxu0
      %7673 = vmatprep.mubr.bf16.mxu0 0
      %7674 = vmatmul.mubr.bf16.gmra.mxu0 %v7088
      %v7675 = vpop.f32.mrf.mxu0
      %v7676 = vadd.f32 0.0, %v7675
      %v7677 = vpop.f32.mrf.mxu0
      %v7678 = vpop.f32.mrf.mxu0
      %v7679 = vadd.f32 0.0, %v7678
      %v7680 = vpop.f32.mrf.mxu0
      %7681 = vmatprep.mubr.bf16.mxu0 0
      %7682 = vmatmul.mubr.bf16.gmra.mxu0 %v7090
      %v7683 = vpop.f32.mrf.mxu0
      %v7684 = vadd.f32 0.0, %v7683
      %v7685 = vpop.f32.mrf.mxu0
      %v7686 = vpop.f32.mrf.mxu0
      %v7687 = vadd.f32 0.0, %v7686
      %v7688 = vpop.f32.mrf.mxu0
      %7689 = vmatprep.mubr.bf16.mxu0 0
      %7690 = vmatmul.mubr.bf16.gmra.mxu0 %v7092
      %v7691 = vpop.f32.mrf.mxu0
      %v7692 = vadd.f32 0.0, %v7691
      %v7693 = vpop.f32.mrf.mxu0
      %v7694 = vpop.f32.mrf.mxu0
      %v7695 = vadd.f32 0.0, %v7694
      %v7696 = vpop.f32.mrf.mxu0
      %7697 = vmatprep.mubr.bf16.mxu0 0
      %7698 = vmatmul.mubr.bf16.gmra.mxu0 %v7094
      %v7699 = vpop.f32.mrf.mxu0
      %v7700 = vadd.f32 0.0, %v7699
      %v7701 = vpop.f32.mrf.mxu0
      %v7702 = vpop.f32.mrf.mxu0
      %v7703 = vadd.f32 0.0, %v7702
      %v7704 = vpop.f32.mrf.mxu0
      %7705 = vmatprep.mubr.bf16.mxu0 0
      %7706 = vmatmul.mubr.bf16.gmra.mxu0 %v7096
      %v7707 = vpop.f32.mrf.mxu0
      %v7708 = vadd.f32 0.0, %v7707
      %v7709 = vpop.f32.mrf.mxu0
      %v7710 = vpop.f32.mrf.mxu0
      %v7711 = vadd.f32 0.0, %v7710
      %v7712 = vpop.f32.mrf.mxu0
      %7713 = vmatprep.mubr.bf16.mxu0 0
      %7714 = vmatmul.mubr.bf16.gmra.mxu0 %v7098
      %v7715 = vpop.f32.mrf.mxu0
      %v7716 = vadd.f32 0.0, %v7715
      %v7717 = vpop.f32.mrf.mxu0
      %v7718 = vpop.f32.mrf.mxu0
      %v7719 = vadd.f32 0.0, %v7718
      %v7720 = vpop.f32.mrf.mxu0
      %7721 = vmatprep.mubr.bf16.mxu0 0
      %7722 = vmatmul.mubr.bf16.gmra.mxu0 %v7100
      %v7723 = vpop.f32.mrf.mxu0
      %v7724 = vadd.f32 0.0, %v7723
      %v7725 = vpop.f32.mrf.mxu0
      %v7726 = vpop.f32.mrf.mxu0
      %v7727 = vadd.f32 0.0, %v7726
      %v7728 = vpop.f32.mrf.mxu0
      %7729 = vmatprep.mubr.bf16.mxu0 0
      %7730 = vmatmul.mubr.bf16.gmra.mxu0 %v7102
      %v7731 = vpop.f32.mrf.mxu0
      %v7732 = vadd.f32 0.0, %v7731
      %v7733 = vpop.f32.mrf.mxu0
      %v7734 = vpop.f32.mrf.mxu0
      %v7735 = vadd.f32 0.0, %v7734
      %v7736 = vpop.f32.mrf.mxu0
      %7737 = vmatprep.mubr.bf16.mxu0 0
      %7738 = vmatmul.mubr.bf16.gmra.mxu0 %v7104
      %v7739 = vpop.f32.mrf.mxu0
      %v7740 = vadd.f32 0.0, %v7739
      %v7741 = vpop.f32.mrf.mxu0
      %v7742 = vpop.f32.mrf.mxu0
      %v7743 = vadd.f32 0.0, %v7742
      %v7744 = vpop.f32.mrf.mxu0
      %7745 = vmatprep.mubr.bf16.mxu0 0
      %7746 = vmatmul.mubr.bf16.gmra.mxu0 %v7106
      %v7747 = vpop.f32.mrf.mxu0
      %v7748 = vadd.f32 0.0, %v7747
      %v7749 = vpop.f32.mrf.mxu0
      %v7750 = vpop.f32.mrf.mxu0
      %v7751 = vadd.f32 0.0, %v7750
      %v7752 = vpop.f32.mrf.mxu0
      %7753 = vmatprep.mubr.bf16.mxu0 0
      %7754 = vmatmul.mubr.bf16.gmra.mxu0 %v7108
      %v7755 = vpop.f32.mrf.mxu0
      %v7756 = vadd.f32 0.0, %v7755
      %v7757 = vpop.f32.mrf.mxu0
      %v7758 = vpop.f32.mrf.mxu0
      %v7759 = vadd.f32 0.0, %v7758
      %v7760 = vpop.f32.mrf.mxu0
      %7761 = vmatprep.mubr.bf16.mxu0 0
      %7762 = vmatmul.mubr.bf16.gmra.mxu0 %v7604
      %v7763 = vpop.f32.mrf.mxu0
      %v7764 = vadd.f32 0.0, %v7763
      %v7765 = vpop.f32.mrf.mxu0
      %v7766 = vpop.f32.mrf.mxu0
      %v7767 = vadd.f32 0.0, %v7766
      %v7768 = vpop.f32.mrf.mxu0
      %7769 = vdwg.mxu0
      %v7770 = vadd.f32 %v7569, %v7644
      %v7771 = vadd.f32 %v7570, %v7647
      %v7772 = vadd.f32 %v7571, %v7652
      %v7773 = vadd.f32 %v7572, %v7655
      %v7774 = vadd.f32 %v7573, %v7660
      %v7775 = vadd.f32 %v7574, %v7663
      %v7776 = vadd.f32 %v7575, %v7668
      %v7777 = vadd.f32 %v7576, %v7671
      %v7778 = vadd.f32 %v7577, %v7676
      %v7779 = vadd.f32 %v7578, %v7679
      %v7780 = vadd.f32 %v7579, %v7684
      %v7781 = vadd.f32 %v7580, %v7687
      %v7782 = vadd.f32 %v7581, %v7692
      %v7783 = vadd.f32 %v7582, %v7695
      %v7784 = vadd.f32 %v7583, %v7700
      %v7785 = vadd.f32 %v7584, %v7703
      %v7786 = vadd.f32 %v7585, %v7708
      %v7787 = vadd.f32 %v7586, %v7711
      %v7788 = vadd.f32 %v7587, %v7716
      %v7789 = vadd.f32 %v7588, %v7719
      %v7790 = vadd.f32 %v7589, %v7724
      %v7791 = vadd.f32 %v7590, %v7727
      %v7792 = vadd.f32 %v7591, %v7732
      %v7793 = vadd.f32 %v7592, %v7735
      %v7794 = vadd.f32 %v7593, %v7740
      %v7795 = vadd.f32 %v7594, %v7743
      %v7796 = vadd.f32 %v7595, %v7748
      %v7797 = vadd.f32 %v7596, %v7751
      %v7798 = vadd.f32 %v7597, %v7756
      %v7799 = vadd.f32 %v7598, %v7759
      %v7800 = vadd.f32 %v7599, %v7764
      %v7801 = vadd.f32 %v7600, %v7767
      %v7802 = vshrl.u32 %v6666, 16
      %v7804 = vshll.u32 %v6666, 16
      %v7806 = vrot.slane %v7804, 1
      %v7807 = vor.u32 %v7802, %v7806
      %v7809 = vshll.u32 %v6667, 16
      %v7811 = vrot.slane %v7809, 1
      %v7812 = vsel %vm6671, %v7807, %v7811
      %s7813 = scalar_lea.vmem %s4, 8
      %v7814 = vld [vmem:[%s7813] sm:$0x3]
      %v7816 = vsel %vm2874, %v7812, 0
      %v7819 = vsel %vm2938, %v7814, 0
      %7821 = vmatprep.subr.bf16.mxu0 0
      %7822 = vmatpush1.bf16.msra.mxu0 0
      %7823 = vmatprep.subr.bf16.mxu0 0
      %7824 = vmatpush1.bf16.msra.mxu0 0
      %7825 = vmatprep.subr.bf16.mxu0 0
      %7826 = vmatpush1.bf16.msra.mxu0 0
      %7827 = vmatprep.subr.bf16.mxu0 0
      %7828 = vmatpush1.bf16.msra.mxu0 0
      %7829 = vmatprep.subr.bf16.mxu0 0
      %7830 = vmatpush1.bf16.msra.mxu0 0
      %7831 = vmatprep.subr.bf16.mxu0 0
      %7832 = vmatpush1.bf16.msra.mxu0 0
      %7833 = vmatprep.subr.bf16.mxu0 0
      %7834 = vmatpush1.bf16.msra.mxu0 0
      %7835 = vmatprep.subr.bf16.mxu0 0
      %7836 = vmatpush1.bf16.msra.mxu0 %v7819
      %7837 = vmatprep.subr.bf16.mxu0 0
      %7838 = vmatpush2.bf16.msra.mxu0 0
      %7839 = vmatprep.subr.bf16.mxu0 0
      %7840 = vmatpush2.bf16.msra.mxu0 0
      %7841 = vmatprep.subr.bf16.mxu0 0
      %7842 = vmatpush2.bf16.msra.mxu0 0
      %7843 = vmatprep.subr.bf16.mxu0 0
      %7844 = vmatpush2.bf16.msra.mxu0 0
      %7845 = vmatprep.subr.bf16.mxu0 0
      %7846 = vmatpush2.bf16.msra.mxu0 0
      %7847 = vmatprep.subr.bf16.mxu0 0
      %7848 = vmatpush2.bf16.msra.mxu0 0
      %7849 = vmatprep.subr.bf16.mxu0 0
      %7850 = vmatpush2.bf16.msra.mxu0 0
      %7851 = vmatprep.subr.bf16.mxu0 0
      %7852 = vmatpush2.bf16.msra.mxu0 0
      %7853 = vmatprep.mubr.bf16.mxu0 0
      %7854 = vmatmul.mubr.bf16.gmra.mxu0 %v6870
      %v7855 = vpop.f32.mrf.mxu0
      %v7856 = vadd.f32 0.0, %v7855
      %v7857 = vpop.f32.mrf.mxu0
      %v7858 = vpop.f32.mrf.mxu0
      %v7859 = vadd.f32 0.0, %v7858
      %v7860 = vpop.f32.mrf.mxu0
      %7861 = vmatprep.mubr.bf16.mxu0 0
      %7862 = vmatmul.mubr.bf16.gmra.mxu0 %v6873
      %v7863 = vpop.f32.mrf.mxu0
      %v7864 = vadd.f32 0.0, %v7863
      %v7865 = vpop.f32.mrf.mxu0
      %v7866 = vpop.f32.mrf.mxu0
      %v7867 = vadd.f32 0.0, %v7866
      %v7868 = vpop.f32.mrf.mxu0
      %7869 = vmatprep.mubr.bf16.mxu0 0
      %7870 = vmatmul.mubr.bf16.gmra.mxu0 %v6876
      %v7871 = vpop.f32.mrf.mxu0
      %v7872 = vadd.f32 0.0, %v7871
      %v7873 = vpop.f32.mrf.mxu0
      %v7874 = vpop.f32.mrf.mxu0
      %v7875 = vadd.f32 0.0, %v7874
      %v7876 = vpop.f32.mrf.mxu0
      %7877 = vmatprep.mubr.bf16.mxu0 0
      %7878 = vmatmul.mubr.bf16.gmra.mxu0 %v6879
      %v7879 = vpop.f32.mrf.mxu0
      %v7880 = vadd.f32 0.0, %v7879
      %v7881 = vpop.f32.mrf.mxu0
      %v7882 = vpop.f32.mrf.mxu0
      %v7883 = vadd.f32 0.0, %v7882
      %v7884 = vpop.f32.mrf.mxu0
      %7885 = vmatprep.mubr.bf16.mxu0 0
      %7886 = vmatmul.mubr.bf16.gmra.mxu0 %v6882
      %v7887 = vpop.f32.mrf.mxu0
      %v7888 = vadd.f32 0.0, %v7887
      %v7889 = vpop.f32.mrf.mxu0
      %v7890 = vpop.f32.mrf.mxu0
      %v7891 = vadd.f32 0.0, %v7890
      %v7892 = vpop.f32.mrf.mxu0
      %7893 = vmatprep.mubr.bf16.mxu0 0
      %7894 = vmatmul.mubr.bf16.gmra.mxu0 %v6885
      %v7895 = vpop.f32.mrf.mxu0
      %v7896 = vadd.f32 0.0, %v7895
      %v7897 = vpop.f32.mrf.mxu0
      %v7898 = vpop.f32.mrf.mxu0
      %v7899 = vadd.f32 0.0, %v7898
      %v7900 = vpop.f32.mrf.mxu0
      %7901 = vmatprep.mubr.bf16.mxu0 0
      %7902 = vmatmul.mubr.bf16.gmra.mxu0 %v6888
      %v7903 = vpop.f32.mrf.mxu0
      %v7904 = vadd.f32 0.0, %v7903
      %v7905 = vpop.f32.mrf.mxu0
      %v7906 = vpop.f32.mrf.mxu0
      %v7907 = vadd.f32 0.0, %v7906
      %v7908 = vpop.f32.mrf.mxu0
      %7909 = vmatprep.mubr.bf16.mxu0 0
      %7910 = vmatmul.mubr.bf16.gmra.mxu0 %v6891
      %v7911 = vpop.f32.mrf.mxu0
      %v7912 = vadd.f32 0.0, %v7911
      %v7913 = vpop.f32.mrf.mxu0
      %v7914 = vpop.f32.mrf.mxu0
      %v7915 = vadd.f32 0.0, %v7914
      %v7916 = vpop.f32.mrf.mxu0
      %7917 = vmatprep.mubr.bf16.mxu0 0
      %7918 = vmatmul.mubr.bf16.gmra.mxu0 %v6894
      %v7919 = vpop.f32.mrf.mxu0
      %v7920 = vadd.f32 0.0, %v7919
      %v7921 = vpop.f32.mrf.mxu0
      %v7922 = vpop.f32.mrf.mxu0
      %v7923 = vadd.f32 0.0, %v7922
      %v7924 = vpop.f32.mrf.mxu0
      %7925 = vmatprep.mubr.bf16.mxu0 0
      %7926 = vmatmul.mubr.bf16.gmra.mxu0 %v6897
      %v7927 = vpop.f32.mrf.mxu0
      %v7928 = vadd.f32 0.0, %v7927
      %v7929 = vpop.f32.mrf.mxu0
      %v7930 = vpop.f32.mrf.mxu0
      %v7931 = vadd.f32 0.0, %v7930
      %v7932 = vpop.f32.mrf.mxu0
      %7933 = vmatprep.mubr.bf16.mxu0 0
      %7934 = vmatmul.mubr.bf16.gmra.mxu0 %v6900
      %v7935 = vpop.f32.mrf.mxu0
      %v7936 = vadd.f32 0.0, %v7935
      %v7937 = vpop.f32.mrf.mxu0
      %v7938 = vpop.f32.mrf.mxu0
      %v7939 = vadd.f32 0.0, %v7938
      %v7940 = vpop.f32.mrf.mxu0
      %7941 = vmatprep.mubr.bf16.mxu0 0
      %7942 = vmatmul.mubr.bf16.gmra.mxu0 %v6903
      %v7943 = vpop.f32.mrf.mxu0
      %v7944 = vadd.f32 0.0, %v7943
      %v7945 = vpop.f32.mrf.mxu0
      %v7946 = vpop.f32.mrf.mxu0
      %v7947 = vadd.f32 0.0, %v7946
      %v7948 = vpop.f32.mrf.mxu0
      %7949 = vmatprep.mubr.bf16.mxu0 0
      %7950 = vmatmul.mubr.bf16.gmra.mxu0 %v6906
      %v7951 = vpop.f32.mrf.mxu0
      %v7952 = vadd.f32 0.0, %v7951
      %v7953 = vpop.f32.mrf.mxu0
      %v7954 = vpop.f32.mrf.mxu0
      %v7955 = vadd.f32 0.0, %v7954
      %v7956 = vpop.f32.mrf.mxu0
      %7957 = vmatprep.mubr.bf16.mxu0 0
      %7958 = vmatmul.mubr.bf16.gmra.mxu0 %v6909
      %v7959 = vpop.f32.mrf.mxu0
      %v7960 = vadd.f32 0.0, %v7959
      %v7961 = vpop.f32.mrf.mxu0
      %v7962 = vpop.f32.mrf.mxu0
      %v7963 = vadd.f32 0.0, %v7962
      %v7964 = vpop.f32.mrf.mxu0
      %7965 = vmatprep.mubr.bf16.mxu0 0
      %7966 = vmatmul.mubr.bf16.gmra.mxu0 %v6912
      %v7967 = vpop.f32.mrf.mxu0
      %v7968 = vadd.f32 0.0, %v7967
      %v7969 = vpop.f32.mrf.mxu0
      %v7970 = vpop.f32.mrf.mxu0
      %v7971 = vadd.f32 0.0, %v7970
      %v7972 = vpop.f32.mrf.mxu0
      %7973 = vmatprep.mubr.bf16.mxu0 0
      %7974 = vmatmul.mubr.bf16.gmra.mxu0 %v7816
      %v7975 = vpop.f32.mrf.mxu0
      %v7976 = vadd.f32 0.0, %v7975
      %v7977 = vpop.f32.mrf.mxu0
      %v7978 = vpop.f32.mrf.mxu0
      %v7979 = vadd.f32 0.0, %v7978
      %v7980 = vpop.f32.mrf.mxu0
      %7981 = vdwg.mxu0
      %v7982 = vadd.f32 %v7770, %v7856
      %v7983 = vadd.f32 %v7771, %v7859
      %v7984 = vadd.f32 %v7772, %v7864
      %v7985 = vadd.f32 %v7773, %v7867
      %v7986 = vadd.f32 %v7774, %v7872
      %v7987 = vadd.f32 %v7775, %v7875
      %v7988 = vadd.f32 %v7776, %v7880
      %v7989 = vadd.f32 %v7777, %v7883
      %v7990 = vadd.f32 %v7778, %v7888
      %v7991 = vadd.f32 %v7779, %v7891
      %v7992 = vadd.f32 %v7780, %v7896
      %v7993 = vadd.f32 %v7781, %v7899
      %v7994 = vadd.f32 %v7782, %v7904
      %v7995 = vadd.f32 %v7783, %v7907
      %v7996 = vadd.f32 %v7784, %v7912
      %v7997 = vadd.f32 %v7785, %v7915
      %v7998 = vadd.f32 %v7786, %v7920
      %v7999 = vadd.f32 %v7787, %v7923
      %v8000 = vadd.f32 %v7788, %v7928
      %v8001 = vadd.f32 %v7789, %v7931
      %v8002 = vadd.f32 %v7790, %v7936
      %v8003 = vadd.f32 %v7791, %v7939
      %v8004 = vadd.f32 %v7792, %v7944
      %v8005 = vadd.f32 %v7793, %v7947
      %v8006 = vadd.f32 %v7794, %v7952
      %v8007 = vadd.f32 %v7795, %v7955
      %v8008 = vadd.f32 %v7796, %v7960
      %v8009 = vadd.f32 %v7797, %v7963
      %v8010 = vadd.f32 %v7798, %v7968
      %v8011 = vadd.f32 %v7799, %v7971
      %v8012 = vadd.f32 %v7800, %v7976
      %v8013 = vadd.f32 %v7801, %v7979
      %v8016 = vrot.slane %v6666, 1
      %v8017 = vrot.slane %v6667, 1
      %v8018 = vsel %vm7306, %v8016, %v8017
      %s8019 = scalar_lea.vmem %s4, 10
      %v8020 = vld [vmem:[%s8019] sm:$0x3]
      %v8022 = vsel %vm2874, %v8018, 0
      %v8025 = vsel %vm2938, %v8020, 0
      %8027 = vmatprep.subr.bf16.mxu0 0
      %8028 = vmatpush1.bf16.msra.mxu0 0
      %8029 = vmatprep.subr.bf16.mxu0 0
      %8030 = vmatpush1.bf16.msra.mxu0 0
      %8031 = vmatprep.subr.bf16.mxu0 0
      %8032 = vmatpush1.bf16.msra.mxu0 0
      %8033 = vmatprep.subr.bf16.mxu0 0
      %8034 = vmatpush1.bf16.msra.mxu0 0
      %8035 = vmatprep.subr.bf16.mxu0 0
      %8036 = vmatpush1.bf16.msra.mxu0 0
      %8037 = vmatprep.subr.bf16.mxu0 0
      %8038 = vmatpush1.bf16.msra.mxu0 0
      %8039 = vmatprep.subr.bf16.mxu0 0
      %8040 = vmatpush1.bf16.msra.mxu0 0
      %8041 = vmatprep.subr.bf16.mxu0 0
      %8042 = vmatpush1.bf16.msra.mxu0 %v8025
      %8043 = vmatprep.subr.bf16.mxu0 0
      %8044 = vmatpush2.bf16.msra.mxu0 0
      %8045 = vmatprep.subr.bf16.mxu0 0
      %8046 = vmatpush2.bf16.msra.mxu0 0
      %8047 = vmatprep.subr.bf16.mxu0 0
      %8048 = vmatpush2.bf16.msra.mxu0 0
      %8049 = vmatprep.subr.bf16.mxu0 0
      %8050 = vmatpush2.bf16.msra.mxu0 0
      %8051 = vmatprep.subr.bf16.mxu0 0
      %8052 = vmatpush2.bf16.msra.mxu0 0
      %8053 = vmatprep.subr.bf16.mxu0 0
      %8054 = vmatpush2.bf16.msra.mxu0 0
      %8055 = vmatprep.subr.bf16.mxu0 0
      %8056 = vmatpush2.bf16.msra.mxu0 0
      %8057 = vmatprep.subr.bf16.mxu0 0
      %8058 = vmatpush2.bf16.msra.mxu0 0
      %8059 = vmatprep.mubr.bf16.mxu0 0
      %8060 = vmatmul.mubr.bf16.gmra.mxu0 %v7361
      %v8061 = vpop.f32.mrf.mxu0
      %v8062 = vadd.f32 0.0, %v8061
      %v8063 = vpop.f32.mrf.mxu0
      %v8064 = vpop.f32.mrf.mxu0
      %v8065 = vadd.f32 0.0, %v8064
      %v8066 = vpop.f32.mrf.mxu0
      %8067 = vmatprep.mubr.bf16.mxu0 0
      %8068 = vmatmul.mubr.bf16.gmra.mxu0 %v7364
      %v8069 = vpop.f32.mrf.mxu0
      %v8070 = vadd.f32 0.0, %v8069
      %v8071 = vpop.f32.mrf.mxu0
      %v8072 = vpop.f32.mrf.mxu0
      %v8073 = vadd.f32 0.0, %v8072
      %v8074 = vpop.f32.mrf.mxu0
      %8075 = vmatprep.mubr.bf16.mxu0 0
      %8076 = vmatmul.mubr.bf16.gmra.mxu0 %v7367
      %v8077 = vpop.f32.mrf.mxu0
      %v8078 = vadd.f32 0.0, %v8077
      %v8079 = vpop.f32.mrf.mxu0
      %v8080 = vpop.f32.mrf.mxu0
      %v8081 = vadd.f32 0.0, %v8080
      %v8082 = vpop.f32.mrf.mxu0
      %8083 = vmatprep.mubr.bf16.mxu0 0
      %8084 = vmatmul.mubr.bf16.gmra.mxu0 %v7370
      %v8085 = vpop.f32.mrf.mxu0
      %v8086 = vadd.f32 0.0, %v8085
      %v8087 = vpop.f32.mrf.mxu0
      %v8088 = vpop.f32.mrf.mxu0
      %v8089 = vadd.f32 0.0, %v8088
      %v8090 = vpop.f32.mrf.mxu0
      %8091 = vmatprep.mubr.bf16.mxu0 0
      %8092 = vmatmul.mubr.bf16.gmra.mxu0 %v7373
      %v8093 = vpop.f32.mrf.mxu0
      %v8094 = vadd.f32 0.0, %v8093
      %v8095 = vpop.f32.mrf.mxu0
      %v8096 = vpop.f32.mrf.mxu0
      %v8097 = vadd.f32 0.0, %v8096
      %v8098 = vpop.f32.mrf.mxu0
      %8099 = vmatprep.mubr.bf16.mxu0 0
      %8100 = vmatmul.mubr.bf16.gmra.mxu0 %v7376
      %v8101 = vpop.f32.mrf.mxu0
      %v8102 = vadd.f32 0.0, %v8101
      %v8103 = vpop.f32.mrf.mxu0
      %v8104 = vpop.f32.mrf.mxu0
      %v8105 = vadd.f32 0.0, %v8104
      %v8106 = vpop.f32.mrf.mxu0
      %8107 = vmatprep.mubr.bf16.mxu0 0
      %8108 = vmatmul.mubr.bf16.gmra.mxu0 %v7379
      %v8109 = vpop.f32.mrf.mxu0
      %v8110 = vadd.f32 0.0, %v8109
      %v8111 = vpop.f32.mrf.mxu0
      %v8112 = vpop.f32.mrf.mxu0
      %v8113 = vadd.f32 0.0, %v8112
      %v8114 = vpop.f32.mrf.mxu0
      %8115 = vmatprep.mubr.bf16.mxu0 0
      %8116 = vmatmul.mubr.bf16.gmra.mxu0 %v7382
      %v8117 = vpop.f32.mrf.mxu0
      %v8118 = vadd.f32 0.0, %v8117
      %v8119 = vpop.f32.mrf.mxu0
      %v8120 = vpop.f32.mrf.mxu0
      %v8121 = vadd.f32 0.0, %v8120
      %v8122 = vpop.f32.mrf.mxu0
      %8123 = vmatprep.mubr.bf16.mxu0 0
      %8124 = vmatmul.mubr.bf16.gmra.mxu0 %v7385
      %v8125 = vpop.f32.mrf.mxu0
      %v8126 = vadd.f32 0.0, %v8125
      %v8127 = vpop.f32.mrf.mxu0
      %v8128 = vpop.f32.mrf.mxu0
      %v8129 = vadd.f32 0.0, %v8128
      %v8130 = vpop.f32.mrf.mxu0
      %8131 = vmatprep.mubr.bf16.mxu0 0
      %8132 = vmatmul.mubr.bf16.gmra.mxu0 %v7388
      %v8133 = vpop.f32.mrf.mxu0
      %v8134 = vadd.f32 0.0, %v8133
      %v8135 = vpop.f32.mrf.mxu0
      %v8136 = vpop.f32.mrf.mxu0
      %v8137 = vadd.f32 0.0, %v8136
      %v8138 = vpop.f32.mrf.mxu0
      %8139 = vmatprep.mubr.bf16.mxu0 0
      %8140 = vmatmul.mubr.bf16.gmra.mxu0 %v7391
      %v8141 = vpop.f32.mrf.mxu0
      %v8142 = vadd.f32 0.0, %v8141
      %v8143 = vpop.f32.mrf.mxu0
      %v8144 = vpop.f32.mrf.mxu0
      %v8145 = vadd.f32 0.0, %v8144
      %v8146 = vpop.f32.mrf.mxu0
      %8147 = vmatprep.mubr.bf16.mxu0 0
      %8148 = vmatmul.mubr.bf16.gmra.mxu0 %v7394
      %v8149 = vpop.f32.mrf.mxu0
      %v8150 = vadd.f32 0.0, %v8149
      %v8151 = vpop.f32.mrf.mxu0
      %v8152 = vpop.f32.mrf.mxu0
      %v8153 = vadd.f32 0.0, %v8152
      %v8154 = vpop.f32.mrf.mxu0
      %8155 = vmatprep.mubr.bf16.mxu0 0
      %8156 = vmatmul.mubr.bf16.gmra.mxu0 %v7397
      %v8157 = vpop.f32.mrf.mxu0
      %v8158 = vadd.f32 0.0, %v8157
      %v8159 = vpop.f32.mrf.mxu0
      %v8160 = vpop.f32.mrf.mxu0
      %v8161 = vadd.f32 0.0, %v8160
      %v8162 = vpop.f32.mrf.mxu0
      %8163 = vmatprep.mubr.bf16.mxu0 0
      %8164 = vmatmul.mubr.bf16.gmra.mxu0 %v7400
      %v8165 = vpop.f32.mrf.mxu0
      %v8166 = vadd.f32 0.0, %v8165
      %v8167 = vpop.f32.mrf.mxu0
      %v8168 = vpop.f32.mrf.mxu0
      %v8169 = vadd.f32 0.0, %v8168
      %v8170 = vpop.f32.mrf.mxu0
      %8171 = vmatprep.mubr.bf16.mxu0 0
      %8172 = vmatmul.mubr.bf16.gmra.mxu0 %v7403
      %v8173 = vpop.f32.mrf.mxu0
      %v8174 = vadd.f32 0.0, %v8173
      %v8175 = vpop.f32.mrf.mxu0
      %v8176 = vpop.f32.mrf.mxu0
      %v8177 = vadd.f32 0.0, %v8176
      %v8178 = vpop.f32.mrf.mxu0
      %8179 = vmatprep.mubr.bf16.mxu0 0
      %8180 = vmatmul.mubr.bf16.gmra.mxu0 %v8022
      %v8181 = vpop.f32.mrf.mxu0
      %v8182 = vadd.f32 0.0, %v8181
      %v8183 = vpop.f32.mrf.mxu0
      %v8184 = vpop.f32.mrf.mxu0
      %v8185 = vadd.f32 0.0, %v8184
      %v8186 = vpop.f32.mrf.mxu0
      %8187 = vdwg.mxu0
      %v8188 = vadd.f32 %v7982, %v8062
      %v8189 = vadd.f32 %v7983, %v8065
      %v8190 = vadd.f32 %v7984, %v8070
      %v8191 = vadd.f32 %v7985, %v8073
      %v8192 = vadd.f32 %v7986, %v8078
      %v8193 = vadd.f32 %v7987, %v8081
      %v8194 = vadd.f32 %v7988, %v8086
      %v8195 = vadd.f32 %v7989, %v8089
      %v8196 = vadd.f32 %v7990, %v8094
      %v8197 = vadd.f32 %v7991, %v8097
      %v8198 = vadd.f32 %v7992, %v8102
      %v8199 = vadd.f32 %v7993, %v8105
      %v8200 = vadd.f32 %v7994, %v8110
      %v8201 = vadd.f32 %v7995, %v8113
      %v8202 = vadd.f32 %v7996, %v8118
      %v8203 = vadd.f32 %v7997, %v8121
      %v8204 = vadd.f32 %v7998, %v8126
      %v8205 = vadd.f32 %v7999, %v8129
      %v8206 = vadd.f32 %v8000, %v8134
      %v8207 = vadd.f32 %v8001, %v8137
      %v8208 = vadd.f32 %v8002, %v8142
      %v8209 = vadd.f32 %v8003, %v8145
      %v8210 = vadd.f32 %v8004, %v8150
      %v8211 = vadd.f32 %v8005, %v8153
      %v8212 = vadd.f32 %v8006, %v8158
      %v8213 = vadd.f32 %v8007, %v8161
      %v8214 = vadd.f32 %v8008, %v8166
      %v8215 = vadd.f32 %v8009, %v8169
      %v8216 = vadd.f32 %v8010, %v8174
      %v8217 = vadd.f32 %v8011, %v8177
      %v8218 = vadd.f32 %v8012, %v8182
      %v8219 = vadd.f32 %v8013, %v8185
      %s8220 = scalar_lea.vmem %s4, 12
      %v8221 = vld [vmem:[%s8220] sm:$0x3]
      %v8223 = vsel %vm2874, %v6668, 0
      %v8226 = vsel %vm2938, %v8221, 0
      %8228 = vmatprep.subr.bf16.mxu0 0
      %8229 = vmatpush1.bf16.msra.mxu0 0
      %8230 = vmatprep.subr.bf16.mxu0 0
      %8231 = vmatpush1.bf16.msra.mxu0 0
      %8232 = vmatprep.subr.bf16.mxu0 0
      %8233 = vmatpush1.bf16.msra.mxu0 0
      %8234 = vmatprep.subr.bf16.mxu0 0
      %8235 = vmatpush1.bf16.msra.mxu0 0
      %8236 = vmatprep.subr.bf16.mxu0 0
      %8237 = vmatpush1.bf16.msra.mxu0 0
      %8238 = vmatprep.subr.bf16.mxu0 0
      %8239 = vmatpush1.bf16.msra.mxu0 0
      %8240 = vmatprep.subr.bf16.mxu0 0
      %8241 = vmatpush1.bf16.msra.mxu0 0
      %8242 = vmatprep.subr.bf16.mxu0 0
      %8243 = vmatpush1.bf16.msra.mxu0 %v8226
      %8244 = vmatprep.subr.bf16.mxu0 0
      %8245 = vmatpush2.bf16.msra.mxu0 0
      %8246 = vmatprep.subr.bf16.mxu0 0
      %8247 = vmatpush2.bf16.msra.mxu0 0
      %8248 = vmatprep.subr.bf16.mxu0 0
      %8249 = vmatpush2.bf16.msra.mxu0 0
      %8250 = vmatprep.subr.bf16.mxu0 0
      %8251 = vmatpush2.bf16.msra.mxu0 0
      %8252 = vmatprep.subr.bf16.mxu0 0
      %8253 = vmatpush2.bf16.msra.mxu0 0
      %8254 = vmatprep.subr.bf16.mxu0 0
      %8255 = vmatpush2.bf16.msra.mxu0 0
      %8256 = vmatprep.subr.bf16.mxu0 0
      %8257 = vmatpush2.bf16.msra.mxu0 0
      %8258 = vmatprep.subr.bf16.mxu0 0
      %8259 = vmatpush2.bf16.msra.mxu0 0
      %8260 = vmatprep.mubr.bf16.mxu0 0
      %8261 = vmatmul.mubr.bf16.gmra.mxu0 %v7082
      %v8262 = vpop.f32.mrf.mxu0
      %v8263 = vadd.f32 0.0, %v8262
      %v8264 = vpop.f32.mrf.mxu0
      %v8265 = vpop.f32.mrf.mxu0
      %v8266 = vadd.f32 0.0, %v8265
      %v8267 = vpop.f32.mrf.mxu0
      %8268 = vmatprep.mubr.bf16.mxu0 0
      %8269 = vmatmul.mubr.bf16.gmra.mxu0 %v7084
      %v8270 = vpop.f32.mrf.mxu0
      %v8271 = vadd.f32 0.0, %v8270
      %v8272 = vpop.f32.mrf.mxu0
      %v8273 = vpop.f32.mrf.mxu0
      %v8274 = vadd.f32 0.0, %v8273
      %v8275 = vpop.f32.mrf.mxu0
      %8276 = vmatprep.mubr.bf16.mxu0 0
      %8277 = vmatmul.mubr.bf16.gmra.mxu0 %v7086
      %v8278 = vpop.f32.mrf.mxu0
      %v8279 = vadd.f32 0.0, %v8278
      %v8280 = vpop.f32.mrf.mxu0
      %v8281 = vpop.f32.mrf.mxu0
      %v8282 = vadd.f32 0.0, %v8281
      %v8283 = vpop.f32.mrf.mxu0
      %8284 = vmatprep.mubr.bf16.mxu0 0
      %8285 = vmatmul.mubr.bf16.gmra.mxu0 %v7088
      %v8286 = vpop.f32.mrf.mxu0
      %v8287 = vadd.f32 0.0, %v8286
      %v8288 = vpop.f32.mrf.mxu0
      %v8289 = vpop.f32.mrf.mxu0
      %v8290 = vadd.f32 0.0, %v8289
      %v8291 = vpop.f32.mrf.mxu0
      %8292 = vmatprep.mubr.bf16.mxu0 0
      %8293 = vmatmul.mubr.bf16.gmra.mxu0 %v7090
      %v8294 = vpop.f32.mrf.mxu0
      %v8295 = vadd.f32 0.0, %v8294
      %v8296 = vpop.f32.mrf.mxu0
      %v8297 = vpop.f32.mrf.mxu0
      %v8298 = vadd.f32 0.0, %v8297
      %v8299 = vpop.f32.mrf.mxu0
      %8300 = vmatprep.mubr.bf16.mxu0 0
      %8301 = vmatmul.mubr.bf16.gmra.mxu0 %v7092
      %v8302 = vpop.f32.mrf.mxu0
      %v8303 = vadd.f32 0.0, %v8302
      %v8304 = vpop.f32.mrf.mxu0
      %v8305 = vpop.f32.mrf.mxu0
      %v8306 = vadd.f32 0.0, %v8305
      %v8307 = vpop.f32.mrf.mxu0
      %8308 = vmatprep.mubr.bf16.mxu0 0
      %8309 = vmatmul.mubr.bf16.gmra.mxu0 %v7094
      %v8310 = vpop.f32.mrf.mxu0
      %v8311 = vadd.f32 0.0, %v8310
      %v8312 = vpop.f32.mrf.mxu0
      %v8313 = vpop.f32.mrf.mxu0
      %v8314 = vadd.f32 0.0, %v8313
      %v8315 = vpop.f32.mrf.mxu0
      %8316 = vmatprep.mubr.bf16.mxu0 0
      %8317 = vmatmul.mubr.bf16.gmra.mxu0 %v7096
      %v8318 = vpop.f32.mrf.mxu0
      %v8319 = vadd.f32 0.0, %v8318
      %v8320 = vpop.f32.mrf.mxu0
      %v8321 = vpop.f32.mrf.mxu0
      %v8322 = vadd.f32 0.0, %v8321
      %v8323 = vpop.f32.mrf.mxu0
      %8324 = vmatprep.mubr.bf16.mxu0 0
      %8325 = vmatmul.mubr.bf16.gmra.mxu0 %v7098
      %v8326 = vpop.f32.mrf.mxu0
      %v8327 = vadd.f32 0.0, %v8326
      %v8328 = vpop.f32.mrf.mxu0
      %v8329 = vpop.f32.mrf.mxu0
      %v8330 = vadd.f32 0.0, %v8329
      %v8331 = vpop.f32.mrf.mxu0
      %8332 = vmatprep.mubr.bf16.mxu0 0
      %8333 = vmatmul.mubr.bf16.gmra.mxu0 %v7100
      %v8334 = vpop.f32.mrf.mxu0
      %v8335 = vadd.f32 0.0, %v8334
      %v8336 = vpop.f32.mrf.mxu0
      %v8337 = vpop.f32.mrf.mxu0
      %v8338 = vadd.f32 0.0, %v8337
      %v8339 = vpop.f32.mrf.mxu0
      %8340 = vmatprep.mubr.bf16.mxu0 0
      %8341 = vmatmul.mubr.bf16.gmra.mxu0 %v7102
      %v8342 = vpop.f32.mrf.mxu0
      %v8343 = vadd.f32 0.0, %v8342
      %v8344 = vpop.f32.mrf.mxu0
      %v8345 = vpop.f32.mrf.mxu0
      %v8346 = vadd.f32 0.0, %v8345
      %v8347 = vpop.f32.mrf.mxu0
      %8348 = vmatprep.mubr.bf16.mxu0 0
      %8349 = vmatmul.mubr.bf16.gmra.mxu0 %v7104
      %v8350 = vpop.f32.mrf.mxu0
      %v8351 = vadd.f32 0.0, %v8350
      %v8352 = vpop.f32.mrf.mxu0
      %v8353 = vpop.f32.mrf.mxu0
      %v8354 = vadd.f32 0.0, %v8353
      %v8355 = vpop.f32.mrf.mxu0
      %8356 = vmatprep.mubr.bf16.mxu0 0
      %8357 = vmatmul.mubr.bf16.gmra.mxu0 %v7106
      %v8358 = vpop.f32.mrf.mxu0
      %v8359 = vadd.f32 0.0, %v8358
      %v8360 = vpop.f32.mrf.mxu0
      %v8361 = vpop.f32.mrf.mxu0
      %v8362 = vadd.f32 0.0, %v8361
      %v8363 = vpop.f32.mrf.mxu0
      %8364 = vmatprep.mubr.bf16.mxu0 0
      %8365 = vmatmul.mubr.bf16.gmra.mxu0 %v7108
      %v8366 = vpop.f32.mrf.mxu0
      %v8367 = vadd.f32 0.0, %v8366
      %v8368 = vpop.f32.mrf.mxu0
      %v8369 = vpop.f32.mrf.mxu0
      %v8370 = vadd.f32 0.0, %v8369
      %v8371 = vpop.f32.mrf.mxu0
      %8372 = vmatprep.mubr.bf16.mxu0 0
      %8373 = vmatmul.mubr.bf16.gmra.mxu0 %v7604
      %v8374 = vpop.f32.mrf.mxu0
      %v8375 = vadd.f32 0.0, %v8374
      %v8376 = vpop.f32.mrf.mxu0
      %v8377 = vpop.f32.mrf.mxu0
      %v8378 = vadd.f32 0.0, %v8377
      %v8379 = vpop.f32.mrf.mxu0
      %8380 = vmatprep.mubr.bf16.mxu0 0
      %8381 = vmatmul.mubr.bf16.gmra.mxu0 %v8223
      %v8382 = vpop.f32.mrf.mxu0
      %v8383 = vadd.f32 0.0, %v8382
      %v8384 = vpop.f32.mrf.mxu0
      %v8385 = vpop.f32.mrf.mxu0
      %v8386 = vadd.f32 0.0, %v8385
      %v8387 = vpop.f32.mrf.mxu0
      %8388 = vdwg.mxu0
      %v8389 = vadd.f32 %v8188, %v8263
      %v8390 = vadd.f32 %v8189, %v8266
      %v8391 = vadd.f32 %v8190, %v8271
      %v8392 = vadd.f32 %v8191, %v8274
      %v8393 = vadd.f32 %v8192, %v8279
      %v8394 = vadd.f32 %v8193, %v8282
      %v8395 = vadd.f32 %v8194, %v8287
      %v8396 = vadd.f32 %v8195, %v8290
      %v8397 = vadd.f32 %v8196, %v8295
      %v8398 = vadd.f32 %v8197, %v8298
      %v8399 = vadd.f32 %v8198, %v8303
      %v8400 = vadd.f32 %v8199, %v8306
      %v8401 = vadd.f32 %v8200, %v8311
      %v8402 = vadd.f32 %v8201, %v8314
      %v8403 = vadd.f32 %v8202, %v8319
      %v8404 = vadd.f32 %v8203, %v8322
      %v8405 = vadd.f32 %v8204, %v8327
      %v8406 = vadd.f32 %v8205, %v8330
      %v8407 = vadd.f32 %v8206, %v8335
      %v8408 = vadd.f32 %v8207, %v8338
      %v8409 = vadd.f32 %v8208, %v8343
      %v8410 = vadd.f32 %v8209, %v8346
      %v8411 = vadd.f32 %v8210, %v8351
      %v8412 = vadd.f32 %v8211, %v8354
      %v8413 = vadd.f32 %v8212, %v8359
      %v8414 = vadd.f32 %v8213, %v8362
      %v8415 = vadd.f32 %v8214, %v8367
      %v8416 = vadd.f32 %v8215, %v8370
      %v8417 = vadd.f32 %v8216, %v8375
      %v8418 = vadd.f32 %v8217, %v8378
      %v8419 = vadd.f32 %v8218, %v8383
      %v8420 = vadd.f32 %v8219, %v8386
      %v8421 = vshrl.u32 %v6668, 16
      %v8423 = vshll.u32 %v6668, 16
      %v8425 = vrot.slane %v8423, 1
      %v8426 = vor.u32 %v8421, %v8425
      %v8428 = vshll.u32 %v6669, 16
      %v8430 = vrot.slane %v8428, 1
      %v8431 = vsel %vm6671, %v8426, %v8430
      %s8432 = scalar_lea.vmem %s4, 14
      %v8433 = vld [vmem:[%s8432] sm:$0x3]
      %v8435 = vsel %vm2874, %v8431, 0
      %v8438 = vsel %vm2938, %v8433, 0
      %8440 = vmatprep.subr.bf16.mxu0 0
      %8441 = vmatpush1.bf16.msra.mxu0 0
      %8442 = vmatprep.subr.bf16.mxu0 0
      %8443 = vmatpush1.bf16.msra.mxu0 0
      %8444 = vmatprep.subr.bf16.mxu0 0
      %8445 = vmatpush1.bf16.msra.mxu0 0
      %8446 = vmatprep.subr.bf16.mxu0 0
      %8447 = vmatpush1.bf16.msra.mxu0 0
      %8448 = vmatprep.subr.bf16.mxu0 0
      %8449 = vmatpush1.bf16.msra.mxu0 0
      %8450 = vmatprep.subr.bf16.mxu0 0
      %8451 = vmatpush1.bf16.msra.mxu0 0
      %8452 = vmatprep.subr.bf16.mxu0 0
      %8453 = vmatpush1.bf16.msra.mxu0 0
      %8454 = vmatprep.subr.bf16.mxu0 0
      %8455 = vmatpush1.bf16.msra.mxu0 %v8438
      %8456 = vmatprep.subr.bf16.mxu0 0
      %8457 = vmatpush2.bf16.msra.mxu0 0
      %8458 = vmatprep.subr.bf16.mxu0 0
      %8459 = vmatpush2.bf16.msra.mxu0 0
      %8460 = vmatprep.subr.bf16.mxu0 0
      %8461 = vmatpush2.bf16.msra.mxu0 0
      %8462 = vmatprep.subr.bf16.mxu0 0
      %8463 = vmatpush2.bf16.msra.mxu0 0
      %8464 = vmatprep.subr.bf16.mxu0 0
      %8465 = vmatpush2.bf16.msra.mxu0 0
      %8466 = vmatprep.subr.bf16.mxu0 0
      %8467 = vmatpush2.bf16.msra.mxu0 0
      %8468 = vmatprep.subr.bf16.mxu0 0
      %8469 = vmatpush2.bf16.msra.mxu0 0
      %8470 = vmatprep.subr.bf16.mxu0 0
      %8471 = vmatpush2.bf16.msra.mxu0 0
      %8472 = vmatprep.mubr.bf16.mxu0 0
      %8473 = vmatmul.mubr.bf16.gmra.mxu0 %v6873
      %v8474 = vpop.f32.mrf.mxu0
      %v8475 = vadd.f32 0.0, %v8474
      %v8476 = vpop.f32.mrf.mxu0
      %v8477 = vpop.f32.mrf.mxu0
      %v8478 = vadd.f32 0.0, %v8477
      %v8479 = vpop.f32.mrf.mxu0
      %8480 = vmatprep.mubr.bf16.mxu0 0
      %8481 = vmatmul.mubr.bf16.gmra.mxu0 %v6876
      %v8482 = vpop.f32.mrf.mxu0
      %v8483 = vadd.f32 0.0, %v8482
      %v8484 = vpop.f32.mrf.mxu0
      %v8485 = vpop.f32.mrf.mxu0
      %v8486 = vadd.f32 0.0, %v8485
      %v8487 = vpop.f32.mrf.mxu0
      %8488 = vmatprep.mubr.bf16.mxu0 0
      %8489 = vmatmul.mubr.bf16.gmra.mxu0 %v6879
      %v8490 = vpop.f32.mrf.mxu0
      %v8491 = vadd.f32 0.0, %v8490
      %v8492 = vpop.f32.mrf.mxu0
      %v8493 = vpop.f32.mrf.mxu0
      %v8494 = vadd.f32 0.0, %v8493
      %v8495 = vpop.f32.mrf.mxu0
      %8496 = vmatprep.mubr.bf16.mxu0 0
      %8497 = vmatmul.mubr.bf16.gmra.mxu0 %v6882
      %v8498 = vpop.f32.mrf.mxu0
      %v8499 = vadd.f32 0.0, %v8498
      %v8500 = vpop.f32.mrf.mxu0
      %v8501 = vpop.f32.mrf.mxu0
      %v8502 = vadd.f32 0.0, %v8501
      %v8503 = vpop.f32.mrf.mxu0
      %8504 = vmatprep.mubr.bf16.mxu0 0
      %8505 = vmatmul.mubr.bf16.gmra.mxu0 %v6885
      %v8506 = vpop.f32.mrf.mxu0
      %v8507 = vadd.f32 0.0, %v8506
      %v8508 = vpop.f32.mrf.mxu0
      %v8509 = vpop.f32.mrf.mxu0
      %v8510 = vadd.f32 0.0, %v8509
      %v8511 = vpop.f32.mrf.mxu0
      %8512 = vmatprep.mubr.bf16.mxu0 0
      %8513 = vmatmul.mubr.bf16.gmra.mxu0 %v6888
      %v8514 = vpop.f32.mrf.mxu0
      %v8515 = vadd.f32 0.0, %v8514
      %v8516 = vpop.f32.mrf.mxu0
      %v8517 = vpop.f32.mrf.mxu0
      %v8518 = vadd.f32 0.0, %v8517
      %v8519 = vpop.f32.mrf.mxu0
      %8520 = vmatprep.mubr.bf16.mxu0 0
      %8521 = vmatmul.mubr.bf16.gmra.mxu0 %v6891
      %v8522 = vpop.f32.mrf.mxu0
      %v8523 = vadd.f32 0.0, %v8522
      %v8524 = vpop.f32.mrf.mxu0
      %v8525 = vpop.f32.mrf.mxu0
      %v8526 = vadd.f32 0.0, %v8525
      %v8527 = vpop.f32.mrf.mxu0
      %8528 = vmatprep.mubr.bf16.mxu0 0
      %8529 = vmatmul.mubr.bf16.gmra.mxu0 %v6894
      %v8530 = vpop.f32.mrf.mxu0
      %v8531 = vadd.f32 0.0, %v8530
      %v8532 = vpop.f32.mrf.mxu0
      %v8533 = vpop.f32.mrf.mxu0
      %v8534 = vadd.f32 0.0, %v8533
      %v8535 = vpop.f32.mrf.mxu0
      %8536 = vmatprep.mubr.bf16.mxu0 0
      %8537 = vmatmul.mubr.bf16.gmra.mxu0 %v6897
      %v8538 = vpop.f32.mrf.mxu0
      %v8539 = vadd.f32 0.0, %v8538
      %v8540 = vpop.f32.mrf.mxu0
      %v8541 = vpop.f32.mrf.mxu0
      %v8542 = vadd.f32 0.0, %v8541
      %v8543 = vpop.f32.mrf.mxu0
      %8544 = vmatprep.mubr.bf16.mxu0 0
      %8545 = vmatmul.mubr.bf16.gmra.mxu0 %v6900
      %v8546 = vpop.f32.mrf.mxu0
      %v8547 = vadd.f32 0.0, %v8546
      %v8548 = vpop.f32.mrf.mxu0
      %v8549 = vpop.f32.mrf.mxu0
      %v8550 = vadd.f32 0.0, %v8549
      %v8551 = vpop.f32.mrf.mxu0
      %8552 = vmatprep.mubr.bf16.mxu0 0
      %8553 = vmatmul.mubr.bf16.gmra.mxu0 %v6903
      %v8554 = vpop.f32.mrf.mxu0
      %v8555 = vadd.f32 0.0, %v8554
      %v8556 = vpop.f32.mrf.mxu0
      %v8557 = vpop.f32.mrf.mxu0
      %v8558 = vadd.f32 0.0, %v8557
      %v8559 = vpop.f32.mrf.mxu0
      %8560 = vmatprep.mubr.bf16.mxu0 0
      %8561 = vmatmul.mubr.bf16.gmra.mxu0 %v6906
      %v8562 = vpop.f32.mrf.mxu0
      %v8563 = vadd.f32 0.0, %v8562
      %v8564 = vpop.f32.mrf.mxu0
      %v8565 = vpop.f32.mrf.mxu0
      %v8566 = vadd.f32 0.0, %v8565
      %v8567 = vpop.f32.mrf.mxu0
      %8568 = vmatprep.mubr.bf16.mxu0 0
      %8569 = vmatmul.mubr.bf16.gmra.mxu0 %v6909
      %v8570 = vpop.f32.mrf.mxu0
      %v8571 = vadd.f32 0.0, %v8570
      %v8572 = vpop.f32.mrf.mxu0
      %v8573 = vpop.f32.mrf.mxu0
      %v8574 = vadd.f32 0.0, %v8573
      %v8575 = vpop.f32.mrf.mxu0
      %8576 = vmatprep.mubr.bf16.mxu0 0
      %8577 = vmatmul.mubr.bf16.gmra.mxu0 %v6912
      %v8578 = vpop.f32.mrf.mxu0
      %v8579 = vadd.f32 0.0, %v8578
      %v8580 = vpop.f32.mrf.mxu0
      %v8581 = vpop.f32.mrf.mxu0
      %v8582 = vadd.f32 0.0, %v8581
      %v8583 = vpop.f32.mrf.mxu0
      %8584 = vmatprep.mubr.bf16.mxu0 0
      %8585 = vmatmul.mubr.bf16.gmra.mxu0 %v7816
      %v8586 = vpop.f32.mrf.mxu0
      %v8587 = vadd.f32 0.0, %v8586
      %v8588 = vpop.f32.mrf.mxu0
      %v8589 = vpop.f32.mrf.mxu0
      %v8590 = vadd.f32 0.0, %v8589
      %v8591 = vpop.f32.mrf.mxu0
      %8592 = vmatprep.mubr.bf16.mxu0 0
      %8593 = vmatmul.mubr.bf16.gmra.mxu0 %v8435
      %v8594 = vpop.f32.mrf.mxu0
      %v8595 = vadd.f32 0.0, %v8594
      %v8596 = vpop.f32.mrf.mxu0
      %v8597 = vpop.f32.mrf.mxu0
      %v8598 = vadd.f32 0.0, %v8597
      %v8599 = vpop.f32.mrf.mxu0
      %8600 = vdwg.mxu0
      %v8601 = vadd.f32 %v8389, %v8475
      %v8602 = vadd.f32 %v8390, %v8478
      %v8603 = vadd.f32 %v8391, %v8483
      %v8604 = vadd.f32 %v8392, %v8486
      %v8605 = vadd.f32 %v8393, %v8491
      %v8606 = vadd.f32 %v8394, %v8494
      %v8607 = vadd.f32 %v8395, %v8499
      %v8608 = vadd.f32 %v8396, %v8502
      %v8609 = vadd.f32 %v8397, %v8507
      %v8610 = vadd.f32 %v8398, %v8510
      %v8611 = vadd.f32 %v8399, %v8515
      %v8612 = vadd.f32 %v8400, %v8518
      %v8613 = vadd.f32 %v8401, %v8523
      %v8614 = vadd.f32 %v8402, %v8526
      %v8615 = vadd.f32 %v8403, %v8531
      %v8616 = vadd.f32 %v8404, %v8534
      %v8617 = vadd.f32 %v8405, %v8539
      %v8618 = vadd.f32 %v8406, %v8542
      %v8619 = vadd.f32 %v8407, %v8547
      %v8620 = vadd.f32 %v8408, %v8550
      %v8621 = vadd.f32 %v8409, %v8555
      %v8622 = vadd.f32 %v8410, %v8558
      %v8623 = vadd.f32 %v8411, %v8563
      %v8624 = vadd.f32 %v8412, %v8566
      %v8625 = vadd.f32 %v8413, %v8571
      %v8626 = vadd.f32 %v8414, %v8574
      %v8627 = vadd.f32 %v8415, %v8579
      %v8628 = vadd.f32 %v8416, %v8582
      %v8629 = vadd.f32 %v8417, %v8587
      %v8630 = vadd.f32 %v8418, %v8590
      %v8631 = vadd.f32 %v8419, %v8595
      %v8632 = vadd.f32 %v8420, %v8598
      %v8635 = vrot.slane %v6668, 1
      %v8636 = vrot.slane %v6669, 1
      %v8637 = vsel %vm7306, %v8635, %v8636
      %s8638 = scalar_lea.vmem %s4, 16
      %v8639 = vld [vmem:[%s8638] sm:$0x3]
      %v8641 = vsel %vm2874, %v8637, 0
      %v8644 = vsel %vm2938, %v8639, 0
      %8646 = vmatprep.subr.bf16.mxu0 0
      %8647 = vmatpush1.bf16.msra.mxu0 0
      %8648 = vmatprep.subr.bf16.mxu0 0
      %8649 = vmatpush1.bf16.msra.mxu0 0
      %8650 = vmatprep.subr.bf16.mxu0 0
      %8651 = vmatpush1.bf16.msra.mxu0 0
      %8652 = vmatprep.subr.bf16.mxu0 0
      %8653 = vmatpush1.bf16.msra.mxu0 0
      %8654 = vmatprep.subr.bf16.mxu0 0
      %8655 = vmatpush1.bf16.msra.mxu0 0
      %8656 = vmatprep.subr.bf16.mxu0 0
      %8657 = vmatpush1.bf16.msra.mxu0 0
      %8658 = vmatprep.subr.bf16.mxu0 0
      %8659 = vmatpush1.bf16.msra.mxu0 0
      %8660 = vmatprep.subr.bf16.mxu0 0
      %8661 = vmatpush1.bf16.msra.mxu0 %v8644
      %8662 = vmatprep.subr.bf16.mxu0 0
      %8663 = vmatpush2.bf16.msra.mxu0 0
      %8664 = vmatprep.subr.bf16.mxu0 0
      %8665 = vmatpush2.bf16.msra.mxu0 0
      %8666 = vmatprep.subr.bf16.mxu0 0
      %8667 = vmatpush2.bf16.msra.mxu0 0
      %8668 = vmatprep.subr.bf16.mxu0 0
      %8669 = vmatpush2.bf16.msra.mxu0 0
      %8670 = vmatprep.subr.bf16.mxu0 0
      %8671 = vmatpush2.bf16.msra.mxu0 0
      %8672 = vmatprep.subr.bf16.mxu0 0
      %8673 = vmatpush2.bf16.msra.mxu0 0
      %8674 = vmatprep.subr.bf16.mxu0 0
      %8675 = vmatpush2.bf16.msra.mxu0 0
      %8676 = vmatprep.subr.bf16.mxu0 0
      %8677 = vmatpush2.bf16.msra.mxu0 0
      %8678 = vmatprep.mubr.bf16.mxu0 0
      %8679 = vmatmul.mubr.bf16.gmra.mxu0 %v7364
      %v8680 = vpop.f32.mrf.mxu0
      %v8681 = vadd.f32 0.0, %v8680
      %v8682 = vpop.f32.mrf.mxu0
      %v8683 = vpop.f32.mrf.mxu0
      %v8684 = vadd.f32 0.0, %v8683
      %v8685 = vpop.f32.mrf.mxu0
      %8686 = vmatprep.mubr.bf16.mxu0 0
      %8687 = vmatmul.mubr.bf16.gmra.mxu0 %v7367
      %v8688 = vpop.f32.mrf.mxu0
      %v8689 = vadd.f32 0.0, %v8688
      %v8690 = vpop.f32.mrf.mxu0
      %v8691 = vpop.f32.mrf.mxu0
      %v8692 = vadd.f32 0.0, %v8691
      %v8693 = vpop.f32.mrf.mxu0
      %8694 = vmatprep.mubr.bf16.mxu0 0
      %8695 = vmatmul.mubr.bf16.gmra.mxu0 %v7370
      %v8696 = vpop.f32.mrf.mxu0
      %v8697 = vadd.f32 0.0, %v8696
      %v8698 = vpop.f32.mrf.mxu0
      %v8699 = vpop.f32.mrf.mxu0
      %v8700 = vadd.f32 0.0, %v8699
      %v8701 = vpop.f32.mrf.mxu0
      %8702 = vmatprep.mubr.bf16.mxu0 0
      %8703 = vmatmul.mubr.bf16.gmra.mxu0 %v7373
      %v8704 = vpop.f32.mrf.mxu0
      %v8705 = vadd.f32 0.0, %v8704
      %v8706 = vpop.f32.mrf.mxu0
      %v8707 = vpop.f32.mrf.mxu0
      %v8708 = vadd.f32 0.0, %v8707
      %v8709 = vpop.f32.mrf.mxu0
      %8710 = vmatprep.mubr.bf16.mxu0 0
      %8711 = vmatmul.mubr.bf16.gmra.mxu0 %v7376
      %v8712 = vpop.f32.mrf.mxu0
      %v8713 = vadd.f32 0.0, %v8712
      %v8714 = vpop.f32.mrf.mxu0
      %v8715 = vpop.f32.mrf.mxu0
      %v8716 = vadd.f32 0.0, %v8715
      %v8717 = vpop.f32.mrf.mxu0
      %8718 = vmatprep.mubr.bf16.mxu0 0
      %8719 = vmatmul.mubr.bf16.gmra.mxu0 %v7379
      %v8720 = vpop.f32.mrf.mxu0
      %v8721 = vadd.f32 0.0, %v8720
      %v8722 = vpop.f32.mrf.mxu0
      %v8723 = vpop.f32.mrf.mxu0
      %v8724 = vadd.f32 0.0, %v8723
      %v8725 = vpop.f32.mrf.mxu0
      %8726 = vmatprep.mubr.bf16.mxu0 0
      %8727 = vmatmul.mubr.bf16.gmra.mxu0 %v7382
      %v8728 = vpop.f32.mrf.mxu0
      %v8729 = vadd.f32 0.0, %v8728
      %v8730 = vpop.f32.mrf.mxu0
      %v8731 = vpop.f32.mrf.mxu0
      %v8732 = vadd.f32 0.0, %v8731
      %v8733 = vpop.f32.mrf.mxu0
      %8734 = vmatprep.mubr.bf16.mxu0 0
      %8735 = vmatmul.mubr.bf16.gmra.mxu0 %v7385
      %v8736 = vpop.f32.mrf.mxu0
      %v8737 = vadd.f32 0.0, %v8736
      %v8738 = vpop.f32.mrf.mxu0
      %v8739 = vpop.f32.mrf.mxu0
      %v8740 = vadd.f32 0.0, %v8739
      %v8741 = vpop.f32.mrf.mxu0
      %8742 = vmatprep.mubr.bf16.mxu0 0
      %8743 = vmatmul.mubr.bf16.gmra.mxu0 %v7388
      %v8744 = vpop.f32.mrf.mxu0
      %v8745 = vadd.f32 0.0, %v8744
      %v8746 = vpop.f32.mrf.mxu0
      %v8747 = vpop.f32.mrf.mxu0
      %v8748 = vadd.f32 0.0, %v8747
      %v8749 = vpop.f32.mrf.mxu0
      %8750 = vmatprep.mubr.bf16.mxu0 0
      %8751 = vmatmul.mubr.bf16.gmra.mxu0 %v7391
      %v8752 = vpop.f32.mrf.mxu0
      %v8753 = vadd.f32 0.0, %v8752
      %v8754 = vpop.f32.mrf.mxu0
      %v8755 = vpop.f32.mrf.mxu0
      %v8756 = vadd.f32 0.0, %v8755
      %v8757 = vpop.f32.mrf.mxu0
      %8758 = vmatprep.mubr.bf16.mxu0 0
      %8759 = vmatmul.mubr.bf16.gmra.mxu0 %v7394
      %v8760 = vpop.f32.mrf.mxu0
      %v8761 = vadd.f32 0.0, %v8760
      %v8762 = vpop.f32.mrf.mxu0
      %v8763 = vpop.f32.mrf.mxu0
      %v8764 = vadd.f32 0.0, %v8763
      %v8765 = vpop.f32.mrf.mxu0
      %8766 = vmatprep.mubr.bf16.mxu0 0
      %8767 = vmatmul.mubr.bf16.gmra.mxu0 %v7397
      %v8768 = vpop.f32.mrf.mxu0
      %v8769 = vadd.f32 0.0, %v8768
      %v8770 = vpop.f32.mrf.mxu0
      %v8771 = vpop.f32.mrf.mxu0
      %v8772 = vadd.f32 0.0, %v8771
      %v8773 = vpop.f32.mrf.mxu0
      %8774 = vmatprep.mubr.bf16.mxu0 0
      %8775 = vmatmul.mubr.bf16.gmra.mxu0 %v7400
      %v8776 = vpop.f32.mrf.mxu0
      %v8777 = vadd.f32 0.0, %v8776
      %v8778 = vpop.f32.mrf.mxu0
      %v8779 = vpop.f32.mrf.mxu0
      %v8780 = vadd.f32 0.0, %v8779
      %v8781 = vpop.f32.mrf.mxu0
      %8782 = vmatprep.mubr.bf16.mxu0 0
      %8783 = vmatmul.mubr.bf16.gmra.mxu0 %v7403
      %v8784 = vpop.f32.mrf.mxu0
      %v8785 = vadd.f32 0.0, %v8784
      %v8786 = vpop.f32.mrf.mxu0
      %v8787 = vpop.f32.mrf.mxu0
      %v8788 = vadd.f32 0.0, %v8787
      %v8789 = vpop.f32.mrf.mxu0
      %8790 = vmatprep.mubr.bf16.mxu0 0
      %8791 = vmatmul.mubr.bf16.gmra.mxu0 %v8022
      %v8792 = vpop.f32.mrf.mxu0
      %v8793 = vadd.f32 0.0, %v8792
      %v8794 = vpop.f32.mrf.mxu0
      %v8795 = vpop.f32.mrf.mxu0
      %v8796 = vadd.f32 0.0, %v8795
      %v8797 = vpop.f32.mrf.mxu0
      %8798 = vmatprep.mubr.bf16.mxu0 0
      %8799 = vmatmul.mubr.bf16.gmra.mxu0 %v8641
      %v8800 = vpop.f32.mrf.mxu0
      %v8801 = vadd.f32 0.0, %v8800
      %v8802 = vpop.f32.mrf.mxu0
      %v8803 = vpop.f32.mrf.mxu0
      %v8804 = vadd.f32 0.0, %v8803
      %v8805 = vpop.f32.mrf.mxu0
      %8806 = vdwg.mxu0
      %v8807 = vadd.f32 %v8601, %v8681
      %v8808 = vadd.f32 %v8602, %v8684
      %v8809 = vadd.f32 %v8603, %v8689
      %v8810 = vadd.f32 %v8604, %v8692
      %v8811 = vadd.f32 %v8605, %v8697
      %v8812 = vadd.f32 %v8606, %v8700
      %v8813 = vadd.f32 %v8607, %v8705
      %v8814 = vadd.f32 %v8608, %v8708
      %v8815 = vadd.f32 %v8609, %v8713
      %v8816 = vadd.f32 %v8610, %v8716
      %v8817 = vadd.f32 %v8611, %v8721
      %v8818 = vadd.f32 %v8612, %v8724
      %v8819 = vadd.f32 %v8613, %v8729
      %v8820 = vadd.f32 %v8614, %v8732
      %v8821 = vadd.f32 %v8615, %v8737
      %v8822 = vadd.f32 %v8616, %v8740
      %v8823 = vadd.f32 %v8617, %v8745
      %v8824 = vadd.f32 %v8618, %v8748
      %v8825 = vadd.f32 %v8619, %v8753
      %v8826 = vadd.f32 %v8620, %v8756
      %v8827 = vadd.f32 %v8621, %v8761
      %v8828 = vadd.f32 %v8622, %v8764
      %v8829 = vadd.f32 %v8623, %v8769
      %v8830 = vadd.f32 %v8624, %v8772
      %v8831 = vadd.f32 %v8625, %v8777
      %v8832 = vadd.f32 %v8626, %v8780
      %v8833 = vadd.f32 %v8627, %v8785
      %v8834 = vadd.f32 %v8628, %v8788
      %v8835 = vadd.f32 %v8629, %v8793
      %v8836 = vadd.f32 %v8630, %v8796
      %v8837 = vadd.f32 %v8631, %v8801
      %v8838 = vadd.f32 %v8632, %v8804
      %v8839 = vld [vmem:[%s5] sm:$0x1]
      %v8841 = vlaneseq
      %v8842 = vshrl.u32 %v8841, 7
      %v8843 = vsub.s32 0, %v8842
      %v8844 = vrot.slane %v8839, %v8843
      %v8846 = vmul.f32 %v8807, %v8844
      %v8847 = vmul.f32 %v8808, %v8844
      %v8848 = vmul.f32 %v8809, %v8844
      %v8849 = vmul.f32 %v8810, %v8844
      %v8850 = vmul.f32 %v8811, %v8844
      %v8851 = vmul.f32 %v8812, %v8844
      %v8852 = vmul.f32 %v8813, %v8844
      %v8853 = vmul.f32 %v8814, %v8844
      %v8854 = vmul.f32 %v8815, %v8844
      %v8855 = vmul.f32 %v8816, %v8844
      %v8856 = vmul.f32 %v8817, %v8844
      %v8857 = vmul.f32 %v8818, %v8844
      %v8858 = vmul.f32 %v8819, %v8844
      %v8859 = vmul.f32 %v8820, %v8844
      %v8860 = vmul.f32 %v8821, %v8844
      %v8861 = vmul.f32 %v8822, %v8844
      %v8862 = vmul.f32 %v8823, %v8844
      %v8863 = vmul.f32 %v8824, %v8844
      %v8864 = vmul.f32 %v8825, %v8844
      %v8865 = vmul.f32 %v8826, %v8844
      %v8866 = vmul.f32 %v8827, %v8844
      %v8867 = vmul.f32 %v8828, %v8844
      %v8868 = vmul.f32 %v8829, %v8844
      %v8869 = vmul.f32 %v8830, %v8844
      %v8870 = vmul.f32 %v8831, %v8844
      %v8871 = vmul.f32 %v8832, %v8844
      %v8872 = vmul.f32 %v8833, %v8844
      %v8873 = vmul.f32 %v8834, %v8844
      %v8874 = vmul.f32 %v8835, %v8844
      %v8875 = vmul.f32 %v8836, %v8844
      %v8876 = vmul.f32 %v8837, %v8844
      %v8877 = vmul.f32 %v8838, %v8844
      %v8878 = vld [vmem:[%s6] sm:$0x1]
      %v8880 = vlaneseq
      %v8881 = vshrl.u32 %v8880, 7
      %v8882 = vsub.s32 0, %v8881
      %v8883 = vrot.slane %v8878, %v8882
      %v8885 = vadd.f32 %v8846, %v8883
      %v8886 = vadd.f32 %v8847, %v8883
      %v8887 = vadd.f32 %v8848, %v8883
      %v8888 = vadd.f32 %v8849, %v8883
      %v8889 = vadd.f32 %v8850, %v8883
      %v8890 = vadd.f32 %v8851, %v8883
      %v8891 = vadd.f32 %v8852, %v8883
      %v8892 = vadd.f32 %v8853, %v8883
      %v8893 = vadd.f32 %v8854, %v8883
      %v8894 = vadd.f32 %v8855, %v8883
      %v8895 = vadd.f32 %v8856, %v8883
      %v8896 = vadd.f32 %v8857, %v8883
      %v8897 = vadd.f32 %v8858, %v8883
      %v8898 = vadd.f32 %v8859, %v8883
      %v8899 = vadd.f32 %v8860, %v8883
      %v8900 = vadd.f32 %v8861, %v8883
      %v8901 = vadd.f32 %v8862, %v8883
      %v8902 = vadd.f32 %v8863, %v8883
      %v8903 = vadd.f32 %v8864, %v8883
      %v8904 = vadd.f32 %v8865, %v8883
      %v8905 = vadd.f32 %v8866, %v8883
      %v8906 = vadd.f32 %v8867, %v8883
      %v8907 = vadd.f32 %v8868, %v8883
      %v8908 = vadd.f32 %v8869, %v8883
      %v8909 = vadd.f32 %v8870, %v8883
      %v8910 = vadd.f32 %v8871, %v8883
      %v8911 = vadd.f32 %v8872, %v8883
      %v8912 = vadd.f32 %v8873, %v8883
      %v8913 = vadd.f32 %v8874, %v8883
      %v8914 = vadd.f32 %v8875, %v8883
      %v8915 = vadd.f32 %v8876, %v8883
      %v8916 = vadd.f32 %v8877, %v8883
      %v8917 = vmax.f32 %v8885, 0.0
      %v8918 = vmax.f32 %v8886, 0.0
      %v8919 = vmax.f32 %v8887, 0.0
      %v8920 = vmax.f32 %v8888, 0.0
      %v8921 = vmax.f32 %v8889, 0.0
      %v8922 = vmax.f32 %v8890, 0.0
      %v8923 = vmax.f32 %v8891, 0.0
      %v8924 = vmax.f32 %v8892, 0.0
      %v8925 = vmax.f32 %v8893, 0.0
      %v8926 = vmax.f32 %v8894, 0.0
      %v8927 = vmax.f32 %v8895, 0.0
      %v8928 = vmax.f32 %v8896, 0.0
      %v8929 = vmax.f32 %v8897, 0.0
      %v8930 = vmax.f32 %v8898, 0.0
      %v8931 = vmax.f32 %v8899, 0.0
      %v8932 = vmax.f32 %v8900, 0.0
      %v8933 = vmax.f32 %v8901, 0.0
      %v8934 = vmax.f32 %v8902, 0.0
      %v8935 = vmax.f32 %v8903, 0.0
      %v8936 = vmax.f32 %v8904, 0.0
      %v8937 = vmax.f32 %v8905, 0.0
      %v8938 = vmax.f32 %v8906, 0.0
      %v8939 = vmax.f32 %v8907, 0.0
      %v8940 = vmax.f32 %v8908, 0.0
      %v8941 = vmax.f32 %v8909, 0.0
      %v8942 = vmax.f32 %v8910, 0.0
      %v8943 = vmax.f32 %v8911, 0.0
      %v8944 = vmax.f32 %v8912, 0.0
      %v8945 = vmax.f32 %v8913, 0.0
      %v8946 = vmax.f32 %v8914, 0.0
      %v8947 = vmax.f32 %v8915, 0.0
      %v8948 = vmax.f32 %v8916, 0.0
      %v8949 = vpack.c.bf16 %v8918, %v8917
      %v8950 = vpack.c.bf16 %v8920, %v8919
      %v8951 = vpack.c.bf16 %v8922, %v8921
      %v8952 = vpack.c.bf16 %v8924, %v8923
      %v8953 = vpack.c.bf16 %v8926, %v8925
      %v8954 = vpack.c.bf16 %v8928, %v8927
      %v8955 = vpack.c.bf16 %v8930, %v8929
      %v8956 = vpack.c.bf16 %v8932, %v8931
      %v8957 = vpack.c.bf16 %v8934, %v8933
      %v8958 = vpack.c.bf16 %v8936, %v8935
      %v8959 = vpack.c.bf16 %v8938, %v8937
      %v8960 = vpack.c.bf16 %v8940, %v8939
      %v8961 = vpack.c.bf16 %v8942, %v8941
      %v8962 = vpack.c.bf16 %v8944, %v8943
      %v8963 = vpack.c.bf16 %v8946, %v8945
      %v8964 = vpack.c.bf16 %v8948, %v8947
      %v8965 = vld [vmem:[%s7] sm:$0x3]
      %v8967 = vsel %vm2874, %v8949, 0
      %v8970 = vsel %vm2874, %v8950, 0
      %v8973 = vsel %vm2874, %v8951, 0
      %v8976 = vsel %vm2874, %v8952, 0
      %v8979 = vsel %vm2874, %v8953, 0
      %v8982 = vsel %vm2874, %v8954, 0
      %v8985 = vsel %vm2874, %v8955, 0
      %v8988 = vsel %vm2874, %v8956, 0
      %v8991 = vsel %vm2874, %v8957, 0
      %v8994 = vsel %vm2874, %v8958, 0
      %v8997 = vsel %vm2874, %v8959, 0
      %v9000 = vsel %vm2874, %v8960, 0
      %v9003 = vsel %vm2874, %v8961, 0
      %v9006 = vsel %vm2874, %v8962, 0
      %v9009 = vsel %vm2874, %v8963, 0
      %v9012 = vsel %vm2874, %v8964, 0
      %v9015 = vsel %vm2938, %v8965, 0
      %9017 = vmatprep.subr.bf16.mxu0 0
      %9018 = vmatpush1.bf16.msra.mxu0 0
      %9019 = vmatprep.subr.bf16.mxu0 0
      %9020 = vmatpush1.bf16.msra.mxu0 0
      %9021 = vmatprep.subr.bf16.mxu0 0
      %9022 = vmatpush1.bf16.msra.mxu0 0
      %9023 = vmatprep.subr.bf16.mxu0 0
      %9024 = vmatpush1.bf16.msra.mxu0 0
      %9025 = vmatprep.subr.bf16.mxu0 0
      %9026 = vmatpush1.bf16.msra.mxu0 0
      %9027 = vmatprep.subr.bf16.mxu0 0
      %9028 = vmatpush1.bf16.msra.mxu0 0
      %9029 = vmatprep.subr.bf16.mxu0 0
      %9030 = vmatpush1.bf16.msra.mxu0 0
      %9031 = vmatprep.subr.bf16.mxu0 0
      %9032 = vmatpush1.bf16.msra.mxu0 %v9015
      %9033 = vmatprep.subr.bf16.mxu0 0
      %9034 = vmatpush2.bf16.msra.mxu0 0
      %9035 = vmatprep.subr.bf16.mxu0 0
      %9036 = vmatpush2.bf16.msra.mxu0 0
      %9037 = vmatprep.subr.bf16.mxu0 0
      %9038 = vmatpush2.bf16.msra.mxu0 0
      %9039 = vmatprep.subr.bf16.mxu0 0
      %9040 = vmatpush2.bf16.msra.mxu0 0
      %9041 = vmatprep.subr.bf16.mxu0 0
      %9042 = vmatpush2.bf16.msra.mxu0 0
      %9043 = vmatprep.subr.bf16.mxu0 0
      %9044 = vmatpush2.bf16.msra.mxu0 0
      %9045 = vmatprep.subr.bf16.mxu0 0
      %9046 = vmatpush2.bf16.msra.mxu0 0
      %9047 = vmatprep.subr.bf16.mxu0 0
      %9048 = vmatpush2.bf16.msra.mxu0 0
      %9049 = vmatprep.mubr.bf16.mxu0 0
      %9050 = vmatmul.mubr.bf16.gmra.mxu0 %v8967
      %v9051 = vpop.f32.mrf.mxu0
      %v9052 = vadd.f32 0.0, %v9051
      %v9053 = vpop.f32.mrf.mxu0
      %v9054 = vpop.f32.mrf.mxu0
      %v9055 = vadd.f32 0.0, %v9054
      %v9056 = vpop.f32.mrf.mxu0
      %9057 = vmatprep.mubr.bf16.mxu0 0
      %9058 = vmatmul.mubr.bf16.gmra.mxu0 %v8970
      %v9059 = vpop.f32.mrf.mxu0
      %v9060 = vadd.f32 0.0, %v9059
      %v9061 = vpop.f32.mrf.mxu0
      %v9062 = vpop.f32.mrf.mxu0
      %v9063 = vadd.f32 0.0, %v9062
      %v9064 = vpop.f32.mrf.mxu0
      %9065 = vmatprep.mubr.bf16.mxu0 0
      %9066 = vmatmul.mubr.bf16.gmra.mxu0 %v8973
      %v9067 = vpop.f32.mrf.mxu0
      %v9068 = vadd.f32 0.0, %v9067
      %v9069 = vpop.f32.mrf.mxu0
      %v9070 = vpop.f32.mrf.mxu0
      %v9071 = vadd.f32 0.0, %v9070
      %v9072 = vpop.f32.mrf.mxu0
      %9073 = vmatprep.mubr.bf16.mxu0 0
      %9074 = vmatmul.mubr.bf16.gmra.mxu0 %v8976
      %v9075 = vpop.f32.mrf.mxu0
      %v9076 = vadd.f32 0.0, %v9075
      %v9077 = vpop.f32.mrf.mxu0
      %v9078 = vpop.f32.mrf.mxu0
      %v9079 = vadd.f32 0.0, %v9078
      %v9080 = vpop.f32.mrf.mxu0
      %9081 = vmatprep.mubr.bf16.mxu0 0
      %9082 = vmatmul.mubr.bf16.gmra.mxu0 %v8979
      %v9083 = vpop.f32.mrf.mxu0
      %v9084 = vadd.f32 0.0, %v9083
      %v9085 = vpop.f32.mrf.mxu0
      %v9086 = vpop.f32.mrf.mxu0
      %v9087 = vadd.f32 0.0, %v9086
      %v9088 = vpop.f32.mrf.mxu0
      %9089 = vmatprep.mubr.bf16.mxu0 0
      %9090 = vmatmul.mubr.bf16.gmra.mxu0 %v8982
      %v9091 = vpop.f32.mrf.mxu0
      %v9092 = vadd.f32 0.0, %v9091
      %v9093 = vpop.f32.mrf.mxu0
      %v9094 = vpop.f32.mrf.mxu0
      %v9095 = vadd.f32 0.0, %v9094
      %v9096 = vpop.f32.mrf.mxu0
      %9097 = vmatprep.mubr.bf16.mxu0 0
      %9098 = vmatmul.mubr.bf16.gmra.mxu0 %v8985
      %v9099 = vpop.f32.mrf.mxu0
      %v9100 = vadd.f32 0.0, %v9099
      %v9101 = vpop.f32.mrf.mxu0
      %v9102 = vpop.f32.mrf.mxu0
      %v9103 = vadd.f32 0.0, %v9102
      %v9104 = vpop.f32.mrf.mxu0
      %9105 = vmatprep.mubr.bf16.mxu0 0
      %9106 = vmatmul.mubr.bf16.gmra.mxu0 %v8988
      %v9107 = vpop.f32.mrf.mxu0
      %v9108 = vadd.f32 0.0, %v9107
      %v9109 = vpop.f32.mrf.mxu0
      %v9110 = vpop.f32.mrf.mxu0
      %v9111 = vadd.f32 0.0, %v9110
      %v9112 = vpop.f32.mrf.mxu0
      %9113 = vmatprep.mubr.bf16.mxu0 0
      %9114 = vmatmul.mubr.bf16.gmra.mxu0 %v8991
      %v9115 = vpop.f32.mrf.mxu0
      %v9116 = vadd.f32 0.0, %v9115
      %v9117 = vpop.f32.mrf.mxu0
      %v9118 = vpop.f32.mrf.mxu0
      %v9119 = vadd.f32 0.0, %v9118
      %v9120 = vpop.f32.mrf.mxu0
      %9121 = vmatprep.mubr.bf16.mxu0 0
      %9122 = vmatmul.mubr.bf16.gmra.mxu0 %v8994
      %v9123 = vpop.f32.mrf.mxu0
      %v9124 = vadd.f32 0.0, %v9123
      %v9125 = vpop.f32.mrf.mxu0
      %v9126 = vpop.f32.mrf.mxu0
      %v9127 = vadd.f32 0.0, %v9126
      %v9128 = vpop.f32.mrf.mxu0
      %9129 = vmatprep.mubr.bf16.mxu0 0
      %9130 = vmatmul.mubr.bf16.gmra.mxu0 %v8997
      %v9131 = vpop.f32.mrf.mxu0
      %v9132 = vadd.f32 0.0, %v9131
      %v9133 = vpop.f32.mrf.mxu0
      %v9134 = vpop.f32.mrf.mxu0
      %v9135 = vadd.f32 0.0, %v9134
      %v9136 = vpop.f32.mrf.mxu0
      %9137 = vmatprep.mubr.bf16.mxu0 0
      %9138 = vmatmul.mubr.bf16.gmra.mxu0 %v9000
      %v9139 = vpop.f32.mrf.mxu0
      %v9140 = vadd.f32 0.0, %v9139
      %v9141 = vpop.f32.mrf.mxu0
      %v9142 = vpop.f32.mrf.mxu0
      %v9143 = vadd.f32 0.0, %v9142
      %v9144 = vpop.f32.mrf.mxu0
      %9145 = vmatprep.mubr.bf16.mxu0 0
      %9146 = vmatmul.mubr.bf16.gmra.mxu0 %v9003
      %v9147 = vpop.f32.mrf.mxu0
      %v9148 = vadd.f32 0.0, %v9147
      %v9149 = vpop.f32.mrf.mxu0
      %v9150 = vpop.f32.mrf.mxu0
      %v9151 = vadd.f32 0.0, %v9150
      %v9152 = vpop.f32.mrf.mxu0
      %9153 = vmatprep.mubr.bf16.mxu0 0
      %9154 = vmatmul.mubr.bf16.gmra.mxu0 %v9006
      %v9155 = vpop.f32.mrf.mxu0
      %v9156 = vadd.f32 0.0, %v9155
      %v9157 = vpop.f32.mrf.mxu0
      %v9158 = vpop.f32.mrf.mxu0
      %v9159 = vadd.f32 0.0, %v9158
      %v9160 = vpop.f32.mrf.mxu0
      %9161 = vmatprep.mubr.bf16.mxu0 0
      %9162 = vmatmul.mubr.bf16.gmra.mxu0 %v9009
      %v9163 = vpop.f32.mrf.mxu0
      %v9164 = vadd.f32 0.0, %v9163
      %v9165 = vpop.f32.mrf.mxu0
      %v9166 = vpop.f32.mrf.mxu0
      %v9167 = vadd.f32 0.0, %v9166
      %v9168 = vpop.f32.mrf.mxu0
      %9169 = vmatprep.mubr.bf16.mxu0 0
      %9170 = vmatmul.mubr.bf16.gmra.mxu0 %v9012
      %v9171 = vpop.f32.mrf.mxu0
      %v9172 = vadd.f32 0.0, %v9171
      %v9173 = vpop.f32.mrf.mxu0
      %v9174 = vpop.f32.mrf.mxu0
      %v9175 = vadd.f32 0.0, %v9174
      %v9176 = vpop.f32.mrf.mxu0
      %9177 = vdwg.mxu0
      %v9178 = vld [vmem:[%s8] sm:$0x1]
      %v9180 = vlaneseq
      %v9181 = vshrl.u32 %v9180, 7
      %v9182 = vsub.s32 0, %v9181
      %v9183 = vrot.slane %v9178, %v9182
      %v9185 = vmul.f32 %v9052, %v9183
      %v9186 = vmul.f32 %v9055, %v9183
      %v9187 = vmul.f32 %v9060, %v9183
      %v9188 = vmul.f32 %v9063, %v9183
      %v9189 = vmul.f32 %v9068, %v9183
      %v9190 = vmul.f32 %v9071, %v9183
      %v9191 = vmul.f32 %v9076, %v9183
      %v9192 = vmul.f32 %v9079, %v9183
      %v9193 = vmul.f32 %v9084, %v9183
      %v9194 = vmul.f32 %v9087, %v9183
      %v9195 = vmul.f32 %v9092, %v9183
      %v9196 = vmul.f32 %v9095, %v9183
      %v9197 = vmul.f32 %v9100, %v9183
      %v9198 = vmul.f32 %v9103, %v9183
      %v9199 = vmul.f32 %v9108, %v9183
      %v9200 = vmul.f32 %v9111, %v9183
      %v9201 = vmul.f32 %v9116, %v9183
      %v9202 = vmul.f32 %v9119, %v9183
      %v9203 = vmul.f32 %v9124, %v9183
      %v9204 = vmul.f32 %v9127, %v9183
      %v9205 = vmul.f32 %v9132, %v9183
      %v9206 = vmul.f32 %v9135, %v9183
      %v9207 = vmul.f32 %v9140, %v9183
      %v9208 = vmul.f32 %v9143, %v9183
      %v9209 = vmul.f32 %v9148, %v9183
      %v9210 = vmul.f32 %v9151, %v9183
      %v9211 = vmul.f32 %v9156, %v9183
      %v9212 = vmul.f32 %v9159, %v9183
      %v9213 = vmul.f32 %v9164, %v9183
      %v9214 = vmul.f32 %v9167, %v9183
      %v9215 = vmul.f32 %v9172, %v9183
      %v9216 = vmul.f32 %v9175, %v9183
      %v9217 = vld [vmem:[%s9] sm:$0x1]
      %v9219 = vlaneseq
      %v9220 = vshrl.u32 %v9219, 7
      %v9221 = vsub.s32 0, %v9220
      %v9222 = vrot.slane %v9217, %v9221
      %v9224 = vadd.f32 %v9185, %v9222
      %v9225 = vadd.f32 %v9186, %v9222
      %v9226 = vadd.f32 %v9187, %v9222
      %v9227 = vadd.f32 %v9188, %v9222
      %v9228 = vadd.f32 %v9189, %v9222
      %v9229 = vadd.f32 %v9190, %v9222
      %v9230 = vadd.f32 %v9191, %v9222
      %v9231 = vadd.f32 %v9192, %v9222
      %v9232 = vadd.f32 %v9193, %v9222
      %v9233 = vadd.f32 %v9194, %v9222
      %v9234 = vadd.f32 %v9195, %v9222
      %v9235 = vadd.f32 %v9196, %v9222
      %v9236 = vadd.f32 %v9197, %v9222
      %v9237 = vadd.f32 %v9198, %v9222
      %v9238 = vadd.f32 %v9199, %v9222
      %v9239 = vadd.f32 %v9200, %v9222
      %v9240 = vadd.f32 %v9201, %v9222
      %v9241 = vadd.f32 %v9202, %v9222
      %v9242 = vadd.f32 %v9203, %v9222
      %v9243 = vadd.f32 %v9204, %v9222
      %v9244 = vadd.f32 %v9205, %v9222
      %v9245 = vadd.f32 %v9206, %v9222
      %v9246 = vadd.f32 %v9207, %v9222
      %v9247 = vadd.f32 %v9208, %v9222
      %v9248 = vadd.f32 %v9209, %v9222
      %v9249 = vadd.f32 %v9210, %v9222
      %v9250 = vadd.f32 %v9211, %v9222
      %v9251 = vadd.f32 %v9212, %v9222
      %v9252 = vadd.f32 %v9213, %v9222
      %v9253 = vadd.f32 %v9214, %v9222
      %v9254 = vadd.f32 %v9215, %v9222
      %v9255 = vadd.f32 %v9216, %v9222
      %s9256 = sadd.s32 %s467, 1
      %s9257 = smul.u32 %s9256, 3
      %s9258 = smul.addr %s9257, 4
      %s9259 = scalar_lea.vmem %s454, %s9258
      %v9260 = vld [vmem:[%s9259] sm:$0xf]
      %v9261 = vld [vmem:[%s9259 + $0x4] sm:$0xf]
      %v9262 = vld [vmem:[%s9259 + $0x8] sm:$0x1]
      %v9263 = vld [vmem:[%s9259 + $0xc] sm:$0xf]
      %v9264 = vld [vmem:[%s9259 + $0x10] sm:$0xf]
      %v9265 = vld [vmem:[%s9259 + $0x14] sm:$0x1]
      %v9266 = vld [vmem:[%s9259 + $0x18] sm:$0xf]
      %v9267 = vld [vmem:[%s9259 + $0x1c] sm:$0xf]
      %v9268 = vld [vmem:[%s9259 + $0x20] sm:$0x1]
      %v9269 = vld [vmem:[%s9259 + $0x24] sm:$0xf]
      %v9270 = vld [vmem:[%s9259 + $0x28] sm:$0xf]
      %v9271 = vld [vmem:[%s9259 + $0x2c] sm:$0x1]
      %v9272 = vld [vmem:[%s9259 + $0x30] sm:$0xf]
      %v9273 = vld [vmem:[%s9259 + $0x34] sm:$0xf]
      %v9274 = vld [vmem:[%s9259 + $0x38] sm:$0x1]
      %v9275 = vld [vmem:[%s9259 + $0x3c] sm:$0xf]
      %v9276 = vld [vmem:[%s9259 + $0x40] sm:$0xf]
      %v9277 = vld [vmem:[%s9259 + $0x44] sm:$0x1]
      %v9278 = vld [vmem:[%s9259 + $0x48] sm:$0xf]
      %v9279 = vld [vmem:[%s9259 + $0x4c] sm:$0xf]
      %v9280 = vld [vmem:[%s9259 + $0x50] sm:$0x1]
      %v9281 = vld [vmem:[%s9259 + $0x54] sm:$0xf]
      %v9282 = vld [vmem:[%s9259 + $0x58] sm:$0xf]
      %v9283 = vld [vmem:[%s9259 + $0x5c] sm:$0x1]
      %v9284 = vld [vmem:[%s9259 + $0x60] sm:$0xf]
      %v9285 = vld [vmem:[%s9259 + $0x64] sm:$0xf]
      %v9286 = vld [vmem:[%s9259 + $0x68] sm:$0x1]
      %v9287 = vld [vmem:[%s9259 + $0x6c] sm:$0xf]
      %v9288 = vld [vmem:[%s9259 + $0x70] sm:$0xf]
      %v9289 = vld [vmem:[%s9259 + $0x74] sm:$0x1]
      %v9290 = vld [vmem:[%s9259 + $0x78] sm:$0xf]
      %v9291 = vld [vmem:[%s9259 + $0x7c] sm:$0xf]
      %v9292 = vld [vmem:[%s9259 + $0x80] sm:$0x1]
      %v9293 = vld [vmem:[%s9259 + $0x84] sm:$0xf]
      %v9294 = vld [vmem:[%s9259 + $0x88] sm:$0xf]
      %v9295 = vld [vmem:[%s9259 + $0x8c] sm:$0x1]
      %v9296 = vld [vmem:[%s9259 + $0x90] sm:$0xf]
      %v9297 = vld [vmem:[%s9259 + $0x94] sm:$0xf]
      %v9298 = vld [vmem:[%s9259 + $0x98] sm:$0x1]
      %v9299 = vld [vmem:[%s9259 + $0x9c] sm:$0xf]
      %v9300 = vld [vmem:[%s9259 + $0xa0] sm:$0xf]
      %v9301 = vld [vmem:[%s9259 + $0xa4] sm:$0x1]
      %v9302 = vld [vmem:[%s9259 + $0xa8] sm:$0xf]
      %v9303 = vld [vmem:[%s9259 + $0xac] sm:$0xf]
      %v9304 = vld [vmem:[%s9259 + $0xb0] sm:$0x1]
      %v9305 = vld [vmem:[%s9259 + $0xb4] sm:$0xf]
      %v9306 = vld [vmem:[%s9259 + $0xb8] sm:$0xf]
      %v9307 = vld [vmem:[%s9259 + $0xbc] sm:$0x1]
      %vm9308 = vsmask.f32 3328
      %vm9309 = vsmask.f32 7440
      %vm9310 = vmor %vm9308, %vm9309
      %v9312 = vshrl.u32 %v9260, 16
      %v9314 = vrot.slane %v9312, 4
      %v9315 = vshll.u32 %v9260, 16
      %v9317 = vrot.slane %v9315, 5
      %v9318 = vor.u32 %v9314, %v9317
      %v9319 = vrot.slane %v9318, 4
      %v9321 = vshll.u32 %v9261, 16
      %v9323 = vrot.slane %v9321, 5
      %v9324 = vsel %vm9310, %v9319, %v9323
      %v9325 = vshrl.u32 %v9261, 16
      %v9327 = vrot.slane %v9325, 4
      %v9328 = vor.u32 %v9327, %v9323
      %v9329 = vrot.slane %v9328, 4
      %v9331 = vshll.u32 %v9262, 16
      %v9333 = vrot.slane %v9331, 5
      %v9334 = vsel %vm9310, %v9329, %v9333
      %v9336 = vshrl.u32 %v9263, 16
      %v9338 = vrot.slane %v9336, 4
      %v9339 = vshll.u32 %v9263, 16
      %v9341 = vrot.slane %v9339, 5
      %v9342 = vor.u32 %v9338, %v9341
      %v9343 = vrot.slane %v9342, 4
      %v9345 = vshll.u32 %v9264, 16
      %v9347 = vrot.slane %v9345, 5
      %v9348 = vsel %vm9310, %v9343, %v9347
      %v9349 = vshrl.u32 %v9264, 16
      %v9351 = vrot.slane %v9349, 4
      %v9352 = vor.u32 %v9351, %v9347
      %v9353 = vrot.slane %v9352, 4
      %v9355 = vshll.u32 %v9265, 16
      %v9357 = vrot.slane %v9355, 5
      %v9358 = vsel %vm9310, %v9353, %v9357
      %v9360 = vshrl.u32 %v9266, 16
      %v9362 = vrot.slane %v9360, 4
      %v9363 = vshll.u32 %v9266, 16
      %v9365 = vrot.slane %v9363, 5
      %v9366 = vor.u32 %v9362, %v9365
      %v9367 = vrot.slane %v9366, 4
      %v9369 = vshll.u32 %v9267, 16
      %v9371 = vrot.slane %v9369, 5
      %v9372 = vsel %vm9310, %v9367, %v9371
      %v9373 = vshrl.u32 %v9267, 16
      %v9375 = vrot.slane %v9373, 4
      %v9376 = vor.u32 %v9375, %v9371
      %v9377 = vrot.slane %v9376, 4
      %v9379 = vshll.u32 %v9268, 16
      %v9381 = vrot.slane %v9379, 5
      %v9382 = vsel %vm9310, %v9377, %v9381
      %v9384 = vshrl.u32 %v9269, 16
      %v9386 = vrot.slane %v9384, 4
      %v9387 = vshll.u32 %v9269, 16
      %v9389 = vrot.slane %v9387, 5
      %v9390 = vor.u32 %v9386, %v9389
      %v9391 = vrot.slane %v9390, 4
      %v9393 = vshll.u32 %v9270, 16
      %v9395 = vrot.slane %v9393, 5
      %v9396 = vsel %vm9310, %v9391, %v9395
      %v9397 = vshrl.u32 %v9270, 16
      %v9399 = vrot.slane %v9397, 4
      %v9400 = vor.u32 %v9399, %v9395
      %v9401 = vrot.slane %v9400, 4
      %v9403 = vshll.u32 %v9271, 16
      %v9405 = vrot.slane %v9403, 5
      %v9406 = vsel %vm9310, %v9401, %v9405
      %v9408 = vshrl.u32 %v9272, 16
      %v9410 = vrot.slane %v9408, 4
      %v9411 = vshll.u32 %v9272, 16
      %v9413 = vrot.slane %v9411, 5
      %v9414 = vor.u32 %v9410, %v9413
      %v9415 = vrot.slane %v9414, 4
      %v9417 = vshll.u32 %v9273, 16
      %v9419 = vrot.slane %v9417, 5
      %v9420 = vsel %vm9310, %v9415, %v9419
      %v9421 = vshrl.u32 %v9273, 16
      %v9423 = vrot.slane %v9421, 4
      %v9424 = vor.u32 %v9423, %v9419
      %v9425 = vrot.slane %v9424, 4
      %v9427 = vshll.u32 %v9274, 16
      %v9429 = vrot.slane %v9427, 5
      %v9430 = vsel %vm9310, %v9425, %v9429
      %v9432 = vshrl.u32 %v9275, 16
      %v9434 = vrot.slane %v9432, 4
      %v9435 = vshll.u32 %v9275, 16
      %v9437 = vrot.slane %v9435, 5
      %v9438 = vor.u32 %v9434, %v9437
      %v9439 = vrot.slane %v9438, 4
      %v9441 = vshll.u32 %v9276, 16
      %v9443 = vrot.slane %v9441, 5
      %v9444 = vsel %vm9310, %v9439, %v9443
      %v9445 = vshrl.u32 %v9276, 16
      %v9447 = vrot.slane %v9445, 4
      %v9448 = vor.u32 %v9447, %v9443
      %v9449 = vrot.slane %v9448, 4
      %v9451 = vshll.u32 %v9277, 16
      %v9453 = vrot.slane %v9451, 5
      %v9454 = vsel %vm9310, %v9449, %v9453
      %v9456 = vshrl.u32 %v9278, 16
      %v9458 = vrot.slane %v9456, 4
      %v9459 = vshll.u32 %v9278, 16
      %v9461 = vrot.slane %v9459, 5
      %v9462 = vor.u32 %v9458, %v9461
      %v9463 = vrot.slane %v9462, 4
      %v9465 = vshll.u32 %v9279, 16
      %v9467 = vrot.slane %v9465, 5
      %v9468 = vsel %vm9310, %v9463, %v9467
      %v9469 = vshrl.u32 %v9279, 16
      %v9471 = vrot.slane %v9469, 4
      %v9472 = vor.u32 %v9471, %v9467
      %v9473 = vrot.slane %v9472, 4
      %v9475 = vshll.u32 %v9280, 16
      %v9477 = vrot.slane %v9475, 5
      %v9478 = vsel %vm9310, %v9473, %v9477
      %v9480 = vshrl.u32 %v9281, 16
      %v9482 = vrot.slane %v9480, 4
      %v9483 = vshll.u32 %v9281, 16
      %v9485 = vrot.slane %v9483, 5
      %v9486 = vor.u32 %v9482, %v9485
      %v9487 = vrot.slane %v9486, 4
      %v9489 = vshll.u32 %v9282, 16
      %v9491 = vrot.slane %v9489, 5
      %v9492 = vsel %vm9310, %v9487, %v9491
      %v9493 = vshrl.u32 %v9282, 16
      %v9495 = vrot.slane %v9493, 4
      %v9496 = vor.u32 %v9495, %v9491
      %v9497 = vrot.slane %v9496, 4
      %v9499 = vshll.u32 %v9283, 16
      %v9501 = vrot.slane %v9499, 5
      %v9502 = vsel %vm9310, %v9497, %v9501
      %v9504 = vshrl.u32 %v9284, 16
      %v9506 = vrot.slane %v9504, 4
      %v9507 = vshll.u32 %v9284, 16
      %v9509 = vrot.slane %v9507, 5
      %v9510 = vor.u32 %v9506, %v9509
      %v9511 = vrot.slane %v9510, 4
      %v9513 = vshll.u32 %v9285, 16
      %v9515 = vrot.slane %v9513, 5
      %v9516 = vsel %vm9310, %v9511, %v9515
      %v9517 = vshrl.u32 %v9285, 16
      %v9519 = vrot.slane %v9517, 4
      %v9520 = vor.u32 %v9519, %v9515
      %v9521 = vrot.slane %v9520, 4
      %v9523 = vshll.u32 %v9286, 16
      %v9525 = vrot.slane %v9523, 5
      %v9526 = vsel %vm9310, %v9521, %v9525
      %v9528 = vshrl.u32 %v9287, 16
      %v9530 = vrot.slane %v9528, 4
      %v9531 = vshll.u32 %v9287, 16
      %v9533 = vrot.slane %v9531, 5
      %v9534 = vor.u32 %v9530, %v9533
      %v9535 = vrot.slane %v9534, 4
      %v9537 = vshll.u32 %v9288, 16
      %v9539 = vrot.slane %v9537, 5
      %v9540 = vsel %vm9310, %v9535, %v9539
      %v9541 = vshrl.u32 %v9288, 16
      %v9543 = vrot.slane %v9541, 4
      %v9544 = vor.u32 %v9543, %v9539
      %v9545 = vrot.slane %v9544, 4
      %v9547 = vshll.u32 %v9289, 16
      %v9549 = vrot.slane %v9547, 5
      %v9550 = vsel %vm9310, %v9545, %v9549
      %v9552 = vshrl.u32 %v9290, 16
      %v9554 = vrot.slane %v9552, 4
      %v9555 = vshll.u32 %v9290, 16
      %v9557 = vrot.slane %v9555, 5
      %v9558 = vor.u32 %v9554, %v9557
      %v9559 = vrot.slane %v9558, 4
      %v9561 = vshll.u32 %v9291, 16
      %v9563 = vrot.slane %v9561, 5
      %v9564 = vsel %vm9310, %v9559, %v9563
      %v9565 = vshrl.u32 %v9291, 16
      %v9567 = vrot.slane %v9565, 4
      %v9568 = vor.u32 %v9567, %v9563
      %v9569 = vrot.slane %v9568, 4
      %v9571 = vshll.u32 %v9292, 16
      %v9573 = vrot.slane %v9571, 5
      %v9574 = vsel %vm9310, %v9569, %v9573
      %v9576 = vshrl.u32 %v9293, 16
      %v9578 = vrot.slane %v9576, 4
      %v9579 = vshll.u32 %v9293, 16
      %v9581 = vrot.slane %v9579, 5
      %v9582 = vor.u32 %v9578, %v9581
      %v9583 = vrot.slane %v9582, 4
      %v9585 = vshll.u32 %v9294, 16
      %v9587 = vrot.slane %v9585, 5
      %v9588 = vsel %vm9310, %v9583, %v9587
      %v9589 = vshrl.u32 %v9294, 16
      %v9591 = vrot.slane %v9589, 4
      %v9592 = vor.u32 %v9591, %v9587
      %v9593 = vrot.slane %v9592, 4
      %v9595 = vshll.u32 %v9295, 16
      %v9597 = vrot.slane %v9595, 5
      %v9598 = vsel %vm9310, %v9593, %v9597
      %v9600 = vshrl.u32 %v9296, 16
      %v9602 = vrot.slane %v9600, 4
      %v9603 = vshll.u32 %v9296, 16
      %v9605 = vrot.slane %v9603, 5
      %v9606 = vor.u32 %v9602, %v9605
      %v9607 = vrot.slane %v9606, 4
      %v9609 = vshll.u32 %v9297, 16
      %v9611 = vrot.slane %v9609, 5
      %v9612 = vsel %vm9310, %v9607, %v9611
      %v9613 = vshrl.u32 %v9297, 16
      %v9615 = vrot.slane %v9613, 4
      %v9616 = vor.u32 %v9615, %v9611
      %v9617 = vrot.slane %v9616, 4
      %v9619 = vshll.u32 %v9298, 16
      %v9621 = vrot.slane %v9619, 5
      %v9622 = vsel %vm9310, %v9617, %v9621
      %v9624 = vshrl.u32 %v9299, 16
      %v9626 = vrot.slane %v9624, 4
      %v9627 = vshll.u32 %v9299, 16
      %v9629 = vrot.slane %v9627, 5
      %v9630 = vor.u32 %v9626, %v9629
      %v9631 = vrot.slane %v9630, 4
      %v9633 = vshll.u32 %v9300, 16
      %v9635 = vrot.slane %v9633, 5
      %v9636 = vsel %vm9310, %v9631, %v9635
      %v9637 = vshrl.u32 %v9300, 16
      %v9639 = vrot.slane %v9637, 4
      %v9640 = vor.u32 %v9639, %v9635
      %v9641 = vrot.slane %v9640, 4
      %v9643 = vshll.u32 %v9301, 16
      %v9645 = vrot.slane %v9643, 5
      %v9646 = vsel %vm9310, %v9641, %v9645
      %v9648 = vshrl.u32 %v9302, 16
      %v9650 = vrot.slane %v9648, 4
      %v9651 = vshll.u32 %v9302, 16
      %v9653 = vrot.slane %v9651, 5
      %v9654 = vor.u32 %v9650, %v9653
      %v9655 = vrot.slane %v9654, 4
      %v9657 = vshll.u32 %v9303, 16
      %v9659 = vrot.slane %v9657, 5
      %v9660 = vsel %vm9310, %v9655, %v9659
      %v9661 = vshrl.u32 %v9303, 16
      %v9663 = vrot.slane %v9661, 4
      %v9664 = vor.u32 %v9663, %v9659
      %v9665 = vrot.slane %v9664, 4
      %v9667 = vshll.u32 %v9304, 16
      %v9669 = vrot.slane %v9667, 5
      %v9670 = vsel %vm9310, %v9665, %v9669
      %v9672 = vshrl.u32 %v9305, 16
      %v9674 = vrot.slane %v9672, 4
      %v9675 = vshll.u32 %v9305, 16
      %v9677 = vrot.slane %v9675, 5
      %v9678 = vor.u32 %v9674, %v9677
      %v9679 = vrot.slane %v9678, 4
      %v9681 = vshll.u32 %v9306, 16
      %v9683 = vrot.slane %v9681, 5
      %v9684 = vsel %vm9310, %v9679, %v9683
      %v9685 = vshrl.u32 %v9306, 16
      %v9687 = vrot.slane %v9685, 4
      %v9688 = vor.u32 %v9687, %v9683
      %v9689 = vrot.slane %v9688, 4
      %v9691 = vshll.u32 %v9307, 16
      %v9693 = vrot.slane %v9691, 5
      %v9694 = vsel %vm9310, %v9689, %v9693
      %v9695 = vld [vmem:[%s10] sm:$0x3]
      %v9696 = vunpack.c.l.b16 %v9324
      %v9697 = vunpack.c.l.b16 %v9334
      %v9698 = vunpack.c.l.b16 %v9348
      %v9699 = vunpack.c.l.b16 %v9358
      %v9700 = vunpack.c.l.b16 %v9372
      %v9701 = vunpack.c.l.b16 %v9382
      %v9702 = vunpack.c.l.b16 %v9396
      %v9703 = vunpack.c.l.b16 %v9406
      %v9704 = vunpack.c.l.b16 %v9420
      %v9705 = vunpack.c.l.b16 %v9430
      %v9706 = vunpack.c.l.b16 %v9444
      %v9707 = vunpack.c.l.b16 %v9454
      %v9708 = vunpack.c.l.b16 %v9468
      %v9709 = vunpack.c.l.b16 %v9478
      %v9710 = vunpack.c.l.b16 %v9492
      %v9711 = vunpack.c.l.b16 %v9502
      %v9712 = vunpack.c.l.b16 %v9516
      %v9713 = vunpack.c.l.b16 %v9526
      %v9714 = vunpack.c.l.b16 %v9540
      %v9715 = vunpack.c.l.b16 %v9550
      %v9716 = vunpack.c.l.b16 %v9564
      %v9717 = vunpack.c.l.b16 %v9574
      %v9718 = vunpack.c.l.b16 %v9588
      %v9719 = vunpack.c.l.b16 %v9598
      %v9720 = vunpack.c.l.b16 %v9612
      %v9721 = vunpack.c.l.b16 %v9622
      %v9722 = vunpack.c.l.b16 %v9636
      %v9723 = vunpack.c.l.b16 %v9646
      %v9724 = vunpack.c.l.b16 %v9660
      %v9725 = vunpack.c.l.b16 %v9670
      %v9726 = vunpack.c.l.b16 %v9684
      %v9727 = vunpack.c.l.b16 %v9694
      %v9728 = vpack.c.b16 %v9697, %v9696
      %v9729 = vpack.c.b16 %v9699, %v9698
      %v9730 = vpack.c.b16 %v9701, %v9700
      %v9731 = vpack.c.b16 %v9703, %v9702
      %v9732 = vpack.c.b16 %v9705, %v9704
      %v9733 = vpack.c.b16 %v9707, %v9706
      %v9734 = vpack.c.b16 %v9709, %v9708
      %v9735 = vpack.c.b16 %v9711, %v9710
      %v9736 = vpack.c.b16 %v9713, %v9712
      %v9737 = vpack.c.b16 %v9715, %v9714
      %v9738 = vpack.c.b16 %v9717, %v9716
      %v9739 = vpack.c.b16 %v9719, %v9718
      %v9740 = vpack.c.b16 %v9721, %v9720
      %v9741 = vpack.c.b16 %v9723, %v9722
      %v9742 = vpack.c.b16 %v9725, %v9724
      %v9743 = vpack.c.b16 %v9727, %v9726
      %v9745 = vsel %vm2874, %v9728, 0
      %v9748 = vsel %vm2874, %v9729, 0
      %v9751 = vsel %vm2874, %v9730, 0
      %v9754 = vsel %vm2874, %v9731, 0
      %v9757 = vsel %vm2874, %v9732, 0
      %v9760 = vsel %vm2874, %v9733, 0
      %v9763 = vsel %vm2874, %v9734, 0
      %v9766 = vsel %vm2874, %v9735, 0
      %v9769 = vsel %vm2874, %v9736, 0
      %v9772 = vsel %vm2874, %v9737, 0
      %v9775 = vsel %vm2874, %v9738, 0
      %v9778 = vsel %vm2874, %v9739, 0
      %v9781 = vsel %vm2874, %v9740, 0
      %v9784 = vsel %vm2874, %v9741, 0
      %v9787 = vsel %vm2874, %v9742, 0
      %v9790 = vsel %vm2874, %v9743, 0
      %v9793 = vsel %vm2938, %v9695, 0
      %9795 = vmatprep.subr.bf16.mxu0 0
      %9796 = vmatpush1.bf16.msra.mxu0 0
      %9797 = vmatprep.subr.bf16.mxu0 0
      %9798 = vmatpush1.bf16.msra.mxu0 0
      %9799 = vmatprep.subr.bf16.mxu0 0
      %9800 = vmatpush1.bf16.msra.mxu0 0
      %9801 = vmatprep.subr.bf16.mxu0 0
      %9802 = vmatpush1.bf16.msra.mxu0 0
      %9803 = vmatprep.subr.bf16.mxu0 0
      %9804 = vmatpush1.bf16.msra.mxu0 0
      %9805 = vmatprep.subr.bf16.mxu0 0
      %9806 = vmatpush1.bf16.msra.mxu0 0
      %9807 = vmatprep.subr.bf16.mxu0 0
      %9808 = vmatpush1.bf16.msra.mxu0 0
      %9809 = vmatprep.subr.bf16.mxu0 0
      %9810 = vmatpush1.bf16.msra.mxu0 %v9793
      %9811 = vmatprep.subr.bf16.mxu0 0
      %9812 = vmatpush2.bf16.msra.mxu0 0
      %9813 = vmatprep.subr.bf16.mxu0 0
      %9814 = vmatpush2.bf16.msra.mxu0 0
      %9815 = vmatprep.subr.bf16.mxu0 0
      %9816 = vmatpush2.bf16.msra.mxu0 0
      %9817 = vmatprep.subr.bf16.mxu0 0
      %9818 = vmatpush2.bf16.msra.mxu0 0
      %9819 = vmatprep.subr.bf16.mxu0 0
      %9820 = vmatpush2.bf16.msra.mxu0 0
      %9821 = vmatprep.subr.bf16.mxu0 0
      %9822 = vmatpush2.bf16.msra.mxu0 0
      %9823 = vmatprep.subr.bf16.mxu0 0
      %9824 = vmatpush2.bf16.msra.mxu0 0
      %9825 = vmatprep.subr.bf16.mxu0 0
      %9826 = vmatpush2.bf16.msra.mxu0 0
      %9827 = vmatprep.mubr.bf16.mxu0 0
      %9828 = vmatmul.mubr.bf16.gmra.mxu0 %v9745
      %v9829 = vpop.f32.mrf.mxu0
      %v9830 = vadd.f32 0.0, %v9829
      %v9831 = vpop.f32.mrf.mxu0
      %v9832 = vpop.f32.mrf.mxu0
      %v9833 = vadd.f32 0.0, %v9832
      %v9834 = vpop.f32.mrf.mxu0
      %9835 = vmatprep.mubr.bf16.mxu0 0
      %9836 = vmatmul.mubr.bf16.gmra.mxu0 %v9748
      %v9837 = vpop.f32.mrf.mxu0
      %v9838 = vadd.f32 0.0, %v9837
      %v9839 = vpop.f32.mrf.mxu0
      %v9840 = vpop.f32.mrf.mxu0
      %v9841 = vadd.f32 0.0, %v9840
      %v9842 = vpop.f32.mrf.mxu0
      %9843 = vmatprep.mubr.bf16.mxu0 0
      %9844 = vmatmul.mubr.bf16.gmra.mxu0 %v9751
      %v9845 = vpop.f32.mrf.mxu0
      %v9846 = vadd.f32 0.0, %v9845
      %v9847 = vpop.f32.mrf.mxu0
      %v9848 = vpop.f32.mrf.mxu0
      %v9849 = vadd.f32 0.0, %v9848
      %v9850 = vpop.f32.mrf.mxu0
      %9851 = vmatprep.mubr.bf16.mxu0 0
      %9852 = vmatmul.mubr.bf16.gmra.mxu0 %v9754
      %v9853 = vpop.f32.mrf.mxu0
      %v9854 = vadd.f32 0.0, %v9853
      %v9855 = vpop.f32.mrf.mxu0
      %v9856 = vpop.f32.mrf.mxu0
      %v9857 = vadd.f32 0.0, %v9856
      %v9858 = vpop.f32.mrf.mxu0
      %9859 = vmatprep.mubr.bf16.mxu0 0
      %9860 = vmatmul.mubr.bf16.gmra.mxu0 %v9757
      %v9861 = vpop.f32.mrf.mxu0
      %v9862 = vadd.f32 0.0, %v9861
      %v9863 = vpop.f32.mrf.mxu0
      %v9864 = vpop.f32.mrf.mxu0
      %v9865 = vadd.f32 0.0, %v9864
      %v9866 = vpop.f32.mrf.mxu0
      %9867 = vmatprep.mubr.bf16.mxu0 0
      %9868 = vmatmul.mubr.bf16.gmra.mxu0 %v9760
      %v9869 = vpop.f32.mrf.mxu0
      %v9870 = vadd.f32 0.0, %v9869
      %v9871 = vpop.f32.mrf.mxu0
      %v9872 = vpop.f32.mrf.mxu0
      %v9873 = vadd.f32 0.0, %v9872
      %v9874 = vpop.f32.mrf.mxu0
      %9875 = vmatprep.mubr.bf16.mxu0 0
      %9876 = vmatmul.mubr.bf16.gmra.mxu0 %v9763
      %v9877 = vpop.f32.mrf.mxu0
      %v9878 = vadd.f32 0.0, %v9877
      %v9879 = vpop.f32.mrf.mxu0
      %v9880 = vpop.f32.mrf.mxu0
      %v9881 = vadd.f32 0.0, %v9880
      %v9882 = vpop.f32.mrf.mxu0
      %9883 = vmatprep.mubr.bf16.mxu0 0
      %9884 = vmatmul.mubr.bf16.gmra.mxu0 %v9766
      %v9885 = vpop.f32.mrf.mxu0
      %v9886 = vadd.f32 0.0, %v9885
      %v9887 = vpop.f32.mrf.mxu0
      %v9888 = vpop.f32.mrf.mxu0
      %v9889 = vadd.f32 0.0, %v9888
      %v9890 = vpop.f32.mrf.mxu0
      %9891 = vmatprep.mubr.bf16.mxu0 0
      %9892 = vmatmul.mubr.bf16.gmra.mxu0 %v9769
      %v9893 = vpop.f32.mrf.mxu0
      %v9894 = vadd.f32 0.0, %v9893
      %v9895 = vpop.f32.mrf.mxu0
      %v9896 = vpop.f32.mrf.mxu0
      %v9897 = vadd.f32 0.0, %v9896
      %v9898 = vpop.f32.mrf.mxu0
      %9899 = vmatprep.mubr.bf16.mxu0 0
      %9900 = vmatmul.mubr.bf16.gmra.mxu0 %v9772
      %v9901 = vpop.f32.mrf.mxu0
      %v9902 = vadd.f32 0.0, %v9901
      %v9903 = vpop.f32.mrf.mxu0
      %v9904 = vpop.f32.mrf.mxu0
      %v9905 = vadd.f32 0.0, %v9904
      %v9906 = vpop.f32.mrf.mxu0
      %9907 = vmatprep.mubr.bf16.mxu0 0
      %9908 = vmatmul.mubr.bf16.gmra.mxu0 %v9775
      %v9909 = vpop.f32.mrf.mxu0
      %v9910 = vadd.f32 0.0, %v9909
      %v9911 = vpop.f32.mrf.mxu0
      %v9912 = vpop.f32.mrf.mxu0
      %v9913 = vadd.f32 0.0, %v9912
      %v9914 = vpop.f32.mrf.mxu0
      %9915 = vmatprep.mubr.bf16.mxu0 0
      %9916 = vmatmul.mubr.bf16.gmra.mxu0 %v9778
      %v9917 = vpop.f32.mrf.mxu0
      %v9918 = vadd.f32 0.0, %v9917
      %v9919 = vpop.f32.mrf.mxu0
      %v9920 = vpop.f32.mrf.mxu0
      %v9921 = vadd.f32 0.0, %v9920
      %v9922 = vpop.f32.mrf.mxu0
      %9923 = vmatprep.mubr.bf16.mxu0 0
      %9924 = vmatmul.mubr.bf16.gmra.mxu0 %v9781
      %v9925 = vpop.f32.mrf.mxu0
      %v9926 = vadd.f32 0.0, %v9925
      %v9927 = vpop.f32.mrf.mxu0
      %v9928 = vpop.f32.mrf.mxu0
      %v9929 = vadd.f32 0.0, %v9928
      %v9930 = vpop.f32.mrf.mxu0
      %9931 = vmatprep.mubr.bf16.mxu0 0
      %9932 = vmatmul.mubr.bf16.gmra.mxu0 %v9784
      %v9933 = vpop.f32.mrf.mxu0
      %v9934 = vadd.f32 0.0, %v9933
      %v9935 = vpop.f32.mrf.mxu0
      %v9936 = vpop.f32.mrf.mxu0
      %v9937 = vadd.f32 0.0, %v9936
      %v9938 = vpop.f32.mrf.mxu0
      %9939 = vmatprep.mubr.bf16.mxu0 0
      %9940 = vmatmul.mubr.bf16.gmra.mxu0 %v9787
      %v9941 = vpop.f32.mrf.mxu0
      %v9942 = vadd.f32 0.0, %v9941
      %v9943 = vpop.f32.mrf.mxu0
      %v9944 = vpop.f32.mrf.mxu0
      %v9945 = vadd.f32 0.0, %v9944
      %v9946 = vpop.f32.mrf.mxu0
      %9947 = vmatprep.mubr.bf16.mxu0 0
      %9948 = vmatmul.mubr.bf16.gmra.mxu0 %v9790
      %v9949 = vpop.f32.mrf.mxu0
      %v9950 = vadd.f32 0.0, %v9949
      %v9951 = vpop.f32.mrf.mxu0
      %v9952 = vpop.f32.mrf.mxu0
      %v9953 = vadd.f32 0.0, %v9952
      %v9954 = vpop.f32.mrf.mxu0
      %9955 = vdwg.mxu0
      %v9956 = vld [vmem:[%s11] sm:$0x1]
      %v9958 = vlaneseq
      %v9959 = vshrl.u32 %v9958, 7
      %v9960 = vsub.s32 0, %v9959
      %v9961 = vrot.slane %v9956, %v9960
      %v9963 = vmul.f32 %v9830, %v9961
      %v9964 = vmul.f32 %v9833, %v9961
      %v9965 = vmul.f32 %v9838, %v9961
      %v9966 = vmul.f32 %v9841, %v9961
      %v9967 = vmul.f32 %v9846, %v9961
      %v9968 = vmul.f32 %v9849, %v9961
      %v9969 = vmul.f32 %v9854, %v9961
      %v9970 = vmul.f32 %v9857, %v9961
      %v9971 = vmul.f32 %v9862, %v9961
      %v9972 = vmul.f32 %v9865, %v9961
      %v9973 = vmul.f32 %v9870, %v9961
      %v9974 = vmul.f32 %v9873, %v9961
      %v9975 = vmul.f32 %v9878, %v9961
      %v9976 = vmul.f32 %v9881, %v9961
      %v9977 = vmul.f32 %v9886, %v9961
      %v9978 = vmul.f32 %v9889, %v9961
      %v9979 = vmul.f32 %v9894, %v9961
      %v9980 = vmul.f32 %v9897, %v9961
      %v9981 = vmul.f32 %v9902, %v9961
      %v9982 = vmul.f32 %v9905, %v9961
      %v9983 = vmul.f32 %v9910, %v9961
      %v9984 = vmul.f32 %v9913, %v9961
      %v9985 = vmul.f32 %v9918, %v9961
      %v9986 = vmul.f32 %v9921, %v9961
      %v9987 = vmul.f32 %v9926, %v9961
      %v9988 = vmul.f32 %v9929, %v9961
      %v9989 = vmul.f32 %v9934, %v9961
      %v9990 = vmul.f32 %v9937, %v9961
      %v9991 = vmul.f32 %v9942, %v9961
      %v9992 = vmul.f32 %v9945, %v9961
      %v9993 = vmul.f32 %v9950, %v9961
      %v9994 = vmul.f32 %v9953, %v9961
      %v9995 = vadd.f32 %v9224, %v9963
      %v9996 = vadd.f32 %v9225, %v9964
      %v9997 = vadd.f32 %v9226, %v9965
      %v9998 = vadd.f32 %v9227, %v9966
      %v9999 = vadd.f32 %v9228, %v9967
      %v10000 = vadd.f32 %v9229, %v9968
      %v10001 = vadd.f32 %v9230, %v9969
      %v10002 = vadd.f32 %v9231, %v9970
      %v10003 = vadd.f32 %v9232, %v9971
      %v10004 = vadd.f32 %v9233, %v9972
      %v10005 = vadd.f32 %v9234, %v9973
      %v10006 = vadd.f32 %v9235, %v9974
      %v10007 = vadd.f32 %v9236, %v9975
      %v10008 = vadd.f32 %v9237, %v9976
      %v10009 = vadd.f32 %v9238, %v9977
      %v10010 = vadd.f32 %v9239, %v9978
      %v10011 = vadd.f32 %v9240, %v9979
      %v10012 = vadd.f32 %v9241, %v9980
      %v10013 = vadd.f32 %v9242, %v9981
      %v10014 = vadd.f32 %v9243, %v9982
      %v10015 = vadd.f32 %v9244, %v9983
      %v10016 = vadd.f32 %v9245, %v9984
      %v10017 = vadd.f32 %v9246, %v9985
      %v10018 = vadd.f32 %v9247, %v9986
      %v10019 = vadd.f32 %v9248, %v9987
      %v10020 = vadd.f32 %v9249, %v9988
      %v10021 = vadd.f32 %v9250, %v9989
      %v10022 = vadd.f32 %v9251, %v9990
      %v10023 = vadd.f32 %v9252, %v9991
      %v10024 = vadd.f32 %v9253, %v9992
      %v10025 = vadd.f32 %v9254, %v9993
      %v10026 = vadd.f32 %v9255, %v9994
      %v10027 = vld [vmem:[%s12] sm:$0x1]
      %v10029 = vlaneseq
      %v10030 = vshrl.u32 %v10029, 7
      %v10031 = vsub.s32 0, %v10030
      %v10032 = vrot.slane %v10027, %v10031
      %v10034 = vadd.f32 %v9995, %v10032
      %v10035 = vadd.f32 %v9996, %v10032
      %v10036 = vadd.f32 %v9997, %v10032
      %v10037 = vadd.f32 %v9998, %v10032
      %v10038 = vadd.f32 %v9999, %v10032
      %v10039 = vadd.f32 %v10000, %v10032
      %v10040 = vadd.f32 %v10001, %v10032
      %v10041 = vadd.f32 %v10002, %v10032
      %v10042 = vadd.f32 %v10003, %v10032
      %v10043 = vadd.f32 %v10004, %v10032
      %v10044 = vadd.f32 %v10005, %v10032
      %v10045 = vadd.f32 %v10006, %v10032
      %v10046 = vadd.f32 %v10007, %v10032
      %v10047 = vadd.f32 %v10008, %v10032
      %v10048 = vadd.f32 %v10009, %v10032
      %v10049 = vadd.f32 %v10010, %v10032
      %v10050 = vadd.f32 %v10011, %v10032
      %v10051 = vadd.f32 %v10012, %v10032
      %v10052 = vadd.f32 %v10013, %v10032
      %v10053 = vadd.f32 %v10014, %v10032
      %v10054 = vadd.f32 %v10015, %v10032
      %v10055 = vadd.f32 %v10016, %v10032
      %v10056 = vadd.f32 %v10017, %v10032
      %v10057 = vadd.f32 %v10018, %v10032
      %v10058 = vadd.f32 %v10019, %v10032
      %v10059 = vadd.f32 %v10020, %v10032
      %v10060 = vadd.f32 %v10021, %v10032
      %v10061 = vadd.f32 %v10022, %v10032
      %v10062 = vadd.f32 %v10023, %v10032
      %v10063 = vadd.f32 %v10024, %v10032
      %v10064 = vadd.f32 %v10025, %v10032
      %v10065 = vadd.f32 %v10026, %v10032
      %v10066 = vmax.f32 %v10034, 0.0
      %v10067 = vmax.f32 %v10035, 0.0
      %v10068 = vmax.f32 %v10036, 0.0
      %v10069 = vmax.f32 %v10037, 0.0
      %v10070 = vmax.f32 %v10038, 0.0
      %v10071 = vmax.f32 %v10039, 0.0
      %v10072 = vmax.f32 %v10040, 0.0
      %v10073 = vmax.f32 %v10041, 0.0
      %v10074 = vmax.f32 %v10042, 0.0
      %v10075 = vmax.f32 %v10043, 0.0
      %v10076 = vmax.f32 %v10044, 0.0
      %v10077 = vmax.f32 %v10045, 0.0
      %v10078 = vmax.f32 %v10046, 0.0
      %v10079 = vmax.f32 %v10047, 0.0
      %v10080 = vmax.f32 %v10048, 0.0
      %v10081 = vmax.f32 %v10049, 0.0
      %v10082 = vmax.f32 %v10050, 0.0
      %v10083 = vmax.f32 %v10051, 0.0
      %v10084 = vmax.f32 %v10052, 0.0
      %v10085 = vmax.f32 %v10053, 0.0
      %v10086 = vmax.f32 %v10054, 0.0
      %v10087 = vmax.f32 %v10055, 0.0
      %v10088 = vmax.f32 %v10056, 0.0
      %v10089 = vmax.f32 %v10057, 0.0
      %v10090 = vmax.f32 %v10058, 0.0
      %v10091 = vmax.f32 %v10059, 0.0
      %v10092 = vmax.f32 %v10060, 0.0
      %v10093 = vmax.f32 %v10061, 0.0
      %v10094 = vmax.f32 %v10062, 0.0
      %v10095 = vmax.f32 %v10063, 0.0
      %v10096 = vmax.f32 %v10064, 0.0
      %v10097 = vmax.f32 %v10065, 0.0
      %v10098 = vpack.c.bf16 %v10067, %v10066
      %v10099 = vpack.c.bf16 %v10069, %v10068
      %v10100 = vpack.c.bf16 %v10071, %v10070
      %v10101 = vpack.c.bf16 %v10073, %v10072
      %v10102 = vpack.c.bf16 %v10075, %v10074
      %v10103 = vpack.c.bf16 %v10077, %v10076
      %v10104 = vpack.c.bf16 %v10079, %v10078
      %v10105 = vpack.c.bf16 %v10081, %v10080
      %v10106 = vpack.c.bf16 %v10083, %v10082
      %v10107 = vpack.c.bf16 %v10085, %v10084
      %v10108 = vpack.c.bf16 %v10087, %v10086
      %v10109 = vpack.c.bf16 %v10089, %v10088
      %v10110 = vpack.c.bf16 %v10091, %v10090
      %v10111 = vpack.c.bf16 %v10093, %v10092
      %v10112 = vpack.c.bf16 %v10095, %v10094
      %v10113 = vpack.c.bf16 %v10097, %v10096
      %v10130 = vunpack.c.l.b16 %v10098
      %v10131 = vunpack.c.h.b16 %v10098
      %v10132 = vunpack.c.l.b16 %v10099
      %v10133 = vunpack.c.h.b16 %v10099
      %v10134 = vunpack.c.l.b16 %v10100
      %v10135 = vunpack.c.h.b16 %v10100
      %v10136 = vunpack.c.l.b16 %v10101
      %v10137 = vunpack.c.h.b16 %v10101
      %v10138 = vunpack.c.l.b16 %v10102
      %v10139 = vunpack.c.h.b16 %v10102
      %v10140 = vunpack.c.l.b16 %v10103
      %v10141 = vunpack.c.h.b16 %v10103
      %v10142 = vunpack.c.l.b16 %v10104
      %v10143 = vunpack.c.h.b16 %v10104
      %v10144 = vunpack.c.l.b16 %v10105
      %v10145 = vunpack.c.h.b16 %v10105
      %v10146 = vunpack.c.l.b16 %v10106
      %v10147 = vunpack.c.h.b16 %v10106
      %v10148 = vunpack.c.l.b16 %v10107
      %v10149 = vunpack.c.h.b16 %v10107
      %v10150 = vunpack.c.l.b16 %v10108
      %v10151 = vunpack.c.h.b16 %v10108
      %v10152 = vunpack.c.l.b16 %v10109
      %v10153 = vunpack.c.h.b16 %v10109
      %v10154 = vunpack.c.l.b16 %v10110
      %v10155 = vunpack.c.h.b16 %v10110
      %v10156 = vunpack.c.l.b16 %v10111
      %v10157 = vunpack.c.h.b16 %v10111
      %v10158 = vunpack.c.l.b16 %v10112
      %v10159 = vunpack.c.h.b16 %v10112
      %v10160 = vunpack.c.l.b16 %v10113
      %v10161 = vunpack.c.h.b16 %v10113
      %v10162 = vpack.c.b16 %v10130, %v10130
      %v10163 = vpack.c.b16 %v10131, %v10131
      %v10164 = vpack.c.b16 %v10132, %v10132
      %v10165 = vpack.c.b16 %v10133, %v10133
      %v10166 = vpack.c.b16 %v10134, %v10134
      %v10167 = vpack.c.b16 %v10135, %v10135
      %v10168 = vpack.c.b16 %v10136, %v10136
      %v10169 = vpack.c.b16 %v10137, %v10137
      %v10170 = vpack.c.b16 %v10138, %v10138
      %v10171 = vpack.c.b16 %v10139, %v10139
      %v10172 = vpack.c.b16 %v10140, %v10140
      %v10173 = vpack.c.b16 %v10141, %v10141
      %v10174 = vpack.c.b16 %v10142, %v10142
      %v10175 = vpack.c.b16 %v10143, %v10143
      %v10176 = vpack.c.b16 %v10144, %v10144
      %v10177 = vpack.c.b16 %v10145, %v10145
      %v10178 = vpack.c.b16 %v10146, %v10146
      %v10179 = vpack.c.b16 %v10147, %v10147
      %v10180 = vpack.c.b16 %v10148, %v10148
      %v10181 = vpack.c.b16 %v10149, %v10149
      %v10182 = vpack.c.b16 %v10150, %v10150
      %v10183 = vpack.c.b16 %v10151, %v10151
      %v10184 = vpack.c.b16 %v10152, %v10152
      %v10185 = vpack.c.b16 %v10153, %v10153
      %v10186 = vpack.c.b16 %v10154, %v10154
      %v10187 = vpack.c.b16 %v10155, %v10155
      %v10188 = vpack.c.b16 %v10156, %v10156
      %v10189 = vpack.c.b16 %v10157, %v10157
      %v10190 = vpack.c.b16 %v10158, %v10158
      %v10191 = vpack.c.b16 %v10159, %v10159
      %v10192 = vpack.c.b16 %v10160, %v10160
      %v10193 = vpack.c.b16 %v10161, %v10161
      %vm10226 = vcmask 125952
      %10227 = vst.msk [vmem:[%s464] sm:$0xf] %vm10226, %v10162
      %10228 = vst.msk [vmem:[%s464 + $0x4] sm:$0xf] %vm10226, %v10163
      %10229 = vst.msk [vmem:[%s464 + $0x8] sm:$0xf] %vm10226, %v10164
      %10230 = vst.msk [vmem:[%s464 + $0xc] sm:$0xf] %vm10226, %v10165
      %10231 = vst.msk [vmem:[%s464 + $0x10] sm:$0xf] %vm10226, %v10166
      %10232 = vst.msk [vmem:[%s464 + $0x14] sm:$0xf] %vm10226, %v10167
      %10233 = vst.msk [vmem:[%s464 + $0x18] sm:$0xf] %vm10226, %v10168
      %10234 = vst.msk [vmem:[%s464 + $0x1c] sm:$0xf] %vm10226, %v10169
      %10235 = vst.msk [vmem:[%s464 + $0x20] sm:$0xf] %vm10226, %v10170
      %10236 = vst.msk [vmem:[%s464 + $0x24] sm:$0xf] %vm10226, %v10171
      %10237 = vst.msk [vmem:[%s464 + $0x28] sm:$0xf] %vm10226, %v10172
      %10238 = vst.msk [vmem:[%s464 + $0x2c] sm:$0xf] %vm10226, %v10173
      %10239 = vst.msk [vmem:[%s464 + $0x30] sm:$0xf] %vm10226, %v10174
      %10240 = vst.msk [vmem:[%s464 + $0x34] sm:$0xf] %vm10226, %v10175
      %10241 = vst.msk [vmem:[%s464 + $0x38] sm:$0xf] %vm10226, %v10176
      %10242 = vst.msk [vmem:[%s464 + $0x3c] sm:$0xf] %vm10226, %v10177
      %10243 = vst.msk [vmem:[%s464 + $0x40] sm:$0xf] %vm10226, %v10178
      %10244 = vst.msk [vmem:[%s464 + $0x44] sm:$0xf] %vm10226, %v10179
      %10245 = vst.msk [vmem:[%s464 + $0x48] sm:$0xf] %vm10226, %v10180
      %10246 = vst.msk [vmem:[%s464 + $0x4c] sm:$0xf] %vm10226, %v10181
      %10247 = vst.msk [vmem:[%s464 + $0x50] sm:$0xf] %vm10226, %v10182
      %10248 = vst.msk [vmem:[%s464 + $0x54] sm:$0xf] %vm10226, %v10183
      %10249 = vst.msk [vmem:[%s464 + $0x58] sm:$0xf] %vm10226, %v10184
      %10250 = vst.msk [vmem:[%s464 + $0x5c] sm:$0xf] %vm10226, %v10185
      %10251 = vst.msk [vmem:[%s464 + $0x60] sm:$0xf] %vm10226, %v10186
      %10252 = vst.msk [vmem:[%s464 + $0x64] sm:$0xf] %vm10226, %v10187
      %10253 = vst.msk [vmem:[%s464 + $0x68] sm:$0xf] %vm10226, %v10188
      %10254 = vst.msk [vmem:[%s464 + $0x6c] sm:$0xf] %vm10226, %v10189
      %10255 = vst.msk [vmem:[%s464 + $0x70] sm:$0xf] %vm10226, %v10190
      %10256 = vst.msk [vmem:[%s464 + $0x74] sm:$0xf] %vm10226, %v10191
      %10257 = vst.msk [vmem:[%s464 + $0x78] sm:$0xf] %vm10226, %v10192
      %10258 = vst.msk [vmem:[%s464 + $0x7c] sm:$0xf] %vm10226, %v10193
      %s10259 = smul.u32 16, %s29
      %p10260 = scmp.lt.s32.totalorder %s28, 1
      %s10261 = scalar_select %p10260, %s28, 1
      %p10262 = scmp.lt.s32.totalorder %s10259, 15
      %s10263 = scalar_select %p10262, %s10259, 15
      %s10264 = smul.addr %s10263, 2
      %s10265 = smul.addr %s10261, 32
      %s10266 = sadd.s32 %s10264, %s10265
      %s10267 = smul.addr %s10266, 4
      %s10268 = scalar_lea.vmem %s13, %s10267
      // Predicated region
      $region73: #{bottleneck_forward.1} parent=71 // pred_check
        %p10269 = pneg %p334
      $region74: #{bottleneck_forward.1} parent=71 // pred_check_branch
        %10271 = sbr.rel (%p10269) target = $region76
      $region75: #{bottleneck_forward.1} parent=71 // pred_region
        %s10272 = smul.u32 16, %s29
      $region76: #{bottleneck_forward.1} parent=71 // pred_fallthru
        _
    $region72: #{bottleneck_forward.1} parent=5 // pred_fallthru
      _
    %p10273 = scmp.le.s32.totalorder 2, %s19
    // Predicated region
    $region77: #{bottleneck_forward.1} parent=5 // pred_check
      %p10274 = pneg %p10273
    $region78: #{bottleneck_forward.1} parent=5 // pred_check_branch
      %10276 = sbr.rel (%p10274) target = $region80
    $region79: #{bottleneck_forward.1} parent=5 // pred_region
      %s10277 = ssub.s32 %s19, 2
      // Predicated region
      $region81: #{bottleneck_forward.1} parent=79 // pred_check
        %p10278 = pneg %p340
      $region82: #{bottleneck_forward.1} parent=79 // pred_check_branch
        %10280 = sbr.rel (%p10278) target = $region84
      $region83: #{bottleneck_forward.1} parent=79 // pred_region
        %s10281 = smul.u32 16, %s31
        %p10282 = scmp.lt.s32.totalorder %s30, 1
        %s10283 = scalar_select %p10282, %s30, 1
        %p10284 = scmp.lt.s32.totalorder %s10281, 15
        %s10285 = scalar_select %p10284, %s10281, 15
        %s10286 = smul.addr %s10285, 2
        %s10287 = smul.addr %s10283, 32
        %s10288 = sadd.s32 %s10286, %s10287
        %s10289 = smul.addr %s10288, 4
        %s10290 = scalar_lea.vmem %s13, %s10289
      $region84: #{bottleneck_forward.1} parent=79 // pred_fallthru
        _
    $region80: #{bottleneck_forward.1} parent=5 // pred_fallthru
      _
  $region6: #{bottleneck_forward.1} parent=0 // loop_footer
    %s23 = sadd.s32 1, %s19
  $region7: #{bottleneck_forward.1} parent=0 // loop_footer_branch
    %18 = sbr.rel target = $region3
  $region8: #{bottleneck_forward.1} parent=0 // loop_exit
    _

</llo_original>
